<compile_context>
chip_gen: v5e
topology: v5e:2x2
jax: 0.10.0
libtpu: 0.0.40
codegen_flags: <defaults>
</compile_context>

<pallas_src>
import numpy as np

import jax
import jax.numpy as jnp
from jax import random
from jax.experimental import pallas as pl
from jax.experimental.pallas import tpu as pltpu


# ----------------------------- configuration ------------------------------
B = 2                                        # batch
N_FRAMES = 4                                 # RGB frames
IMG_C, IMG_H, IMG_W = 3, 16, 16              # RGB / Gait input images
FEAT_C, FEAT_H, FEAT_W = 32, 8, 8            # backbone-proxy feature map
D_IN = IMG_C * IMG_H * IMG_W                 # 768
D_FEAT = FEAT_C * FEAT_H * FEAT_W            # 2048
D_BRANCH = FEAT_C * (FEAT_H // 2) * (FEAT_W // 2)   # per-branch flatten = 512
D_FUSION = 2 * D_BRANCH                              # 1024
ENC_DIMS = (D_FUSION, D_FUSION // 2, D_FUSION // 4, D_FUSION // 8)  # 1024,512,256,128
N_ID = 84
N_ID_PAD = 128                               # lane-dense preID output width
N_POOL = 4                                   # 2x2 pool positions == grid length


# -------------------- weight-layout plumbing (host side) -------------------
def _pool_permutation(C, H, W):
    """Column permutation so a 2x2/stride-2 max-pool of the (C,H,W)-flattened
    backbone output becomes an elementwise max of FOUR CONTIGUOUS 512-wide
    lane blocks.  new[pos*D + c*Hp*Wp + hp*Wp + wp] = old[c*H*W + (2hp+py)*W
    + (2wp+px)] with pos = py*2 + px.  After the max over pos-blocks the
    column order equals PyTorch's flatten(maxpool(feat))."""
    Hp, Wp = H // 2, W // 2
    D = C * Hp * Wp
    perm = np.empty(4 * D, dtype=np.int32)
    for py in range(2):
        for px in range(2):
            pos = py * 2 + px
            for c in range(C):
                for hp in range(Hp):
                    for wp in range(Wp):
                        new = pos * D + c * Hp * Wp + hp * Wp + wp
                        old = c * H * W + (2 * hp + py) * W + (2 * wp + px)
                        perm[new] = old
    return perm


# ------------------------------ Pallas kernel ------------------------------
def _fused_kernel(xr_ref, xg_ref,
                  w1_ref, b1_ref, w2_ref, b2_ref,
                  aw_ref, gw_ref,
                  ew0, eb0, ew1, eb1, ew2, eb2,
                  dw0, db0, dw1, db1, dw2, db2,
                  pw, pb,
                  enc_ref, pre_ref, fus_ref, dec_ref,
                  app_acc, gai_acc):
    """grid=(4,) over the 4 pool-position column blocks of the (pre-permuted)
    backbone weights.  Each step: one 512-wide slab of both backbones
    (bf16 MXU, f32 accumulate), frame-average, running max into VMEM scratch.
    Last step: per-sample scaling + concat (lane-aligned slice stores), then
    the whole AE encoder/decoder + preID head with VMEM-resident bf16
    weights."""
    k = pl.program_id(0)
    Bn = xg_ref.shape[0]

    # --- frontend: current pool-position block of both backbone branches ---
    yr = jnp.dot(xr_ref[...], w1_ref[...],
                 preferred_element_type=jnp.float32) + b1_ref[...]
    yr = jnp.maximum(yr, 0.0)                                 # (4*B, 512) f32
    # frame average (frame-major rows).  TODO(synk): at larger batch, replace
    # these sub-8-sublane slices with a (B x 4B) averaging matmul on the MXU.
    avg = (yr[0 * Bn:1 * Bn] + yr[1 * Bn:2 * Bn]
           + yr[2 * Bn:3 * Bn] + yr[3 * Bn:4 * Bn]) * 0.25    # (B, 512)

    yg = jnp.dot(xg_ref[...], w2_ref[...],
                 preferred_element_type=jnp.float32) + b2_ref[...]
    yg = jnp.maximum(yg, 0.0)                                 # (B, 512)

    @pl.when(k == 0)
    def _():
        app_acc[...] = avg
        gai_acc[...] = yg

    @pl.when(k > 0)
    def _():
        app_acc[...] = jnp.maximum(app_acc[...], avg)
        gai_acc[...] = jnp.maximum(gai_acc[...], yg)

    # --- last pool block: scale, concat, AE encoder/decoder, preID head ----
    @pl.when(k == pl.num_programs(0) - 1)
    def _():
        fus_ref[:, 0:D_BRANCH] = app_acc[...] * aw_ref[...]
        fus_ref[:, D_BRANCH:D_FUSION] = gai_acc[...] * gw_ref[...]
        fusion = fus_ref[...]

        def lin(x, w_ref, b_ref):
            # bf16 matmul operands, f32 accumulate, f32 bias add.
            return jnp.dot(x.astype(jnp.bfloat16), w_ref[...],
                           preferred_element_type=jnp.float32) + b_ref[...]

        h = jnp.maximum(lin(fusion, ew0, eb0), 0.0)
        h = jnp.maximum(lin(h, ew1, eb1), 0.0)
        enc = jnp.maximum(lin(h, ew2, eb2), 0.0)
        enc_ref[...] = enc

        d = jnp.maximum(lin(enc, dw0, db0), 0.0)
        d = jnp.maximum(lin(d, dw1, db1), 0.0)
        z = lin(d, dw2, db2)
        # sigmoid: exp on EUP + approx reciprocal (EUP), no VPU divide.
        dec_ref[...] = pl.reciprocal(1.0 + jnp.exp(-z), approx=True)

        pre_ref[...] = lin(enc, pw, pb)


# ------------------------------ model pieces ------------------------------
def init_params(key):
    """Standard-layout f32 parameters (same ones the plain-JAX reference uses)."""
    def lin_init(k, fan_in, fan_out):
        kw, _ = random.split(k)
        w = random.normal(kw, (fan_in, fan_out), jnp.float32) / jnp.sqrt(fan_in)
        b = jnp.zeros((fan_out,), jnp.float32)
        return w, b

    keys = random.split(key, 9)
    p = {}
    # TODO(synk): stand-in for ResNet-50 — a single linear+ReLU projection to
    # a (C, H, W) feature map; a full ResNet-50 is out of scope here.
    p["bb1_w"], p["bb1_b"] = lin_init(keys[0], D_IN, D_FEAT)
    p["bb2_w"], p["bb2_b"] = lin_init(keys[1], D_IN, D_FEAT)
    # AE encoder
    p["enc_w0"], p["enc_b0"] = lin_init(keys[2], ENC_DIMS[0], ENC_DIMS[1])
    p["enc_w1"], p["enc_b1"] = lin_init(keys[3], ENC_DIMS[1], ENC_DIMS[2])
    p["enc_w2"], p["enc_b2"] = lin_init(keys[4], ENC_DIMS[2], ENC_DIMS[3])
    # AE decoder
    p["dec_w0"], p["dec_b0"] = lin_init(keys[5], ENC_DIMS[3], ENC_DIMS[2])
    p["dec_w1"], p["dec_b1"] = lin_init(keys[6], ENC_DIMS[2], ENC_DIMS[1])
    p["dec_w2"], p["dec_b2"] = lin_init(keys[7], ENC_DIMS[1], ENC_DIMS[0])
    # preID head
    p["pre_w"], p["pre_b"] = lin_init(keys[8], ENC_DIMS[3], N_ID)
    return p


def prepare_kernel_params(p):
    """One-time, host-side layout plumbing for the Pallas path:
    - backbone weight columns permuted into pool-friendly order,
    - all matmul weights cast to bf16 (halves HBM weight DMA),
    - biases kept f32 and reshaped to (1, N) rows,
    - preID padded from 84 to 128 output columns (zeros)."""
    perm = jnp.asarray(_pool_permutation(FEAT_C, FEAT_H, FEAT_W))
    kp = {}
    kp["bb1_w"] = p["bb1_w"][:, perm].astype(jnp.bfloat16)
    kp["bb1_b"] = p["bb1_b"][perm].reshape(1, -1)
    kp["bb2_w"] = p["bb2_w"][:, perm].astype(jnp.bfloat16)
    kp["bb2_b"] = p["bb2_b"][perm].reshape(1, -1)
    for name in ("enc_w0", "enc_w1", "enc_w2", "dec_w0", "dec_w1", "dec_w2"):
        kp[name] = p[name].astype(jnp.bfloat16)
    for name in ("enc_b0", "enc_b1", "enc_b2", "dec_b0", "dec_b1", "dec_b2"):
        kp[name] = p[name].reshape(1, -1)
    pw = jnp.zeros((ENC_DIMS[3], N_ID_PAD), jnp.float32).at[:, :N_ID].set(p["pre_w"])
    pb = jnp.zeros((1, N_ID_PAD), jnp.float32).at[:, :N_ID].set(p["pre_b"].reshape(1, -1))
    kp["pre_w"] = pw.astype(jnp.bfloat16)
    kp["pre_b"] = pb
    return kp


def forward(kp, RGB, Gait, app_w, gait_w):
    """RGB: (4, B, 3, H, W) stack of frames; Gait: (B, 3, H, W);
    app_w / gait_w: (B,) per-sample weights.  Returns the same 4-tuple as
    the PyTorch forward."""
    Bn = Gait.shape[0]
    # torch.t(torch.reshape(x, (1, B))) -> (B, 1) float32
    aw = app_w.reshape(1, Bn).T.astype(jnp.float32)
    gw = gait_w.reshape(1, Bn).T.astype(jnp.float32)

    # bf16 matmul inputs (frame-major rows for the RGB stack).
    x_rgb = RGB.astype(jnp.bfloat16).reshape(N_FRAMES * Bn, -1)
    x_gait = Gait.astype(jnp.bfloat16).reshape(Bn, -1)

    def res(shape):  # full-array block, resident across the pool grid axis
        return pl.BlockSpec(shape, lambda k: (0, 0))

    in_specs = [
        res((N_FRAMES * Bn, D_IN)),                            # x_rgb
        res((Bn, D_IN)),                                       # x_gait
        pl.BlockSpec((D_IN, D_BRANCH), lambda k: (0, k)),      # bb1_w (per pool block)
        pl.BlockSpec((1, D_BRANCH), lambda k: (0, k)),         # bb1_b
        pl.BlockSpec((D_IN, D_BRANCH), lambda k: (0, k)),      # bb2_w
        pl.BlockSpec((1, D_BRANCH), lambda k: (0, k)),         # bb2_b
        res((Bn, 1)),                                          # aw
        res((Bn, 1)),                                          # gw
        res((ENC_DIMS[0], ENC_DIMS[1])), res((1, ENC_DIMS[1])),
        res((ENC_DIMS[1], ENC_DIMS[2])), res((1, ENC_DIMS[2])),
        res((ENC_DIMS[2], ENC_DIMS[3])), res((1, ENC_DIMS[3])),
        res((ENC_DIMS[3], ENC_DIMS[2])), res((1, ENC_DIMS[2])),
        res((ENC_DIMS[2], ENC_DIMS[1])), res((1, ENC_DIMS[1])),
        res((ENC_DIMS[1], ENC_DIMS[0])), res((1, ENC_DIMS[0])),
        res((ENC_DIMS[3], N_ID_PAD)), res((1, N_ID_PAD)),
    ]
    out_specs = (
        res((Bn, ENC_DIMS[3])),     # encode_feature
        res((Bn, N_ID_PAD)),        # preID (padded)
        res((Bn, D_FUSION)),        # fusion_feature
        res((Bn, D_FUSION)),        # decode_feature
    )

    enc, pre_pad, fusion_feature, decode_feature = pl.pallas_call(
        _fused_kernel,
        out_shape=(
            jax.ShapeDtypeStruct((Bn, ENC_DIMS[3]), jnp.float32),
            jax.ShapeDtypeStruct((Bn, N_ID_PAD), jnp.float32),
            jax.ShapeDtypeStruct((Bn, D_FUSION), jnp.float32),
            jax.ShapeDtypeStruct((Bn, D_FUSION), jnp.float32),
        ),
        grid_spec=pltpu.PrefetchScalarGridSpec(
            num_scalar_prefetch=0,
            grid=(N_POOL,),
            in_specs=in_specs,
            out_specs=out_specs,
            scratch_shapes=[
                pltpu.VMEM((Bn, D_BRANCH), jnp.float32),   # appearance running max
                pltpu.VMEM((Bn, D_BRANCH), jnp.float32),   # gait running max
            ]),
        compiler_params=pltpu.CompilerParams(
            dimension_semantics=("arbitrary",),
            vmem_limit_bytes=24 * 1024 * 1024),
    )(x_rgb, x_gait,
      kp["bb1_w"], kp["bb1_b"], kp["bb2_w"], kp["bb2_b"], aw, gw,
      kp["enc_w0"], kp["enc_b0"], kp["enc_w1"], kp["enc_b1"],
      kp["enc_w2"], kp["enc_b2"],
      kp["dec_w0"], kp["dec_b0"], kp["dec_w1"], kp["dec_b1"],
      kp["dec_w2"], kp["dec_b2"],
      kp["pre_w"], kp["pre_b"])

    preID = pre_pad[:, :N_ID]
    return enc, preID, fusion_feature, decode_feature


# ------------------------------- reference --------------------------------
def forward_ref(params, RGB, Gait, app_w, gait_w):
    Bn = Gait.shape[0]
    aw = app_w.reshape(1, Bn).T.astype(jnp.float32)
    gw = gait_w.reshape(1, Bn).T.astype(jnp.float32)

    def lin(x, w, b, act):
        y = x @ w + b
        if act == "relu":
            y = jnp.maximum(y, 0.0)
        elif act == "sigmoid":
            y = 1.0 / (1.0 + jnp.exp(-y))
        return y

    def bb(x, w, b):
        return lin(x.reshape(Bn, -1), w, b, "relu").reshape(
            Bn, FEAT_C, FEAT_H, FEAT_W)

    def maxpool2(x):
        Bn_, C, H, W = x.shape
        return jnp.max(x.reshape(Bn_, C, H // 2, 2, W // 2, 2), axis=(3, 5))

    feats = [bb(RGB[i], params["bb1_w"], params["bb1_b"]) for i in range(4)]
    app = (feats[0] + feats[1] + feats[2] + feats[3]) / 4.0
    app = maxpool2(app).reshape(Bn, -1)
    gai = maxpool2(bb(Gait, params["bb2_w"], params["bb2_b"])).reshape(Bn, -1)
    fusion = jnp.concatenate([app * aw, gai * gw], axis=1)
    h = lin(fusion, params["enc_w0"], params["enc_b0"], "relu")
    h = lin(h, params["enc_w1"], params["enc_b1"], "relu")
    enc = lin(h, params["enc_w2"], params["enc_b2"], "relu")
    d = lin(enc, params["dec_w0"], params["dec_b0"], "relu")
    d = lin(d, params["dec_w1"], params["dec_b1"], "relu")
    dec = lin(d, params["dec_w2"], params["dec_b2"], "sigmoid")
    pre = lin(enc, params["pre_w"], params["pre_b"], "none")
    return enc, pre, fusion, dec


# --------------------------------- main ------------------------------------
if __name__ == "__main__":
    key = random.PRNGKey(0)
    kp_key, k_rgb, k_gait, k_aw, k_gw = random.split(key, 5)

    params = init_params(kp_key)
    kernel_params = prepare_kernel_params(params)   # one-time layout/dtype prep

    RGB = random.normal(k_rgb, (N_FRAMES, B, IMG_C, IMG_H, IMG_W), jnp.float32)
    Gait = random.normal(k_gait, (B, IMG_C, IMG_H, IMG_W), jnp.float32)
    app_w = random.uniform(k_aw, (B,), jnp.float32)
    gait_w = random.uniform(k_gw, (B,), jnp.float32)

    fwd = jax.jit(forward)
    enc, pre, fusion, dec = fwd(kernel_params, RGB, Gait, app_w, gait_w)
    jax.block_until_ready((enc, pre, fusion, dec))

    assert enc.shape == (B, ENC_DIMS[3])
    assert pre.shape == (B, N_ID)
    assert fusion.shape == (B, D_FUSION)
    assert dec.shape == (B, D_FUSION)

    # numerical check against the f32 plain-JAX reference; tolerance loosened
    # because the Pallas path uses bf16 matmul operands (f32 accumulate).
    ref = forward_ref(params, RGB, Gait, app_w, gait_w)
    for got, want in zip((enc, pre, fusion, dec), ref):
        assert jnp.allclose(got, want, rtol=5e-2, atol=5e-2), "mismatch vs ref"

    print("KERNEL_OK")
</pallas_src>

<mosaic_0001>
module attributes {stable_mosaic.version = 11 : i64} {
  func.func @_fused_kernel(%arg0: i32, %arg1: memref<8x768xbf16, #tpu.memory_space<vmem>>, %arg2: memref<2x768xbf16, #tpu.memory_space<vmem>>, %arg3: memref<768x512xbf16, #tpu.memory_space<vmem>>, %arg4: memref<1x512xf32, #tpu.memory_space<vmem>>, %arg5: memref<768x512xbf16, #tpu.memory_space<vmem>>, %arg6: memref<1x512xf32, #tpu.memory_space<vmem>>, %arg7: memref<2x1xf32, #tpu.memory_space<vmem>>, %arg8: memref<2x1xf32, #tpu.memory_space<vmem>>, %arg9: memref<1024x512xbf16, #tpu.memory_space<vmem>>, %arg10: memref<1x512xf32, #tpu.memory_space<vmem>>, %arg11: memref<512x256xbf16, #tpu.memory_space<vmem>>, %arg12: memref<1x256xf32, #tpu.memory_space<vmem>>, %arg13: memref<256x128xbf16, #tpu.memory_space<vmem>>, %arg14: memref<1x128xf32, #tpu.memory_space<vmem>>, %arg15: memref<128x256xbf16, #tpu.memory_space<vmem>>, %arg16: memref<1x256xf32, #tpu.memory_space<vmem>>, %arg17: memref<256x512xbf16, #tpu.memory_space<vmem>>, %arg18: memref<1x512xf32, #tpu.memory_space<vmem>>, %arg19: memref<512x1024xbf16, #tpu.memory_space<vmem>>, %arg20: memref<1x1024xf32, #tpu.memory_space<vmem>>, %arg21: memref<128x128xbf16, #tpu.memory_space<vmem>>, %arg22: memref<1x128xf32, #tpu.memory_space<vmem>>, %arg23: memref<2x128xf32, #tpu.memory_space<vmem>>, %arg24: memref<2x128xf32, #tpu.memory_space<vmem>>, %arg25: memref<2x1024xf32, #tpu.memory_space<vmem>>, %arg26: memref<2x1024xf32, #tpu.memory_space<vmem>>, %arg27: memref<2x512xf32, #tpu.memory_space<vmem>>, %arg28: memref<2x512xf32, #tpu.memory_space<vmem>>) attributes {dimension_semantics = [#tpu.dimension_semantics<arbitrary>], iteration_bounds = array<i64: 4>, scalar_prefetch = 0 : i64, scratch_operands = 2 : i64, tpu.core_type = #tpu.core_type<tc>, window_params = [{pipeline_mode = #tpu.pipeline_mode<synchronous>, transform_indices = @transform_0, window_bounds = array<i64: 8, 768>}, {pipeline_mode = #tpu.pipeline_mode<synchronous>, transform_indices = @transform_1, window_bounds = array<i64: 2, 768>}, {transform_indices = @transform_2, window_bounds = array<i64: 768, 512>}, {transform_indices = @transform_3, window_bounds = array<i64: 1, 512>}, {transform_indices = @transform_4, window_bounds = array<i64: 768, 512>}, {transform_indices = @transform_5, window_bounds = array<i64: 1, 512>}, {pipeline_mode = #tpu.pipeline_mode<synchronous>, transform_indices = @transform_6, window_bounds = array<i64: 2, 1>}, {pipeline_mode = #tpu.pipeline_mode<synchronous>, transform_indices = @transform_7, window_bounds = array<i64: 2, 1>}, {pipeline_mode = #tpu.pipeline_mode<synchronous>, transform_indices = @transform_8, window_bounds = array<i64: 1024, 512>}, {pipeline_mode = #tpu.pipeline_mode<synchronous>, transform_indices = @transform_9, window_bounds = array<i64: 1, 512>}, {pipeline_mode = #tpu.pipeline_mode<synchronous>, transform_indices = @transform_10, window_bounds = array<i64: 512, 256>}, {pipeline_mode = #tpu.pipeline_mode<synchronous>, transform_indices = @transform_11, window_bounds = array<i64: 1, 256>}, {pipeline_mode = #tpu.pipeline_mode<synchronous>, transform_indices = @transform_12, window_bounds = array<i64: 256, 128>}, {pipeline_mode = #tpu.pipeline_mode<synchronous>, transform_indices = @transform_13, window_bounds = array<i64: 1, 128>}, {pipeline_mode = #tpu.pipeline_mode<synchronous>, transform_indices = @transform_14, window_bounds = array<i64: 128, 256>}, {pipeline_mode = #tpu.pipeline_mode<synchronous>, transform_indices = @transform_15, window_bounds = array<i64: 1, 256>}, {pipeline_mode = #tpu.pipeline_mode<synchronous>, transform_indices = @transform_16, window_bounds = array<i64: 256, 512>}, {pipeline_mode = #tpu.pipeline_mode<synchronous>, transform_indices = @transform_17, window_bounds = array<i64: 1, 512>}, {pipeline_mode = #tpu.pipeline_mode<synchronous>, transform_indices = @transform_18, window_bounds = array<i64: 512, 1024>}, {pipeline_mode = #tpu.pipeline_mode<synchronous>, transform_indices = @transform_19, window_bounds = array<i64: 1, 1024>}, {pipeline_mode = #tpu.pipeline_mode<synchronous>, transform_indices = @transform_20, window_bounds = array<i64: 128, 128>}, {pipeline_mode = #tpu.pipeline_mode<synchronous>, transform_indices = @transform_21, window_bounds = array<i64: 1, 128>}, {pipeline_mode = #tpu.pipeline_mode<synchronous>, transform_indices = @transform_22, window_bounds = array<i64: 2, 128>}, {pipeline_mode = #tpu.pipeline_mode<synchronous>, transform_indices = @transform_23, window_bounds = array<i64: 2, 128>}, {pipeline_mode = #tpu.pipeline_mode<synchronous>, transform_indices = @transform_24, window_bounds = array<i64: 2, 1024>}, {pipeline_mode = #tpu.pipeline_mode<synchronous>, transform_indices = @transform_25, window_bounds = array<i64: 2, 1024>}]} {
    %c0 = arith.constant 0 : index
    %c0_0 = arith.constant 0 : index
    %0 = vector.load %arg1[%c0, %c0_0] : memref<8x768xbf16, #tpu.memory_space<vmem>>, vector<8x768xbf16>
    %c0_1 = arith.constant 0 : index
    %c0_2 = arith.constant 0 : index
    %1 = vector.load %arg3[%c0_1, %c0_2] : memref<768x512xbf16, #tpu.memory_space<vmem>>, vector<768x512xbf16>
    %cst = arith.constant dense<0.000000e+00> : vector<8x512xf32>
    %2 = tpu.matmul %0, %1, %cst {dimension_numbers = #tpu.dot_dimension_numbers<[1], [0], [0], [1], [0, 0, 1, 1], [], []>} : vector<8x768xbf16>, vector<768x512xbf16>, vector<8x512xf32> -> vector<8x512xf32>
    %c0_3 = arith.constant 0 : index
    %c0_4 = arith.constant 0 : index
    %3 = vector.load %arg4[%c0_3, %c0_4] : memref<1x512xf32, #tpu.memory_space<vmem>>, vector<1x512xf32>
    %4 = vector.broadcast %3 : vector<1x512xf32> to vector<8x512xf32>
    %5 = arith.addf %2, %4 : vector<8x512xf32>
    %cst_5 = arith.constant 0.000000e+00 : f32
    %6 = vector.broadcast %cst_5 : f32 to vector<8x512xf32>
    %7 = arith.maximumf %5, %6 : vector<8x512xf32>
    %8 = vector.extract_strided_slice %7 {offsets = [0, 0], sizes = [2, 512], strides = [1, 1]} : vector<8x512xf32> to vector<2x512xf32>
    %9 = vector.extract_strided_slice %7 {offsets = [2, 0], sizes = [2, 512], strides = [1, 1]} : vector<8x512xf32> to vector<2x512xf32>
    %10 = arith.addf %8, %9 : vector<2x512xf32>
    %11 = vector.extract_strided_slice %7 {offsets = [4, 0], sizes = [2, 512], strides = [1, 1]} : vector<8x512xf32> to vector<2x512xf32>
    %12 = arith.addf %10, %11 : vector<2x512xf32>
    %13 = vector.extract_strided_slice %7 {offsets = [6, 0], sizes = [2, 512], strides = [1, 1]} : vector<8x512xf32> to vector<2x512xf32>
    %14 = arith.addf %12, %13 : vector<2x512xf32>
    %cst_6 = arith.constant 2.500000e-01 : f32
    %15 = vector.broadcast %cst_6 : f32 to vector<2x512xf32>
    %16 = arith.mulf %14, %15 : vector<2x512xf32>
    %c0_7 = arith.constant 0 : index
    %c0_8 = arith.constant 0 : index
    %17 = vector.load %arg2[%c0_7, %c0_8] : memref<2x768xbf16, #tpu.memory_space<vmem>>, vector<2x768xbf16>
    %c0_9 = arith.constant 0 : index
    %c0_10 = arith.constant 0 : index
    %18 = vector.load %arg5[%c0_9, %c0_10] : memref<768x512xbf16, #tpu.memory_space<vmem>>, vector<768x512xbf16>
    %cst_11 = arith.constant dense<0.000000e+00> : vector<2x512xf32>
    %19 = tpu.matmul %17, %18, %cst_11 {dimension_numbers = #tpu.dot_dimension_numbers<[1], [0], [0], [1], [0, 0, 1, 1], [], []>} : vector<2x768xbf16>, vector<768x512xbf16>, vector<2x512xf32> -> vector<2x512xf32>
    %c0_12 = arith.constant 0 : index
    %c0_13 = arith.constant 0 : index
    %20 = vector.load %arg6[%c0_12, %c0_13] : memref<1x512xf32, #tpu.memory_space<vmem>>, vector<1x512xf32>
    %21 = vector.broadcast %20 : vector<1x512xf32> to vector<2x512xf32>
    %22 = arith.addf %19, %21 : vector<2x512xf32>
    %cst_14 = arith.constant 0.000000e+00 : f32
    %23 = vector.broadcast %cst_14 : f32 to vector<2x512xf32>
    %24 = arith.maximumf %22, %23 : vector<2x512xf32>
    %c0_i32 = arith.constant 0 : i32
    %25 = arith.cmpi eq, %arg0, %c0_i32 : i32
    %26 = arith.extui %25 : i1 to i32
    %c0_i32_15 = arith.constant 0 : i32
    %27 = arith.cmpi ne, %26, %c0_i32_15 : i32
    scf.if %27 {
      %c0_19 = arith.constant 0 : index
      %c0_20 = arith.constant 0 : index
      %34 = vector.load %arg27[%c0_19, %c0_20] : memref<2x512xf32, #tpu.memory_space<vmem>>, vector<2x512xf32>
      tpu.vector_store %arg27[%c0_19, %c0_20], %16 {strides = array<i32>} : memref<2x512xf32, #tpu.memory_space<vmem>>, vector<2x512xf32>,
      %c0_21 = arith.constant 0 : index
      %c0_22 = arith.constant 0 : index
      %35 = vector.load %arg28[%c0_21, %c0_22] : memref<2x512xf32, #tpu.memory_space<vmem>>, vector<2x512xf32>
      tpu.vector_store %arg28[%c0_21, %c0_22], %24 {strides = array<i32>} : memref<2x512xf32, #tpu.memory_space<vmem>>, vector<2x512xf32>,
    } else {
    }
    %c0_i32_16 = arith.constant 0 : i32
    %28 = arith.cmpi sgt, %arg0, %c0_i32_16 : i32
    %29 = arith.extui %28 : i1 to i32
    %c0_i32_17 = arith.constant 0 : i32
    %30 = arith.cmpi ne, %29, %c0_i32_17 : i32
    scf.if %30 {
      %c0_19 = arith.constant 0 : index
      %c0_20 = arith.constant 0 : index
      %34 = vector.load %arg27[%c0_19, %c0_20] : memref<2x512xf32, #tpu.memory_space<vmem>>, vector<2x512xf32>
      %35 = arith.maximumf %34, %16 : vector<2x512xf32>
      %c0_21 = arith.constant 0 : index
      %c0_22 = arith.constant 0 : index
      %36 = vector.load %arg27[%c0_21, %c0_22] : memref<2x512xf32, #tpu.memory_space<vmem>>, vector<2x512xf32>
      tpu.vector_store %arg27[%c0_21, %c0_22], %35 {strides = array<i32>} : memref<2x512xf32, #tpu.memory_space<vmem>>, vector<2x512xf32>,
      %c0_23 = arith.constant 0 : index
      %c0_24 = arith.constant 0 : index
      %37 = vector.load %arg28[%c0_23, %c0_24] : memref<2x512xf32, #tpu.memory_space<vmem>>, vector<2x512xf32>
      %38 = arith.maximumf %37, %24 : vector<2x512xf32>
      %c0_25 = arith.constant 0 : index
      %c0_26 = arith.constant 0 : index
      %39 = vector.load %arg28[%c0_25, %c0_26] : memref<2x512xf32, #tpu.memory_space<vmem>>, vector<2x512xf32>
      tpu.vector_store %arg28[%c0_25, %c0_26], %38 {strides = array<i32>} : memref<2x512xf32, #tpu.memory_space<vmem>>, vector<2x512xf32>,
    } else {
    }
    %c3_i32 = arith.constant 3 : i32
    %31 = arith.cmpi eq, %arg0, %c3_i32 : i32
    %32 = arith.extui %31 : i1 to i32
    %c0_i32_18 = arith.constant 0 : i32
    %33 = arith.cmpi ne, %32, %c0_i32_18 : i32
    scf.if %33 {
      %c0_19 = arith.constant 0 : index
      %c0_20 = arith.constant 0 : index
      %34 = vector.load %arg27[%c0_19, %c0_20] : memref<2x512xf32, #tpu.memory_space<vmem>>, vector<2x512xf32>
      %c0_21 = arith.constant 0 : index
      %c0_22 = arith.constant 0 : index
      %35 = vector.load %arg7[%c0_21, %c0_22] : memref<2x1xf32, #tpu.memory_space<vmem>>, vector<2x1xf32>
      %36 = vector.broadcast %35 : vector<2x1xf32> to vector<2x512xf32>
      %37 = arith.mulf %34, %36 : vector<2x512xf32>
      %c0_23 = arith.constant 0 : index
      %c0_24 = arith.constant 0 : index
      %38 = vector.load %arg25[%c0_23, %c0_24] : memref<2x1024xf32, #tpu.memory_space<vmem>>, vector<2x512xf32>
      tpu.vector_store %arg25[%c0_23, %c0_24], %37 {strides = array<i32>} : memref<2x1024xf32, #tpu.memory_space<vmem>>, vector<2x512xf32>,
      %c0_25 = arith.constant 0 : index
      %c0_26 = arith.constant 0 : index
      %39 = vector.load %arg28[%c0_25, %c0_26] : memref<2x512xf32, #tpu.memory_space<vmem>>, vector<2x512xf32>
      %c0_27 = arith.constant 0 : index
      %c0_28 = arith.constant 0 : index
      %40 = vector.load %arg8[%c0_27, %c0_28] : memref<2x1xf32, #tpu.memory_space<vmem>>, vector<2x1xf32>
      %41 = vector.broadcast %40 : vector<2x1xf32> to vector<2x512xf32>
      %42 = arith.mulf %39, %41 : vector<2x512xf32>
      %c0_29 = arith.constant 0 : index
      %c512 = arith.constant 512 : index
      %43 = vector.load %arg25[%c0_29, %c512] : memref<2x1024xf32, #tpu.memory_space<vmem>>, vector<2x512xf32>
      tpu.vector_store %arg25[%c0_29, %c512], %42 {strides = array<i32>} : memref<2x1024xf32, #tpu.memory_space<vmem>>, vector<2x512xf32>,
      %c0_30 = arith.constant 0 : index
      %c0_31 = arith.constant 0 : index
      %44 = vector.load %arg25[%c0_30, %c0_31] : memref<2x1024xf32, #tpu.memory_space<vmem>>, vector<2x1024xf32>
      %45 = arith.truncf %44 : vector<2x1024xf32> to vector<2x1024xbf16>
      %c0_32 = arith.constant 0 : index
      %c0_33 = arith.constant 0 : index
      %46 = vector.load %arg9[%c0_32, %c0_33] : memref<1024x512xbf16, #tpu.memory_space<vmem>>, vector<1024x512xbf16>
      %cst_34 = arith.constant dense<0.000000e+00> : vector<2x512xf32>
      %47 = tpu.matmul %45, %46, %cst_34 {dimension_numbers = #tpu.dot_dimension_numbers<[1], [0], [0], [1], [0, 0, 1, 1], [], []>} : vector<2x1024xbf16>, vector<1024x512xbf16>, vector<2x512xf32> -> vector<2x512xf32>
      %c0_35 = arith.constant 0 : index
      %c0_36 = arith.constant 0 : index
      %48 = vector.load %arg10[%c0_35, %c0_36] : memref<1x512xf32, #tpu.memory_space<vmem>>, vector<1x512xf32>
      %49 = vector.broadcast %48 : vector<1x512xf32> to vector<2x512xf32>
      %50 = arith.addf %47, %49 : vector<2x512xf32>
      %cst_37 = arith.constant 0.000000e+00 : f32
      %51 = vector.broadcast %cst_37 : f32 to vector<2x512xf32>
      %52 = arith.maximumf %50, %51 : vector<2x512xf32>
      %53 = arith.truncf %52 : vector<2x512xf32> to vector<2x512xbf16>
      %c0_38 = arith.constant 0 : index
      %c0_39 = arith.constant 0 : index
      %54 = vector.load %arg11[%c0_38, %c0_39] : memref<512x256xbf16, #tpu.memory_space<vmem>>, vector<512x256xbf16>
      %cst_40 = arith.constant dense<0.000000e+00> : vector<2x256xf32>
      %55 = tpu.matmul %53, %54, %cst_40 {dimension_numbers = #tpu.dot_dimension_numbers<[1], [0], [0], [1], [0, 0, 1, 1], [], []>} : vector<2x512xbf16>, vector<512x256xbf16>, vector<2x256xf32> -> vector<2x256xf32>
      %c0_41 = arith.constant 0 : index
      %c0_42 = arith.constant 0 : index
      %56 = vector.load %arg12[%c0_41, %c0_42] : memref<1x256xf32, #tpu.memory_space<vmem>>, vector<1x256xf32>
      %57 = vector.broadcast %56 : vector<1x256xf32> to vector<2x256xf32>
      %58 = arith.addf %55, %57 : vector<2x256xf32>
      %cst_43 = arith.constant 0.000000e+00 : f32
      %59 = vector.broadcast %cst_43 : f32 to vector<2x256xf32>
      %60 = arith.maximumf %58, %59 : vector<2x256xf32>
      %61 = arith.truncf %60 : vector<2x256xf32> to vector<2x256xbf16>
      %c0_44 = arith.constant 0 : index
      %c0_45 = arith.constant 0 : index
      %62 = vector.load %arg13[%c0_44, %c0_45] : memref<256x128xbf16, #tpu.memory_space<vmem>>, vector<256x128xbf16>
      %cst_46 = arith.constant dense<0.000000e+00> : vector<2x128xf32>
      %63 = tpu.matmul %61, %62, %cst_46 {dimension_numbers = #tpu.dot_dimension_numbers<[1], [0], [0], [1], [0, 0, 1, 1], [], []>} : vector<2x256xbf16>, vector<256x128xbf16>, vector<2x128xf32> -> vector<2x128xf32>
      %c0_47 = arith.constant 0 : index
      %c0_48 = arith.constant 0 : index
      %64 = vector.load %arg14[%c0_47, %c0_48] : memref<1x128xf32, #tpu.memory_space<vmem>>, vector<1x128xf32>
      %65 = vector.broadcast %64 : vector<1x128xf32> to vector<2x128xf32>
      %66 = arith.addf %63, %65 : vector<2x128xf32>
      %cst_49 = arith.constant 0.000000e+00 : f32
      %67 = vector.broadcast %cst_49 : f32 to vector<2x128xf32>
      %68 = arith.maximumf %66, %67 : vector<2x128xf32>
      %c0_50 = arith.constant 0 : index
      %c0_51 = arith.constant 0 : index
      %69 = vector.load %arg23[%c0_50, %c0_51] : memref<2x128xf32, #tpu.memory_space<vmem>>, vector<2x128xf32>
      tpu.vector_store %arg23[%c0_50, %c0_51], %68 {strides = array<i32>} : memref<2x128xf32, #tpu.memory_space<vmem>>, vector<2x128xf32>,
      %70 = arith.truncf %68 : vector<2x128xf32> to vector<2x128xbf16>
      %c0_52 = arith.constant 0 : index
      %c0_53 = arith.constant 0 : index
      %71 = vector.load %arg15[%c0_52, %c0_53] : memref<128x256xbf16, #tpu.memory_space<vmem>>, vector<128x256xbf16>
      %cst_54 = arith.constant dense<0.000000e+00> : vector<2x256xf32>
      %72 = tpu.matmul %70, %71, %cst_54 {dimension_numbers = #tpu.dot_dimension_numbers<[1], [0], [0], [1], [0, 0, 1, 1], [], []>} : vector<2x128xbf16>, vector<128x256xbf16>, vector<2x256xf32> -> vector<2x256xf32>
      %c0_55 = arith.constant 0 : index
      %c0_56 = arith.constant 0 : index
      %73 = vector.load %arg16[%c0_55, %c0_56] : memref<1x256xf32, #tpu.memory_space<vmem>>, vector<1x256xf32>
      %74 = vector.broadcast %73 : vector<1x256xf32> to vector<2x256xf32>
      %75 = arith.addf %72, %74 : vector<2x256xf32>
      %cst_57 = arith.constant 0.000000e+00 : f32
      %76 = vector.broadcast %cst_57 : f32 to vector<2x256xf32>
      %77 = arith.maximumf %75, %76 : vector<2x256xf32>
      %78 = arith.truncf %77 : vector<2x256xf32> to vector<2x256xbf16>
      %c0_58 = arith.constant 0 : index
      %c0_59 = arith.constant 0 : index
      %79 = vector.load %arg17[%c0_58, %c0_59] : memref<256x512xbf16, #tpu.memory_space<vmem>>, vector<256x512xbf16>
      %cst_60 = arith.constant dense<0.000000e+00> : vector<2x512xf32>
      %80 = tpu.matmul %78, %79, %cst_60 {dimension_numbers = #tpu.dot_dimension_numbers<[1], [0], [0], [1], [0, 0, 1, 1], [], []>} : vector<2x256xbf16>, vector<256x512xbf16>, vector<2x512xf32> -> vector<2x512xf32>
      %c0_61 = arith.constant 0 : index
      %c0_62 = arith.constant 0 : index
      %81 = vector.load %arg18[%c0_61, %c0_62] : memref<1x512xf32, #tpu.memory_space<vmem>>, vector<1x512xf32>
      %82 = vector.broadcast %81 : vector<1x512xf32> to vector<2x512xf32>
      %83 = arith.addf %80, %82 : vector<2x512xf32>
      %cst_63 = arith.constant 0.000000e+00 : f32
      %84 = vector.broadcast %cst_63 : f32 to vector<2x512xf32>
      %85 = arith.maximumf %83, %84 : vector<2x512xf32>
      %86 = arith.truncf %85 : vector<2x512xf32> to vector<2x512xbf16>
      %c0_64 = arith.constant 0 : index
      %c0_65 = arith.constant 0 : index
      %87 = vector.load %arg19[%c0_64, %c0_65] : memref<512x1024xbf16, #tpu.memory_space<vmem>>, vector<512x1024xbf16>
      %cst_66 = arith.constant dense<0.000000e+00> : vector<2x1024xf32>
      %88 = tpu.matmul %86, %87, %cst_66 {dimension_numbers = #tpu.dot_dimension_numbers<[1], [0], [0], [1], [0, 0, 1, 1], [], []>} : vector<2x512xbf16>, vector<512x1024xbf16>, vector<2x1024xf32> -> vector<2x1024xf32>
      %c0_67 = arith.constant 0 : index
      %c0_68 = arith.constant 0 : index
      %89 = vector.load %arg20[%c0_67, %c0_68] : memref<1x1024xf32, #tpu.memory_space<vmem>>, vector<1x1024xf32>
      %90 = vector.broadcast %89 : vector<1x1024xf32> to vector<2x1024xf32>
      %91 = arith.addf %88, %90 : vector<2x1024xf32>
      %cst_69 = arith.constant 0.000000e+00 : f32
      %92 = vector.broadcast %cst_69 : f32 to vector<2x1024xf32>
      %93 = arith.subf %92, %91 : vector<2x1024xf32>
      %94 = math.exp %93 : vector<2x1024xf32>
      %cst_70 = arith.constant 1.000000e+00 : f32
      %95 = vector.broadcast %cst_70 : f32 to vector<2x1024xf32>
      %96 = arith.addf %95, %94 : vector<2x1024xf32>
      %97 = tpu.reciprocal %96 {approx = true} : vector<2x1024xf32> -> vector<2x1024xf32>
      %c0_71 = arith.constant 0 : index
      %c0_72 = arith.constant 0 : index
      %98 = vector.load %arg26[%c0_71, %c0_72] : memref<2x1024xf32, #tpu.memory_space<vmem>>, vector<2x1024xf32>
      tpu.vector_store %arg26[%c0_71, %c0_72], %97 {strides = array<i32>} : memref<2x1024xf32, #tpu.memory_space<vmem>>, vector<2x1024xf32>,
      %99 = arith.truncf %68 : vector<2x128xf32> to vector<2x128xbf16>
      %c0_73 = arith.constant 0 : index
      %c0_74 = arith.constant 0 : index
      %100 = vector.load %arg21[%c0_73, %c0_74] : memref<128x128xbf16, #tpu.memory_space<vmem>>, vector<128x128xbf16>
      %cst_75 = arith.constant dense<0.000000e+00> : vector<2x128xf32>
      %101 = tpu.matmul %99, %100, %cst_75 {dimension_numbers = #tpu.dot_dimension_numbers<[1], [0], [0], [1], [0, 0, 1, 1], [], []>} : vector<2x128xbf16>, vector<128x128xbf16>, vector<2x128xf32> -> vector<2x128xf32>
      %c0_76 = arith.constant 0 : index
      %c0_77 = arith.constant 0 : index
      %102 = vector.load %arg22[%c0_76, %c0_77] : memref<1x128xf32, #tpu.memory_space<vmem>>, vector<1x128xf32>
      %103 = vector.broadcast %102 : vector<1x128xf32> to vector<2x128xf32>
      %104 = arith.addf %101, %103 : vector<2x128xf32>
      %c0_78 = arith.constant 0 : index
      %c0_79 = arith.constant 0 : index
      %105 = vector.load %arg24[%c0_78, %c0_79] : memref<2x128xf32, #tpu.memory_space<vmem>>, vector<2x128xf32>
      tpu.vector_store %arg24[%c0_78, %c0_79], %104 {strides = array<i32>} : memref<2x128xf32, #tpu.memory_space<vmem>>, vector<2x128xf32>,
    } else {
    }
    return
  }
  func.func @transform_0(%arg0: i32) -> (i32, i32) {
    %c0_i32 = arith.constant 0 : i32
    %c0_i32_0 = arith.constant 0 : i32
    %c0_i32_1 = arith.constant 0 : i32
    return %c0_i32, %c0_i32_0 : i32, i32
  }
  func.func @transform_1(%arg0: i32) -> (i32, i32) {
    %c0_i32 = arith.constant 0 : i32
    %c0_i32_0 = arith.constant 0 : i32
    %c0_i32_1 = arith.constant 0 : i32
    return %c0_i32, %c0_i32_0 : i32, i32
  }
  func.func @transform_2(%arg0: i32) -> (i32, i32) {
    %c0_i32 = arith.constant 0 : i32
    %c0_i32_0 = arith.constant 0 : i32
    return %c0_i32, %arg0 : i32, i32
  }
  func.func @transform_3(%arg0: i32) -> (i32, i32) {
    %c0_i32 = arith.constant 0 : i32
    %c0_i32_0 = arith.constant 0 : i32
    return %c0_i32, %arg0 : i32, i32
  }
  func.func @transform_4(%arg0: i32) -> (i32, i32) {
    %c0_i32 = arith.constant 0 : i32
    %c0_i32_0 = arith.constant 0 : i32
    return %c0_i32, %arg0 : i32, i32
  }
  func.func @transform_5(%arg0: i32) -> (i32, i32) {
    %c0_i32 = arith.constant 0 : i32
    %c0_i32_0 = arith.constant 0 : i32
    return %c0_i32, %arg0 : i32, i32
  }
  func.func @transform_6(%arg0: i32) -> (i32, i32) {
    %c0_i32 = arith.constant 0 : i32
    %c0_i32_0 = arith.constant 0 : i32
    %c0_i32_1 = arith.constant 0 : i32
    return %c0_i32, %c0_i32_0 : i32, i32
  }
  func.func @transform_7(%arg0: i32) -> (i32, i32) {
    %c0_i32 = arith.constant 0 : i32
    %c0_i32_0 = arith.constant 0 : i32
    %c0_i32_1 = arith.constant 0 : i32
    return %c0_i32, %c0_i32_0 : i32, i32
  }
  func.func @transform_8(%arg0: i32) -> (i32, i32) {
    %c0_i32 = arith.constant 0 : i32
    %c0_i32_0 = arith.constant 0 : i32
    %c0_i32_1 = arith.constant 0 : i32
    return %c0_i32, %c0_i32_0 : i32, i32
  }
  func.func @transform_9(%arg0: i32) -> (i32, i32) {
    %c0_i32 = arith.constant 0 : i32
    %c0_i32_0 = arith.constant 0 : i32
    %c0_i32_1 = arith.constant 0 : i32
    return %c0_i32, %c0_i32_0 : i32, i32
  }
  func.func @transform_10(%arg0: i32) -> (i32, i32) {
    %c0_i32 = arith.constant 0 : i32
    %c0_i32_0 = arith.constant 0 : i32
    %c0_i32_1 = arith.constant 0 : i32
    return %c0_i32, %c0_i32_0 : i32, i32
  }
  func.func @transform_11(%arg0: i32) -> (i32, i32) {
    %c0_i32 = arith.constant 0 : i32
    %c0_i32_0 = arith.constant 0 : i32
    %c0_i32_1 = arith.constant 0 : i32
    return %c0_i32, %c0_i32_0 : i32, i32
  }
  func.func @transform_12(%arg0: i32) -> (i32, i32) {
    %c0_i32 = arith.constant 0 : i32
    %c0_i32_0 = arith.constant 0 : i32
    %c0_i32_1 = arith.constant 0 : i32
    return %c0_i32, %c0_i32_0 : i32, i32
  }
  func.func @transform_13(%arg0: i32) -> (i32, i32) {
    %c0_i32 = arith.constant 0 : i32
    %c0_i32_0 = arith.constant 0 : i32
    %c0_i32_1 = arith.constant 0 : i32
    return %c0_i32, %c0_i32_0 : i32, i32
  }
  func.func @transform_14(%arg0: i32) -> (i32, i32) {
    %c0_i32 = arith.constant 0 : i32
    %c0_i32_0 = arith.constant 0 : i32
    %c0_i32_1 = arith.constant 0 : i32
    return %c0_i32, %c0_i32_0 : i32, i32
  }
  func.func @transform_15(%arg0: i32) -> (i32, i32) {
    %c0_i32 = arith.constant 0 : i32
    %c0_i32_0 = arith.constant 0 : i32
    %c0_i32_1 = arith.constant 0 : i32
    return %c0_i32, %c0_i32_0 : i32, i32
  }
  func.func @transform_16(%arg0: i32) -> (i32, i32) {
    %c0_i32 = arith.constant 0 : i32
    %c0_i32_0 = arith.constant 0 : i32
    %c0_i32_1 = arith.constant 0 : i32
    return %c0_i32, %c0_i32_0 : i32, i32
  }
  func.func @transform_17(%arg0: i32) -> (i32, i32) {
    %c0_i32 = arith.constant 0 : i32
    %c0_i32_0 = arith.constant 0 : i32
    %c0_i32_1 = arith.constant 0 : i32
    return %c0_i32, %c0_i32_0 : i32, i32
  }
  func.func @transform_18(%arg0: i32) -> (i32, i32) {
    %c0_i32 = arith.constant 0 : i32
    %c0_i32_0 = arith.constant 0 : i32
    %c0_i32_1 = arith.constant 0 : i32
    return %c0_i32, %c0_i32_0 : i32, i32
  }
  func.func @transform_19(%arg0: i32) -> (i32, i32) {
    %c0_i32 = arith.constant 0 : i32
    %c0_i32_0 = arith.constant 0 : i32
    %c0_i32_1 = arith.constant 0 : i32
    return %c0_i32, %c0_i32_0 : i32, i32
  }
  func.func @transform_20(%arg0: i32) -> (i32, i32) {
    %c0_i32 = arith.constant 0 : i32
    %c0_i32_0 = arith.constant 0 : i32
    %c0_i32_1 = arith.constant 0 : i32
    return %c0_i32, %c0_i32_0 : i32, i32
  }
  func.func @transform_21(%arg0: i32) -> (i32, i32) {
    %c0_i32 = arith.constant 0 : i32
    %c0_i32_0 = arith.constant 0 : i32
    %c0_i32_1 = arith.constant 0 : i32
    return %c0_i32, %c0_i32_0 : i32, i32
  }
  func.func @transform_22(%arg0: i32) -> (i32, i32) {
    %c0_i32 = arith.constant 0 : i32
    %c0_i32_0 = arith.constant 0 : i32
    %c0_i32_1 = arith.constant 0 : i32
    return %c0_i32, %c0_i32_0 : i32, i32
  }
  func.func @transform_23(%arg0: i32) -> (i32, i32) {
    %c0_i32 = arith.constant 0 : i32
    %c0_i32_0 = arith.constant 0 : i32
    %c0_i32_1 = arith.constant 0 : i32
    return %c0_i32, %c0_i32_0 : i32, i32
  }
  func.func @transform_24(%arg0: i32) -> (i32, i32) {
    %c0_i32 = arith.constant 0 : i32
    %c0_i32_0 = arith.constant 0 : i32
    %c0_i32_1 = arith.constant 0 : i32
    return %c0_i32, %c0_i32_0 : i32, i32
  }
  func.func @transform_25(%arg0: i32) -> (i32, i32) {
    %c0_i32 = arith.constant 0 : i32
    %c0_i32_0 = arith.constant 0 : i32
    %c0_i32_1 = arith.constant 0 : i32
    return %c0_i32, %c0_i32_0 : i32, i32
  }
}

</mosaic_0001>

<llo_original>
// kernel: forward.1
$region0: #{forward.1}
  #allocation0 [shape = 'u32[]', space=smem, size = 0x4, offset = 0x4, fixed_abs, tag = 'smem constant byte address 0x4 - core index']
  #allocation1 [shape = 'u32[72,128]{1,0:T(1,128)}', space=vmem, size = 0x9000, scoped, tag = 'internal scratch']
  #allocation2 [shape = 'f32[2,512]{1,0:T(2,128)}', space=vmem, size = 0x1000, scoped, tag = 'scratch operand']
  #allocation3 [shape = 'f32[2,512]{1,0:T(2,128)}', space=vmem, size = 0x1000, scoped, tag = 'scratch operand']
  %s0 = inlined_call_operand.vmem [shape: bf16[8,768], index: 0, kind: input, shape index: {}]
  %s1 = inlined_call_operand.vmem [shape: bf16[2,768], index: 1, kind: input, shape index: {}]
  %s2 = inlined_call_operand.hbm [shape: bf16[768,2048], index: 2, kind: input, shape index: {}]
  %s3 = inlined_call_operand.hbm [shape: f32[1,2048], index: 3, kind: input, shape index: {}]
  %s4 = inlined_call_operand.hbm [shape: bf16[768,2048], index: 4, kind: input, shape index: {}]
  %s5 = inlined_call_operand.hbm [shape: f32[1,2048], index: 5, kind: input, shape index: {}]
  %s6 = inlined_call_operand.vmem [shape: f32[2,1], index: 6, kind: input, shape index: {}]
  %s7 = inlined_call_operand.vmem [shape: f32[2,1], index: 7, kind: input, shape index: {}]
  %s8 = inlined_call_operand.hbm [shape: bf16[1024,512], index: 8, kind: input, shape index: {}]
  %s9 = inlined_call_operand.hbm [shape: f32[1,512], index: 9, kind: input, shape index: {}]
  %s10 = inlined_call_operand.hbm [shape: bf16[512,256], index: 10, kind: input, shape index: {}]
  %s11 = inlined_call_operand.hbm [shape: f32[1,256], index: 11, kind: input, shape index: {}]
  %s12 = inlined_call_operand.hbm [shape: bf16[256,128], index: 12, kind: input, shape index: {}]
  %s13 = inlined_call_operand.hbm [shape: f32[1,128], index: 13, kind: input, shape index: {}]
  %s14 = inlined_call_operand.hbm [shape: bf16[128,256], index: 14, kind: input, shape index: {}]
  %s15 = inlined_call_operand.hbm [shape: f32[1,256], index: 15, kind: input, shape index: {}]
  %s16 = inlined_call_operand.hbm [shape: bf16[256,512], index: 16, kind: input, shape index: {}]
  %s17 = inlined_call_operand.hbm [shape: f32[1,512], index: 17, kind: input, shape index: {}]
  %s18 = inlined_call_operand.hbm [shape: bf16[512,1024], index: 18, kind: input, shape index: {}]
  %s19 = inlined_call_operand.hbm [shape: f32[1,1024], index: 19, kind: input, shape index: {}]
  %s20 = inlined_call_operand.hbm [shape: bf16[128,128], index: 20, kind: input, shape index: {}]
  %s21 = inlined_call_operand.hbm [shape: f32[1,128], index: 21, kind: input, shape index: {}]
  %s22 = inlined_call_operand.hbm [shape: f32[2,128], index: 22, kind: output, shape index: {0}]
  %s23 = inlined_call_operand.hbm [shape: f32[2,128], index: 23, kind: output, shape index: {1}]
  %s24 = inlined_call_operand.hbm [shape: f32[2,1024], index: 24, kind: output, shape index: {2}]
  %s25 = inlined_call_operand.hbm [shape: f32[2,1024], index: 25, kind: output, shape index: {3}]
  %26 = xla_tuple %s22, %s23, %s24, %s25
  %s27 = sld [smem:[#allocation0]]
  $region229: #{forward.1} parent=0
    _
  %s29 = ssub.s32 1, %s27
  %s30 = scalar_select 0, %s29, %s27
  $region1: #{forward.1} parent=0
    #allocation4 [shape = 'u8[1572864]{0}', space=vmem, size = 0x180000, scoped, tag = 'input window, operand 2']
    #allocation5 [shape = 's32[2]{0}', space=sflag, size = 0x8, scoped, tag = 'scoped memory for forward.1']
    #allocation6 [shape = 's32[2]{0}', space=sflag, size = 0x8, scoped, tag = 'scoped memory for forward.1']
    #allocation7 [shape = 'u8[4096]{0}', space=vmem, size = 0x1000, scoped, tag = 'input window, operand 3']
    #allocation8 [shape = 's32[2]{0}', space=sflag, size = 0x8, scoped, tag = 'scoped memory for forward.1']
    #allocation9 [shape = 'u8[1572864]{0}', space=vmem, size = 0x180000, scoped, tag = 'input window, operand 4']
    #allocation10 [shape = 'u8[4096]{0}', space=vmem, size = 0x1000, scoped, tag = 'input window, operand 5']
    #allocation11 [shape = 's32[2]{0}', space=sflag, size = 0x8, scoped, tag = 'scoped memory for forward.1']
    #allocation12 [shape = 'u8[1048576]{0}', space=vmem, size = 0x100000, scoped, tag = 'input window, operand 8, single buffered']
    #allocation13 [shape = 'u8[2048]{0}', space=vmem, size = 0x800, scoped, tag = 'input window, operand 9, single buffered']
    #allocation14 [shape = 's32[1]{0}', space=sflag, size = 0x4, scoped, tag = 'scoped memory for forward.1']
    #allocation15 [shape = 'u8[262144]{0}', space=vmem, size = 0x40000, scoped, tag = 'input window, operand 10, single buffered']
    #allocation16 [shape = 'u8[1024]{0}', space=vmem, size = 0x400, scoped, tag = 'input window, operand 11, single buffered']
    #allocation17 [shape = 's32[1]{0}', space=sflag, size = 0x4, scoped, tag = 'scoped memory for forward.1']
    #allocation18 [shape = 'u8[65536]{0}', space=vmem, size = 0x10000, scoped, tag = 'input window, operand 12, single buffered']
    #allocation19 [shape = 'u8[512]{0}', space=vmem, size = 0x400, scoped, tag = 'input window, operand 13, single buffered']
    #allocation20 [shape = 's32[1]{0}', space=sflag, size = 0x4, scoped, tag = 'scoped memory for forward.1']
    #allocation21 [shape = 'u8[65536]{0}', space=vmem, size = 0x10000, scoped, tag = 'input window, operand 14, single buffered']
    #allocation22 [shape = 'u8[1024]{0}', space=vmem, size = 0x400, scoped, tag = 'input window, operand 15, single buffered']
    #allocation23 [shape = 's32[1]{0}', space=sflag, size = 0x4, scoped, tag = 'scoped memory for forward.1']
    #allocation24 [shape = 'u8[262144]{0}', space=vmem, size = 0x40000, scoped, tag = 'input window, operand 16, single buffered']
    #allocation25 [shape = 'u8[2048]{0}', space=vmem, size = 0x800, scoped, tag = 'input window, operand 17, single buffered']
    #allocation26 [shape = 's32[1]{0}', space=sflag, size = 0x4, scoped, tag = 'scoped memory for forward.1']
    #allocation27 [shape = 'u8[1048576]{0}', space=vmem, size = 0x100000, scoped, tag = 'input window, operand 18, single buffered']
    #allocation28 [shape = 'u8[4096]{0}', space=vmem, size = 0x1000, scoped, tag = 'input window, operand 19, single buffered']
    #allocation29 [shape = 's32[1]{0}', space=sflag, size = 0x4, scoped, tag = 'scoped memory for forward.1']
    #allocation30 [shape = 'u8[32768]{0}', space=vmem, size = 0x8000, scoped, tag = 'input window, operand 20, single buffered']
    #allocation31 [shape = 'u8[512]{0}', space=vmem, size = 0x400, scoped, tag = 'input window, operand 21, single buffered']
    #allocation32 [shape = 's32[1]{0}', space=sflag, size = 0x4, scoped, tag = 'scoped memory for forward.1']
    #allocation33 [shape = 'u8[1024]{0}', space=vmem, size = 0x400, scoped, tag = 'output window, operand 0, single buffered']
    #allocation34 [shape = 'u8[1024]{0}', space=vmem, size = 0x400, scoped, tag = 'output window, operand 1, single buffered']
    #allocation35 [shape = 's32[1]{0}', space=sflag, size = 0x4, scoped, tag = 'scoped memory for forward.1']
    #allocation36 [shape = 'u8[8192]{0}', space=vmem, size = 0x2000, scoped, tag = 'output window, operand 2, single buffered']
    #allocation37 [shape = 'u8[8192]{0}', space=vmem, size = 0x2000, scoped, tag = 'output window, operand 3, single buffered']
    #allocation38 [shape = 's32[1]{0}', space=sflag, size = 0x4, scoped, tag = 'scoped memory for forward.1']
    %31 = vsyncpa [#allocation5], 0
    %s32 = scalar_lea.sflag [#allocation5], 1
    %33 = vsyncpa %s32, 0
    %34 = vsyncpa [#allocation8], 0
    %s35 = scalar_lea.sflag [#allocation8], 1
    %36 = vsyncpa %s35, 0
    %37 = vsyncpa [#allocation11], 0
    %s38 = scalar_lea.sflag [#allocation11], 1
    %39 = vsyncpa %s38, 0
    %40 = vsyncpa [#allocation14], 0
    %41 = vsyncpa [#allocation17], 0
    %42 = vsyncpa [#allocation20], 0
    %43 = vsyncpa [#allocation23], 0
    %44 = vsyncpa [#allocation26], 0
    %45 = vsyncpa [#allocation29], 0
    %46 = vsyncpa [#allocation32], 0
    %47 = vsyncpa [#allocation6], 0
    %48 = vsyncpa [#allocation35], 0
    %49 = vsyncpa [#allocation38], 0
    loop: start=0, step=1, limit=6
    $region2: #{forward.1} parent=1 // loop_pre_header
      _
    $region3: #{forward.1} parent=1 // loop_header
      %s51 = sphi 0, %s55
      %p52 = scmp.ge.s32.totalorder %s51, 6
      %s59 = sphi 0, %s59
      %s61 = sphi 0, %s59
      %s62 = sphi 0, %s61
      %s76 = sphi 0, %s62
      %s80 = sphi 0, %s80
      %s82 = sphi 0, %s80
      %s83 = sphi 0, %s82
      %s97 = sphi 0, %s83
      %s103 = sphi 0, %s105
      %s106 = sphi 0, %s103
      %s107 = sphi 0, %s106
      %s123 = sphi 0, %s107
      %s129 = sphi 0, %s131
      %s132 = sphi 0, %s129
      %s133 = sphi 0, %s132
      %s149 = sphi 0, %s133
      %s155 = sphi 0, %s157
      %s158 = sphi 0, %s155
      %s159 = sphi 0, %s158
      %s175 = sphi 0, %s159
      %s181 = sphi 0, %s183
      %s184 = sphi 0, %s181
      %s185 = sphi 0, %s184
      %s201 = sphi 0, %s185
      %s205 = sphi 0, %s205
      %s207 = sphi 0, %s205
      %s208 = sphi 0, %s207
      %s222 = sphi 0, %s208
      %s226 = sphi 0, %s226
      %s228 = sphi 0, %s226
      %s229 = sphi 0, %s228
      %s243 = sphi 0, %s229
      %s247 = sphi 0, %s247
      %s249 = sphi 0, %s247
      %s250 = sphi 0, %s249
      %s264 = sphi 0, %s250
      %s268 = sphi 0, %s268
      %s270 = sphi 0, %s268
      %s271 = sphi 0, %s270
      %s285 = sphi 0, %s271
      %s289 = sphi 0, %s289
      %s291 = sphi 0, %s289
      %s292 = sphi 0, %s291
      %s306 = sphi 0, %s292
      %s310 = sphi 0, %s310
      %s312 = sphi 0, %s310
      %s313 = sphi 0, %s312
      %s327 = sphi 0, %s313
      %s331 = sphi 0, %s331
      %s333 = sphi 0, %s331
      %s334 = sphi 0, %s333
      %s348 = sphi 0, %s334
      %s352 = sphi 0, %s352
      %s354 = sphi 0, %s352
      %s355 = sphi 0, %s354
      %s369 = sphi 0, %s355
      %s373 = sphi 0, %s373
      %s375 = sphi 0, %s373
      %s376 = sphi 0, %s375
      %s390 = sphi 0, %s376
      %s394 = sphi 0, %s394
      %s396 = sphi 0, %s394
      %s397 = sphi 0, %s396
      %s411 = sphi 0, %s397
      %s415 = sphi 0, %s415
      %s417 = sphi 0, %s415
      %s418 = sphi 0, %s417
      %s432 = sphi 0, %s418
      %s436 = sphi 0, %s436
      %s438 = sphi 0, %s436
      %s439 = sphi 0, %s438
      %s453 = sphi 0, %s439
      %s457 = sphi 0, %s457
      %s459 = sphi 0, %s457
      %s460 = sphi 0, %s459
      %s474 = sphi 0, %s460
      %s478 = sphi 0, %s478
      %s480 = sphi 0, %s478
      %s481 = sphi 0, %s480
      %s495 = sphi 0, %s481
      %s499 = sphi 0, %s499
      %s501 = sphi 0, %s499
      %s502 = sphi 0, %s501
      %s516 = sphi 0, %s502
      %s520 = sphi 0, %s520
      %s522 = sphi 0, %s520
      %s523 = sphi 0, %s522
      %s537 = sphi 0, %s523
      %s541 = sphi 0, %s541
      %s543 = sphi 0, %s541
      %s544 = sphi 0, %s543
      %s558 = sphi 0, %s544
      %s562 = sphi 0, %s562
      %s564 = sphi 0, %s562
      %s565 = sphi 0, %s564
      %s579 = sphi 0, %s565
      %s583 = sphi 0, %s583
      %s585 = sphi 0, %s583
      %s586 = sphi 0, %s585
      %s600 = sphi 0, %s586
      %s604 = sphi 0, %s604
      %s606 = sphi 0, %s604
      %s607 = sphi 0, %s606
      %s621 = sphi 0, %s607
    $region4: #{forward.1} parent=1 // loop_header_branch
      %54 = sbr.rel (%p52) target = $region8
    $region5: #{forward.1} parent=1 // loop_body
      %s56 = ssub.s32 %s51, 1
      %s57 = ssub.s32 %s51, 2
      %s58 = sadd.s32 %s51, 1
      %s60 = sadd.s32 %s59, 1
      %p63 = scmp.eq.s32.totalorder %s51, 3
      %p64 = scmp.ne.s32.totalorder %s59, %s61
      %p65 = scmp.eq.s32.totalorder %s51, 0
      %p66 = por %p64, %p65
      %p67 = scmp.ne.s32.totalorder %s59, %s61
      %p68 = scmp.eq.s32.totalorder %s56, 3
      %p69 = por %p67, %p68
      %p70 = scmp.ne.s32.totalorder %s61, %s62
      %p71 = scmp.eq.s32.totalorder %s56, 0
      %p72 = por %p70, %p71
      %p73 = scmp.ne.s32.totalorder %s61, %s62
      %p74 = scmp.eq.s32.totalorder %s57, 3
      %p75 = por %p73, %p74
      %p77 = scmp.ne.s32.totalorder %s62, %s76
      %p78 = scmp.eq.s32.totalorder %s57, 0
      %p79 = por %p77, %p78
      %s81 = sadd.s32 %s80, 1
      %p84 = scmp.eq.s32.totalorder %s51, 3
      %p85 = scmp.ne.s32.totalorder %s80, %s82
      %p86 = scmp.eq.s32.totalorder %s51, 0
      %p87 = por %p85, %p86
      %p88 = scmp.ne.s32.totalorder %s80, %s82
      %p89 = scmp.eq.s32.totalorder %s56, 3
      %p90 = por %p88, %p89
      %p91 = scmp.ne.s32.totalorder %s82, %s83
      %p92 = scmp.eq.s32.totalorder %s56, 0
      %p93 = por %p91, %p92
      %p94 = scmp.ne.s32.totalorder %s82, %s83
      %p95 = scmp.eq.s32.totalorder %s57, 3
      %p96 = por %p94, %p95
      %p98 = scmp.ne.s32.totalorder %s83, %s97
      %p99 = scmp.eq.s32.totalorder %s57, 0
      %p100 = por %p98, %p99
      %s101 = ssub.s32 %s51, %s58
      %p102 = scmp.eq.s32.totalorder %s101, 0
      %s104 = sadd.s32 %s103, 1
      %s105 = scalar_select %p102, %s103, %s104
      %p108 = pneg %p102
      %p109 = scmp.eq.s32.totalorder %s51, 3
      %p110 = por %p108, %p109
      %p111 = scmp.ne.s32.totalorder %s103, %s106
      %p112 = scmp.eq.s32.totalorder %s51, 0
      %p113 = por %p111, %p112
      %p114 = scmp.ne.s32.totalorder %s103, %s106
      %p115 = scmp.eq.s32.totalorder %s56, 3
      %p116 = por %p114, %p115
      %p117 = scmp.ne.s32.totalorder %s106, %s107
      %p118 = scmp.eq.s32.totalorder %s56, 0
      %p119 = por %p117, %p118
      %p120 = scmp.ne.s32.totalorder %s106, %s107
      %p121 = scmp.eq.s32.totalorder %s57, 3
      %p122 = por %p120, %p121
      %p124 = scmp.ne.s32.totalorder %s107, %s123
      %p125 = scmp.eq.s32.totalorder %s57, 0
      %p126 = por %p124, %p125
      %s127 = ssub.s32 %s51, %s58
      %p128 = scmp.eq.s32.totalorder %s127, 0
      %s130 = sadd.s32 %s129, 1
      %s131 = scalar_select %p128, %s129, %s130
      %p134 = pneg %p128
      %p135 = scmp.eq.s32.totalorder %s51, 3
      %p136 = por %p134, %p135
      %p137 = scmp.ne.s32.totalorder %s129, %s132
      %p138 = scmp.eq.s32.totalorder %s51, 0
      %p139 = por %p137, %p138
      %p140 = scmp.ne.s32.totalorder %s129, %s132
      %p141 = scmp.eq.s32.totalorder %s56, 3
      %p142 = por %p140, %p141
      %p143 = scmp.ne.s32.totalorder %s132, %s133
      %p144 = scmp.eq.s32.totalorder %s56, 0
      %p145 = por %p143, %p144
      %p146 = scmp.ne.s32.totalorder %s132, %s133
      %p147 = scmp.eq.s32.totalorder %s57, 3
      %p148 = por %p146, %p147
      %p150 = scmp.ne.s32.totalorder %s133, %s149
      %p151 = scmp.eq.s32.totalorder %s57, 0
      %p152 = por %p150, %p151
      %s153 = ssub.s32 %s51, %s58
      %p154 = scmp.eq.s32.totalorder %s153, 0
      %s156 = sadd.s32 %s155, 1
      %s157 = scalar_select %p154, %s155, %s156
      %p160 = pneg %p154
      %p161 = scmp.eq.s32.totalorder %s51, 3
      %p162 = por %p160, %p161
      %p163 = scmp.ne.s32.totalorder %s155, %s158
      %p164 = scmp.eq.s32.totalorder %s51, 0
      %p165 = por %p163, %p164
      %p166 = scmp.ne.s32.totalorder %s155, %s158
      %p167 = scmp.eq.s32.totalorder %s56, 3
      %p168 = por %p166, %p167
      %p169 = scmp.ne.s32.totalorder %s158, %s159
      %p170 = scmp.eq.s32.totalorder %s56, 0
      %p171 = por %p169, %p170
      %p172 = scmp.ne.s32.totalorder %s158, %s159
      %p173 = scmp.eq.s32.totalorder %s57, 3
      %p174 = por %p172, %p173
      %p176 = scmp.ne.s32.totalorder %s159, %s175
      %p177 = scmp.eq.s32.totalorder %s57, 0
      %p178 = por %p176, %p177
      %s179 = ssub.s32 %s51, %s58
      %p180 = scmp.eq.s32.totalorder %s179, 0
      %s182 = sadd.s32 %s181, 1
      %s183 = scalar_select %p180, %s181, %s182
      %p186 = pneg %p180
      %p187 = scmp.eq.s32.totalorder %s51, 3
      %p188 = por %p186, %p187
      %p189 = scmp.ne.s32.totalorder %s181, %s184
      %p190 = scmp.eq.s32.totalorder %s51, 0
      %p191 = por %p189, %p190
      %p192 = scmp.ne.s32.totalorder %s181, %s184
      %p193 = scmp.eq.s32.totalorder %s56, 3
      %p194 = por %p192, %p193
      %p195 = scmp.ne.s32.totalorder %s184, %s185
      %p196 = scmp.eq.s32.totalorder %s56, 0
      %p197 = por %p195, %p196
      %p198 = scmp.ne.s32.totalorder %s184, %s185
      %p199 = scmp.eq.s32.totalorder %s57, 3
      %p200 = por %p198, %p199
      %p202 = scmp.ne.s32.totalorder %s185, %s201
      %p203 = scmp.eq.s32.totalorder %s57, 0
      %p204 = por %p202, %p203
      %s206 = sadd.s32 %s205, 1
      %p209 = scmp.eq.s32.totalorder %s51, 3
      %p210 = scmp.ne.s32.totalorder %s205, %s207
      %p211 = scmp.eq.s32.totalorder %s51, 0
      %p212 = por %p210, %p211
      %p213 = scmp.ne.s32.totalorder %s205, %s207
      %p214 = scmp.eq.s32.totalorder %s56, 3
      %p215 = por %p213, %p214
      %p216 = scmp.ne.s32.totalorder %s207, %s208
      %p217 = scmp.eq.s32.totalorder %s56, 0
      %p218 = por %p216, %p217
      %p219 = scmp.ne.s32.totalorder %s207, %s208
      %p220 = scmp.eq.s32.totalorder %s57, 3
      %p221 = por %p219, %p220
      %p223 = scmp.ne.s32.totalorder %s208, %s222
      %p224 = scmp.eq.s32.totalorder %s57, 0
      %p225 = por %p223, %p224
      %s227 = sadd.s32 %s226, 1
      %p230 = scmp.eq.s32.totalorder %s51, 3
      %p231 = scmp.ne.s32.totalorder %s226, %s228
      %p232 = scmp.eq.s32.totalorder %s51, 0
      %p233 = por %p231, %p232
      %p234 = scmp.ne.s32.totalorder %s226, %s228
      %p235 = scmp.eq.s32.totalorder %s56, 3
      %p236 = por %p234, %p235
      %p237 = scmp.ne.s32.totalorder %s228, %s229
      %p238 = scmp.eq.s32.totalorder %s56, 0
      %p239 = por %p237, %p238
      %p240 = scmp.ne.s32.totalorder %s228, %s229
      %p241 = scmp.eq.s32.totalorder %s57, 3
      %p242 = por %p240, %p241
      %p244 = scmp.ne.s32.totalorder %s229, %s243
      %p245 = scmp.eq.s32.totalorder %s57, 0
      %p246 = por %p244, %p245
      %s248 = sadd.s32 %s247, 1
      %p251 = scmp.eq.s32.totalorder %s51, 3
      %p252 = scmp.ne.s32.totalorder %s247, %s249
      %p253 = scmp.eq.s32.totalorder %s51, 0
      %p254 = por %p252, %p253
      %p255 = scmp.ne.s32.totalorder %s247, %s249
      %p256 = scmp.eq.s32.totalorder %s56, 3
      %p257 = por %p255, %p256
      %p258 = scmp.ne.s32.totalorder %s249, %s250
      %p259 = scmp.eq.s32.totalorder %s56, 0
      %p260 = por %p258, %p259
      %p261 = scmp.ne.s32.totalorder %s249, %s250
      %p262 = scmp.eq.s32.totalorder %s57, 3
      %p263 = por %p261, %p262
      %p265 = scmp.ne.s32.totalorder %s250, %s264
      %p266 = scmp.eq.s32.totalorder %s57, 0
      %p267 = por %p265, %p266
      %s269 = sadd.s32 %s268, 1
      %p272 = scmp.eq.s32.totalorder %s51, 3
      %p273 = scmp.ne.s32.totalorder %s268, %s270
      %p274 = scmp.eq.s32.totalorder %s51, 0
      %p275 = por %p273, %p274
      %p276 = scmp.ne.s32.totalorder %s268, %s270
      %p277 = scmp.eq.s32.totalorder %s56, 3
      %p278 = por %p276, %p277
      %p279 = scmp.ne.s32.totalorder %s270, %s271
      %p280 = scmp.eq.s32.totalorder %s56, 0
      %p281 = por %p279, %p280
      %p282 = scmp.ne.s32.totalorder %s270, %s271
      %p283 = scmp.eq.s32.totalorder %s57, 3
      %p284 = por %p282, %p283
      %p286 = scmp.ne.s32.totalorder %s271, %s285
      %p287 = scmp.eq.s32.totalorder %s57, 0
      %p288 = por %p286, %p287
      %s290 = sadd.s32 %s289, 1
      %p293 = scmp.eq.s32.totalorder %s51, 3
      %p294 = scmp.ne.s32.totalorder %s289, %s291
      %p295 = scmp.eq.s32.totalorder %s51, 0
      %p296 = por %p294, %p295
      %p297 = scmp.ne.s32.totalorder %s289, %s291
      %p298 = scmp.eq.s32.totalorder %s56, 3
      %p299 = por %p297, %p298
      %p300 = scmp.ne.s32.totalorder %s291, %s292
      %p301 = scmp.eq.s32.totalorder %s56, 0
      %p302 = por %p300, %p301
      %p303 = scmp.ne.s32.totalorder %s291, %s292
      %p304 = scmp.eq.s32.totalorder %s57, 3
      %p305 = por %p303, %p304
      %p307 = scmp.ne.s32.totalorder %s292, %s306
      %p308 = scmp.eq.s32.totalorder %s57, 0
      %p309 = por %p307, %p308
      %s311 = sadd.s32 %s310, 1
      %p314 = scmp.eq.s32.totalorder %s51, 3
      %p315 = scmp.ne.s32.totalorder %s310, %s312
      %p316 = scmp.eq.s32.totalorder %s51, 0
      %p317 = por %p315, %p316
      %p318 = scmp.ne.s32.totalorder %s310, %s312
      %p319 = scmp.eq.s32.totalorder %s56, 3
      %p320 = por %p318, %p319
      %p321 = scmp.ne.s32.totalorder %s312, %s313
      %p322 = scmp.eq.s32.totalorder %s56, 0
      %p323 = por %p321, %p322
      %p324 = scmp.ne.s32.totalorder %s312, %s313
      %p325 = scmp.eq.s32.totalorder %s57, 3
      %p326 = por %p324, %p325
      %p328 = scmp.ne.s32.totalorder %s313, %s327
      %p329 = scmp.eq.s32.totalorder %s57, 0
      %p330 = por %p328, %p329
      %s332 = sadd.s32 %s331, 1
      %p335 = scmp.eq.s32.totalorder %s51, 3
      %p336 = scmp.ne.s32.totalorder %s331, %s333
      %p337 = scmp.eq.s32.totalorder %s51, 0
      %p338 = por %p336, %p337
      %p339 = scmp.ne.s32.totalorder %s331, %s333
      %p340 = scmp.eq.s32.totalorder %s56, 3
      %p341 = por %p339, %p340
      %p342 = scmp.ne.s32.totalorder %s333, %s334
      %p343 = scmp.eq.s32.totalorder %s56, 0
      %p344 = por %p342, %p343
      %p345 = scmp.ne.s32.totalorder %s333, %s334
      %p346 = scmp.eq.s32.totalorder %s57, 3
      %p347 = por %p345, %p346
      %p349 = scmp.ne.s32.totalorder %s334, %s348
      %p350 = scmp.eq.s32.totalorder %s57, 0
      %p351 = por %p349, %p350
      %s353 = sadd.s32 %s352, 1
      %p356 = scmp.eq.s32.totalorder %s51, 3
      %p357 = scmp.ne.s32.totalorder %s352, %s354
      %p358 = scmp.eq.s32.totalorder %s51, 0
      %p359 = por %p357, %p358
      %p360 = scmp.ne.s32.totalorder %s352, %s354
      %p361 = scmp.eq.s32.totalorder %s56, 3
      %p362 = por %p360, %p361
      %p363 = scmp.ne.s32.totalorder %s354, %s355
      %p364 = scmp.eq.s32.totalorder %s56, 0
      %p365 = por %p363, %p364
      %p366 = scmp.ne.s32.totalorder %s354, %s355
      %p367 = scmp.eq.s32.totalorder %s57, 3
      %p368 = por %p366, %p367
      %p370 = scmp.ne.s32.totalorder %s355, %s369
      %p371 = scmp.eq.s32.totalorder %s57, 0
      %p372 = por %p370, %p371
      %s374 = sadd.s32 %s373, 1
      %p377 = scmp.eq.s32.totalorder %s51, 3
      %p378 = scmp.ne.s32.totalorder %s373, %s375
      %p379 = scmp.eq.s32.totalorder %s51, 0
      %p380 = por %p378, %p379
      %p381 = scmp.ne.s32.totalorder %s373, %s375
      %p382 = scmp.eq.s32.totalorder %s56, 3
      %p383 = por %p381, %p382
      %p384 = scmp.ne.s32.totalorder %s375, %s376
      %p385 = scmp.eq.s32.totalorder %s56, 0
      %p386 = por %p384, %p385
      %p387 = scmp.ne.s32.totalorder %s375, %s376
      %p388 = scmp.eq.s32.totalorder %s57, 3
      %p389 = por %p387, %p388
      %p391 = scmp.ne.s32.totalorder %s376, %s390
      %p392 = scmp.eq.s32.totalorder %s57, 0
      %p393 = por %p391, %p392
      %s395 = sadd.s32 %s394, 1
      %p398 = scmp.eq.s32.totalorder %s51, 3
      %p399 = scmp.ne.s32.totalorder %s394, %s396
      %p400 = scmp.eq.s32.totalorder %s51, 0
      %p401 = por %p399, %p400
      %p402 = scmp.ne.s32.totalorder %s394, %s396
      %p403 = scmp.eq.s32.totalorder %s56, 3
      %p404 = por %p402, %p403
      %p405 = scmp.ne.s32.totalorder %s396, %s397
      %p406 = scmp.eq.s32.totalorder %s56, 0
      %p407 = por %p405, %p406
      %p408 = scmp.ne.s32.totalorder %s396, %s397
      %p409 = scmp.eq.s32.totalorder %s57, 3
      %p410 = por %p408, %p409
      %p412 = scmp.ne.s32.totalorder %s397, %s411
      %p413 = scmp.eq.s32.totalorder %s57, 0
      %p414 = por %p412, %p413
      %s416 = sadd.s32 %s415, 1
      %p419 = scmp.eq.s32.totalorder %s51, 3
      %p420 = scmp.ne.s32.totalorder %s415, %s417
      %p421 = scmp.eq.s32.totalorder %s51, 0
      %p422 = por %p420, %p421
      %p423 = scmp.ne.s32.totalorder %s415, %s417
      %p424 = scmp.eq.s32.totalorder %s56, 3
      %p425 = por %p423, %p424
      %p426 = scmp.ne.s32.totalorder %s417, %s418
      %p427 = scmp.eq.s32.totalorder %s56, 0
      %p428 = por %p426, %p427
      %p429 = scmp.ne.s32.totalorder %s417, %s418
      %p430 = scmp.eq.s32.totalorder %s57, 3
      %p431 = por %p429, %p430
      %p433 = scmp.ne.s32.totalorder %s418, %s432
      %p434 = scmp.eq.s32.totalorder %s57, 0
      %p435 = por %p433, %p434
      %s437 = sadd.s32 %s436, 1
      %p440 = scmp.eq.s32.totalorder %s51, 3
      %p441 = scmp.ne.s32.totalorder %s436, %s438
      %p442 = scmp.eq.s32.totalorder %s51, 0
      %p443 = por %p441, %p442
      %p444 = scmp.ne.s32.totalorder %s436, %s438
      %p445 = scmp.eq.s32.totalorder %s56, 3
      %p446 = por %p444, %p445
      %p447 = scmp.ne.s32.totalorder %s438, %s439
      %p448 = scmp.eq.s32.totalorder %s56, 0
      %p449 = por %p447, %p448
      %p450 = scmp.ne.s32.totalorder %s438, %s439
      %p451 = scmp.eq.s32.totalorder %s57, 3
      %p452 = por %p450, %p451
      %p454 = scmp.ne.s32.totalorder %s439, %s453
      %p455 = scmp.eq.s32.totalorder %s57, 0
      %p456 = por %p454, %p455
      %s458 = sadd.s32 %s457, 1
      %p461 = scmp.eq.s32.totalorder %s51, 3
      %p462 = scmp.ne.s32.totalorder %s457, %s459
      %p463 = scmp.eq.s32.totalorder %s51, 0
      %p464 = por %p462, %p463
      %p465 = scmp.ne.s32.totalorder %s457, %s459
      %p466 = scmp.eq.s32.totalorder %s56, 3
      %p467 = por %p465, %p466
      %p468 = scmp.ne.s32.totalorder %s459, %s460
      %p469 = scmp.eq.s32.totalorder %s56, 0
      %p470 = por %p468, %p469
      %p471 = scmp.ne.s32.totalorder %s459, %s460
      %p472 = scmp.eq.s32.totalorder %s57, 3
      %p473 = por %p471, %p472
      %p475 = scmp.ne.s32.totalorder %s460, %s474
      %p476 = scmp.eq.s32.totalorder %s57, 0
      %p477 = por %p475, %p476
      %s479 = sadd.s32 %s478, 1
      %p482 = scmp.eq.s32.totalorder %s51, 3
      %p483 = scmp.ne.s32.totalorder %s478, %s480
      %p484 = scmp.eq.s32.totalorder %s51, 0
      %p485 = por %p483, %p484
      %p486 = scmp.ne.s32.totalorder %s478, %s480
      %p487 = scmp.eq.s32.totalorder %s56, 3
      %p488 = por %p486, %p487
      %p489 = scmp.ne.s32.totalorder %s480, %s481
      %p490 = scmp.eq.s32.totalorder %s56, 0
      %p491 = por %p489, %p490
      %p492 = scmp.ne.s32.totalorder %s480, %s481
      %p493 = scmp.eq.s32.totalorder %s57, 3
      %p494 = por %p492, %p493
      %p496 = scmp.ne.s32.totalorder %s481, %s495
      %p497 = scmp.eq.s32.totalorder %s57, 0
      %p498 = por %p496, %p497
      %s500 = sadd.s32 %s499, 1
      %p503 = scmp.eq.s32.totalorder %s51, 3
      %p504 = scmp.ne.s32.totalorder %s499, %s501
      %p505 = scmp.eq.s32.totalorder %s51, 0
      %p506 = por %p504, %p505
      %p507 = scmp.ne.s32.totalorder %s499, %s501
      %p508 = scmp.eq.s32.totalorder %s56, 3
      %p509 = por %p507, %p508
      %p510 = scmp.ne.s32.totalorder %s501, %s502
      %p511 = scmp.eq.s32.totalorder %s56, 0
      %p512 = por %p510, %p511
      %p513 = scmp.ne.s32.totalorder %s501, %s502
      %p514 = scmp.eq.s32.totalorder %s57, 3
      %p515 = por %p513, %p514
      %p517 = scmp.ne.s32.totalorder %s502, %s516
      %p518 = scmp.eq.s32.totalorder %s57, 0
      %p519 = por %p517, %p518
      %s521 = sadd.s32 %s520, 1
      %p524 = scmp.eq.s32.totalorder %s51, 3
      %p525 = scmp.ne.s32.totalorder %s520, %s522
      %p526 = scmp.eq.s32.totalorder %s51, 0
      %p527 = por %p525, %p526
      %p528 = scmp.ne.s32.totalorder %s520, %s522
      %p529 = scmp.eq.s32.totalorder %s56, 3
      %p530 = por %p528, %p529
      %p531 = scmp.ne.s32.totalorder %s522, %s523
      %p532 = scmp.eq.s32.totalorder %s56, 0
      %p533 = por %p531, %p532
      %p534 = scmp.ne.s32.totalorder %s522, %s523
      %p535 = scmp.eq.s32.totalorder %s57, 3
      %p536 = por %p534, %p535
      %p538 = scmp.ne.s32.totalorder %s523, %s537
      %p539 = scmp.eq.s32.totalorder %s57, 0
      %p540 = por %p538, %p539
      %s542 = sadd.s32 %s541, 1
      %p545 = scmp.eq.s32.totalorder %s51, 3
      %p546 = scmp.ne.s32.totalorder %s541, %s543
      %p547 = scmp.eq.s32.totalorder %s51, 0
      %p548 = por %p546, %p547
      %p549 = scmp.ne.s32.totalorder %s541, %s543
      %p550 = scmp.eq.s32.totalorder %s56, 3
      %p551 = por %p549, %p550
      %p552 = scmp.ne.s32.totalorder %s543, %s544
      %p553 = scmp.eq.s32.totalorder %s56, 0
      %p554 = por %p552, %p553
      %p555 = scmp.ne.s32.totalorder %s543, %s544
      %p556 = scmp.eq.s32.totalorder %s57, 3
      %p557 = por %p555, %p556
      %p559 = scmp.ne.s32.totalorder %s544, %s558
      %p560 = scmp.eq.s32.totalorder %s57, 0
      %p561 = por %p559, %p560
      %s563 = sadd.s32 %s562, 1
      %p566 = scmp.eq.s32.totalorder %s51, 3
      %p567 = scmp.ne.s32.totalorder %s562, %s564
      %p568 = scmp.eq.s32.totalorder %s51, 0
      %p569 = por %p567, %p568
      %p570 = scmp.ne.s32.totalorder %s562, %s564
      %p571 = scmp.eq.s32.totalorder %s56, 3
      %p572 = por %p570, %p571
      %p573 = scmp.ne.s32.totalorder %s564, %s565
      %p574 = scmp.eq.s32.totalorder %s56, 0
      %p575 = por %p573, %p574
      %p576 = scmp.ne.s32.totalorder %s564, %s565
      %p577 = scmp.eq.s32.totalorder %s57, 3
      %p578 = por %p576, %p577
      %p580 = scmp.ne.s32.totalorder %s565, %s579
      %p581 = scmp.eq.s32.totalorder %s57, 0
      %p582 = por %p580, %p581
      %s584 = sadd.s32 %s583, 1
      %p587 = scmp.eq.s32.totalorder %s51, 3
      %p588 = scmp.ne.s32.totalorder %s583, %s585
      %p589 = scmp.eq.s32.totalorder %s51, 0
      %p590 = por %p588, %p589
      %p591 = scmp.ne.s32.totalorder %s583, %s585
      %p592 = scmp.eq.s32.totalorder %s56, 3
      %p593 = por %p591, %p592
      %p594 = scmp.ne.s32.totalorder %s585, %s586
      %p595 = scmp.eq.s32.totalorder %s56, 0
      %p596 = por %p594, %p595
      %p597 = scmp.ne.s32.totalorder %s585, %s586
      %p598 = scmp.eq.s32.totalorder %s57, 3
      %p599 = por %p597, %p598
      %p601 = scmp.ne.s32.totalorder %s586, %s600
      %p602 = scmp.eq.s32.totalorder %s57, 0
      %p603 = por %p601, %p602
      %s605 = sadd.s32 %s604, 1
      %p608 = scmp.eq.s32.totalorder %s51, 3
      %p609 = scmp.ne.s32.totalorder %s604, %s606
      %p610 = scmp.eq.s32.totalorder %s51, 0
      %p611 = por %p609, %p610
      %p612 = scmp.ne.s32.totalorder %s604, %s606
      %p613 = scmp.eq.s32.totalorder %s56, 3
      %p614 = por %p612, %p613
      %p615 = scmp.ne.s32.totalorder %s606, %s607
      %p616 = scmp.eq.s32.totalorder %s56, 0
      %p617 = por %p615, %p616
      %p618 = scmp.ne.s32.totalorder %s606, %s607
      %p619 = scmp.eq.s32.totalorder %s57, 3
      %p620 = por %p618, %p619
      %p622 = scmp.ne.s32.totalorder %s607, %s621
      %p623 = scmp.eq.s32.totalorder %s57, 0
      %p624 = por %p622, %p623
      %p625 = scmp.le.s32.totalorder 1, %s51
      %p626 = scmp.lt.s32.totalorder %s51, 5
      %p627 = pnand %p625, %p626
      %p628 = pneg %p627
      // Predicated region
      $region9: #{forward.1} parent=5 // pred_check
        _
      $region10: #{forward.1} parent=5 // pred_check_branch
        %630 = sbr.rel (%p627) target = $region12
      $region11: #{forward.1} parent=5 // pred_region
        %s631 = ssub.s32 %s51, 1
        // Predicated region
        $region13: #{forward.1} parent=11 // pred_check
          %p632 = pneg %p72
        $region14: #{forward.1} parent=11 // pred_check_branch
          %634 = sbr.rel (%p632) target = $region16
        $region15: #{forward.1} parent=11 // pred_region
          _
        $region16: #{forward.1} parent=11 // pred_fallthru
          _
        // Predicated region
        $region17: #{forward.1} parent=11 // pred_check
          %p635 = pneg %p93
        $region18: #{forward.1} parent=11 // pred_check_branch
          %637 = sbr.rel (%p635) target = $region20
        $region19: #{forward.1} parent=11 // pred_region
          _
        $region20: #{forward.1} parent=11 // pred_fallthru
          _
        // Predicated region
        $region21: #{forward.1} parent=11 // pred_check
          %p638 = pneg %p218
        $region22: #{forward.1} parent=11 // pred_check_branch
          %640 = sbr.rel (%p638) target = $region24
        $region23: #{forward.1} parent=11 // pred_region
          _
        $region24: #{forward.1} parent=11 // pred_fallthru
          _
        // Predicated region
        $region25: #{forward.1} parent=11 // pred_check
          %p641 = pneg %p239
        $region26: #{forward.1} parent=11 // pred_check_branch
          %643 = sbr.rel (%p641) target = $region28
        $region27: #{forward.1} parent=11 // pred_region
          _
        $region28: #{forward.1} parent=11 // pred_fallthru
          _
        // Predicated region
        $region29: #{forward.1} parent=11 // pred_check
          %p644 = pneg %p260
        $region30: #{forward.1} parent=11 // pred_check_branch
          %646 = sbr.rel (%p644) target = $region32
        $region31: #{forward.1} parent=11 // pred_region
          %648 = vsyncadd [#allocation11], 0
          %s649 = sshll.u32 %s8, 4
          %s650 = int_to_ptr.hbm [resolvable:$true] %s649
          %s651 = sshll.u32 [#allocation12], 4
          %s652 = int_to_ptr.vmem [resolvable:$true] %s651
          %657 = dma.hbm_to_vmem [thread:$0]  %s650, 32768, %s652, [#allocation11], 256, 256, 16
        $region32: #{forward.1} parent=11 // pred_fallthru
          _
        // Predicated region
        $region33: #{forward.1} parent=11 // pred_check
          %p658 = pneg %p281
        $region34: #{forward.1} parent=11 // pred_check_branch
          %660 = sbr.rel (%p658) target = $region36
        $region35: #{forward.1} parent=11 // pred_region
          %662 = vsyncadd [#allocation14], 0
          %s664 = sshll.u32 %s9, 4
          %s665 = int_to_ptr.hbm [resolvable:$true] %s664
          %s666 = sshll.u32 [#allocation13], 4
          %s667 = int_to_ptr.vmem [resolvable:$true] %s666
          %669 = dma.hbm_to_vmem [thread:$0]  %s665, 64, %s667, [#allocation14]
        $region36: #{forward.1} parent=11 // pred_fallthru
          _
        // Predicated region
        $region37: #{forward.1} parent=11 // pred_check
          %p670 = pneg %p302
        $region38: #{forward.1} parent=11 // pred_check_branch
          %672 = sbr.rel (%p670) target = $region40
        $region39: #{forward.1} parent=11 // pred_region
          %674 = vsyncadd [#allocation14], 0
          %s675 = sshll.u32 %s10, 4
          %s676 = int_to_ptr.hbm [resolvable:$true] %s675
          %s677 = sshll.u32 [#allocation15], 4
          %s678 = int_to_ptr.vmem [resolvable:$true] %s677
          %683 = dma.hbm_to_vmem [thread:$0]  %s676, 8192, %s678, [#allocation14], 128, 128, 8
        $region40: #{forward.1} parent=11 // pred_fallthru
          _
        // Predicated region
        $region41: #{forward.1} parent=11 // pred_check
          %p684 = pneg %p323
        $region42: #{forward.1} parent=11 // pred_check_branch
          %686 = sbr.rel (%p684) target = $region44
        $region43: #{forward.1} parent=11 // pred_region
          %688 = vsyncadd [#allocation17], 0
          %s690 = sshll.u32 %s11, 4
          %s691 = int_to_ptr.hbm [resolvable:$true] %s690
          %s692 = sshll.u32 [#allocation16], 4
          %s693 = int_to_ptr.vmem [resolvable:$true] %s692
          %695 = dma.hbm_to_vmem [thread:$0]  %s691, 32, %s693, [#allocation17]
        $region44: #{forward.1} parent=11 // pred_fallthru
          _
        // Predicated region
        $region45: #{forward.1} parent=11 // pred_check
          %p696 = pneg %p344
        $region46: #{forward.1} parent=11 // pred_check_branch
          %698 = sbr.rel (%p696) target = $region48
        $region47: #{forward.1} parent=11 // pred_region
          %700 = vsyncadd [#allocation17], 0
          %s701 = sshll.u32 %s12, 4
          %s702 = int_to_ptr.hbm [resolvable:$true] %s701
          %s703 = sshll.u32 [#allocation18], 4
          %s704 = int_to_ptr.vmem [resolvable:$true] %s703
          %709 = dma.hbm_to_vmem [thread:$0]  %s702, 2048, %s704, [#allocation17], 64, 64, 4
        $region48: #{forward.1} parent=11 // pred_fallthru
          _
        // Predicated region
        $region49: #{forward.1} parent=11 // pred_check
          %p710 = pneg %p365
        $region50: #{forward.1} parent=11 // pred_check_branch
          %712 = sbr.rel (%p710) target = $region52
        $region51: #{forward.1} parent=11 // pred_region
          %714 = vsyncadd [#allocation20], 0
          %s716 = sshll.u32 %s13, 4
          %s717 = int_to_ptr.hbm [resolvable:$true] %s716
          %s718 = sshll.u32 [#allocation19], 4
          %s719 = int_to_ptr.vmem [resolvable:$true] %s718
          %721 = dma.hbm_to_vmem [thread:$0]  %s717, 16, %s719, [#allocation20]
        $region52: #{forward.1} parent=11 // pred_fallthru
          _
        // Predicated region
        $region53: #{forward.1} parent=11 // pred_check
          %p722 = pneg %p386
        $region54: #{forward.1} parent=11 // pred_check_branch
          %724 = sbr.rel (%p722) target = $region56
        $region55: #{forward.1} parent=11 // pred_region
          %726 = vsyncadd [#allocation20], 0
          %s727 = sshll.u32 %s14, 4
          %s728 = int_to_ptr.hbm [resolvable:$true] %s727
          %s729 = sshll.u32 [#allocation21], 4
          %s730 = int_to_ptr.vmem [resolvable:$true] %s729
          %735 = dma.hbm_to_vmem [thread:$0]  %s728, 2048, %s730, [#allocation20], 128, 128, 8
        $region56: #{forward.1} parent=11 // pred_fallthru
          _
        // Predicated region
        $region57: #{forward.1} parent=11 // pred_check
          %p736 = pneg %p407
        $region58: #{forward.1} parent=11 // pred_check_branch
          %738 = sbr.rel (%p736) target = $region60
        $region59: #{forward.1} parent=11 // pred_region
          %740 = vsyncadd [#allocation23], 0
          %s742 = sshll.u32 %s15, 4
          %s743 = int_to_ptr.hbm [resolvable:$true] %s742
          %s744 = sshll.u32 [#allocation22], 4
          %s745 = int_to_ptr.vmem [resolvable:$true] %s744
          %747 = dma.hbm_to_vmem [thread:$0]  %s743, 32, %s745, [#allocation23]
        $region60: #{forward.1} parent=11 // pred_fallthru
          _
        // Predicated region
        $region61: #{forward.1} parent=11 // pred_check
          %p748 = pneg %p428
        $region62: #{forward.1} parent=11 // pred_check_branch
          %750 = sbr.rel (%p748) target = $region64
        $region63: #{forward.1} parent=11 // pred_region
          %752 = vsyncadd [#allocation23], 0
          %s753 = sshll.u32 %s16, 4
          %s754 = int_to_ptr.hbm [resolvable:$true] %s753
          %s755 = sshll.u32 [#allocation24], 4
          %s756 = int_to_ptr.vmem [resolvable:$true] %s755
          %761 = dma.hbm_to_vmem [thread:$0]  %s754, 8192, %s756, [#allocation23], 256, 256, 16
        $region64: #{forward.1} parent=11 // pred_fallthru
          _
        // Predicated region
        $region65: #{forward.1} parent=11 // pred_check
          %p762 = pneg %p449
        $region66: #{forward.1} parent=11 // pred_check_branch
          %764 = sbr.rel (%p762) target = $region68
        $region67: #{forward.1} parent=11 // pred_region
          %766 = vsyncadd [#allocation26], 0
          %s768 = sshll.u32 %s17, 4
          %s769 = int_to_ptr.hbm [resolvable:$true] %s768
          %s770 = sshll.u32 [#allocation25], 4
          %s771 = int_to_ptr.vmem [resolvable:$true] %s770
          %773 = dma.hbm_to_vmem [thread:$0]  %s769, 64, %s771, [#allocation26]
        $region68: #{forward.1} parent=11 // pred_fallthru
          _
        // Predicated region
        $region69: #{forward.1} parent=11 // pred_check
          %p774 = pneg %p470
        $region70: #{forward.1} parent=11 // pred_check_branch
          %776 = sbr.rel (%p774) target = $region72
        $region71: #{forward.1} parent=11 // pred_region
          %778 = vsyncadd [#allocation26], 0
          %s779 = sshll.u32 %s18, 4
          %s780 = int_to_ptr.hbm [resolvable:$true] %s779
          %s781 = sshll.u32 [#allocation27], 4
          %s782 = int_to_ptr.vmem [resolvable:$true] %s781
          %787 = dma.hbm_to_vmem [thread:$0]  %s780, 32768, %s782, [#allocation26], 512, 512, 32
        $region72: #{forward.1} parent=11 // pred_fallthru
          _
        // Predicated region
        $region73: #{forward.1} parent=11 // pred_check
          %p788 = pneg %p491
        $region74: #{forward.1} parent=11 // pred_check_branch
          %790 = sbr.rel (%p788) target = $region76
        $region75: #{forward.1} parent=11 // pred_region
          %792 = vsyncadd [#allocation29], 0
          %s794 = sshll.u32 %s19, 4
          %s795 = int_to_ptr.hbm [resolvable:$true] %s794
          %s796 = sshll.u32 [#allocation28], 4
          %s797 = int_to_ptr.vmem [resolvable:$true] %s796
          %799 = dma.hbm_to_vmem [thread:$0]  %s795, 128, %s797, [#allocation29]
        $region76: #{forward.1} parent=11 // pred_fallthru
          _
        // Predicated region
        $region77: #{forward.1} parent=11 // pred_check
          %p800 = pneg %p512
        $region78: #{forward.1} parent=11 // pred_check_branch
          %802 = sbr.rel (%p800) target = $region80
        $region79: #{forward.1} parent=11 // pred_region
          %804 = vsyncadd [#allocation29], 0
          %s805 = sshll.u32 %s20, 4
          %s806 = int_to_ptr.hbm [resolvable:$true] %s805
          %s807 = sshll.u32 [#allocation30], 4
          %s808 = int_to_ptr.vmem [resolvable:$true] %s807
          %813 = dma.hbm_to_vmem [thread:$0]  %s806, 1024, %s808, [#allocation29], 64, 64, 4
        $region80: #{forward.1} parent=11 // pred_fallthru
          _
        // Predicated region
        $region81: #{forward.1} parent=11 // pred_check
          %p814 = pneg %p533
        $region82: #{forward.1} parent=11 // pred_check_branch
          %816 = sbr.rel (%p814) target = $region84
        $region83: #{forward.1} parent=11 // pred_region
          %818 = vsyncadd [#allocation32], 0
          %s820 = sshll.u32 %s21, 4
          %s821 = int_to_ptr.hbm [resolvable:$true] %s820
          %s822 = sshll.u32 [#allocation31], 4
          %s823 = int_to_ptr.vmem [resolvable:$true] %s822
          %825 = dma.hbm_to_vmem [thread:$0]  %s821, 16, %s823, [#allocation32]
        $region84: #{forward.1} parent=11 // pred_fallthru
          _
      $region12: #{forward.1} parent=5 // pred_fallthru
        _
      %p826 = scmp.lt.s32.totalorder %s51, 4
      // Predicated region
      $region85: #{forward.1} parent=5 // pred_check
        %p827 = pneg %p826
      $region86: #{forward.1} parent=5 // pred_check_branch
        %829 = sbr.rel (%p827) target = $region88
      $region87: #{forward.1} parent=5 // pred_region
        // Predicated region
        $region89: #{forward.1} parent=87 // pred_check
          %p830 = pneg %p113
        $region90: #{forward.1} parent=87 // pred_check_branch
          %832 = sbr.rel (%p830) target = $region92
        $region91: #{forward.1} parent=87 // pred_region
          %s833 = sand.u32 %s103, 1
          %s834 = scalar_lea.sflag [#allocation5], %s833
          %s835 = sand.u32 %s103, 1
          %s836 = smul.addr %s835, 1536
          %s837 = scalar_lea.vmem [#allocation4], %s836
          %s838 = smul.u32 4, %s51
          %840 = vsyncadd %s834, 0
          %s841 = smul.addr %s838, 4
          %s842 = scalar_lea.hbm %s2, %s841
          %s843 = sshll.u32 %s842, 4
          %s844 = int_to_ptr.hbm [resolvable:$true] %s843
          %s845 = sshll.u32 %s837, 4
          %s846 = int_to_ptr.vmem [resolvable:$true] %s845
          %851 = dma.hbm_to_vmem [thread:$0]  %s844, 24576, %s846, %s834, 1024, 256, 16
        $region92: #{forward.1} parent=87 // pred_fallthru
          _
        // Predicated region
        $region93: #{forward.1} parent=87 // pred_check
          %p852 = pneg %p139
        $region94: #{forward.1} parent=87 // pred_check_branch
          %854 = sbr.rel (%p852) target = $region96
        $region95: #{forward.1} parent=87 // pred_region
          %s855 = sand.u32 %s51, 1
          %s856 = scalar_lea.sflag [#allocation8], %s855
          %s857 = sand.u32 %s129, 1
          %s858 = smul.addr %s857, 4
          %s859 = scalar_lea.vmem [#allocation7], %s858
          %s860 = smul.u32 4, %s51
          %862 = vsyncadd %s856, 0
          %s863 = scalar_lea.hbm %s3, %s860
          %s865 = sshll.u32 %s863, 4
          %s866 = int_to_ptr.hbm [resolvable:$true] %s865
          %s867 = sshll.u32 %s859, 4
          %s868 = int_to_ptr.vmem [resolvable:$true] %s867
          %870 = dma.hbm_to_vmem [thread:$0]  %s866, 64, %s868, %s856
        $region96: #{forward.1} parent=87 // pred_fallthru
          _
        // Predicated region
        $region97: #{forward.1} parent=87 // pred_check
          %p871 = pneg %p165
        $region98: #{forward.1} parent=87 // pred_check_branch
          %873 = sbr.rel (%p871) target = $region100
        $region99: #{forward.1} parent=87 // pred_region
          %s874 = sand.u32 %s51, 1
          %s875 = scalar_lea.sflag [#allocation8], %s874
          %s876 = sand.u32 %s155, 1
          %s877 = smul.addr %s876, 1536
          %s878 = scalar_lea.vmem [#allocation9], %s877
          %s879 = smul.u32 4, %s51
          %881 = vsyncadd %s875, 0
          %s882 = smul.addr %s879, 4
          %s883 = scalar_lea.hbm %s4, %s882
          %s884 = sshll.u32 %s883, 4
          %s885 = int_to_ptr.hbm [resolvable:$true] %s884
          %s886 = sshll.u32 %s878, 4
          %s887 = int_to_ptr.vmem [resolvable:$true] %s886
          %892 = dma.hbm_to_vmem [thread:$0]  %s885, 24576, %s887, %s875, 1024, 256, 16
        $region100: #{forward.1} parent=87 // pred_fallthru
          _
        // Predicated region
        $region101: #{forward.1} parent=87 // pred_check
          %p893 = pneg %p191
        $region102: #{forward.1} parent=87 // pred_check_branch
          %895 = sbr.rel (%p893) target = $region104
        $region103: #{forward.1} parent=87 // pred_region
          %s896 = sand.u32 %s51, 1
          %s897 = scalar_lea.sflag [#allocation11], %s896
          %s898 = sand.u32 %s181, 1
          %s899 = smul.addr %s898, 4
          %s900 = scalar_lea.vmem [#allocation10], %s899
          %s901 = smul.u32 4, %s51
          %903 = vsyncadd %s897, 0
          %s904 = scalar_lea.hbm %s5, %s901
          %s906 = sshll.u32 %s904, 4
          %s907 = int_to_ptr.hbm [resolvable:$true] %s906
          %s908 = sshll.u32 %s900, 4
          %s909 = int_to_ptr.vmem [resolvable:$true] %s908
          %911 = dma.hbm_to_vmem [thread:$0]  %s907, 64, %s909, %s897
        $region104: #{forward.1} parent=87 // pred_fallthru
          _
      $region88: #{forward.1} parent=5 // pred_fallthru
        _
      %p912 = scmp.le.s32.totalorder 1, %s51
      %p913 = scmp.lt.s32.totalorder %s51, 5
      %p914 = pnand %p912, %p913
      %p915 = pneg %p914
      // Predicated region
      $region105: #{forward.1} parent=5 // pred_check
        _
      $region106: #{forward.1} parent=5 // pred_check_branch
        %917 = sbr.rel (%p914) target = $region108
      $region107: #{forward.1} parent=5 // pred_region
        %s918 = ssub.s32 %s51, 1
        %s919 = sand.u32 %s106, 1
        %s920 = scalar_lea.sflag [#allocation5], %s919
        %s921 = sand.u32 %s106, 1
        %s922 = smul.addr %s921, 1536
        %s923 = scalar_lea.vmem [#allocation4], %s922
        // Predicated region
        $region109: #{forward.1} parent=107 // pred_check
          %p924 = pneg %p119
        $region110: #{forward.1} parent=107 // pred_check_branch
          %926 = sbr.rel (%p924) target = $region112
        $region111: #{forward.1} parent=107 // pred_region
          %928 = dma.done %s920, 24576
        $region112: #{forward.1} parent=107 // pred_fallthru
          _
        %s929 = sand.u32 %s56, 1
        %s930 = scalar_lea.sflag [#allocation8], %s929
        %s931 = sand.u32 %s132, 1
        %s932 = smul.addr %s931, 4
        %s933 = scalar_lea.vmem [#allocation7], %s932
        // Predicated region
        $region113: #{forward.1} parent=107 // pred_check
          %p934 = pneg %p145
        $region114: #{forward.1} parent=107 // pred_check_branch
          %936 = sbr.rel (%p934) target = $region116
        $region115: #{forward.1} parent=107 // pred_region
          %938 = dma.done %s930, 64
        $region116: #{forward.1} parent=107 // pred_fallthru
          _
        %s939 = sand.u32 %s56, 1
        %s940 = scalar_lea.sflag [#allocation8], %s939
        %s941 = sand.u32 %s158, 1
        %s942 = smul.addr %s941, 1536
        %s943 = scalar_lea.vmem [#allocation9], %s942
        // Predicated region
        $region117: #{forward.1} parent=107 // pred_check
          %p944 = pneg %p171
        $region118: #{forward.1} parent=107 // pred_check_branch
          %946 = sbr.rel (%p944) target = $region120
        $region119: #{forward.1} parent=107 // pred_region
          %948 = dma.done %s940, 24576
        $region120: #{forward.1} parent=107 // pred_fallthru
          _
        %s949 = sand.u32 %s56, 1
        %s950 = scalar_lea.sflag [#allocation11], %s949
        %s951 = sand.u32 %s184, 1
        %s952 = smul.addr %s951, 4
        %s953 = scalar_lea.vmem [#allocation10], %s952
        // Predicated region
        $region121: #{forward.1} parent=107 // pred_check
          %p954 = pneg %p197
        $region122: #{forward.1} parent=107 // pred_check_branch
          %956 = sbr.rel (%p954) target = $region124
        $region123: #{forward.1} parent=107 // pred_region
          %958 = dma.done %s950, 64
        $region124: #{forward.1} parent=107 // pred_fallthru
          _
        // Predicated region
        $region125: #{forward.1} parent=107 // pred_check
          %p959 = pneg %p260
        $region126: #{forward.1} parent=107 // pred_check_branch
          %961 = sbr.rel (%p959) target = $region128
        $region127: #{forward.1} parent=107 // pred_region
          %963 = dma.done [#allocation11], 32768
        $region128: #{forward.1} parent=107 // pred_fallthru
          _
        // Predicated region
        $region129: #{forward.1} parent=107 // pred_check
          %p964 = pneg %p281
        $region130: #{forward.1} parent=107 // pred_check_branch
          %966 = sbr.rel (%p964) target = $region132
        $region131: #{forward.1} parent=107 // pred_region
          %968 = dma.done [#allocation14], 64
        $region132: #{forward.1} parent=107 // pred_fallthru
          _
        // Predicated region
        $region133: #{forward.1} parent=107 // pred_check
          %p969 = pneg %p302
        $region134: #{forward.1} parent=107 // pred_check_branch
          %971 = sbr.rel (%p969) target = $region136
        $region135: #{forward.1} parent=107 // pred_region
          %973 = dma.done [#allocation14], 8192
        $region136: #{forward.1} parent=107 // pred_fallthru
          _
        // Predicated region
        $region137: #{forward.1} parent=107 // pred_check
          %p974 = pneg %p323
        $region138: #{forward.1} parent=107 // pred_check_branch
          %976 = sbr.rel (%p974) target = $region140
        $region139: #{forward.1} parent=107 // pred_region
          %978 = dma.done [#allocation17], 32
        $region140: #{forward.1} parent=107 // pred_fallthru
          _
        // Predicated region
        $region141: #{forward.1} parent=107 // pred_check
          %p979 = pneg %p344
        $region142: #{forward.1} parent=107 // pred_check_branch
          %981 = sbr.rel (%p979) target = $region144
        $region143: #{forward.1} parent=107 // pred_region
          %983 = dma.done [#allocation17], 2048
        $region144: #{forward.1} parent=107 // pred_fallthru
          _
        // Predicated region
        $region145: #{forward.1} parent=107 // pred_check
          %p984 = pneg %p365
        $region146: #{forward.1} parent=107 // pred_check_branch
          %986 = sbr.rel (%p984) target = $region148
        $region147: #{forward.1} parent=107 // pred_region
          %988 = dma.done [#allocation20], 16
        $region148: #{forward.1} parent=107 // pred_fallthru
          _
        // Predicated region
        $region149: #{forward.1} parent=107 // pred_check
          %p989 = pneg %p386
        $region150: #{forward.1} parent=107 // pred_check_branch
          %991 = sbr.rel (%p989) target = $region152
        $region151: #{forward.1} parent=107 // pred_region
          %993 = dma.done [#allocation20], 2048
        $region152: #{forward.1} parent=107 // pred_fallthru
          _
        // Predicated region
        $region153: #{forward.1} parent=107 // pred_check
          %p994 = pneg %p407
        $region154: #{forward.1} parent=107 // pred_check_branch
          %996 = sbr.rel (%p994) target = $region156
        $region155: #{forward.1} parent=107 // pred_region
          %998 = dma.done [#allocation23], 32
        $region156: #{forward.1} parent=107 // pred_fallthru
          _
        // Predicated region
        $region157: #{forward.1} parent=107 // pred_check
          %p999 = pneg %p428
        $region158: #{forward.1} parent=107 // pred_check_branch
          %1001 = sbr.rel (%p999) target = $region160
        $region159: #{forward.1} parent=107 // pred_region
          %1003 = dma.done [#allocation23], 8192
        $region160: #{forward.1} parent=107 // pred_fallthru
          _
        // Predicated region
        $region161: #{forward.1} parent=107 // pred_check
          %p1004 = pneg %p449
        $region162: #{forward.1} parent=107 // pred_check_branch
          %1006 = sbr.rel (%p1004) target = $region164
        $region163: #{forward.1} parent=107 // pred_region
          %1008 = dma.done [#allocation26], 64
        $region164: #{forward.1} parent=107 // pred_fallthru
          _
        // Predicated region
        $region165: #{forward.1} parent=107 // pred_check
          %p1009 = pneg %p470
        $region166: #{forward.1} parent=107 // pred_check_branch
          %1011 = sbr.rel (%p1009) target = $region168
        $region167: #{forward.1} parent=107 // pred_region
          %1013 = dma.done [#allocation26], 32768
        $region168: #{forward.1} parent=107 // pred_fallthru
          _
        // Predicated region
        $region169: #{forward.1} parent=107 // pred_check
          %p1014 = pneg %p491
        $region170: #{forward.1} parent=107 // pred_check_branch
          %1016 = sbr.rel (%p1014) target = $region172
        $region171: #{forward.1} parent=107 // pred_region
          %1018 = dma.done [#allocation29], 128
        $region172: #{forward.1} parent=107 // pred_fallthru
          _
        // Predicated region
        $region173: #{forward.1} parent=107 // pred_check
          %p1019 = pneg %p512
        $region174: #{forward.1} parent=107 // pred_check_branch
          %1021 = sbr.rel (%p1019) target = $region176
        $region175: #{forward.1} parent=107 // pred_region
          %1023 = dma.done [#allocation29], 1024
        $region176: #{forward.1} parent=107 // pred_fallthru
          _
        // Predicated region
        $region177: #{forward.1} parent=107 // pred_check
          %p1024 = pneg %p533
        $region178: #{forward.1} parent=107 // pred_check_branch
          %1026 = sbr.rel (%p1024) target = $region180
        $region179: #{forward.1} parent=107 // pred_region
          %1028 = dma.done [#allocation32], 16
        $region180: #{forward.1} parent=107 // pred_fallthru
          _
        %p1029 = pneg %p72
        %p1030 = pneg %p69
        %p1031 = pneg %p93
        %p1032 = pneg %p90
        %s1033 = sand.u32 %s106, 1
        %s1034 = scalar_lea.sflag [#allocation5], %s1033
        %s1035 = sand.u32 %s106, 1
        %s1036 = smul.addr %s1035, 1536
        %s1037 = scalar_lea.vmem [#allocation4], %s1036
        %p1038 = pneg %p119
        %p1039 = pneg %p116
        %s1040 = sand.u32 %s56, 1
        %s1041 = scalar_lea.sflag [#allocation8], %s1040
        %s1042 = sand.u32 %s132, 1
        %s1043 = smul.addr %s1042, 4
        %s1044 = scalar_lea.vmem [#allocation7], %s1043
        %p1045 = pneg %p145
        %p1046 = pneg %p142
        %s1047 = sand.u32 %s56, 1
        %s1048 = scalar_lea.sflag [#allocation8], %s1047
        %s1049 = sand.u32 %s158, 1
        %s1050 = smul.addr %s1049, 1536
        %s1051 = scalar_lea.vmem [#allocation9], %s1050
        %p1052 = pneg %p171
        %p1053 = pneg %p168
        %s1054 = sand.u32 %s56, 1
        %s1055 = scalar_lea.sflag [#allocation11], %s1054
        %s1056 = sand.u32 %s184, 1
        %s1057 = smul.addr %s1056, 4
        %s1058 = scalar_lea.vmem [#allocation10], %s1057
        %p1059 = pneg %p197
        %p1060 = pneg %p194
        %p1061 = pneg %p218
        %p1062 = pneg %p215
        %p1063 = pneg %p239
        %p1064 = pneg %p236
        %p1065 = pneg %p260
        %p1066 = pneg %p257
        %p1067 = pneg %p281
        %p1068 = pneg %p278
        %p1069 = pneg %p302
        %p1070 = pneg %p299
        %p1071 = pneg %p323
        %p1072 = pneg %p320
        %p1073 = pneg %p344
        %p1074 = pneg %p341
        %p1075 = pneg %p365
        %p1076 = pneg %p362
        %p1077 = pneg %p386
        %p1078 = pneg %p383
        %p1079 = pneg %p407
        %p1080 = pneg %p404
        %p1081 = pneg %p428
        %p1082 = pneg %p425
        %p1083 = pneg %p449
        %p1084 = pneg %p446
        %p1085 = pneg %p470
        %p1086 = pneg %p467
        %p1087 = pneg %p491
        %p1088 = pneg %p488
        %p1089 = pneg %p512
        %p1090 = pneg %p509
        %p1091 = pneg %p533
        %p1092 = pneg %p530
        %p1093 = pneg %p554
        %p1094 = pneg %p551
        %p1095 = pneg %p575
        %p1096 = pneg %p572
        %p1097 = pneg %p596
        %p1098 = pneg %p593
        %p1099 = pneg %p617
        %p1100 = pneg %p614
        %s1101 = smul.u32 4, %s56
        %s1102 = smul.u32 4, %s56
        %s1103 = smul.u32 4, %s56
        %s1104 = smul.u32 4, %s56
        %v1105 = vld [vmem:[%s0] sm:$0xff]
        %v1106 = vld [vmem:[%s0 + $0x8] sm:$0xff]
        %v1107 = vld [vmem:[%s0 + $0x10] sm:$0xff]
        %v1108 = vld [vmem:[%s923] sm:$0xff]
        %v1109 = vld [vmem:[%s923 + $0x8] sm:$0xff]
        %v1110 = vld [vmem:[%s923 + $0x10] sm:$0xff]
        %v1111 = vld [vmem:[%s923 + $0x18] sm:$0xff]
        %v1112 = vld [vmem:[%s923 + $0x20] sm:$0xff]
        %v1113 = vld [vmem:[%s923 + $0x28] sm:$0xff]
        %v1114 = vld [vmem:[%s923 + $0x30] sm:$0xff]
        %v1115 = vld [vmem:[%s923 + $0x38] sm:$0xff]
        %v1116 = vld [vmem:[%s923 + $0x40] sm:$0xff]
        %v1117 = vld [vmem:[%s923 + $0x48] sm:$0xff]
        %v1118 = vld [vmem:[%s923 + $0x50] sm:$0xff]
        %v1119 = vld [vmem:[%s923 + $0x58] sm:$0xff]
        %v1120 = vld [vmem:[%s923 + $0x60] sm:$0xff]
        %v1121 = vld [vmem:[%s923 + $0x68] sm:$0xff]
        %v1122 = vld [vmem:[%s923 + $0x70] sm:$0xff]
        %v1123 = vld [vmem:[%s923 + $0x78] sm:$0xff]
        %v1124 = vld [vmem:[%s923 + $0x80] sm:$0xff]
        %v1125 = vld [vmem:[%s923 + $0x88] sm:$0xff]
        %v1126 = vld [vmem:[%s923 + $0x90] sm:$0xff]
        %v1127 = vld [vmem:[%s923 + $0x98] sm:$0xff]
        %v1128 = vld [vmem:[%s923 + $0xa0] sm:$0xff]
        %v1129 = vld [vmem:[%s923 + $0xa8] sm:$0xff]
        %v1130 = vld [vmem:[%s923 + $0xb0] sm:$0xff]
        %v1131 = vld [vmem:[%s923 + $0xb8] sm:$0xff]
        %v1132 = vld [vmem:[%s923 + $0xc0] sm:$0xff]
        %v1133 = vld [vmem:[%s923 + $0xc8] sm:$0xff]
        %v1134 = vld [vmem:[%s923 + $0xd0] sm:$0xff]
        %v1135 = vld [vmem:[%s923 + $0xd8] sm:$0xff]
        %v1136 = vld [vmem:[%s923 + $0xe0] sm:$0xff]
        %v1137 = vld [vmem:[%s923 + $0xe8] sm:$0xff]
        %v1138 = vld [vmem:[%s923 + $0xf0] sm:$0xff]
        %v1139 = vld [vmem:[%s923 + $0xf8] sm:$0xff]
        %v1140 = vld [vmem:[%s923 + $0x100] sm:$0xff]
        %v1141 = vld [vmem:[%s923 + $0x108] sm:$0xff]
        %v1142 = vld [vmem:[%s923 + $0x110] sm:$0xff]
        %v1143 = vld [vmem:[%s923 + $0x118] sm:$0xff]
        %v1144 = vld [vmem:[%s923 + $0x120] sm:$0xff]
        %v1145 = vld [vmem:[%s923 + $0x128] sm:$0xff]
        %v1146 = vld [vmem:[%s923 + $0x130] sm:$0xff]
        %v1147 = vld [vmem:[%s923 + $0x138] sm:$0xff]
        %v1148 = vld [vmem:[%s923 + $0x140] sm:$0xff]
        %v1149 = vld [vmem:[%s923 + $0x148] sm:$0xff]
        %v1150 = vld [vmem:[%s923 + $0x150] sm:$0xff]
        %v1151 = vld [vmem:[%s923 + $0x158] sm:$0xff]
        %v1152 = vld [vmem:[%s923 + $0x160] sm:$0xff]
        %v1153 = vld [vmem:[%s923 + $0x168] sm:$0xff]
        %v1154 = vld [vmem:[%s923 + $0x170] sm:$0xff]
        %v1155 = vld [vmem:[%s923 + $0x178] sm:$0xff]
        %v1156 = vld [vmem:[%s923 + $0x180] sm:$0xff]
        %v1157 = vld [vmem:[%s923 + $0x188] sm:$0xff]
        %v1158 = vld [vmem:[%s923 + $0x190] sm:$0xff]
        %v1159 = vld [vmem:[%s923 + $0x198] sm:$0xff]
        %v1160 = vld [vmem:[%s923 + $0x1a0] sm:$0xff]
        %v1161 = vld [vmem:[%s923 + $0x1a8] sm:$0xff]
        %v1162 = vld [vmem:[%s923 + $0x1b0] sm:$0xff]
        %v1163 = vld [vmem:[%s923 + $0x1b8] sm:$0xff]
        %v1164 = vld [vmem:[%s923 + $0x1c0] sm:$0xff]
        %v1165 = vld [vmem:[%s923 + $0x1c8] sm:$0xff]
        %v1166 = vld [vmem:[%s923 + $0x1d0] sm:$0xff]
        %v1167 = vld [vmem:[%s923 + $0x1d8] sm:$0xff]
        %v1168 = vld [vmem:[%s923 + $0x1e0] sm:$0xff]
        %v1169 = vld [vmem:[%s923 + $0x1e8] sm:$0xff]
        %v1170 = vld [vmem:[%s923 + $0x1f0] sm:$0xff]
        %v1171 = vld [vmem:[%s923 + $0x1f8] sm:$0xff]
        %v1172 = vld [vmem:[%s923 + $0x200] sm:$0xff]
        %v1173 = vld [vmem:[%s923 + $0x208] sm:$0xff]
        %v1174 = vld [vmem:[%s923 + $0x210] sm:$0xff]
        %v1175 = vld [vmem:[%s923 + $0x218] sm:$0xff]
        %v1176 = vld [vmem:[%s923 + $0x220] sm:$0xff]
        %v1177 = vld [vmem:[%s923 + $0x228] sm:$0xff]
        %v1178 = vld [vmem:[%s923 + $0x230] sm:$0xff]
        %v1179 = vld [vmem:[%s923 + $0x238] sm:$0xff]
        %v1180 = vld [vmem:[%s923 + $0x240] sm:$0xff]
        %v1181 = vld [vmem:[%s923 + $0x248] sm:$0xff]
        %v1182 = vld [vmem:[%s923 + $0x250] sm:$0xff]
        %v1183 = vld [vmem:[%s923 + $0x258] sm:$0xff]
        %v1184 = vld [vmem:[%s923 + $0x260] sm:$0xff]
        %v1185 = vld [vmem:[%s923 + $0x268] sm:$0xff]
        %v1186 = vld [vmem:[%s923 + $0x270] sm:$0xff]
        %v1187 = vld [vmem:[%s923 + $0x278] sm:$0xff]
        %v1188 = vld [vmem:[%s923 + $0x280] sm:$0xff]
        %v1189 = vld [vmem:[%s923 + $0x288] sm:$0xff]
        %v1190 = vld [vmem:[%s923 + $0x290] sm:$0xff]
        %v1191 = vld [vmem:[%s923 + $0x298] sm:$0xff]
        %v1192 = vld [vmem:[%s923 + $0x2a0] sm:$0xff]
        %v1193 = vld [vmem:[%s923 + $0x2a8] sm:$0xff]
        %v1194 = vld [vmem:[%s923 + $0x2b0] sm:$0xff]
        %v1195 = vld [vmem:[%s923 + $0x2b8] sm:$0xff]
        %v1196 = vld [vmem:[%s923 + $0x2c0] sm:$0xff]
        %v1197 = vld [vmem:[%s923 + $0x2c8] sm:$0xff]
        %v1198 = vld [vmem:[%s923 + $0x2d0] sm:$0xff]
        %v1199 = vld [vmem:[%s923 + $0x2d8] sm:$0xff]
        %v1200 = vld [vmem:[%s923 + $0x2e0] sm:$0xff]
        %v1201 = vld [vmem:[%s923 + $0x2e8] sm:$0xff]
        %v1202 = vld [vmem:[%s923 + $0x2f0] sm:$0xff]
        %v1203 = vld [vmem:[%s923 + $0x2f8] sm:$0xff]
        %v1204 = vld [vmem:[%s923 + $0x300] sm:$0xff]
        %v1205 = vld [vmem:[%s923 + $0x308] sm:$0xff]
        %v1206 = vld [vmem:[%s923 + $0x310] sm:$0xff]
        %v1207 = vld [vmem:[%s923 + $0x318] sm:$0xff]
        %v1208 = vld [vmem:[%s923 + $0x320] sm:$0xff]
        %v1209 = vld [vmem:[%s923 + $0x328] sm:$0xff]
        %v1210 = vld [vmem:[%s923 + $0x330] sm:$0xff]
        %v1211 = vld [vmem:[%s923 + $0x338] sm:$0xff]
        %v1212 = vld [vmem:[%s923 + $0x340] sm:$0xff]
        %v1213 = vld [vmem:[%s923 + $0x348] sm:$0xff]
        %v1214 = vld [vmem:[%s923 + $0x350] sm:$0xff]
        %v1215 = vld [vmem:[%s923 + $0x358] sm:$0xff]
        %v1216 = vld [vmem:[%s923 + $0x360] sm:$0xff]
        %v1217 = vld [vmem:[%s923 + $0x368] sm:$0xff]
        %v1218 = vld [vmem:[%s923 + $0x370] sm:$0xff]
        %v1219 = vld [vmem:[%s923 + $0x378] sm:$0xff]
        %v1220 = vld [vmem:[%s923 + $0x380] sm:$0xff]
        %v1221 = vld [vmem:[%s923 + $0x388] sm:$0xff]
        %v1222 = vld [vmem:[%s923 + $0x390] sm:$0xff]
        %v1223 = vld [vmem:[%s923 + $0x398] sm:$0xff]
        %v1224 = vld [vmem:[%s923 + $0x3a0] sm:$0xff]
        %v1225 = vld [vmem:[%s923 + $0x3a8] sm:$0xff]
        %v1226 = vld [vmem:[%s923 + $0x3b0] sm:$0xff]
        %v1227 = vld [vmem:[%s923 + $0x3b8] sm:$0xff]
        %v1228 = vld [vmem:[%s923 + $0x3c0] sm:$0xff]
        %v1229 = vld [vmem:[%s923 + $0x3c8] sm:$0xff]
        %v1230 = vld [vmem:[%s923 + $0x3d0] sm:$0xff]
        %v1231 = vld [vmem:[%s923 + $0x3d8] sm:$0xff]
        %v1232 = vld [vmem:[%s923 + $0x3e0] sm:$0xff]
        %v1233 = vld [vmem:[%s923 + $0x3e8] sm:$0xff]
        %v1234 = vld [vmem:[%s923 + $0x3f0] sm:$0xff]
        %v1235 = vld [vmem:[%s923 + $0x3f8] sm:$0xff]
        %v1236 = vld [vmem:[%s923 + $0x400] sm:$0xff]
        %v1237 = vld [vmem:[%s923 + $0x408] sm:$0xff]
        %v1238 = vld [vmem:[%s923 + $0x410] sm:$0xff]
        %v1239 = vld [vmem:[%s923 + $0x418] sm:$0xff]
        %v1240 = vld [vmem:[%s923 + $0x420] sm:$0xff]
        %v1241 = vld [vmem:[%s923 + $0x428] sm:$0xff]
        %v1242 = vld [vmem:[%s923 + $0x430] sm:$0xff]
        %v1243 = vld [vmem:[%s923 + $0x438] sm:$0xff]
        %v1244 = vld [vmem:[%s923 + $0x440] sm:$0xff]
        %v1245 = vld [vmem:[%s923 + $0x448] sm:$0xff]
        %v1246 = vld [vmem:[%s923 + $0x450] sm:$0xff]
        %v1247 = vld [vmem:[%s923 + $0x458] sm:$0xff]
        %v1248 = vld [vmem:[%s923 + $0x460] sm:$0xff]
        %v1249 = vld [vmem:[%s923 + $0x468] sm:$0xff]
        %v1250 = vld [vmem:[%s923 + $0x470] sm:$0xff]
        %v1251 = vld [vmem:[%s923 + $0x478] sm:$0xff]
        %v1252 = vld [vmem:[%s923 + $0x480] sm:$0xff]
        %v1253 = vld [vmem:[%s923 + $0x488] sm:$0xff]
        %v1254 = vld [vmem:[%s923 + $0x490] sm:$0xff]
        %v1255 = vld [vmem:[%s923 + $0x498] sm:$0xff]
        %v1256 = vld [vmem:[%s923 + $0x4a0] sm:$0xff]
        %v1257 = vld [vmem:[%s923 + $0x4a8] sm:$0xff]
        %v1258 = vld [vmem:[%s923 + $0x4b0] sm:$0xff]
        %v1259 = vld [vmem:[%s923 + $0x4b8] sm:$0xff]
        %v1260 = vld [vmem:[%s923 + $0x4c0] sm:$0xff]
        %v1261 = vld [vmem:[%s923 + $0x4c8] sm:$0xff]
        %v1262 = vld [vmem:[%s923 + $0x4d0] sm:$0xff]
        %v1263 = vld [vmem:[%s923 + $0x4d8] sm:$0xff]
        %v1264 = vld [vmem:[%s923 + $0x4e0] sm:$0xff]
        %v1265 = vld [vmem:[%s923 + $0x4e8] sm:$0xff]
        %v1266 = vld [vmem:[%s923 + $0x4f0] sm:$0xff]
        %v1267 = vld [vmem:[%s923 + $0x4f8] sm:$0xff]
        %v1268 = vld [vmem:[%s923 + $0x500] sm:$0xff]
        %v1269 = vld [vmem:[%s923 + $0x508] sm:$0xff]
        %v1270 = vld [vmem:[%s923 + $0x510] sm:$0xff]
        %v1271 = vld [vmem:[%s923 + $0x518] sm:$0xff]
        %v1272 = vld [vmem:[%s923 + $0x520] sm:$0xff]
        %v1273 = vld [vmem:[%s923 + $0x528] sm:$0xff]
        %v1274 = vld [vmem:[%s923 + $0x530] sm:$0xff]
        %v1275 = vld [vmem:[%s923 + $0x538] sm:$0xff]
        %v1276 = vld [vmem:[%s923 + $0x540] sm:$0xff]
        %v1277 = vld [vmem:[%s923 + $0x548] sm:$0xff]
        %v1278 = vld [vmem:[%s923 + $0x550] sm:$0xff]
        %v1279 = vld [vmem:[%s923 + $0x558] sm:$0xff]
        %v1280 = vld [vmem:[%s923 + $0x560] sm:$0xff]
        %v1281 = vld [vmem:[%s923 + $0x568] sm:$0xff]
        %v1282 = vld [vmem:[%s923 + $0x570] sm:$0xff]
        %v1283 = vld [vmem:[%s923 + $0x578] sm:$0xff]
        %v1284 = vld [vmem:[%s923 + $0x580] sm:$0xff]
        %v1285 = vld [vmem:[%s923 + $0x588] sm:$0xff]
        %v1286 = vld [vmem:[%s923 + $0x590] sm:$0xff]
        %v1287 = vld [vmem:[%s923 + $0x598] sm:$0xff]
        %v1288 = vld [vmem:[%s923 + $0x5a0] sm:$0xff]
        %v1289 = vld [vmem:[%s923 + $0x5a8] sm:$0xff]
        %v1290 = vld [vmem:[%s923 + $0x5b0] sm:$0xff]
        %v1291 = vld [vmem:[%s923 + $0x5b8] sm:$0xff]
        %v1292 = vld [vmem:[%s923 + $0x5c0] sm:$0xff]
        %v1293 = vld [vmem:[%s923 + $0x5c8] sm:$0xff]
        %v1294 = vld [vmem:[%s923 + $0x5d0] sm:$0xff]
        %v1295 = vld [vmem:[%s923 + $0x5d8] sm:$0xff]
        %v1296 = vld [vmem:[%s923 + $0x5e0] sm:$0xff]
        %v1297 = vld [vmem:[%s923 + $0x5e8] sm:$0xff]
        %v1298 = vld [vmem:[%s923 + $0x5f0] sm:$0xff]
        %v1299 = vld [vmem:[%s923 + $0x5f8] sm:$0xff]
        %v1300 = vld [vmem:[%s933] sm:$0xf]
        %v1302 = vperm.slane %v1300, 0
        %v1303 = vperm.slane %v1300, 1
        %v1304 = vperm.slane %v1300, 2
        %v1305 = vperm.slane %v1300, 3
        %v1313 = vunpack.c.l.b16 %v1105
        %v1314 = vunpack.c.h.b16 %v1105
        %v1315 = vunpack.c.l.b16 %v1106
        %v1316 = vunpack.c.h.b16 %v1106
        %v1317 = vunpack.c.l.b16 %v1107
        %v1318 = vunpack.c.h.b16 %v1107
        %v1319 = vpack.c.b16 %v1313, %v1313
        %v1320 = vpack.c.b16 %v1314, %v1314
        %v1321 = vpack.c.b16 %v1315, %v1315
        %v1322 = vpack.c.b16 %v1316, %v1316
        %v1323 = vpack.c.b16 %v1317, %v1317
        %v1324 = vpack.c.b16 %v1318, %v1318
        %v1523 = vunpack.c.l.b16 %v1108
        %v1524 = vunpack.c.h.b16 %v1108
        %v1525 = vunpack.c.l.b16 %v1109
        %v1526 = vunpack.c.h.b16 %v1109
        %v1527 = vunpack.c.l.b16 %v1110
        %v1528 = vunpack.c.h.b16 %v1110
        %v1529 = vunpack.c.l.b16 %v1111
        %v1530 = vunpack.c.h.b16 %v1111
        %v1531 = vunpack.c.l.b16 %v1112
        %v1532 = vunpack.c.h.b16 %v1112
        %v1533 = vunpack.c.l.b16 %v1113
        %v1534 = vunpack.c.h.b16 %v1113
        %v1535 = vunpack.c.l.b16 %v1114
        %v1536 = vunpack.c.h.b16 %v1114
        %v1537 = vunpack.c.l.b16 %v1115
        %v1538 = vunpack.c.h.b16 %v1115
        %v1539 = vunpack.c.l.b16 %v1116
        %v1540 = vunpack.c.h.b16 %v1116
        %v1541 = vunpack.c.l.b16 %v1117
        %v1542 = vunpack.c.h.b16 %v1117
        %v1543 = vunpack.c.l.b16 %v1118
        %v1544 = vunpack.c.h.b16 %v1118
        %v1545 = vunpack.c.l.b16 %v1119
        %v1546 = vunpack.c.h.b16 %v1119
        %v1547 = vunpack.c.l.b16 %v1120
        %v1548 = vunpack.c.h.b16 %v1120
        %v1549 = vunpack.c.l.b16 %v1121
        %v1550 = vunpack.c.h.b16 %v1121
        %v1551 = vunpack.c.l.b16 %v1122
        %v1552 = vunpack.c.h.b16 %v1122
        %v1553 = vunpack.c.l.b16 %v1123
        %v1554 = vunpack.c.h.b16 %v1123
        %v1555 = vunpack.c.l.b16 %v1124
        %v1556 = vunpack.c.h.b16 %v1124
        %v1557 = vunpack.c.l.b16 %v1125
        %v1558 = vunpack.c.h.b16 %v1125
        %v1559 = vunpack.c.l.b16 %v1126
        %v1560 = vunpack.c.h.b16 %v1126
        %v1561 = vunpack.c.l.b16 %v1127
        %v1562 = vunpack.c.h.b16 %v1127
        %v1563 = vunpack.c.l.b16 %v1128
        %v1564 = vunpack.c.h.b16 %v1128
        %v1565 = vunpack.c.l.b16 %v1129
        %v1566 = vunpack.c.h.b16 %v1129
        %v1567 = vunpack.c.l.b16 %v1130
        %v1568 = vunpack.c.h.b16 %v1130
        %v1569 = vunpack.c.l.b16 %v1131
        %v1570 = vunpack.c.h.b16 %v1131
        %v1571 = vunpack.c.l.b16 %v1132
        %v1572 = vunpack.c.h.b16 %v1132
        %v1573 = vunpack.c.l.b16 %v1133
        %v1574 = vunpack.c.h.b16 %v1133
        %v1575 = vunpack.c.l.b16 %v1134
        %v1576 = vunpack.c.h.b16 %v1134
        %v1577 = vunpack.c.l.b16 %v1135
        %v1578 = vunpack.c.h.b16 %v1135
        %v1579 = vunpack.c.l.b16 %v1136
        %v1580 = vunpack.c.h.b16 %v1136
        %v1581 = vunpack.c.l.b16 %v1137
        %v1582 = vunpack.c.h.b16 %v1137
        %v1583 = vunpack.c.l.b16 %v1138
        %v1584 = vunpack.c.h.b16 %v1138
        %v1585 = vunpack.c.l.b16 %v1139
        %v1586 = vunpack.c.h.b16 %v1139
        %v1587 = vunpack.c.l.b16 %v1140
        %v1588 = vunpack.c.h.b16 %v1140
        %v1589 = vunpack.c.l.b16 %v1141
        %v1590 = vunpack.c.h.b16 %v1141
        %v1591 = vunpack.c.l.b16 %v1142
        %v1592 = vunpack.c.h.b16 %v1142
        %v1593 = vunpack.c.l.b16 %v1143
        %v1594 = vunpack.c.h.b16 %v1143
        %v1595 = vunpack.c.l.b16 %v1144
        %v1596 = vunpack.c.h.b16 %v1144
        %v1597 = vunpack.c.l.b16 %v1145
        %v1598 = vunpack.c.h.b16 %v1145
        %v1599 = vunpack.c.l.b16 %v1146
        %v1600 = vunpack.c.h.b16 %v1146
        %v1601 = vunpack.c.l.b16 %v1147
        %v1602 = vunpack.c.h.b16 %v1147
        %v1603 = vunpack.c.l.b16 %v1148
        %v1604 = vunpack.c.h.b16 %v1148
        %v1605 = vunpack.c.l.b16 %v1149
        %v1606 = vunpack.c.h.b16 %v1149
        %v1607 = vunpack.c.l.b16 %v1150
        %v1608 = vunpack.c.h.b16 %v1150
        %v1609 = vunpack.c.l.b16 %v1151
        %v1610 = vunpack.c.h.b16 %v1151
        %v1611 = vunpack.c.l.b16 %v1152
        %v1612 = vunpack.c.h.b16 %v1152
        %v1613 = vunpack.c.l.b16 %v1153
        %v1614 = vunpack.c.h.b16 %v1153
        %v1615 = vunpack.c.l.b16 %v1154
        %v1616 = vunpack.c.h.b16 %v1154
        %v1617 = vunpack.c.l.b16 %v1155
        %v1618 = vunpack.c.h.b16 %v1155
        %v1619 = vunpack.c.l.b16 %v1156
        %v1620 = vunpack.c.h.b16 %v1156
        %v1621 = vunpack.c.l.b16 %v1157
        %v1622 = vunpack.c.h.b16 %v1157
        %v1623 = vunpack.c.l.b16 %v1158
        %v1624 = vunpack.c.h.b16 %v1158
        %v1625 = vunpack.c.l.b16 %v1159
        %v1626 = vunpack.c.h.b16 %v1159
        %v1627 = vunpack.c.l.b16 %v1160
        %v1628 = vunpack.c.h.b16 %v1160
        %v1629 = vunpack.c.l.b16 %v1161
        %v1630 = vunpack.c.h.b16 %v1161
        %v1631 = vunpack.c.l.b16 %v1162
        %v1632 = vunpack.c.h.b16 %v1162
        %v1633 = vunpack.c.l.b16 %v1163
        %v1634 = vunpack.c.h.b16 %v1163
        %v1635 = vunpack.c.l.b16 %v1164
        %v1636 = vunpack.c.h.b16 %v1164
        %v1637 = vunpack.c.l.b16 %v1165
        %v1638 = vunpack.c.h.b16 %v1165
        %v1639 = vunpack.c.l.b16 %v1166
        %v1640 = vunpack.c.h.b16 %v1166
        %v1641 = vunpack.c.l.b16 %v1167
        %v1642 = vunpack.c.h.b16 %v1167
        %v1643 = vunpack.c.l.b16 %v1168
        %v1644 = vunpack.c.h.b16 %v1168
        %v1645 = vunpack.c.l.b16 %v1169
        %v1646 = vunpack.c.h.b16 %v1169
        %v1647 = vunpack.c.l.b16 %v1170
        %v1648 = vunpack.c.h.b16 %v1170
        %v1649 = vunpack.c.l.b16 %v1171
        %v1650 = vunpack.c.h.b16 %v1171
        %v1651 = vunpack.c.l.b16 %v1172
        %v1652 = vunpack.c.h.b16 %v1172
        %v1653 = vunpack.c.l.b16 %v1173
        %v1654 = vunpack.c.h.b16 %v1173
        %v1655 = vunpack.c.l.b16 %v1174
        %v1656 = vunpack.c.h.b16 %v1174
        %v1657 = vunpack.c.l.b16 %v1175
        %v1658 = vunpack.c.h.b16 %v1175
        %v1659 = vunpack.c.l.b16 %v1176
        %v1660 = vunpack.c.h.b16 %v1176
        %v1661 = vunpack.c.l.b16 %v1177
        %v1662 = vunpack.c.h.b16 %v1177
        %v1663 = vunpack.c.l.b16 %v1178
        %v1664 = vunpack.c.h.b16 %v1178
        %v1665 = vunpack.c.l.b16 %v1179
        %v1666 = vunpack.c.h.b16 %v1179
        %v1667 = vunpack.c.l.b16 %v1180
        %v1668 = vunpack.c.h.b16 %v1180
        %v1669 = vunpack.c.l.b16 %v1181
        %v1670 = vunpack.c.h.b16 %v1181
        %v1671 = vunpack.c.l.b16 %v1182
        %v1672 = vunpack.c.h.b16 %v1182
        %v1673 = vunpack.c.l.b16 %v1183
        %v1674 = vunpack.c.h.b16 %v1183
        %v1675 = vunpack.c.l.b16 %v1184
        %v1676 = vunpack.c.h.b16 %v1184
        %v1677 = vunpack.c.l.b16 %v1185
        %v1678 = vunpack.c.h.b16 %v1185
        %v1679 = vunpack.c.l.b16 %v1186
        %v1680 = vunpack.c.h.b16 %v1186
        %v1681 = vunpack.c.l.b16 %v1187
        %v1682 = vunpack.c.h.b16 %v1187
        %v1683 = vunpack.c.l.b16 %v1188
        %v1684 = vunpack.c.h.b16 %v1188
        %v1685 = vunpack.c.l.b16 %v1189
        %v1686 = vunpack.c.h.b16 %v1189
        %v1687 = vunpack.c.l.b16 %v1190
        %v1688 = vunpack.c.h.b16 %v1190
        %v1689 = vunpack.c.l.b16 %v1191
        %v1690 = vunpack.c.h.b16 %v1191
        %v1691 = vunpack.c.l.b16 %v1192
        %v1692 = vunpack.c.h.b16 %v1192
        %v1693 = vunpack.c.l.b16 %v1193
        %v1694 = vunpack.c.h.b16 %v1193
        %v1695 = vunpack.c.l.b16 %v1194
        %v1696 = vunpack.c.h.b16 %v1194
        %v1697 = vunpack.c.l.b16 %v1195
        %v1698 = vunpack.c.h.b16 %v1195
        %v1699 = vunpack.c.l.b16 %v1196
        %v1700 = vunpack.c.h.b16 %v1196
        %v1701 = vunpack.c.l.b16 %v1197
        %v1702 = vunpack.c.h.b16 %v1197
        %v1703 = vunpack.c.l.b16 %v1198
        %v1704 = vunpack.c.h.b16 %v1198
        %v1705 = vunpack.c.l.b16 %v1199
        %v1706 = vunpack.c.h.b16 %v1199
        %v1707 = vunpack.c.l.b16 %v1200
        %v1708 = vunpack.c.h.b16 %v1200
        %v1709 = vunpack.c.l.b16 %v1201
        %v1710 = vunpack.c.h.b16 %v1201
        %v1711 = vunpack.c.l.b16 %v1202
        %v1712 = vunpack.c.h.b16 %v1202
        %v1713 = vunpack.c.l.b16 %v1203
        %v1714 = vunpack.c.h.b16 %v1203
        %v1715 = vunpack.c.l.b16 %v1204
        %v1716 = vunpack.c.h.b16 %v1204
        %v1717 = vunpack.c.l.b16 %v1205
        %v1718 = vunpack.c.h.b16 %v1205
        %v1719 = vunpack.c.l.b16 %v1206
        %v1720 = vunpack.c.h.b16 %v1206
        %v1721 = vunpack.c.l.b16 %v1207
        %v1722 = vunpack.c.h.b16 %v1207
        %v1723 = vunpack.c.l.b16 %v1208
        %v1724 = vunpack.c.h.b16 %v1208
        %v1725 = vunpack.c.l.b16 %v1209
        %v1726 = vunpack.c.h.b16 %v1209
        %v1727 = vunpack.c.l.b16 %v1210
        %v1728 = vunpack.c.h.b16 %v1210
        %v1729 = vunpack.c.l.b16 %v1211
        %v1730 = vunpack.c.h.b16 %v1211
        %v1731 = vunpack.c.l.b16 %v1212
        %v1732 = vunpack.c.h.b16 %v1212
        %v1733 = vunpack.c.l.b16 %v1213
        %v1734 = vunpack.c.h.b16 %v1213
        %v1735 = vunpack.c.l.b16 %v1214
        %v1736 = vunpack.c.h.b16 %v1214
        %v1737 = vunpack.c.l.b16 %v1215
        %v1738 = vunpack.c.h.b16 %v1215
        %v1739 = vunpack.c.l.b16 %v1216
        %v1740 = vunpack.c.h.b16 %v1216
        %v1741 = vunpack.c.l.b16 %v1217
        %v1742 = vunpack.c.h.b16 %v1217
        %v1743 = vunpack.c.l.b16 %v1218
        %v1744 = vunpack.c.h.b16 %v1218
        %v1745 = vunpack.c.l.b16 %v1219
        %v1746 = vunpack.c.h.b16 %v1219
        %v1747 = vunpack.c.l.b16 %v1220
        %v1748 = vunpack.c.h.b16 %v1220
        %v1749 = vunpack.c.l.b16 %v1221
        %v1750 = vunpack.c.h.b16 %v1221
        %v1751 = vunpack.c.l.b16 %v1222
        %v1752 = vunpack.c.h.b16 %v1222
        %v1753 = vunpack.c.l.b16 %v1223
        %v1754 = vunpack.c.h.b16 %v1223
        %v1755 = vunpack.c.l.b16 %v1224
        %v1756 = vunpack.c.h.b16 %v1224
        %v1757 = vunpack.c.l.b16 %v1225
        %v1758 = vunpack.c.h.b16 %v1225
        %v1759 = vunpack.c.l.b16 %v1226
        %v1760 = vunpack.c.h.b16 %v1226
        %v1761 = vunpack.c.l.b16 %v1227
        %v1762 = vunpack.c.h.b16 %v1227
        %v1763 = vunpack.c.l.b16 %v1228
        %v1764 = vunpack.c.h.b16 %v1228
        %v1765 = vunpack.c.l.b16 %v1229
        %v1766 = vunpack.c.h.b16 %v1229
        %v1767 = vunpack.c.l.b16 %v1230
        %v1768 = vunpack.c.h.b16 %v1230
        %v1769 = vunpack.c.l.b16 %v1231
        %v1770 = vunpack.c.h.b16 %v1231
        %v1771 = vunpack.c.l.b16 %v1232
        %v1772 = vunpack.c.h.b16 %v1232
        %v1773 = vunpack.c.l.b16 %v1233
        %v1774 = vunpack.c.h.b16 %v1233
        %v1775 = vunpack.c.l.b16 %v1234
        %v1776 = vunpack.c.h.b16 %v1234
        %v1777 = vunpack.c.l.b16 %v1235
        %v1778 = vunpack.c.h.b16 %v1235
        %v1779 = vunpack.c.l.b16 %v1236
        %v1780 = vunpack.c.h.b16 %v1236
        %v1781 = vunpack.c.l.b16 %v1237
        %v1782 = vunpack.c.h.b16 %v1237
        %v1783 = vunpack.c.l.b16 %v1238
        %v1784 = vunpack.c.h.b16 %v1238
        %v1785 = vunpack.c.l.b16 %v1239
        %v1786 = vunpack.c.h.b16 %v1239
        %v1787 = vunpack.c.l.b16 %v1240
        %v1788 = vunpack.c.h.b16 %v1240
        %v1789 = vunpack.c.l.b16 %v1241
        %v1790 = vunpack.c.h.b16 %v1241
        %v1791 = vunpack.c.l.b16 %v1242
        %v1792 = vunpack.c.h.b16 %v1242
        %v1793 = vunpack.c.l.b16 %v1243
        %v1794 = vunpack.c.h.b16 %v1243
        %v1795 = vunpack.c.l.b16 %v1244
        %v1796 = vunpack.c.h.b16 %v1244
        %v1797 = vunpack.c.l.b16 %v1245
        %v1798 = vunpack.c.h.b16 %v1245
        %v1799 = vunpack.c.l.b16 %v1246
        %v1800 = vunpack.c.h.b16 %v1246
        %v1801 = vunpack.c.l.b16 %v1247
        %v1802 = vunpack.c.h.b16 %v1247
        %v1803 = vunpack.c.l.b16 %v1248
        %v1804 = vunpack.c.h.b16 %v1248
        %v1805 = vunpack.c.l.b16 %v1249
        %v1806 = vunpack.c.h.b16 %v1249
        %v1807 = vunpack.c.l.b16 %v1250
        %v1808 = vunpack.c.h.b16 %v1250
        %v1809 = vunpack.c.l.b16 %v1251
        %v1810 = vunpack.c.h.b16 %v1251
        %v1811 = vunpack.c.l.b16 %v1252
        %v1812 = vunpack.c.h.b16 %v1252
        %v1813 = vunpack.c.l.b16 %v1253
        %v1814 = vunpack.c.h.b16 %v1253
        %v1815 = vunpack.c.l.b16 %v1254
        %v1816 = vunpack.c.h.b16 %v1254
        %v1817 = vunpack.c.l.b16 %v1255
        %v1818 = vunpack.c.h.b16 %v1255
        %v1819 = vunpack.c.l.b16 %v1256
        %v1820 = vunpack.c.h.b16 %v1256
        %v1821 = vunpack.c.l.b16 %v1257
        %v1822 = vunpack.c.h.b16 %v1257
        %v1823 = vunpack.c.l.b16 %v1258
        %v1824 = vunpack.c.h.b16 %v1258
        %v1825 = vunpack.c.l.b16 %v1259
        %v1826 = vunpack.c.h.b16 %v1259
        %v1827 = vunpack.c.l.b16 %v1260
        %v1828 = vunpack.c.h.b16 %v1260
        %v1829 = vunpack.c.l.b16 %v1261
        %v1830 = vunpack.c.h.b16 %v1261
        %v1831 = vunpack.c.l.b16 %v1262
        %v1832 = vunpack.c.h.b16 %v1262
        %v1833 = vunpack.c.l.b16 %v1263
        %v1834 = vunpack.c.h.b16 %v1263
        %v1835 = vunpack.c.l.b16 %v1264
        %v1836 = vunpack.c.h.b16 %v1264
        %v1837 = vunpack.c.l.b16 %v1265
        %v1838 = vunpack.c.h.b16 %v1265
        %v1839 = vunpack.c.l.b16 %v1266
        %v1840 = vunpack.c.h.b16 %v1266
        %v1841 = vunpack.c.l.b16 %v1267
        %v1842 = vunpack.c.h.b16 %v1267
        %v1843 = vunpack.c.l.b16 %v1268
        %v1844 = vunpack.c.h.b16 %v1268
        %v1845 = vunpack.c.l.b16 %v1269
        %v1846 = vunpack.c.h.b16 %v1269
        %v1847 = vunpack.c.l.b16 %v1270
        %v1848 = vunpack.c.h.b16 %v1270
        %v1849 = vunpack.c.l.b16 %v1271
        %v1850 = vunpack.c.h.b16 %v1271
        %v1851 = vunpack.c.l.b16 %v1272
        %v1852 = vunpack.c.h.b16 %v1272
        %v1853 = vunpack.c.l.b16 %v1273
        %v1854 = vunpack.c.h.b16 %v1273
        %v1855 = vunpack.c.l.b16 %v1274
        %v1856 = vunpack.c.h.b16 %v1274
        %v1857 = vunpack.c.l.b16 %v1275
        %v1858 = vunpack.c.h.b16 %v1275
        %v1859 = vunpack.c.l.b16 %v1276
        %v1860 = vunpack.c.h.b16 %v1276
        %v1861 = vunpack.c.l.b16 %v1277
        %v1862 = vunpack.c.h.b16 %v1277
        %v1863 = vunpack.c.l.b16 %v1278
        %v1864 = vunpack.c.h.b16 %v1278
        %v1865 = vunpack.c.l.b16 %v1279
        %v1866 = vunpack.c.h.b16 %v1279
        %v1867 = vunpack.c.l.b16 %v1280
        %v1868 = vunpack.c.h.b16 %v1280
        %v1869 = vunpack.c.l.b16 %v1281
        %v1870 = vunpack.c.h.b16 %v1281
        %v1871 = vunpack.c.l.b16 %v1282
        %v1872 = vunpack.c.h.b16 %v1282
        %v1873 = vunpack.c.l.b16 %v1283
        %v1874 = vunpack.c.h.b16 %v1283
        %v1875 = vunpack.c.l.b16 %v1284
        %v1876 = vunpack.c.h.b16 %v1284
        %v1877 = vunpack.c.l.b16 %v1285
        %v1878 = vunpack.c.h.b16 %v1285
        %v1879 = vunpack.c.l.b16 %v1286
        %v1880 = vunpack.c.h.b16 %v1286
        %v1881 = vunpack.c.l.b16 %v1287
        %v1882 = vunpack.c.h.b16 %v1287
        %v1883 = vunpack.c.l.b16 %v1288
        %v1884 = vunpack.c.h.b16 %v1288
        %v1885 = vunpack.c.l.b16 %v1289
        %v1886 = vunpack.c.h.b16 %v1289
        %v1887 = vunpack.c.l.b16 %v1290
        %v1888 = vunpack.c.h.b16 %v1290
        %v1889 = vunpack.c.l.b16 %v1291
        %v1890 = vunpack.c.h.b16 %v1291
        %v1891 = vunpack.c.l.b16 %v1292
        %v1892 = vunpack.c.h.b16 %v1292
        %v1893 = vunpack.c.l.b16 %v1293
        %v1894 = vunpack.c.h.b16 %v1293
        %v1895 = vunpack.c.l.b16 %v1294
        %v1896 = vunpack.c.h.b16 %v1294
        %v1897 = vunpack.c.l.b16 %v1295
        %v1898 = vunpack.c.h.b16 %v1295
        %v1899 = vunpack.c.l.b16 %v1296
        %v1900 = vunpack.c.h.b16 %v1296
        %v1901 = vunpack.c.l.b16 %v1297
        %v1902 = vunpack.c.h.b16 %v1297
        %v1903 = vunpack.c.l.b16 %v1298
        %v1904 = vunpack.c.h.b16 %v1298
        %v1905 = vunpack.c.l.b16 %v1299
        %v1906 = vunpack.c.h.b16 %v1299
        %v1907 = vpack.c.b16 %v1527, %v1523
        %v1908 = vpack.c.b16 %v1528, %v1524
        %v1909 = vpack.c.b16 %v1529, %v1525
        %v1910 = vpack.c.b16 %v1530, %v1526
        %v1911 = vpack.c.b16 %v1535, %v1531
        %v1912 = vpack.c.b16 %v1536, %v1532
        %v1913 = vpack.c.b16 %v1537, %v1533
        %v1914 = vpack.c.b16 %v1538, %v1534
        %v1915 = vpack.c.b16 %v1543, %v1539
        %v1916 = vpack.c.b16 %v1544, %v1540
        %v1917 = vpack.c.b16 %v1545, %v1541
        %v1918 = vpack.c.b16 %v1546, %v1542
        %v1919 = vpack.c.b16 %v1551, %v1547
        %v1920 = vpack.c.b16 %v1552, %v1548
        %v1921 = vpack.c.b16 %v1553, %v1549
        %v1922 = vpack.c.b16 %v1554, %v1550
        %v1923 = vpack.c.b16 %v1559, %v1555
        %v1924 = vpack.c.b16 %v1560, %v1556
        %v1925 = vpack.c.b16 %v1561, %v1557
        %v1926 = vpack.c.b16 %v1562, %v1558
        %v1927 = vpack.c.b16 %v1567, %v1563
        %v1928 = vpack.c.b16 %v1568, %v1564
        %v1929 = vpack.c.b16 %v1569, %v1565
        %v1930 = vpack.c.b16 %v1570, %v1566
        %v1931 = vpack.c.b16 %v1575, %v1571
        %v1932 = vpack.c.b16 %v1576, %v1572
        %v1933 = vpack.c.b16 %v1577, %v1573
        %v1934 = vpack.c.b16 %v1578, %v1574
        %v1935 = vpack.c.b16 %v1583, %v1579
        %v1936 = vpack.c.b16 %v1584, %v1580
        %v1937 = vpack.c.b16 %v1585, %v1581
        %v1938 = vpack.c.b16 %v1586, %v1582
        %v1939 = vpack.c.b16 %v1591, %v1587
        %v1940 = vpack.c.b16 %v1592, %v1588
        %v1941 = vpack.c.b16 %v1593, %v1589
        %v1942 = vpack.c.b16 %v1594, %v1590
        %v1943 = vpack.c.b16 %v1599, %v1595
        %v1944 = vpack.c.b16 %v1600, %v1596
        %v1945 = vpack.c.b16 %v1601, %v1597
        %v1946 = vpack.c.b16 %v1602, %v1598
        %v1947 = vpack.c.b16 %v1607, %v1603
        %v1948 = vpack.c.b16 %v1608, %v1604
        %v1949 = vpack.c.b16 %v1609, %v1605
        %v1950 = vpack.c.b16 %v1610, %v1606
        %v1951 = vpack.c.b16 %v1615, %v1611
        %v1952 = vpack.c.b16 %v1616, %v1612
        %v1953 = vpack.c.b16 %v1617, %v1613
        %v1954 = vpack.c.b16 %v1618, %v1614
        %v1955 = vpack.c.b16 %v1623, %v1619
        %v1956 = vpack.c.b16 %v1624, %v1620
        %v1957 = vpack.c.b16 %v1625, %v1621
        %v1958 = vpack.c.b16 %v1626, %v1622
        %v1959 = vpack.c.b16 %v1631, %v1627
        %v1960 = vpack.c.b16 %v1632, %v1628
        %v1961 = vpack.c.b16 %v1633, %v1629
        %v1962 = vpack.c.b16 %v1634, %v1630
        %v1963 = vpack.c.b16 %v1639, %v1635
        %v1964 = vpack.c.b16 %v1640, %v1636
        %v1965 = vpack.c.b16 %v1641, %v1637
        %v1966 = vpack.c.b16 %v1642, %v1638
        %v1967 = vpack.c.b16 %v1647, %v1643
        %v1968 = vpack.c.b16 %v1648, %v1644
        %v1969 = vpack.c.b16 %v1649, %v1645
        %v1970 = vpack.c.b16 %v1650, %v1646
        %v1971 = vpack.c.b16 %v1655, %v1651
        %v1972 = vpack.c.b16 %v1656, %v1652
        %v1973 = vpack.c.b16 %v1657, %v1653
        %v1974 = vpack.c.b16 %v1658, %v1654
        %v1975 = vpack.c.b16 %v1663, %v1659
        %v1976 = vpack.c.b16 %v1664, %v1660
        %v1977 = vpack.c.b16 %v1665, %v1661
        %v1978 = vpack.c.b16 %v1666, %v1662
        %v1979 = vpack.c.b16 %v1671, %v1667
        %v1980 = vpack.c.b16 %v1672, %v1668
        %v1981 = vpack.c.b16 %v1673, %v1669
        %v1982 = vpack.c.b16 %v1674, %v1670
        %v1983 = vpack.c.b16 %v1679, %v1675
        %v1984 = vpack.c.b16 %v1680, %v1676
        %v1985 = vpack.c.b16 %v1681, %v1677
        %v1986 = vpack.c.b16 %v1682, %v1678
        %v1987 = vpack.c.b16 %v1687, %v1683
        %v1988 = vpack.c.b16 %v1688, %v1684
        %v1989 = vpack.c.b16 %v1689, %v1685
        %v1990 = vpack.c.b16 %v1690, %v1686
        %v1991 = vpack.c.b16 %v1695, %v1691
        %v1992 = vpack.c.b16 %v1696, %v1692
        %v1993 = vpack.c.b16 %v1697, %v1693
        %v1994 = vpack.c.b16 %v1698, %v1694
        %v1995 = vpack.c.b16 %v1703, %v1699
        %v1996 = vpack.c.b16 %v1704, %v1700
        %v1997 = vpack.c.b16 %v1705, %v1701
        %v1998 = vpack.c.b16 %v1706, %v1702
        %v1999 = vpack.c.b16 %v1711, %v1707
        %v2000 = vpack.c.b16 %v1712, %v1708
        %v2001 = vpack.c.b16 %v1713, %v1709
        %v2002 = vpack.c.b16 %v1714, %v1710
        %v2003 = vpack.c.b16 %v1719, %v1715
        %v2004 = vpack.c.b16 %v1720, %v1716
        %v2005 = vpack.c.b16 %v1721, %v1717
        %v2006 = vpack.c.b16 %v1722, %v1718
        %v2007 = vpack.c.b16 %v1727, %v1723
        %v2008 = vpack.c.b16 %v1728, %v1724
        %v2009 = vpack.c.b16 %v1729, %v1725
        %v2010 = vpack.c.b16 %v1730, %v1726
        %v2011 = vpack.c.b16 %v1735, %v1731
        %v2012 = vpack.c.b16 %v1736, %v1732
        %v2013 = vpack.c.b16 %v1737, %v1733
        %v2014 = vpack.c.b16 %v1738, %v1734
        %v2015 = vpack.c.b16 %v1743, %v1739
        %v2016 = vpack.c.b16 %v1744, %v1740
        %v2017 = vpack.c.b16 %v1745, %v1741
        %v2018 = vpack.c.b16 %v1746, %v1742
        %v2019 = vpack.c.b16 %v1751, %v1747
        %v2020 = vpack.c.b16 %v1752, %v1748
        %v2021 = vpack.c.b16 %v1753, %v1749
        %v2022 = vpack.c.b16 %v1754, %v1750
        %v2023 = vpack.c.b16 %v1759, %v1755
        %v2024 = vpack.c.b16 %v1760, %v1756
        %v2025 = vpack.c.b16 %v1761, %v1757
        %v2026 = vpack.c.b16 %v1762, %v1758
        %v2027 = vpack.c.b16 %v1767, %v1763
        %v2028 = vpack.c.b16 %v1768, %v1764
        %v2029 = vpack.c.b16 %v1769, %v1765
        %v2030 = vpack.c.b16 %v1770, %v1766
        %v2031 = vpack.c.b16 %v1775, %v1771
        %v2032 = vpack.c.b16 %v1776, %v1772
        %v2033 = vpack.c.b16 %v1777, %v1773
        %v2034 = vpack.c.b16 %v1778, %v1774
        %v2035 = vpack.c.b16 %v1783, %v1779
        %v2036 = vpack.c.b16 %v1784, %v1780
        %v2037 = vpack.c.b16 %v1785, %v1781
        %v2038 = vpack.c.b16 %v1786, %v1782
        %v2039 = vpack.c.b16 %v1791, %v1787
        %v2040 = vpack.c.b16 %v1792, %v1788
        %v2041 = vpack.c.b16 %v1793, %v1789
        %v2042 = vpack.c.b16 %v1794, %v1790
        %v2043 = vpack.c.b16 %v1799, %v1795
        %v2044 = vpack.c.b16 %v1800, %v1796
        %v2045 = vpack.c.b16 %v1801, %v1797
        %v2046 = vpack.c.b16 %v1802, %v1798
        %v2047 = vpack.c.b16 %v1807, %v1803
        %v2048 = vpack.c.b16 %v1808, %v1804
        %v2049 = vpack.c.b16 %v1809, %v1805
        %v2050 = vpack.c.b16 %v1810, %v1806
        %v2051 = vpack.c.b16 %v1815, %v1811
        %v2052 = vpack.c.b16 %v1816, %v1812
        %v2053 = vpack.c.b16 %v1817, %v1813
        %v2054 = vpack.c.b16 %v1818, %v1814
        %v2055 = vpack.c.b16 %v1823, %v1819
        %v2056 = vpack.c.b16 %v1824, %v1820
        %v2057 = vpack.c.b16 %v1825, %v1821
        %v2058 = vpack.c.b16 %v1826, %v1822
        %v2059 = vpack.c.b16 %v1831, %v1827
        %v2060 = vpack.c.b16 %v1832, %v1828
        %v2061 = vpack.c.b16 %v1833, %v1829
        %v2062 = vpack.c.b16 %v1834, %v1830
        %v2063 = vpack.c.b16 %v1839, %v1835
        %v2064 = vpack.c.b16 %v1840, %v1836
        %v2065 = vpack.c.b16 %v1841, %v1837
        %v2066 = vpack.c.b16 %v1842, %v1838
        %v2067 = vpack.c.b16 %v1847, %v1843
        %v2068 = vpack.c.b16 %v1848, %v1844
        %v2069 = vpack.c.b16 %v1849, %v1845
        %v2070 = vpack.c.b16 %v1850, %v1846
        %v2071 = vpack.c.b16 %v1855, %v1851
        %v2072 = vpack.c.b16 %v1856, %v1852
        %v2073 = vpack.c.b16 %v1857, %v1853
        %v2074 = vpack.c.b16 %v1858, %v1854
        %v2075 = vpack.c.b16 %v1863, %v1859
        %v2076 = vpack.c.b16 %v1864, %v1860
        %v2077 = vpack.c.b16 %v1865, %v1861
        %v2078 = vpack.c.b16 %v1866, %v1862
        %v2079 = vpack.c.b16 %v1871, %v1867
        %v2080 = vpack.c.b16 %v1872, %v1868
        %v2081 = vpack.c.b16 %v1873, %v1869
        %v2082 = vpack.c.b16 %v1874, %v1870
        %v2083 = vpack.c.b16 %v1879, %v1875
        %v2084 = vpack.c.b16 %v1880, %v1876
        %v2085 = vpack.c.b16 %v1881, %v1877
        %v2086 = vpack.c.b16 %v1882, %v1878
        %v2087 = vpack.c.b16 %v1887, %v1883
        %v2088 = vpack.c.b16 %v1888, %v1884
        %v2089 = vpack.c.b16 %v1889, %v1885
        %v2090 = vpack.c.b16 %v1890, %v1886
        %v2091 = vpack.c.b16 %v1895, %v1891
        %v2092 = vpack.c.b16 %v1896, %v1892
        %v2093 = vpack.c.b16 %v1897, %v1893
        %v2094 = vpack.c.b16 %v1898, %v1894
        %v2095 = vpack.c.b16 %v1903, %v1899
        %v2096 = vpack.c.b16 %v1904, %v1900
        %v2097 = vpack.c.b16 %v1905, %v1901
        %v2098 = vpack.c.b16 %v1906, %v1902
        %2291 = vmatpush.bf16.msra.mxu0 %v1935
        %2292 = vmatpush.bf16.msra.mxu0 %v1931
        %2293 = vmatpush.bf16.msra.mxu0 %v1927
        %2294 = vmatpush.bf16.msra.mxu0 %v1923
        %2295 = vmatpush.bf16.msra.mxu0 %v1919
        %2296 = vmatpush.bf16.msra.mxu0 %v1915
        %2297 = vmatpush.bf16.msra.mxu0 %v1911
        %2298 = vmatpush.bf16.msra.mxu0 %v1907
        %2299 = vmatmul.bf16.gmra.mxu0 %v1319
        %v2300 = vpop.f32.mrf.mxu0
        %v2301 = vadd.f32 %v1302, %v2300
        %v2302 = vpop.f32.mrf.mxu0
        %2303 = vdwg.mxu0
        %2304 = vmatpush.bf16.msra.mxu0 %v1967
        %2305 = vmatpush.bf16.msra.mxu0 %v1963
        %2306 = vmatpush.bf16.msra.mxu0 %v1959
        %2307 = vmatpush.bf16.msra.mxu0 %v1955
        %2308 = vmatpush.bf16.msra.mxu0 %v1951
        %2309 = vmatpush.bf16.msra.mxu0 %v1947
        %2310 = vmatpush.bf16.msra.mxu0 %v1943
        %2311 = vmatpush.bf16.msra.mxu0 %v1939
        %2312 = vmatmul.bf16.gmra.mxu0 %v1320
        %v2313 = vpop.f32.mrf.mxu0
        %v2314 = vadd.f32 %v2301, %v2313
        %v2315 = vpop.f32.mrf.mxu0
        %2316 = vdwg.mxu0
        %2317 = vmatpush.bf16.msra.mxu0 %v1999
        %2318 = vmatpush.bf16.msra.mxu0 %v1995
        %2319 = vmatpush.bf16.msra.mxu0 %v1991
        %2320 = vmatpush.bf16.msra.mxu0 %v1987
        %2321 = vmatpush.bf16.msra.mxu0 %v1983
        %2322 = vmatpush.bf16.msra.mxu0 %v1979
        %2323 = vmatpush.bf16.msra.mxu0 %v1975
        %2324 = vmatpush.bf16.msra.mxu0 %v1971
        %2325 = vmatmul.bf16.gmra.mxu0 %v1321
        %v2326 = vpop.f32.mrf.mxu0
        %v2327 = vadd.f32 %v2314, %v2326
        %v2328 = vpop.f32.mrf.mxu0
        %2329 = vdwg.mxu0
        %2330 = vmatpush.bf16.msra.mxu0 %v2031
        %2331 = vmatpush.bf16.msra.mxu0 %v2027
        %2332 = vmatpush.bf16.msra.mxu0 %v2023
        %2333 = vmatpush.bf16.msra.mxu0 %v2019
        %2334 = vmatpush.bf16.msra.mxu0 %v2015
        %2335 = vmatpush.bf16.msra.mxu0 %v2011
        %2336 = vmatpush.bf16.msra.mxu0 %v2007
        %2337 = vmatpush.bf16.msra.mxu0 %v2003
        %2338 = vmatmul.bf16.gmra.mxu0 %v1322
        %v2339 = vpop.f32.mrf.mxu0
        %v2340 = vadd.f32 %v2327, %v2339
        %v2341 = vpop.f32.mrf.mxu0
        %2342 = vdwg.mxu0
        %2343 = vmatpush.bf16.msra.mxu0 %v2063
        %2344 = vmatpush.bf16.msra.mxu0 %v2059
        %2345 = vmatpush.bf16.msra.mxu0 %v2055
        %2346 = vmatpush.bf16.msra.mxu0 %v2051
        %2347 = vmatpush.bf16.msra.mxu0 %v2047
        %2348 = vmatpush.bf16.msra.mxu0 %v2043
        %2349 = vmatpush.bf16.msra.mxu0 %v2039
        %2350 = vmatpush.bf16.msra.mxu0 %v2035
        %2351 = vmatmul.bf16.gmra.mxu0 %v1323
        %v2352 = vpop.f32.mrf.mxu0
        %v2353 = vadd.f32 %v2340, %v2352
        %v2354 = vpop.f32.mrf.mxu0
        %2355 = vdwg.mxu0
        %2356 = vmatpush.bf16.msra.mxu0 %v2095
        %2357 = vmatpush.bf16.msra.mxu0 %v2091
        %2358 = vmatpush.bf16.msra.mxu0 %v2087
        %2359 = vmatpush.bf16.msra.mxu0 %v2083
        %2360 = vmatpush.bf16.msra.mxu0 %v2079
        %2361 = vmatpush.bf16.msra.mxu0 %v2075
        %2362 = vmatpush.bf16.msra.mxu0 %v2071
        %2363 = vmatpush.bf16.msra.mxu0 %v2067
        %2364 = vmatmul.bf16.gmra.mxu0 %v1324
        %v2365 = vpop.f32.mrf.mxu0
        %v2366 = vadd.f32 %v2353, %v2365
        %v2367 = vpop.f32.mrf.mxu0
        %2368 = vdwg.mxu0
        %2369 = vmatpush.bf16.msra.mxu0 %v1936
        %2370 = vmatpush.bf16.msra.mxu0 %v1932
        %2371 = vmatpush.bf16.msra.mxu0 %v1928
        %2372 = vmatpush.bf16.msra.mxu0 %v1924
        %2373 = vmatpush.bf16.msra.mxu0 %v1920
        %2374 = vmatpush.bf16.msra.mxu0 %v1916
        %2375 = vmatpush.bf16.msra.mxu0 %v1912
        %2376 = vmatpush.bf16.msra.mxu0 %v1908
        %2377 = vmatmul.bf16.gmra.mxu0 %v1319
        %v2378 = vpop.f32.mrf.mxu0
        %v2379 = vadd.f32 %v1303, %v2378
        %v2380 = vpop.f32.mrf.mxu0
        %2381 = vdwg.mxu0
        %2382 = vmatpush.bf16.msra.mxu0 %v1968
        %2383 = vmatpush.bf16.msra.mxu0 %v1964
        %2384 = vmatpush.bf16.msra.mxu0 %v1960
        %2385 = vmatpush.bf16.msra.mxu0 %v1956
        %2386 = vmatpush.bf16.msra.mxu0 %v1952
        %2387 = vmatpush.bf16.msra.mxu0 %v1948
        %2388 = vmatpush.bf16.msra.mxu0 %v1944
        %2389 = vmatpush.bf16.msra.mxu0 %v1940
        %2390 = vmatmul.bf16.gmra.mxu0 %v1320
        %v2391 = vpop.f32.mrf.mxu0
        %v2392 = vadd.f32 %v2379, %v2391
        %v2393 = vpop.f32.mrf.mxu0
        %2394 = vdwg.mxu0
        %2395 = vmatpush.bf16.msra.mxu0 %v2000
        %2396 = vmatpush.bf16.msra.mxu0 %v1996
        %2397 = vmatpush.bf16.msra.mxu0 %v1992
        %2398 = vmatpush.bf16.msra.mxu0 %v1988
        %2399 = vmatpush.bf16.msra.mxu0 %v1984
        %2400 = vmatpush.bf16.msra.mxu0 %v1980
        %2401 = vmatpush.bf16.msra.mxu0 %v1976
        %2402 = vmatpush.bf16.msra.mxu0 %v1972
        %2403 = vmatmul.bf16.gmra.mxu0 %v1321
        %v2404 = vpop.f32.mrf.mxu0
        %v2405 = vadd.f32 %v2392, %v2404
        %v2406 = vpop.f32.mrf.mxu0
        %2407 = vdwg.mxu0
        %2408 = vmatpush.bf16.msra.mxu0 %v2032
        %2409 = vmatpush.bf16.msra.mxu0 %v2028
        %2410 = vmatpush.bf16.msra.mxu0 %v2024
        %2411 = vmatpush.bf16.msra.mxu0 %v2020
        %2412 = vmatpush.bf16.msra.mxu0 %v2016
        %2413 = vmatpush.bf16.msra.mxu0 %v2012
        %2414 = vmatpush.bf16.msra.mxu0 %v2008
        %2415 = vmatpush.bf16.msra.mxu0 %v2004
        %2416 = vmatmul.bf16.gmra.mxu0 %v1322
        %v2417 = vpop.f32.mrf.mxu0
        %v2418 = vadd.f32 %v2405, %v2417
        %v2419 = vpop.f32.mrf.mxu0
        %2420 = vdwg.mxu0
        %2421 = vmatpush.bf16.msra.mxu0 %v2064
        %2422 = vmatpush.bf16.msra.mxu0 %v2060
        %2423 = vmatpush.bf16.msra.mxu0 %v2056
        %2424 = vmatpush.bf16.msra.mxu0 %v2052
        %2425 = vmatpush.bf16.msra.mxu0 %v2048
        %2426 = vmatpush.bf16.msra.mxu0 %v2044
        %2427 = vmatpush.bf16.msra.mxu0 %v2040
        %2428 = vmatpush.bf16.msra.mxu0 %v2036
        %2429 = vmatmul.bf16.gmra.mxu0 %v1323
        %v2430 = vpop.f32.mrf.mxu0
        %v2431 = vadd.f32 %v2418, %v2430
        %v2432 = vpop.f32.mrf.mxu0
        %2433 = vdwg.mxu0
        %2434 = vmatpush.bf16.msra.mxu0 %v2096
        %2435 = vmatpush.bf16.msra.mxu0 %v2092
        %2436 = vmatpush.bf16.msra.mxu0 %v2088
        %2437 = vmatpush.bf16.msra.mxu0 %v2084
        %2438 = vmatpush.bf16.msra.mxu0 %v2080
        %2439 = vmatpush.bf16.msra.mxu0 %v2076
        %2440 = vmatpush.bf16.msra.mxu0 %v2072
        %2441 = vmatpush.bf16.msra.mxu0 %v2068
        %2442 = vmatmul.bf16.gmra.mxu0 %v1324
        %v2443 = vpop.f32.mrf.mxu0
        %v2444 = vadd.f32 %v2431, %v2443
        %v2445 = vpop.f32.mrf.mxu0
        %2446 = vdwg.mxu0
        %2447 = vmatpush.bf16.msra.mxu0 %v1937
        %2448 = vmatpush.bf16.msra.mxu0 %v1933
        %2449 = vmatpush.bf16.msra.mxu0 %v1929
        %2450 = vmatpush.bf16.msra.mxu0 %v1925
        %2451 = vmatpush.bf16.msra.mxu0 %v1921
        %2452 = vmatpush.bf16.msra.mxu0 %v1917
        %2453 = vmatpush.bf16.msra.mxu0 %v1913
        %2454 = vmatpush.bf16.msra.mxu0 %v1909
        %2455 = vmatmul.bf16.gmra.mxu0 %v1319
        %v2456 = vpop.f32.mrf.mxu0
        %v2457 = vadd.f32 %v1304, %v2456
        %v2458 = vpop.f32.mrf.mxu0
        %2459 = vdwg.mxu0
        %2460 = vmatpush.bf16.msra.mxu0 %v1969
        %2461 = vmatpush.bf16.msra.mxu0 %v1965
        %2462 = vmatpush.bf16.msra.mxu0 %v1961
        %2463 = vmatpush.bf16.msra.mxu0 %v1957
        %2464 = vmatpush.bf16.msra.mxu0 %v1953
        %2465 = vmatpush.bf16.msra.mxu0 %v1949
        %2466 = vmatpush.bf16.msra.mxu0 %v1945
        %2467 = vmatpush.bf16.msra.mxu0 %v1941
        %2468 = vmatmul.bf16.gmra.mxu0 %v1320
        %v2469 = vpop.f32.mrf.mxu0
        %v2470 = vadd.f32 %v2457, %v2469
        %v2471 = vpop.f32.mrf.mxu0
        %2472 = vdwg.mxu0
        %2473 = vmatpush.bf16.msra.mxu0 %v2001
        %2474 = vmatpush.bf16.msra.mxu0 %v1997
        %2475 = vmatpush.bf16.msra.mxu0 %v1993
        %2476 = vmatpush.bf16.msra.mxu0 %v1989
        %2477 = vmatpush.bf16.msra.mxu0 %v1985
        %2478 = vmatpush.bf16.msra.mxu0 %v1981
        %2479 = vmatpush.bf16.msra.mxu0 %v1977
        %2480 = vmatpush.bf16.msra.mxu0 %v1973
        %2481 = vmatmul.bf16.gmra.mxu0 %v1321
        %v2482 = vpop.f32.mrf.mxu0
        %v2483 = vadd.f32 %v2470, %v2482
        %v2484 = vpop.f32.mrf.mxu0
        %2485 = vdwg.mxu0
        %2486 = vmatpush.bf16.msra.mxu0 %v2033
        %2487 = vmatpush.bf16.msra.mxu0 %v2029
        %2488 = vmatpush.bf16.msra.mxu0 %v2025
        %2489 = vmatpush.bf16.msra.mxu0 %v2021
        %2490 = vmatpush.bf16.msra.mxu0 %v2017
        %2491 = vmatpush.bf16.msra.mxu0 %v2013
        %2492 = vmatpush.bf16.msra.mxu0 %v2009
        %2493 = vmatpush.bf16.msra.mxu0 %v2005
        %2494 = vmatmul.bf16.gmra.mxu0 %v1322
        %v2495 = vpop.f32.mrf.mxu0
        %v2496 = vadd.f32 %v2483, %v2495
        %v2497 = vpop.f32.mrf.mxu0
        %2498 = vdwg.mxu0
        %2499 = vmatpush.bf16.msra.mxu0 %v2065
        %2500 = vmatpush.bf16.msra.mxu0 %v2061
        %2501 = vmatpush.bf16.msra.mxu0 %v2057
        %2502 = vmatpush.bf16.msra.mxu0 %v2053
        %2503 = vmatpush.bf16.msra.mxu0 %v2049
        %2504 = vmatpush.bf16.msra.mxu0 %v2045
        %2505 = vmatpush.bf16.msra.mxu0 %v2041
        %2506 = vmatpush.bf16.msra.mxu0 %v2037
        %2507 = vmatmul.bf16.gmra.mxu0 %v1323
        %v2508 = vpop.f32.mrf.mxu0
        %v2509 = vadd.f32 %v2496, %v2508
        %v2510 = vpop.f32.mrf.mxu0
        %2511 = vdwg.mxu0
        %2512 = vmatpush.bf16.msra.mxu0 %v2097
        %2513 = vmatpush.bf16.msra.mxu0 %v2093
        %2514 = vmatpush.bf16.msra.mxu0 %v2089
        %2515 = vmatpush.bf16.msra.mxu0 %v2085
        %2516 = vmatpush.bf16.msra.mxu0 %v2081
        %2517 = vmatpush.bf16.msra.mxu0 %v2077
        %2518 = vmatpush.bf16.msra.mxu0 %v2073
        %2519 = vmatpush.bf16.msra.mxu0 %v2069
        %2520 = vmatmul.bf16.gmra.mxu0 %v1324
        %v2521 = vpop.f32.mrf.mxu0
        %v2522 = vadd.f32 %v2509, %v2521
        %v2523 = vpop.f32.mrf.mxu0
        %2524 = vdwg.mxu0
        %2525 = vmatpush.bf16.msra.mxu0 %v1938
        %2526 = vmatpush.bf16.msra.mxu0 %v1934
        %2527 = vmatpush.bf16.msra.mxu0 %v1930
        %2528 = vmatpush.bf16.msra.mxu0 %v1926
        %2529 = vmatpush.bf16.msra.mxu0 %v1922
        %2530 = vmatpush.bf16.msra.mxu0 %v1918
        %2531 = vmatpush.bf16.msra.mxu0 %v1914
        %2532 = vmatpush.bf16.msra.mxu0 %v1910
        %2533 = vmatmul.bf16.gmra.mxu0 %v1319
        %v2534 = vpop.f32.mrf.mxu0
        %v2535 = vadd.f32 %v1305, %v2534
        %v2536 = vpop.f32.mrf.mxu0
        %2537 = vdwg.mxu0
        %2538 = vmatpush.bf16.msra.mxu0 %v1970
        %2539 = vmatpush.bf16.msra.mxu0 %v1966
        %2540 = vmatpush.bf16.msra.mxu0 %v1962
        %2541 = vmatpush.bf16.msra.mxu0 %v1958
        %2542 = vmatpush.bf16.msra.mxu0 %v1954
        %2543 = vmatpush.bf16.msra.mxu0 %v1950
        %2544 = vmatpush.bf16.msra.mxu0 %v1946
        %2545 = vmatpush.bf16.msra.mxu0 %v1942
        %2546 = vmatmul.bf16.gmra.mxu0 %v1320
        %v2547 = vpop.f32.mrf.mxu0
        %v2548 = vadd.f32 %v2535, %v2547
        %v2549 = vpop.f32.mrf.mxu0
        %2550 = vdwg.mxu0
        %2551 = vmatpush.bf16.msra.mxu0 %v2002
        %2552 = vmatpush.bf16.msra.mxu0 %v1998
        %2553 = vmatpush.bf16.msra.mxu0 %v1994
        %2554 = vmatpush.bf16.msra.mxu0 %v1990
        %2555 = vmatpush.bf16.msra.mxu0 %v1986
        %2556 = vmatpush.bf16.msra.mxu0 %v1982
        %2557 = vmatpush.bf16.msra.mxu0 %v1978
        %2558 = vmatpush.bf16.msra.mxu0 %v1974
        %2559 = vmatmul.bf16.gmra.mxu0 %v1321
        %v2560 = vpop.f32.mrf.mxu0
        %v2561 = vadd.f32 %v2548, %v2560
        %v2562 = vpop.f32.mrf.mxu0
        %2563 = vdwg.mxu0
        %2564 = vmatpush.bf16.msra.mxu0 %v2034
        %2565 = vmatpush.bf16.msra.mxu0 %v2030
        %2566 = vmatpush.bf16.msra.mxu0 %v2026
        %2567 = vmatpush.bf16.msra.mxu0 %v2022
        %2568 = vmatpush.bf16.msra.mxu0 %v2018
        %2569 = vmatpush.bf16.msra.mxu0 %v2014
        %2570 = vmatpush.bf16.msra.mxu0 %v2010
        %2571 = vmatpush.bf16.msra.mxu0 %v2006
        %2572 = vmatmul.bf16.gmra.mxu0 %v1322
        %v2573 = vpop.f32.mrf.mxu0
        %v2574 = vadd.f32 %v2561, %v2573
        %v2575 = vpop.f32.mrf.mxu0
        %2576 = vdwg.mxu0
        %2577 = vmatpush.bf16.msra.mxu0 %v2066
        %2578 = vmatpush.bf16.msra.mxu0 %v2062
        %2579 = vmatpush.bf16.msra.mxu0 %v2058
        %2580 = vmatpush.bf16.msra.mxu0 %v2054
        %2581 = vmatpush.bf16.msra.mxu0 %v2050
        %2582 = vmatpush.bf16.msra.mxu0 %v2046
        %2583 = vmatpush.bf16.msra.mxu0 %v2042
        %2584 = vmatpush.bf16.msra.mxu0 %v2038
        %2585 = vmatmul.bf16.gmra.mxu0 %v1323
        %v2586 = vpop.f32.mrf.mxu0
        %v2587 = vadd.f32 %v2574, %v2586
        %v2588 = vpop.f32.mrf.mxu0
        %2589 = vdwg.mxu0
        %2590 = vmatpush.bf16.msra.mxu0 %v2098
        %2591 = vmatpush.bf16.msra.mxu0 %v2094
        %2592 = vmatpush.bf16.msra.mxu0 %v2090
        %2593 = vmatpush.bf16.msra.mxu0 %v2086
        %2594 = vmatpush.bf16.msra.mxu0 %v2082
        %2595 = vmatpush.bf16.msra.mxu0 %v2078
        %2596 = vmatpush.bf16.msra.mxu0 %v2074
        %2597 = vmatpush.bf16.msra.mxu0 %v2070
        %2598 = vmatmul.bf16.gmra.mxu0 %v1324
        %v2599 = vpop.f32.mrf.mxu0
        %v2600 = vadd.f32 %v2587, %v2599
        %v2601 = vpop.f32.mrf.mxu0
        %2602 = vdwg.mxu0
        %v2603 = vmax.f32 %v2366, 0.0
        %v2604 = vmax.f32 %v2444, 0.0
        %v2605 = vmax.f32 %v2522, 0.0
        %v2606 = vmax.f32 %v2600, 0.0
        %v2611 = vrot.slane %v2603, 2
        %v2612 = vrot.slane %v2604, 2
        %v2613 = vrot.slane %v2605, 2
        %v2614 = vrot.slane %v2606, 2
        %v2619 = vadd.f32 %v2603, %v2611
        %v2620 = vadd.f32 %v2604, %v2612
        %v2621 = vadd.f32 %v2605, %v2613
        %v2622 = vadd.f32 %v2606, %v2614
        %v2623 = vrot.slane %v2603, 4
        %v2624 = vrot.slane %v2604, 4
        %v2625 = vrot.slane %v2605, 4
        %v2626 = vrot.slane %v2606, 4
        %v2631 = vadd.f32 %v2619, %v2623
        %v2632 = vadd.f32 %v2620, %v2624
        %v2633 = vadd.f32 %v2621, %v2625
        %v2634 = vadd.f32 %v2622, %v2626
        %v2635 = vrot.slane %v2603, 6
        %v2636 = vrot.slane %v2604, 6
        %v2637 = vrot.slane %v2605, 6
        %v2638 = vrot.slane %v2606, 6
        %v2643 = vadd.f32 %v2631, %v2635
        %v2644 = vadd.f32 %v2632, %v2636
        %v2645 = vadd.f32 %v2633, %v2637
        %v2646 = vadd.f32 %v2634, %v2638
        %v2647 = vmul.f32 %v2643, 0.25
        %v2648 = vmul.f32 %v2644, 0.25
        %v2649 = vmul.f32 %v2645, 0.25
        %v2650 = vmul.f32 %v2646, 0.25
        %v2651 = vld [vmem:[%s1] sm:$0x3f]
        %v2652 = vld [vmem:[%s943] sm:$0xff]
        %v2653 = vld [vmem:[%s943 + $0x8] sm:$0xff]
        %v2654 = vld [vmem:[%s943 + $0x10] sm:$0xff]
        %v2655 = vld [vmem:[%s943 + $0x18] sm:$0xff]
        %v2656 = vld [vmem:[%s943 + $0x20] sm:$0xff]
        %v2657 = vld [vmem:[%s943 + $0x28] sm:$0xff]
        %v2658 = vld [vmem:[%s943 + $0x30] sm:$0xff]
        %v2659 = vld [vmem:[%s943 + $0x38] sm:$0xff]
        %v2660 = vld [vmem:[%s943 + $0x40] sm:$0xff]
        %v2661 = vld [vmem:[%s943 + $0x48] sm:$0xff]
        %v2662 = vld [vmem:[%s943 + $0x50] sm:$0xff]
        %v2663 = vld [vmem:[%s943 + $0x58] sm:$0xff]
        %v2664 = vld [vmem:[%s943 + $0x60] sm:$0xff]
        %v2665 = vld [vmem:[%s943 + $0x68] sm:$0xff]
        %v2666 = vld [vmem:[%s943 + $0x70] sm:$0xff]
        %v2667 = vld [vmem:[%s943 + $0x78] sm:$0xff]
        %v2668 = vld [vmem:[%s943 + $0x80] sm:$0xff]
        %v2669 = vld [vmem:[%s943 + $0x88] sm:$0xff]
        %v2670 = vld [vmem:[%s943 + $0x90] sm:$0xff]
        %v2671 = vld [vmem:[%s943 + $0x98] sm:$0xff]
        %v2672 = vld [vmem:[%s943 + $0xa0] sm:$0xff]
        %v2673 = vld [vmem:[%s943 + $0xa8] sm:$0xff]
        %v2674 = vld [vmem:[%s943 + $0xb0] sm:$0xff]
        %v2675 = vld [vmem:[%s943 + $0xb8] sm:$0xff]
        %v2676 = vld [vmem:[%s943 + $0xc0] sm:$0xff]
        %v2677 = vld [vmem:[%s943 + $0xc8] sm:$0xff]
        %v2678 = vld [vmem:[%s943 + $0xd0] sm:$0xff]
        %v2679 = vld [vmem:[%s943 + $0xd8] sm:$0xff]
        %v2680 = vld [vmem:[%s943 + $0xe0] sm:$0xff]
        %v2681 = vld [vmem:[%s943 + $0xe8] sm:$0xff]
        %v2682 = vld [vmem:[%s943 + $0xf0] sm:$0xff]
        %v2683 = vld [vmem:[%s943 + $0xf8] sm:$0xff]
        %v2684 = vld [vmem:[%s943 + $0x100] sm:$0xff]
        %v2685 = vld [vmem:[%s943 + $0x108] sm:$0xff]
        %v2686 = vld [vmem:[%s943 + $0x110] sm:$0xff]
        %v2687 = vld [vmem:[%s943 + $0x118] sm:$0xff]
        %v2688 = vld [vmem:[%s943 + $0x120] sm:$0xff]
        %v2689 = vld [vmem:[%s943 + $0x128] sm:$0xff]
        %v2690 = vld [vmem:[%s943 + $0x130] sm:$0xff]
        %v2691 = vld [vmem:[%s943 + $0x138] sm:$0xff]
        %v2692 = vld [vmem:[%s943 + $0x140] sm:$0xff]
        %v2693 = vld [vmem:[%s943 + $0x148] sm:$0xff]
        %v2694 = vld [vmem:[%s943 + $0x150] sm:$0xff]
        %v2695 = vld [vmem:[%s943 + $0x158] sm:$0xff]
        %v2696 = vld [vmem:[%s943 + $0x160] sm:$0xff]
        %v2697 = vld [vmem:[%s943 + $0x168] sm:$0xff]
        %v2698 = vld [vmem:[%s943 + $0x170] sm:$0xff]
        %v2699 = vld [vmem:[%s943 + $0x178] sm:$0xff]
        %v2700 = vld [vmem:[%s943 + $0x180] sm:$0xff]
        %v2701 = vld [vmem:[%s943 + $0x188] sm:$0xff]
        %v2702 = vld [vmem:[%s943 + $0x190] sm:$0xff]
        %v2703 = vld [vmem:[%s943 + $0x198] sm:$0xff]
        %v2704 = vld [vmem:[%s943 + $0x1a0] sm:$0xff]
        %v2705 = vld [vmem:[%s943 + $0x1a8] sm:$0xff]
        %v2706 = vld [vmem:[%s943 + $0x1b0] sm:$0xff]
        %v2707 = vld [vmem:[%s943 + $0x1b8] sm:$0xff]
        %v2708 = vld [vmem:[%s943 + $0x1c0] sm:$0xff]
        %v2709 = vld [vmem:[%s943 + $0x1c8] sm:$0xff]
        %v2710 = vld [vmem:[%s943 + $0x1d0] sm:$0xff]
        %v2711 = vld [vmem:[%s943 + $0x1d8] sm:$0xff]
        %v2712 = vld [vmem:[%s943 + $0x1e0] sm:$0xff]
        %v2713 = vld [vmem:[%s943 + $0x1e8] sm:$0xff]
        %v2714 = vld [vmem:[%s943 + $0x1f0] sm:$0xff]
        %v2715 = vld [vmem:[%s943 + $0x1f8] sm:$0xff]
        %v2716 = vld [vmem:[%s943 + $0x200] sm:$0xff]
        %v2717 = vld [vmem:[%s943 + $0x208] sm:$0xff]
        %v2718 = vld [vmem:[%s943 + $0x210] sm:$0xff]
        %v2719 = vld [vmem:[%s943 + $0x218] sm:$0xff]
        %v2720 = vld [vmem:[%s943 + $0x220] sm:$0xff]
        %v2721 = vld [vmem:[%s943 + $0x228] sm:$0xff]
        %v2722 = vld [vmem:[%s943 + $0x230] sm:$0xff]
        %v2723 = vld [vmem:[%s943 + $0x238] sm:$0xff]
        %v2724 = vld [vmem:[%s943 + $0x240] sm:$0xff]
        %v2725 = vld [vmem:[%s943 + $0x248] sm:$0xff]
        %v2726 = vld [vmem:[%s943 + $0x250] sm:$0xff]
        %v2727 = vld [vmem:[%s943 + $0x258] sm:$0xff]
        %v2728 = vld [vmem:[%s943 + $0x260] sm:$0xff]
        %v2729 = vld [vmem:[%s943 + $0x268] sm:$0xff]
        %v2730 = vld [vmem:[%s943 + $0x270] sm:$0xff]
        %v2731 = vld [vmem:[%s943 + $0x278] sm:$0xff]
        %v2732 = vld [vmem:[%s943 + $0x280] sm:$0xff]
        %v2733 = vld [vmem:[%s943 + $0x288] sm:$0xff]
        %v2734 = vld [vmem:[%s943 + $0x290] sm:$0xff]
        %v2735 = vld [vmem:[%s943 + $0x298] sm:$0xff]
        %v2736 = vld [vmem:[%s943 + $0x2a0] sm:$0xff]
        %v2737 = vld [vmem:[%s943 + $0x2a8] sm:$0xff]
        %v2738 = vld [vmem:[%s943 + $0x2b0] sm:$0xff]
        %v2739 = vld [vmem:[%s943 + $0x2b8] sm:$0xff]
        %v2740 = vld [vmem:[%s943 + $0x2c0] sm:$0xff]
        %v2741 = vld [vmem:[%s943 + $0x2c8] sm:$0xff]
        %v2742 = vld [vmem:[%s943 + $0x2d0] sm:$0xff]
        %v2743 = vld [vmem:[%s943 + $0x2d8] sm:$0xff]
        %v2744 = vld [vmem:[%s943 + $0x2e0] sm:$0xff]
        %v2745 = vld [vmem:[%s943 + $0x2e8] sm:$0xff]
        %v2746 = vld [vmem:[%s943 + $0x2f0] sm:$0xff]
        %v2747 = vld [vmem:[%s943 + $0x2f8] sm:$0xff]
        %v2748 = vld [vmem:[%s943 + $0x300] sm:$0xff]
        %v2749 = vld [vmem:[%s943 + $0x308] sm:$0xff]
        %v2750 = vld [vmem:[%s943 + $0x310] sm:$0xff]
        %v2751 = vld [vmem:[%s943 + $0x318] sm:$0xff]
        %v2752 = vld [vmem:[%s943 + $0x320] sm:$0xff]
        %v2753 = vld [vmem:[%s943 + $0x328] sm:$0xff]
        %v2754 = vld [vmem:[%s943 + $0x330] sm:$0xff]
        %v2755 = vld [vmem:[%s943 + $0x338] sm:$0xff]
        %v2756 = vld [vmem:[%s943 + $0x340] sm:$0xff]
        %v2757 = vld [vmem:[%s943 + $0x348] sm:$0xff]
        %v2758 = vld [vmem:[%s943 + $0x350] sm:$0xff]
        %v2759 = vld [vmem:[%s943 + $0x358] sm:$0xff]
        %v2760 = vld [vmem:[%s943 + $0x360] sm:$0xff]
        %v2761 = vld [vmem:[%s943 + $0x368] sm:$0xff]
        %v2762 = vld [vmem:[%s943 + $0x370] sm:$0xff]
        %v2763 = vld [vmem:[%s943 + $0x378] sm:$0xff]
        %v2764 = vld [vmem:[%s943 + $0x380] sm:$0xff]
        %v2765 = vld [vmem:[%s943 + $0x388] sm:$0xff]
        %v2766 = vld [vmem:[%s943 + $0x390] sm:$0xff]
        %v2767 = vld [vmem:[%s943 + $0x398] sm:$0xff]
        %v2768 = vld [vmem:[%s943 + $0x3a0] sm:$0xff]
        %v2769 = vld [vmem:[%s943 + $0x3a8] sm:$0xff]
        %v2770 = vld [vmem:[%s943 + $0x3b0] sm:$0xff]
        %v2771 = vld [vmem:[%s943 + $0x3b8] sm:$0xff]
        %v2772 = vld [vmem:[%s943 + $0x3c0] sm:$0xff]
        %v2773 = vld [vmem:[%s943 + $0x3c8] sm:$0xff]
        %v2774 = vld [vmem:[%s943 + $0x3d0] sm:$0xff]
        %v2775 = vld [vmem:[%s943 + $0x3d8] sm:$0xff]
        %v2776 = vld [vmem:[%s943 + $0x3e0] sm:$0xff]
        %v2777 = vld [vmem:[%s943 + $0x3e8] sm:$0xff]
        %v2778 = vld [vmem:[%s943 + $0x3f0] sm:$0xff]
        %v2779 = vld [vmem:[%s943 + $0x3f8] sm:$0xff]
        %v2780 = vld [vmem:[%s943 + $0x400] sm:$0xff]
        %v2781 = vld [vmem:[%s943 + $0x408] sm:$0xff]
        %v2782 = vld [vmem:[%s943 + $0x410] sm:$0xff]
        %v2783 = vld [vmem:[%s943 + $0x418] sm:$0xff]
        %v2784 = vld [vmem:[%s943 + $0x420] sm:$0xff]
        %v2785 = vld [vmem:[%s943 + $0x428] sm:$0xff]
        %v2786 = vld [vmem:[%s943 + $0x430] sm:$0xff]
        %v2787 = vld [vmem:[%s943 + $0x438] sm:$0xff]
        %v2788 = vld [vmem:[%s943 + $0x440] sm:$0xff]
        %v2789 = vld [vmem:[%s943 + $0x448] sm:$0xff]
        %v2790 = vld [vmem:[%s943 + $0x450] sm:$0xff]
        %v2791 = vld [vmem:[%s943 + $0x458] sm:$0xff]
        %v2792 = vld [vmem:[%s943 + $0x460] sm:$0xff]
        %v2793 = vld [vmem:[%s943 + $0x468] sm:$0xff]
        %v2794 = vld [vmem:[%s943 + $0x470] sm:$0xff]
        %v2795 = vld [vmem:[%s943 + $0x478] sm:$0xff]
        %v2796 = vld [vmem:[%s943 + $0x480] sm:$0xff]
        %v2797 = vld [vmem:[%s943 + $0x488] sm:$0xff]
        %v2798 = vld [vmem:[%s943 + $0x490] sm:$0xff]
        %v2799 = vld [vmem:[%s943 + $0x498] sm:$0xff]
        %v2800 = vld [vmem:[%s943 + $0x4a0] sm:$0xff]
        %v2801 = vld [vmem:[%s943 + $0x4a8] sm:$0xff]
        %v2802 = vld [vmem:[%s943 + $0x4b0] sm:$0xff]
        %v2803 = vld [vmem:[%s943 + $0x4b8] sm:$0xff]
        %v2804 = vld [vmem:[%s943 + $0x4c0] sm:$0xff]
        %v2805 = vld [vmem:[%s943 + $0x4c8] sm:$0xff]
        %v2806 = vld [vmem:[%s943 + $0x4d0] sm:$0xff]
        %v2807 = vld [vmem:[%s943 + $0x4d8] sm:$0xff]
        %v2808 = vld [vmem:[%s943 + $0x4e0] sm:$0xff]
        %v2809 = vld [vmem:[%s943 + $0x4e8] sm:$0xff]
        %v2810 = vld [vmem:[%s943 + $0x4f0] sm:$0xff]
        %v2811 = vld [vmem:[%s943 + $0x4f8] sm:$0xff]
        %v2812 = vld [vmem:[%s943 + $0x500] sm:$0xff]
        %v2813 = vld [vmem:[%s943 + $0x508] sm:$0xff]
        %v2814 = vld [vmem:[%s943 + $0x510] sm:$0xff]
        %v2815 = vld [vmem:[%s943 + $0x518] sm:$0xff]
        %v2816 = vld [vmem:[%s943 + $0x520] sm:$0xff]
        %v2817 = vld [vmem:[%s943 + $0x528] sm:$0xff]
        %v2818 = vld [vmem:[%s943 + $0x530] sm:$0xff]
        %v2819 = vld [vmem:[%s943 + $0x538] sm:$0xff]
        %v2820 = vld [vmem:[%s943 + $0x540] sm:$0xff]
        %v2821 = vld [vmem:[%s943 + $0x548] sm:$0xff]
        %v2822 = vld [vmem:[%s943 + $0x550] sm:$0xff]
        %v2823 = vld [vmem:[%s943 + $0x558] sm:$0xff]
        %v2824 = vld [vmem:[%s943 + $0x560] sm:$0xff]
        %v2825 = vld [vmem:[%s943 + $0x568] sm:$0xff]
        %v2826 = vld [vmem:[%s943 + $0x570] sm:$0xff]
        %v2827 = vld [vmem:[%s943 + $0x578] sm:$0xff]
        %v2828 = vld [vmem:[%s943 + $0x580] sm:$0xff]
        %v2829 = vld [vmem:[%s943 + $0x588] sm:$0xff]
        %v2830 = vld [vmem:[%s943 + $0x590] sm:$0xff]
        %v2831 = vld [vmem:[%s943 + $0x598] sm:$0xff]
        %v2832 = vld [vmem:[%s943 + $0x5a0] sm:$0xff]
        %v2833 = vld [vmem:[%s943 + $0x5a8] sm:$0xff]
        %v2834 = vld [vmem:[%s943 + $0x5b0] sm:$0xff]
        %v2835 = vld [vmem:[%s943 + $0x5b8] sm:$0xff]
        %v2836 = vld [vmem:[%s943 + $0x5c0] sm:$0xff]
        %v2837 = vld [vmem:[%s943 + $0x5c8] sm:$0xff]
        %v2838 = vld [vmem:[%s943 + $0x5d0] sm:$0xff]
        %v2839 = vld [vmem:[%s943 + $0x5d8] sm:$0xff]
        %v2840 = vld [vmem:[%s943 + $0x5e0] sm:$0xff]
        %v2841 = vld [vmem:[%s943 + $0x5e8] sm:$0xff]
        %v2842 = vld [vmem:[%s943 + $0x5f0] sm:$0xff]
        %v2843 = vld [vmem:[%s943 + $0x5f8] sm:$0xff]
        %v2844 = vld [vmem:[%s953] sm:$0xf]
        %v2846 = vperm.slane %v2844, 0
        %v2847 = vperm.slane %v2844, 1
        %v2848 = vperm.slane %v2844, 2
        %v2849 = vperm.slane %v2844, 3
        %2855 = vst [vmem:[#allocation1] ss:$9 sm:$0xff] %v2651
        %v2856 = vld [vmem:[#allocation1] sm:$0xff]
        %v2857 = vld [vmem:[#allocation1 + $0x9] sm:$0xff]
        %v2858 = vld [vmem:[#allocation1 + $0x12] sm:$0xff]
        %v2859 = vld [vmem:[#allocation1 + $0x1b] sm:$0xff]
        %v2860 = vld [vmem:[#allocation1 + $0x24] sm:$0xff]
        %v2861 = vld [vmem:[#allocation1 + $0x2d] sm:$0xff]
        %v3060 = vunpack.c.l.b16 %v2652
        %v3061 = vunpack.c.h.b16 %v2652
        %v3062 = vunpack.c.l.b16 %v2653
        %v3063 = vunpack.c.h.b16 %v2653
        %v3064 = vunpack.c.l.b16 %v2654
        %v3065 = vunpack.c.h.b16 %v2654
        %v3066 = vunpack.c.l.b16 %v2655
        %v3067 = vunpack.c.h.b16 %v2655
        %v3068 = vunpack.c.l.b16 %v2656
        %v3069 = vunpack.c.h.b16 %v2656
        %v3070 = vunpack.c.l.b16 %v2657
        %v3071 = vunpack.c.h.b16 %v2657
        %v3072 = vunpack.c.l.b16 %v2658
        %v3073 = vunpack.c.h.b16 %v2658
        %v3074 = vunpack.c.l.b16 %v2659
        %v3075 = vunpack.c.h.b16 %v2659
        %v3076 = vunpack.c.l.b16 %v2660
        %v3077 = vunpack.c.h.b16 %v2660
        %v3078 = vunpack.c.l.b16 %v2661
        %v3079 = vunpack.c.h.b16 %v2661
        %v3080 = vunpack.c.l.b16 %v2662
        %v3081 = vunpack.c.h.b16 %v2662
        %v3082 = vunpack.c.l.b16 %v2663
        %v3083 = vunpack.c.h.b16 %v2663
        %v3084 = vunpack.c.l.b16 %v2664
        %v3085 = vunpack.c.h.b16 %v2664
        %v3086 = vunpack.c.l.b16 %v2665
        %v3087 = vunpack.c.h.b16 %v2665
        %v3088 = vunpack.c.l.b16 %v2666
        %v3089 = vunpack.c.h.b16 %v2666
        %v3090 = vunpack.c.l.b16 %v2667
        %v3091 = vunpack.c.h.b16 %v2667
        %v3092 = vunpack.c.l.b16 %v2668
        %v3093 = vunpack.c.h.b16 %v2668
        %v3094 = vunpack.c.l.b16 %v2669
        %v3095 = vunpack.c.h.b16 %v2669
        %v3096 = vunpack.c.l.b16 %v2670
        %v3097 = vunpack.c.h.b16 %v2670
        %v3098 = vunpack.c.l.b16 %v2671
        %v3099 = vunpack.c.h.b16 %v2671
        %v3100 = vunpack.c.l.b16 %v2672
        %v3101 = vunpack.c.h.b16 %v2672
        %v3102 = vunpack.c.l.b16 %v2673
        %v3103 = vunpack.c.h.b16 %v2673
        %v3104 = vunpack.c.l.b16 %v2674
        %v3105 = vunpack.c.h.b16 %v2674
        %v3106 = vunpack.c.l.b16 %v2675
        %v3107 = vunpack.c.h.b16 %v2675
        %v3108 = vunpack.c.l.b16 %v2676
        %v3109 = vunpack.c.h.b16 %v2676
        %v3110 = vunpack.c.l.b16 %v2677
        %v3111 = vunpack.c.h.b16 %v2677
        %v3112 = vunpack.c.l.b16 %v2678
        %v3113 = vunpack.c.h.b16 %v2678
        %v3114 = vunpack.c.l.b16 %v2679
        %v3115 = vunpack.c.h.b16 %v2679
        %v3116 = vunpack.c.l.b16 %v2680
        %v3117 = vunpack.c.h.b16 %v2680
        %v3118 = vunpack.c.l.b16 %v2681
        %v3119 = vunpack.c.h.b16 %v2681
        %v3120 = vunpack.c.l.b16 %v2682
        %v3121 = vunpack.c.h.b16 %v2682
        %v3122 = vunpack.c.l.b16 %v2683
        %v3123 = vunpack.c.h.b16 %v2683
        %v3124 = vunpack.c.l.b16 %v2684
        %v3125 = vunpack.c.h.b16 %v2684
        %v3126 = vunpack.c.l.b16 %v2685
        %v3127 = vunpack.c.h.b16 %v2685
        %v3128 = vunpack.c.l.b16 %v2686
        %v3129 = vunpack.c.h.b16 %v2686
        %v3130 = vunpack.c.l.b16 %v2687
        %v3131 = vunpack.c.h.b16 %v2687
        %v3132 = vunpack.c.l.b16 %v2688
        %v3133 = vunpack.c.h.b16 %v2688
        %v3134 = vunpack.c.l.b16 %v2689
        %v3135 = vunpack.c.h.b16 %v2689
        %v3136 = vunpack.c.l.b16 %v2690
        %v3137 = vunpack.c.h.b16 %v2690
        %v3138 = vunpack.c.l.b16 %v2691
        %v3139 = vunpack.c.h.b16 %v2691
        %v3140 = vunpack.c.l.b16 %v2692
        %v3141 = vunpack.c.h.b16 %v2692
        %v3142 = vunpack.c.l.b16 %v2693
        %v3143 = vunpack.c.h.b16 %v2693
        %v3144 = vunpack.c.l.b16 %v2694
        %v3145 = vunpack.c.h.b16 %v2694
        %v3146 = vunpack.c.l.b16 %v2695
        %v3147 = vunpack.c.h.b16 %v2695
        %v3148 = vunpack.c.l.b16 %v2696
        %v3149 = vunpack.c.h.b16 %v2696
        %v3150 = vunpack.c.l.b16 %v2697
        %v3151 = vunpack.c.h.b16 %v2697
        %v3152 = vunpack.c.l.b16 %v2698
        %v3153 = vunpack.c.h.b16 %v2698
        %v3154 = vunpack.c.l.b16 %v2699
        %v3155 = vunpack.c.h.b16 %v2699
        %v3156 = vunpack.c.l.b16 %v2700
        %v3157 = vunpack.c.h.b16 %v2700
        %v3158 = vunpack.c.l.b16 %v2701
        %v3159 = vunpack.c.h.b16 %v2701
        %v3160 = vunpack.c.l.b16 %v2702
        %v3161 = vunpack.c.h.b16 %v2702
        %v3162 = vunpack.c.l.b16 %v2703
        %v3163 = vunpack.c.h.b16 %v2703
        %v3164 = vunpack.c.l.b16 %v2704
        %v3165 = vunpack.c.h.b16 %v2704
        %v3166 = vunpack.c.l.b16 %v2705
        %v3167 = vunpack.c.h.b16 %v2705
        %v3168 = vunpack.c.l.b16 %v2706
        %v3169 = vunpack.c.h.b16 %v2706
        %v3170 = vunpack.c.l.b16 %v2707
        %v3171 = vunpack.c.h.b16 %v2707
        %v3172 = vunpack.c.l.b16 %v2708
        %v3173 = vunpack.c.h.b16 %v2708
        %v3174 = vunpack.c.l.b16 %v2709
        %v3175 = vunpack.c.h.b16 %v2709
        %v3176 = vunpack.c.l.b16 %v2710
        %v3177 = vunpack.c.h.b16 %v2710
        %v3178 = vunpack.c.l.b16 %v2711
        %v3179 = vunpack.c.h.b16 %v2711
        %v3180 = vunpack.c.l.b16 %v2712
        %v3181 = vunpack.c.h.b16 %v2712
        %v3182 = vunpack.c.l.b16 %v2713
        %v3183 = vunpack.c.h.b16 %v2713
        %v3184 = vunpack.c.l.b16 %v2714
        %v3185 = vunpack.c.h.b16 %v2714
        %v3186 = vunpack.c.l.b16 %v2715
        %v3187 = vunpack.c.h.b16 %v2715
        %v3188 = vunpack.c.l.b16 %v2716
        %v3189 = vunpack.c.h.b16 %v2716
        %v3190 = vunpack.c.l.b16 %v2717
        %v3191 = vunpack.c.h.b16 %v2717
        %v3192 = vunpack.c.l.b16 %v2718
        %v3193 = vunpack.c.h.b16 %v2718
        %v3194 = vunpack.c.l.b16 %v2719
        %v3195 = vunpack.c.h.b16 %v2719
        %v3196 = vunpack.c.l.b16 %v2720
        %v3197 = vunpack.c.h.b16 %v2720
        %v3198 = vunpack.c.l.b16 %v2721
        %v3199 = vunpack.c.h.b16 %v2721
        %v3200 = vunpack.c.l.b16 %v2722
        %v3201 = vunpack.c.h.b16 %v2722
        %v3202 = vunpack.c.l.b16 %v2723
        %v3203 = vunpack.c.h.b16 %v2723
        %v3204 = vunpack.c.l.b16 %v2724
        %v3205 = vunpack.c.h.b16 %v2724
        %v3206 = vunpack.c.l.b16 %v2725
        %v3207 = vunpack.c.h.b16 %v2725
        %v3208 = vunpack.c.l.b16 %v2726
        %v3209 = vunpack.c.h.b16 %v2726
        %v3210 = vunpack.c.l.b16 %v2727
        %v3211 = vunpack.c.h.b16 %v2727
        %v3212 = vunpack.c.l.b16 %v2728
        %v3213 = vunpack.c.h.b16 %v2728
        %v3214 = vunpack.c.l.b16 %v2729
        %v3215 = vunpack.c.h.b16 %v2729
        %v3216 = vunpack.c.l.b16 %v2730
        %v3217 = vunpack.c.h.b16 %v2730
        %v3218 = vunpack.c.l.b16 %v2731
        %v3219 = vunpack.c.h.b16 %v2731
        %v3220 = vunpack.c.l.b16 %v2732
        %v3221 = vunpack.c.h.b16 %v2732
        %v3222 = vunpack.c.l.b16 %v2733
        %v3223 = vunpack.c.h.b16 %v2733
        %v3224 = vunpack.c.l.b16 %v2734
        %v3225 = vunpack.c.h.b16 %v2734
        %v3226 = vunpack.c.l.b16 %v2735
        %v3227 = vunpack.c.h.b16 %v2735
        %v3228 = vunpack.c.l.b16 %v2736
        %v3229 = vunpack.c.h.b16 %v2736
        %v3230 = vunpack.c.l.b16 %v2737
        %v3231 = vunpack.c.h.b16 %v2737
        %v3232 = vunpack.c.l.b16 %v2738
        %v3233 = vunpack.c.h.b16 %v2738
        %v3234 = vunpack.c.l.b16 %v2739
        %v3235 = vunpack.c.h.b16 %v2739
        %v3236 = vunpack.c.l.b16 %v2740
        %v3237 = vunpack.c.h.b16 %v2740
        %v3238 = vunpack.c.l.b16 %v2741
        %v3239 = vunpack.c.h.b16 %v2741
        %v3240 = vunpack.c.l.b16 %v2742
        %v3241 = vunpack.c.h.b16 %v2742
        %v3242 = vunpack.c.l.b16 %v2743
        %v3243 = vunpack.c.h.b16 %v2743
        %v3244 = vunpack.c.l.b16 %v2744
        %v3245 = vunpack.c.h.b16 %v2744
        %v3246 = vunpack.c.l.b16 %v2745
        %v3247 = vunpack.c.h.b16 %v2745
        %v3248 = vunpack.c.l.b16 %v2746
        %v3249 = vunpack.c.h.b16 %v2746
        %v3250 = vunpack.c.l.b16 %v2747
        %v3251 = vunpack.c.h.b16 %v2747
        %v3252 = vunpack.c.l.b16 %v2748
        %v3253 = vunpack.c.h.b16 %v2748
        %v3254 = vunpack.c.l.b16 %v2749
        %v3255 = vunpack.c.h.b16 %v2749
        %v3256 = vunpack.c.l.b16 %v2750
        %v3257 = vunpack.c.h.b16 %v2750
        %v3258 = vunpack.c.l.b16 %v2751
        %v3259 = vunpack.c.h.b16 %v2751
        %v3260 = vunpack.c.l.b16 %v2752
        %v3261 = vunpack.c.h.b16 %v2752
        %v3262 = vunpack.c.l.b16 %v2753
        %v3263 = vunpack.c.h.b16 %v2753
        %v3264 = vunpack.c.l.b16 %v2754
        %v3265 = vunpack.c.h.b16 %v2754
        %v3266 = vunpack.c.l.b16 %v2755
        %v3267 = vunpack.c.h.b16 %v2755
        %v3268 = vunpack.c.l.b16 %v2756
        %v3269 = vunpack.c.h.b16 %v2756
        %v3270 = vunpack.c.l.b16 %v2757
        %v3271 = vunpack.c.h.b16 %v2757
        %v3272 = vunpack.c.l.b16 %v2758
        %v3273 = vunpack.c.h.b16 %v2758
        %v3274 = vunpack.c.l.b16 %v2759
        %v3275 = vunpack.c.h.b16 %v2759
        %v3276 = vunpack.c.l.b16 %v2760
        %v3277 = vunpack.c.h.b16 %v2760
        %v3278 = vunpack.c.l.b16 %v2761
        %v3279 = vunpack.c.h.b16 %v2761
        %v3280 = vunpack.c.l.b16 %v2762
        %v3281 = vunpack.c.h.b16 %v2762
        %v3282 = vunpack.c.l.b16 %v2763
        %v3283 = vunpack.c.h.b16 %v2763
        %v3284 = vunpack.c.l.b16 %v2764
        %v3285 = vunpack.c.h.b16 %v2764
        %v3286 = vunpack.c.l.b16 %v2765
        %v3287 = vunpack.c.h.b16 %v2765
        %v3288 = vunpack.c.l.b16 %v2766
        %v3289 = vunpack.c.h.b16 %v2766
        %v3290 = vunpack.c.l.b16 %v2767
        %v3291 = vunpack.c.h.b16 %v2767
        %v3292 = vunpack.c.l.b16 %v2768
        %v3293 = vunpack.c.h.b16 %v2768
        %v3294 = vunpack.c.l.b16 %v2769
        %v3295 = vunpack.c.h.b16 %v2769
        %v3296 = vunpack.c.l.b16 %v2770
        %v3297 = vunpack.c.h.b16 %v2770
        %v3298 = vunpack.c.l.b16 %v2771
        %v3299 = vunpack.c.h.b16 %v2771
        %v3300 = vunpack.c.l.b16 %v2772
        %v3301 = vunpack.c.h.b16 %v2772
        %v3302 = vunpack.c.l.b16 %v2773
        %v3303 = vunpack.c.h.b16 %v2773
        %v3304 = vunpack.c.l.b16 %v2774
        %v3305 = vunpack.c.h.b16 %v2774
        %v3306 = vunpack.c.l.b16 %v2775
        %v3307 = vunpack.c.h.b16 %v2775
        %v3308 = vunpack.c.l.b16 %v2776
        %v3309 = vunpack.c.h.b16 %v2776
        %v3310 = vunpack.c.l.b16 %v2777
        %v3311 = vunpack.c.h.b16 %v2777
        %v3312 = vunpack.c.l.b16 %v2778
        %v3313 = vunpack.c.h.b16 %v2778
        %v3314 = vunpack.c.l.b16 %v2779
        %v3315 = vunpack.c.h.b16 %v2779
        %v3316 = vunpack.c.l.b16 %v2780
        %v3317 = vunpack.c.h.b16 %v2780
        %v3318 = vunpack.c.l.b16 %v2781
        %v3319 = vunpack.c.h.b16 %v2781
        %v3320 = vunpack.c.l.b16 %v2782
        %v3321 = vunpack.c.h.b16 %v2782
        %v3322 = vunpack.c.l.b16 %v2783
        %v3323 = vunpack.c.h.b16 %v2783
        %v3324 = vunpack.c.l.b16 %v2784
        %v3325 = vunpack.c.h.b16 %v2784
        %v3326 = vunpack.c.l.b16 %v2785
        %v3327 = vunpack.c.h.b16 %v2785
        %v3328 = vunpack.c.l.b16 %v2786
        %v3329 = vunpack.c.h.b16 %v2786
        %v3330 = vunpack.c.l.b16 %v2787
        %v3331 = vunpack.c.h.b16 %v2787
        %v3332 = vunpack.c.l.b16 %v2788
        %v3333 = vunpack.c.h.b16 %v2788
        %v3334 = vunpack.c.l.b16 %v2789
        %v3335 = vunpack.c.h.b16 %v2789
        %v3336 = vunpack.c.l.b16 %v2790
        %v3337 = vunpack.c.h.b16 %v2790
        %v3338 = vunpack.c.l.b16 %v2791
        %v3339 = vunpack.c.h.b16 %v2791
        %v3340 = vunpack.c.l.b16 %v2792
        %v3341 = vunpack.c.h.b16 %v2792
        %v3342 = vunpack.c.l.b16 %v2793
        %v3343 = vunpack.c.h.b16 %v2793
        %v3344 = vunpack.c.l.b16 %v2794
        %v3345 = vunpack.c.h.b16 %v2794
        %v3346 = vunpack.c.l.b16 %v2795
        %v3347 = vunpack.c.h.b16 %v2795
        %v3348 = vunpack.c.l.b16 %v2796
        %v3349 = vunpack.c.h.b16 %v2796
        %v3350 = vunpack.c.l.b16 %v2797
        %v3351 = vunpack.c.h.b16 %v2797
        %v3352 = vunpack.c.l.b16 %v2798
        %v3353 = vunpack.c.h.b16 %v2798
        %v3354 = vunpack.c.l.b16 %v2799
        %v3355 = vunpack.c.h.b16 %v2799
        %v3356 = vunpack.c.l.b16 %v2800
        %v3357 = vunpack.c.h.b16 %v2800
        %v3358 = vunpack.c.l.b16 %v2801
        %v3359 = vunpack.c.h.b16 %v2801
        %v3360 = vunpack.c.l.b16 %v2802
        %v3361 = vunpack.c.h.b16 %v2802
        %v3362 = vunpack.c.l.b16 %v2803
        %v3363 = vunpack.c.h.b16 %v2803
        %v3364 = vunpack.c.l.b16 %v2804
        %v3365 = vunpack.c.h.b16 %v2804
        %v3366 = vunpack.c.l.b16 %v2805
        %v3367 = vunpack.c.h.b16 %v2805
        %v3368 = vunpack.c.l.b16 %v2806
        %v3369 = vunpack.c.h.b16 %v2806
        %v3370 = vunpack.c.l.b16 %v2807
        %v3371 = vunpack.c.h.b16 %v2807
        %v3372 = vunpack.c.l.b16 %v2808
        %v3373 = vunpack.c.h.b16 %v2808
        %v3374 = vunpack.c.l.b16 %v2809
        %v3375 = vunpack.c.h.b16 %v2809
        %v3376 = vunpack.c.l.b16 %v2810
        %v3377 = vunpack.c.h.b16 %v2810
        %v3378 = vunpack.c.l.b16 %v2811
        %v3379 = vunpack.c.h.b16 %v2811
        %v3380 = vunpack.c.l.b16 %v2812
        %v3381 = vunpack.c.h.b16 %v2812
        %v3382 = vunpack.c.l.b16 %v2813
        %v3383 = vunpack.c.h.b16 %v2813
        %v3384 = vunpack.c.l.b16 %v2814
        %v3385 = vunpack.c.h.b16 %v2814
        %v3386 = vunpack.c.l.b16 %v2815
        %v3387 = vunpack.c.h.b16 %v2815
        %v3388 = vunpack.c.l.b16 %v2816
        %v3389 = vunpack.c.h.b16 %v2816
        %v3390 = vunpack.c.l.b16 %v2817
        %v3391 = vunpack.c.h.b16 %v2817
        %v3392 = vunpack.c.l.b16 %v2818
        %v3393 = vunpack.c.h.b16 %v2818
        %v3394 = vunpack.c.l.b16 %v2819
        %v3395 = vunpack.c.h.b16 %v2819
        %v3396 = vunpack.c.l.b16 %v2820
        %v3397 = vunpack.c.h.b16 %v2820
        %v3398 = vunpack.c.l.b16 %v2821
        %v3399 = vunpack.c.h.b16 %v2821
        %v3400 = vunpack.c.l.b16 %v2822
        %v3401 = vunpack.c.h.b16 %v2822
        %v3402 = vunpack.c.l.b16 %v2823
        %v3403 = vunpack.c.h.b16 %v2823
        %v3404 = vunpack.c.l.b16 %v2824
        %v3405 = vunpack.c.h.b16 %v2824
        %v3406 = vunpack.c.l.b16 %v2825
        %v3407 = vunpack.c.h.b16 %v2825
        %v3408 = vunpack.c.l.b16 %v2826
        %v3409 = vunpack.c.h.b16 %v2826
        %v3410 = vunpack.c.l.b16 %v2827
        %v3411 = vunpack.c.h.b16 %v2827
        %v3412 = vunpack.c.l.b16 %v2828
        %v3413 = vunpack.c.h.b16 %v2828
        %v3414 = vunpack.c.l.b16 %v2829
        %v3415 = vunpack.c.h.b16 %v2829
        %v3416 = vunpack.c.l.b16 %v2830
        %v3417 = vunpack.c.h.b16 %v2830
        %v3418 = vunpack.c.l.b16 %v2831
        %v3419 = vunpack.c.h.b16 %v2831
        %v3420 = vunpack.c.l.b16 %v2832
        %v3421 = vunpack.c.h.b16 %v2832
        %v3422 = vunpack.c.l.b16 %v2833
        %v3423 = vunpack.c.h.b16 %v2833
        %v3424 = vunpack.c.l.b16 %v2834
        %v3425 = vunpack.c.h.b16 %v2834
        %v3426 = vunpack.c.l.b16 %v2835
        %v3427 = vunpack.c.h.b16 %v2835
        %v3428 = vunpack.c.l.b16 %v2836
        %v3429 = vunpack.c.h.b16 %v2836
        %v3430 = vunpack.c.l.b16 %v2837
        %v3431 = vunpack.c.h.b16 %v2837
        %v3432 = vunpack.c.l.b16 %v2838
        %v3433 = vunpack.c.h.b16 %v2838
        %v3434 = vunpack.c.l.b16 %v2839
        %v3435 = vunpack.c.h.b16 %v2839
        %v3436 = vunpack.c.l.b16 %v2840
        %v3437 = vunpack.c.h.b16 %v2840
        %v3438 = vunpack.c.l.b16 %v2841
        %v3439 = vunpack.c.h.b16 %v2841
        %v3440 = vunpack.c.l.b16 %v2842
        %v3441 = vunpack.c.h.b16 %v2842
        %v3442 = vunpack.c.l.b16 %v2843
        %v3443 = vunpack.c.h.b16 %v2843
        %v3444 = vpack.c.b16 %v3064, %v3060
        %v3445 = vpack.c.b16 %v3065, %v3061
        %v3446 = vpack.c.b16 %v3066, %v3062
        %v3447 = vpack.c.b16 %v3067, %v3063
        %v3448 = vpack.c.b16 %v3072, %v3068
        %v3449 = vpack.c.b16 %v3073, %v3069
        %v3450 = vpack.c.b16 %v3074, %v3070
        %v3451 = vpack.c.b16 %v3075, %v3071
        %v3452 = vpack.c.b16 %v3080, %v3076
        %v3453 = vpack.c.b16 %v3081, %v3077
        %v3454 = vpack.c.b16 %v3082, %v3078
        %v3455 = vpack.c.b16 %v3083, %v3079
        %v3456 = vpack.c.b16 %v3088, %v3084
        %v3457 = vpack.c.b16 %v3089, %v3085
        %v3458 = vpack.c.b16 %v3090, %v3086
        %v3459 = vpack.c.b16 %v3091, %v3087
        %v3460 = vpack.c.b16 %v3096, %v3092
        %v3461 = vpack.c.b16 %v3097, %v3093
        %v3462 = vpack.c.b16 %v3098, %v3094
        %v3463 = vpack.c.b16 %v3099, %v3095
        %v3464 = vpack.c.b16 %v3104, %v3100
        %v3465 = vpack.c.b16 %v3105, %v3101
        %v3466 = vpack.c.b16 %v3106, %v3102
        %v3467 = vpack.c.b16 %v3107, %v3103
        %v3468 = vpack.c.b16 %v3112, %v3108
        %v3469 = vpack.c.b16 %v3113, %v3109
        %v3470 = vpack.c.b16 %v3114, %v3110
        %v3471 = vpack.c.b16 %v3115, %v3111
        %v3472 = vpack.c.b16 %v3120, %v3116
        %v3473 = vpack.c.b16 %v3121, %v3117
        %v3474 = vpack.c.b16 %v3122, %v3118
        %v3475 = vpack.c.b16 %v3123, %v3119
        %v3476 = vpack.c.b16 %v3128, %v3124
        %v3477 = vpack.c.b16 %v3129, %v3125
        %v3478 = vpack.c.b16 %v3130, %v3126
        %v3479 = vpack.c.b16 %v3131, %v3127
        %v3480 = vpack.c.b16 %v3136, %v3132
        %v3481 = vpack.c.b16 %v3137, %v3133
        %v3482 = vpack.c.b16 %v3138, %v3134
        %v3483 = vpack.c.b16 %v3139, %v3135
        %v3484 = vpack.c.b16 %v3144, %v3140
        %v3485 = vpack.c.b16 %v3145, %v3141
        %v3486 = vpack.c.b16 %v3146, %v3142
        %v3487 = vpack.c.b16 %v3147, %v3143
        %v3488 = vpack.c.b16 %v3152, %v3148
        %v3489 = vpack.c.b16 %v3153, %v3149
        %v3490 = vpack.c.b16 %v3154, %v3150
        %v3491 = vpack.c.b16 %v3155, %v3151
        %v3492 = vpack.c.b16 %v3160, %v3156
        %v3493 = vpack.c.b16 %v3161, %v3157
        %v3494 = vpack.c.b16 %v3162, %v3158
        %v3495 = vpack.c.b16 %v3163, %v3159
        %v3496 = vpack.c.b16 %v3168, %v3164
        %v3497 = vpack.c.b16 %v3169, %v3165
        %v3498 = vpack.c.b16 %v3170, %v3166
        %v3499 = vpack.c.b16 %v3171, %v3167
        %v3500 = vpack.c.b16 %v3176, %v3172
        %v3501 = vpack.c.b16 %v3177, %v3173
        %v3502 = vpack.c.b16 %v3178, %v3174
        %v3503 = vpack.c.b16 %v3179, %v3175
        %v3504 = vpack.c.b16 %v3184, %v3180
        %v3505 = vpack.c.b16 %v3185, %v3181
        %v3506 = vpack.c.b16 %v3186, %v3182
        %v3507 = vpack.c.b16 %v3187, %v3183
        %v3508 = vpack.c.b16 %v3192, %v3188
        %v3509 = vpack.c.b16 %v3193, %v3189
        %v3510 = vpack.c.b16 %v3194, %v3190
        %v3511 = vpack.c.b16 %v3195, %v3191
        %v3512 = vpack.c.b16 %v3200, %v3196
        %v3513 = vpack.c.b16 %v3201, %v3197
        %v3514 = vpack.c.b16 %v3202, %v3198
        %v3515 = vpack.c.b16 %v3203, %v3199
        %v3516 = vpack.c.b16 %v3208, %v3204
        %v3517 = vpack.c.b16 %v3209, %v3205
        %v3518 = vpack.c.b16 %v3210, %v3206
        %v3519 = vpack.c.b16 %v3211, %v3207
        %v3520 = vpack.c.b16 %v3216, %v3212
        %v3521 = vpack.c.b16 %v3217, %v3213
        %v3522 = vpack.c.b16 %v3218, %v3214
        %v3523 = vpack.c.b16 %v3219, %v3215
        %v3524 = vpack.c.b16 %v3224, %v3220
        %v3525 = vpack.c.b16 %v3225, %v3221
        %v3526 = vpack.c.b16 %v3226, %v3222
        %v3527 = vpack.c.b16 %v3227, %v3223
        %v3528 = vpack.c.b16 %v3232, %v3228
        %v3529 = vpack.c.b16 %v3233, %v3229
        %v3530 = vpack.c.b16 %v3234, %v3230
        %v3531 = vpack.c.b16 %v3235, %v3231
        %v3532 = vpack.c.b16 %v3240, %v3236
        %v3533 = vpack.c.b16 %v3241, %v3237
        %v3534 = vpack.c.b16 %v3242, %v3238
        %v3535 = vpack.c.b16 %v3243, %v3239
        %v3536 = vpack.c.b16 %v3248, %v3244
        %v3537 = vpack.c.b16 %v3249, %v3245
        %v3538 = vpack.c.b16 %v3250, %v3246
        %v3539 = vpack.c.b16 %v3251, %v3247
        %v3540 = vpack.c.b16 %v3256, %v3252
        %v3541 = vpack.c.b16 %v3257, %v3253
        %v3542 = vpack.c.b16 %v3258, %v3254
        %v3543 = vpack.c.b16 %v3259, %v3255
        %v3544 = vpack.c.b16 %v3264, %v3260
        %v3545 = vpack.c.b16 %v3265, %v3261
        %v3546 = vpack.c.b16 %v3266, %v3262
        %v3547 = vpack.c.b16 %v3267, %v3263
        %v3548 = vpack.c.b16 %v3272, %v3268
        %v3549 = vpack.c.b16 %v3273, %v3269
        %v3550 = vpack.c.b16 %v3274, %v3270
        %v3551 = vpack.c.b16 %v3275, %v3271
        %v3552 = vpack.c.b16 %v3280, %v3276
        %v3553 = vpack.c.b16 %v3281, %v3277
        %v3554 = vpack.c.b16 %v3282, %v3278
        %v3555 = vpack.c.b16 %v3283, %v3279
        %v3556 = vpack.c.b16 %v3288, %v3284
        %v3557 = vpack.c.b16 %v3289, %v3285
        %v3558 = vpack.c.b16 %v3290, %v3286
        %v3559 = vpack.c.b16 %v3291, %v3287
        %v3560 = vpack.c.b16 %v3296, %v3292
        %v3561 = vpack.c.b16 %v3297, %v3293
        %v3562 = vpack.c.b16 %v3298, %v3294
        %v3563 = vpack.c.b16 %v3299, %v3295
        %v3564 = vpack.c.b16 %v3304, %v3300
        %v3565 = vpack.c.b16 %v3305, %v3301
        %v3566 = vpack.c.b16 %v3306, %v3302
        %v3567 = vpack.c.b16 %v3307, %v3303
        %v3568 = vpack.c.b16 %v3312, %v3308
        %v3569 = vpack.c.b16 %v3313, %v3309
        %v3570 = vpack.c.b16 %v3314, %v3310
        %v3571 = vpack.c.b16 %v3315, %v3311
        %v3572 = vpack.c.b16 %v3320, %v3316
        %v3573 = vpack.c.b16 %v3321, %v3317
        %v3574 = vpack.c.b16 %v3322, %v3318
        %v3575 = vpack.c.b16 %v3323, %v3319
        %v3576 = vpack.c.b16 %v3328, %v3324
        %v3577 = vpack.c.b16 %v3329, %v3325
        %v3578 = vpack.c.b16 %v3330, %v3326
        %v3579 = vpack.c.b16 %v3331, %v3327
        %v3580 = vpack.c.b16 %v3336, %v3332
        %v3581 = vpack.c.b16 %v3337, %v3333
        %v3582 = vpack.c.b16 %v3338, %v3334
        %v3583 = vpack.c.b16 %v3339, %v3335
        %v3584 = vpack.c.b16 %v3344, %v3340
        %v3585 = vpack.c.b16 %v3345, %v3341
        %v3586 = vpack.c.b16 %v3346, %v3342
        %v3587 = vpack.c.b16 %v3347, %v3343
        %v3588 = vpack.c.b16 %v3352, %v3348
        %v3589 = vpack.c.b16 %v3353, %v3349
        %v3590 = vpack.c.b16 %v3354, %v3350
        %v3591 = vpack.c.b16 %v3355, %v3351
        %v3592 = vpack.c.b16 %v3360, %v3356
        %v3593 = vpack.c.b16 %v3361, %v3357
        %v3594 = vpack.c.b16 %v3362, %v3358
        %v3595 = vpack.c.b16 %v3363, %v3359
        %v3596 = vpack.c.b16 %v3368, %v3364
        %v3597 = vpack.c.b16 %v3369, %v3365
        %v3598 = vpack.c.b16 %v3370, %v3366
        %v3599 = vpack.c.b16 %v3371, %v3367
        %v3600 = vpack.c.b16 %v3376, %v3372
        %v3601 = vpack.c.b16 %v3377, %v3373
        %v3602 = vpack.c.b16 %v3378, %v3374
        %v3603 = vpack.c.b16 %v3379, %v3375
        %v3604 = vpack.c.b16 %v3384, %v3380
        %v3605 = vpack.c.b16 %v3385, %v3381
        %v3606 = vpack.c.b16 %v3386, %v3382
        %v3607 = vpack.c.b16 %v3387, %v3383
        %v3608 = vpack.c.b16 %v3392, %v3388
        %v3609 = vpack.c.b16 %v3393, %v3389
        %v3610 = vpack.c.b16 %v3394, %v3390
        %v3611 = vpack.c.b16 %v3395, %v3391
        %v3612 = vpack.c.b16 %v3400, %v3396
        %v3613 = vpack.c.b16 %v3401, %v3397
        %v3614 = vpack.c.b16 %v3402, %v3398
        %v3615 = vpack.c.b16 %v3403, %v3399
        %v3616 = vpack.c.b16 %v3408, %v3404
        %v3617 = vpack.c.b16 %v3409, %v3405
        %v3618 = vpack.c.b16 %v3410, %v3406
        %v3619 = vpack.c.b16 %v3411, %v3407
        %v3620 = vpack.c.b16 %v3416, %v3412
        %v3621 = vpack.c.b16 %v3417, %v3413
        %v3622 = vpack.c.b16 %v3418, %v3414
        %v3623 = vpack.c.b16 %v3419, %v3415
        %v3624 = vpack.c.b16 %v3424, %v3420
        %v3625 = vpack.c.b16 %v3425, %v3421
        %v3626 = vpack.c.b16 %v3426, %v3422
        %v3627 = vpack.c.b16 %v3427, %v3423
        %v3628 = vpack.c.b16 %v3432, %v3428
        %v3629 = vpack.c.b16 %v3433, %v3429
        %v3630 = vpack.c.b16 %v3434, %v3430
        %v3631 = vpack.c.b16 %v3435, %v3431
        %v3632 = vpack.c.b16 %v3440, %v3436
        %v3633 = vpack.c.b16 %v3441, %v3437
        %v3634 = vpack.c.b16 %v3442, %v3438
        %v3635 = vpack.c.b16 %v3443, %v3439
        %3828 = vmatpush.bf16.msra.mxu0 %v3472
        %3829 = vmatpush.bf16.msra.mxu0 %v3468
        %3830 = vmatpush.bf16.msra.mxu0 %v3464
        %3831 = vmatpush.bf16.msra.mxu0 %v3460
        %3832 = vmatpush.bf16.msra.mxu0 %v3456
        %3833 = vmatpush.bf16.msra.mxu0 %v3452
        %3834 = vmatpush.bf16.msra.mxu0 %v3448
        %3835 = vmatpush.bf16.msra.mxu0 %v3444
        %3836 = vmatmul.bf16.gmra.mxu0 %v2856
        %v3837 = vpop.f32.mrf.mxu0
        %v3838 = vadd.f32 %v2846, %v3837
        %v3839 = vpop.f32.mrf.mxu0
        %3840 = vdwg.mxu0
        %3841 = vmatpush.bf16.msra.mxu0 %v3504
        %3842 = vmatpush.bf16.msra.mxu0 %v3500
        %3843 = vmatpush.bf16.msra.mxu0 %v3496
        %3844 = vmatpush.bf16.msra.mxu0 %v3492
        %3845 = vmatpush.bf16.msra.mxu0 %v3488
        %3846 = vmatpush.bf16.msra.mxu0 %v3484
        %3847 = vmatpush.bf16.msra.mxu0 %v3480
        %3848 = vmatpush.bf16.msra.mxu0 %v3476
        %3849 = vmatmul.bf16.gmra.mxu0 %v2857
        %v3850 = vpop.f32.mrf.mxu0
        %v3851 = vadd.f32 %v3838, %v3850
        %v3852 = vpop.f32.mrf.mxu0
        %3853 = vdwg.mxu0
        %3854 = vmatpush.bf16.msra.mxu0 %v3536
        %3855 = vmatpush.bf16.msra.mxu0 %v3532
        %3856 = vmatpush.bf16.msra.mxu0 %v3528
        %3857 = vmatpush.bf16.msra.mxu0 %v3524
        %3858 = vmatpush.bf16.msra.mxu0 %v3520
        %3859 = vmatpush.bf16.msra.mxu0 %v3516
        %3860 = vmatpush.bf16.msra.mxu0 %v3512
        %3861 = vmatpush.bf16.msra.mxu0 %v3508
        %3862 = vmatmul.bf16.gmra.mxu0 %v2858
        %v3863 = vpop.f32.mrf.mxu0
        %v3864 = vadd.f32 %v3851, %v3863
        %v3865 = vpop.f32.mrf.mxu0
        %3866 = vdwg.mxu0
        %3867 = vmatpush.bf16.msra.mxu0 %v3568
        %3868 = vmatpush.bf16.msra.mxu0 %v3564
        %3869 = vmatpush.bf16.msra.mxu0 %v3560
        %3870 = vmatpush.bf16.msra.mxu0 %v3556
        %3871 = vmatpush.bf16.msra.mxu0 %v3552
        %3872 = vmatpush.bf16.msra.mxu0 %v3548
        %3873 = vmatpush.bf16.msra.mxu0 %v3544
        %3874 = vmatpush.bf16.msra.mxu0 %v3540
        %3875 = vmatmul.bf16.gmra.mxu0 %v2859
        %v3876 = vpop.f32.mrf.mxu0
        %v3877 = vadd.f32 %v3864, %v3876
        %v3878 = vpop.f32.mrf.mxu0
        %3879 = vdwg.mxu0
        %3880 = vmatpush.bf16.msra.mxu0 %v3600
        %3881 = vmatpush.bf16.msra.mxu0 %v3596
        %3882 = vmatpush.bf16.msra.mxu0 %v3592
        %3883 = vmatpush.bf16.msra.mxu0 %v3588
        %3884 = vmatpush.bf16.msra.mxu0 %v3584
        %3885 = vmatpush.bf16.msra.mxu0 %v3580
        %3886 = vmatpush.bf16.msra.mxu0 %v3576
        %3887 = vmatpush.bf16.msra.mxu0 %v3572
        %3888 = vmatmul.bf16.gmra.mxu0 %v2860
        %v3889 = vpop.f32.mrf.mxu0
        %v3890 = vadd.f32 %v3877, %v3889
        %v3891 = vpop.f32.mrf.mxu0
        %3892 = vdwg.mxu0
        %3893 = vmatpush.bf16.msra.mxu0 %v3632
        %3894 = vmatpush.bf16.msra.mxu0 %v3628
        %3895 = vmatpush.bf16.msra.mxu0 %v3624
        %3896 = vmatpush.bf16.msra.mxu0 %v3620
        %3897 = vmatpush.bf16.msra.mxu0 %v3616
        %3898 = vmatpush.bf16.msra.mxu0 %v3612
        %3899 = vmatpush.bf16.msra.mxu0 %v3608
        %3900 = vmatpush.bf16.msra.mxu0 %v3604
        %3901 = vmatmul.bf16.gmra.mxu0 %v2861
        %v3902 = vpop.f32.mrf.mxu0
        %v3903 = vadd.f32 %v3890, %v3902
        %v3904 = vpop.f32.mrf.mxu0
        %3905 = vdwg.mxu0
        %3906 = vmatpush.bf16.msra.mxu0 %v3473
        %3907 = vmatpush.bf16.msra.mxu0 %v3469
        %3908 = vmatpush.bf16.msra.mxu0 %v3465
        %3909 = vmatpush.bf16.msra.mxu0 %v3461
        %3910 = vmatpush.bf16.msra.mxu0 %v3457
        %3911 = vmatpush.bf16.msra.mxu0 %v3453
        %3912 = vmatpush.bf16.msra.mxu0 %v3449
        %3913 = vmatpush.bf16.msra.mxu0 %v3445
        %3914 = vmatmul.bf16.gmra.mxu0 %v2856
        %v3915 = vpop.f32.mrf.mxu0
        %v3916 = vadd.f32 %v2847, %v3915
        %v3917 = vpop.f32.mrf.mxu0
        %3918 = vdwg.mxu0
        %3919 = vmatpush.bf16.msra.mxu0 %v3505
        %3920 = vmatpush.bf16.msra.mxu0 %v3501
        %3921 = vmatpush.bf16.msra.mxu0 %v3497
        %3922 = vmatpush.bf16.msra.mxu0 %v3493
        %3923 = vmatpush.bf16.msra.mxu0 %v3489
        %3924 = vmatpush.bf16.msra.mxu0 %v3485
        %3925 = vmatpush.bf16.msra.mxu0 %v3481
        %3926 = vmatpush.bf16.msra.mxu0 %v3477
        %3927 = vmatmul.bf16.gmra.mxu0 %v2857
        %v3928 = vpop.f32.mrf.mxu0
        %v3929 = vadd.f32 %v3916, %v3928
        %v3930 = vpop.f32.mrf.mxu0
        %3931 = vdwg.mxu0
        %3932 = vmatpush.bf16.msra.mxu0 %v3537
        %3933 = vmatpush.bf16.msra.mxu0 %v3533
        %3934 = vmatpush.bf16.msra.mxu0 %v3529
        %3935 = vmatpush.bf16.msra.mxu0 %v3525
        %3936 = vmatpush.bf16.msra.mxu0 %v3521
        %3937 = vmatpush.bf16.msra.mxu0 %v3517
        %3938 = vmatpush.bf16.msra.mxu0 %v3513
        %3939 = vmatpush.bf16.msra.mxu0 %v3509
        %3940 = vmatmul.bf16.gmra.mxu0 %v2858
        %v3941 = vpop.f32.mrf.mxu0
        %v3942 = vadd.f32 %v3929, %v3941
        %v3943 = vpop.f32.mrf.mxu0
        %3944 = vdwg.mxu0
        %3945 = vmatpush.bf16.msra.mxu0 %v3569
        %3946 = vmatpush.bf16.msra.mxu0 %v3565
        %3947 = vmatpush.bf16.msra.mxu0 %v3561
        %3948 = vmatpush.bf16.msra.mxu0 %v3557
        %3949 = vmatpush.bf16.msra.mxu0 %v3553
        %3950 = vmatpush.bf16.msra.mxu0 %v3549
        %3951 = vmatpush.bf16.msra.mxu0 %v3545
        %3952 = vmatpush.bf16.msra.mxu0 %v3541
        %3953 = vmatmul.bf16.gmra.mxu0 %v2859
        %v3954 = vpop.f32.mrf.mxu0
        %v3955 = vadd.f32 %v3942, %v3954
        %v3956 = vpop.f32.mrf.mxu0
        %3957 = vdwg.mxu0
        %3958 = vmatpush.bf16.msra.mxu0 %v3601
        %3959 = vmatpush.bf16.msra.mxu0 %v3597
        %3960 = vmatpush.bf16.msra.mxu0 %v3593
        %3961 = vmatpush.bf16.msra.mxu0 %v3589
        %3962 = vmatpush.bf16.msra.mxu0 %v3585
        %3963 = vmatpush.bf16.msra.mxu0 %v3581
        %3964 = vmatpush.bf16.msra.mxu0 %v3577
        %3965 = vmatpush.bf16.msra.mxu0 %v3573
        %3966 = vmatmul.bf16.gmra.mxu0 %v2860
        %v3967 = vpop.f32.mrf.mxu0
        %v3968 = vadd.f32 %v3955, %v3967
        %v3969 = vpop.f32.mrf.mxu0
        %3970 = vdwg.mxu0
        %3971 = vmatpush.bf16.msra.mxu0 %v3633
        %3972 = vmatpush.bf16.msra.mxu0 %v3629
        %3973 = vmatpush.bf16.msra.mxu0 %v3625
        %3974 = vmatpush.bf16.msra.mxu0 %v3621
        %3975 = vmatpush.bf16.msra.mxu0 %v3617
        %3976 = vmatpush.bf16.msra.mxu0 %v3613
        %3977 = vmatpush.bf16.msra.mxu0 %v3609
        %3978 = vmatpush.bf16.msra.mxu0 %v3605
        %3979 = vmatmul.bf16.gmra.mxu0 %v2861
        %v3980 = vpop.f32.mrf.mxu0
        %v3981 = vadd.f32 %v3968, %v3980
        %v3982 = vpop.f32.mrf.mxu0
        %3983 = vdwg.mxu0
        %3984 = vmatpush.bf16.msra.mxu0 %v3474
        %3985 = vmatpush.bf16.msra.mxu0 %v3470
        %3986 = vmatpush.bf16.msra.mxu0 %v3466
        %3987 = vmatpush.bf16.msra.mxu0 %v3462
        %3988 = vmatpush.bf16.msra.mxu0 %v3458
        %3989 = vmatpush.bf16.msra.mxu0 %v3454
        %3990 = vmatpush.bf16.msra.mxu0 %v3450
        %3991 = vmatpush.bf16.msra.mxu0 %v3446
        %3992 = vmatmul.bf16.gmra.mxu0 %v2856
        %v3993 = vpop.f32.mrf.mxu0
        %v3994 = vadd.f32 %v2848, %v3993
        %v3995 = vpop.f32.mrf.mxu0
        %3996 = vdwg.mxu0
        %3997 = vmatpush.bf16.msra.mxu0 %v3506
        %3998 = vmatpush.bf16.msra.mxu0 %v3502
        %3999 = vmatpush.bf16.msra.mxu0 %v3498
        %4000 = vmatpush.bf16.msra.mxu0 %v3494
        %4001 = vmatpush.bf16.msra.mxu0 %v3490
        %4002 = vmatpush.bf16.msra.mxu0 %v3486
        %4003 = vmatpush.bf16.msra.mxu0 %v3482
        %4004 = vmatpush.bf16.msra.mxu0 %v3478
        %4005 = vmatmul.bf16.gmra.mxu0 %v2857
        %v4006 = vpop.f32.mrf.mxu0
        %v4007 = vadd.f32 %v3994, %v4006
        %v4008 = vpop.f32.mrf.mxu0
        %4009 = vdwg.mxu0
        %4010 = vmatpush.bf16.msra.mxu0 %v3538
        %4011 = vmatpush.bf16.msra.mxu0 %v3534
        %4012 = vmatpush.bf16.msra.mxu0 %v3530
        %4013 = vmatpush.bf16.msra.mxu0 %v3526
        %4014 = vmatpush.bf16.msra.mxu0 %v3522
        %4015 = vmatpush.bf16.msra.mxu0 %v3518
        %4016 = vmatpush.bf16.msra.mxu0 %v3514
        %4017 = vmatpush.bf16.msra.mxu0 %v3510
        %4018 = vmatmul.bf16.gmra.mxu0 %v2858
        %v4019 = vpop.f32.mrf.mxu0
        %v4020 = vadd.f32 %v4007, %v4019
        %v4021 = vpop.f32.mrf.mxu0
        %4022 = vdwg.mxu0
        %4023 = vmatpush.bf16.msra.mxu0 %v3570
        %4024 = vmatpush.bf16.msra.mxu0 %v3566
        %4025 = vmatpush.bf16.msra.mxu0 %v3562
        %4026 = vmatpush.bf16.msra.mxu0 %v3558
        %4027 = vmatpush.bf16.msra.mxu0 %v3554
        %4028 = vmatpush.bf16.msra.mxu0 %v3550
        %4029 = vmatpush.bf16.msra.mxu0 %v3546
        %4030 = vmatpush.bf16.msra.mxu0 %v3542
        %4031 = vmatmul.bf16.gmra.mxu0 %v2859
        %v4032 = vpop.f32.mrf.mxu0
        %v4033 = vadd.f32 %v4020, %v4032
        %v4034 = vpop.f32.mrf.mxu0
        %4035 = vdwg.mxu0
        %4036 = vmatpush.bf16.msra.mxu0 %v3602
        %4037 = vmatpush.bf16.msra.mxu0 %v3598
        %4038 = vmatpush.bf16.msra.mxu0 %v3594
        %4039 = vmatpush.bf16.msra.mxu0 %v3590
        %4040 = vmatpush.bf16.msra.mxu0 %v3586
        %4041 = vmatpush.bf16.msra.mxu0 %v3582
        %4042 = vmatpush.bf16.msra.mxu0 %v3578
        %4043 = vmatpush.bf16.msra.mxu0 %v3574
        %4044 = vmatmul.bf16.gmra.mxu0 %v2860
        %v4045 = vpop.f32.mrf.mxu0
        %v4046 = vadd.f32 %v4033, %v4045
        %v4047 = vpop.f32.mrf.mxu0
        %4048 = vdwg.mxu0
        %4049 = vmatpush.bf16.msra.mxu0 %v3634
        %4050 = vmatpush.bf16.msra.mxu0 %v3630
        %4051 = vmatpush.bf16.msra.mxu0 %v3626
        %4052 = vmatpush.bf16.msra.mxu0 %v3622
        %4053 = vmatpush.bf16.msra.mxu0 %v3618
        %4054 = vmatpush.bf16.msra.mxu0 %v3614
        %4055 = vmatpush.bf16.msra.mxu0 %v3610
        %4056 = vmatpush.bf16.msra.mxu0 %v3606
        %4057 = vmatmul.bf16.gmra.mxu0 %v2861
        %v4058 = vpop.f32.mrf.mxu0
        %v4059 = vadd.f32 %v4046, %v4058
        %v4060 = vpop.f32.mrf.mxu0
        %4061 = vdwg.mxu0
        %4062 = vmatpush.bf16.msra.mxu0 %v3475
        %4063 = vmatpush.bf16.msra.mxu0 %v3471
        %4064 = vmatpush.bf16.msra.mxu0 %v3467
        %4065 = vmatpush.bf16.msra.mxu0 %v3463
        %4066 = vmatpush.bf16.msra.mxu0 %v3459
        %4067 = vmatpush.bf16.msra.mxu0 %v3455
        %4068 = vmatpush.bf16.msra.mxu0 %v3451
        %4069 = vmatpush.bf16.msra.mxu0 %v3447
        %4070 = vmatmul.bf16.gmra.mxu0 %v2856
        %v4071 = vpop.f32.mrf.mxu0
        %v4072 = vadd.f32 %v2849, %v4071
        %v4073 = vpop.f32.mrf.mxu0
        %4074 = vdwg.mxu0
        %4075 = vmatpush.bf16.msra.mxu0 %v3507
        %4076 = vmatpush.bf16.msra.mxu0 %v3503
        %4077 = vmatpush.bf16.msra.mxu0 %v3499
        %4078 = vmatpush.bf16.msra.mxu0 %v3495
        %4079 = vmatpush.bf16.msra.mxu0 %v3491
        %4080 = vmatpush.bf16.msra.mxu0 %v3487
        %4081 = vmatpush.bf16.msra.mxu0 %v3483
        %4082 = vmatpush.bf16.msra.mxu0 %v3479
        %4083 = vmatmul.bf16.gmra.mxu0 %v2857
        %v4084 = vpop.f32.mrf.mxu0
        %v4085 = vadd.f32 %v4072, %v4084
        %v4086 = vpop.f32.mrf.mxu0
        %4087 = vdwg.mxu0
        %4088 = vmatpush.bf16.msra.mxu0 %v3539
        %4089 = vmatpush.bf16.msra.mxu0 %v3535
        %4090 = vmatpush.bf16.msra.mxu0 %v3531
        %4091 = vmatpush.bf16.msra.mxu0 %v3527
        %4092 = vmatpush.bf16.msra.mxu0 %v3523
        %4093 = vmatpush.bf16.msra.mxu0 %v3519
        %4094 = vmatpush.bf16.msra.mxu0 %v3515
        %4095 = vmatpush.bf16.msra.mxu0 %v3511
        %4096 = vmatmul.bf16.gmra.mxu0 %v2858
        %v4097 = vpop.f32.mrf.mxu0
        %v4098 = vadd.f32 %v4085, %v4097
        %v4099 = vpop.f32.mrf.mxu0
        %4100 = vdwg.mxu0
        %4101 = vmatpush.bf16.msra.mxu0 %v3571
        %4102 = vmatpush.bf16.msra.mxu0 %v3567
        %4103 = vmatpush.bf16.msra.mxu0 %v3563
        %4104 = vmatpush.bf16.msra.mxu0 %v3559
        %4105 = vmatpush.bf16.msra.mxu0 %v3555
        %4106 = vmatpush.bf16.msra.mxu0 %v3551
        %4107 = vmatpush.bf16.msra.mxu0 %v3547
        %4108 = vmatpush.bf16.msra.mxu0 %v3543
        %4109 = vmatmul.bf16.gmra.mxu0 %v2859
        %v4110 = vpop.f32.mrf.mxu0
        %v4111 = vadd.f32 %v4098, %v4110
        %v4112 = vpop.f32.mrf.mxu0
        %4113 = vdwg.mxu0
        %4114 = vmatpush.bf16.msra.mxu0 %v3603
        %4115 = vmatpush.bf16.msra.mxu0 %v3599
        %4116 = vmatpush.bf16.msra.mxu0 %v3595
        %4117 = vmatpush.bf16.msra.mxu0 %v3591
        %4118 = vmatpush.bf16.msra.mxu0 %v3587
        %4119 = vmatpush.bf16.msra.mxu0 %v3583
        %4120 = vmatpush.bf16.msra.mxu0 %v3579
        %4121 = vmatpush.bf16.msra.mxu0 %v3575
        %4122 = vmatmul.bf16.gmra.mxu0 %v2860
        %v4123 = vpop.f32.mrf.mxu0
        %v4124 = vadd.f32 %v4111, %v4123
        %v4125 = vpop.f32.mrf.mxu0
        %4126 = vdwg.mxu0
        %4127 = vmatpush.bf16.msra.mxu0 %v3635
        %4128 = vmatpush.bf16.msra.mxu0 %v3631
        %4129 = vmatpush.bf16.msra.mxu0 %v3627
        %4130 = vmatpush.bf16.msra.mxu0 %v3623
        %4131 = vmatpush.bf16.msra.mxu0 %v3619
        %4132 = vmatpush.bf16.msra.mxu0 %v3615
        %4133 = vmatpush.bf16.msra.mxu0 %v3611
        %4134 = vmatpush.bf16.msra.mxu0 %v3607
        %4135 = vmatmul.bf16.gmra.mxu0 %v2861
        %v4136 = vpop.f32.mrf.mxu0
        %v4137 = vadd.f32 %v4124, %v4136
        %v4138 = vpop.f32.mrf.mxu0
        %4139 = vdwg.mxu0
        %v4140 = vmax.f32 %v3903, 0.0
        %v4141 = vmax.f32 %v3981, 0.0
        %v4142 = vmax.f32 %v4059, 0.0
        %v4143 = vmax.f32 %v4137, 0.0
        %p4144 = scmp.eq.s32.totalorder %s56, 0
        // Predicated region
        $region181: #{forward.1} parent=107 // pred_check
          %p4145 = pneg %p4144
        $region182: #{forward.1} parent=107 // pred_check_branch
          %4147 = sbr.rel (%p4145) target = $region184
        $region183: #{forward.1} parent=107 // pred_region
          %v4152 = vrot.slane %v2648, 6
          %v4153 = vrot.slane %v2649, 4
          %v4154 = vrot.slane %v2650, 2
          %vm4155 = vcmask 1041408
          %v4156 = vsel %vm4155, %v2647, %v4152
          %vm4157 = vcmask 1045508
          %v4158 = vsel %vm4157, %v4153, %v4154
          %vm4159 = vcmask 1043456
          %v4160 = vsel %vm4159, %v4156, %v4158
          %4162 = vst [vmem:[#allocation2] sm:$0xff] %v4160
          %v4167 = vrot.slane %v4141, 6
          %v4168 = vrot.slane %v4142, 4
          %v4169 = vrot.slane %v4143, 2
          %v4170 = vsel %vm4155, %v4140, %v4167
          %v4171 = vsel %vm4157, %v4168, %v4169
          %v4172 = vsel %vm4159, %v4170, %v4171
          %4174 = vst [vmem:[#allocation3] sm:$0xff] %v4172
        $region184: #{forward.1} parent=107 // pred_fallthru
          _
        %p4175 = scmp.gt.s32.totalorder %s56, 0
        // Predicated region
        $region185: #{forward.1} parent=107 // pred_check
          %p4176 = pneg %p4175
        $region186: #{forward.1} parent=107 // pred_check_branch
          %4178 = sbr.rel (%p4176) target = $region188
        $region187: #{forward.1} parent=107 // pred_region
          %v4179 = vld [vmem:[#allocation2] sm:$0xff]
          %v4184 = vrot.slane %v2648, 6
          %v4185 = vrot.slane %v2649, 4
          %v4186 = vrot.slane %v2650, 2
          %vm4187 = vcmask 1041408
          %v4188 = vsel %vm4187, %v2647, %v4184
          %vm4189 = vcmask 1045508
          %v4190 = vsel %vm4189, %v4185, %v4186
          %vm4191 = vcmask 1043456
          %v4192 = vsel %vm4191, %v4188, %v4190
          %v4194 = vmax.f32 %v4179, %v4192
          %4195 = vst [vmem:[#allocation2] sm:$0xff] %v4194
          %v4196 = vld [vmem:[#allocation3] sm:$0xff]
          %v4201 = vrot.slane %v4141, 6
          %v4202 = vrot.slane %v4142, 4
          %v4203 = vrot.slane %v4143, 2
          %v4204 = vsel %vm4187, %v4140, %v4201
          %v4205 = vsel %vm4189, %v4202, %v4203
          %v4206 = vsel %vm4191, %v4204, %v4205
          %v4208 = vmax.f32 %v4196, %v4206
          %4209 = vst [vmem:[#allocation3] sm:$0xff] %v4208
        $region188: #{forward.1} parent=107 // pred_fallthru
          _
        %p4210 = scmp.eq.s32.totalorder %s56, 3
        // Predicated region
        $region189: #{forward.1} parent=107 // pred_check
          %p4211 = pneg %p4210
        $region190: #{forward.1} parent=107 // pred_check_branch
          %4213 = sbr.rel (%p4211) target = $region192
        $region191: #{forward.1} parent=107 // pred_region
          %v4214 = vld [vmem:[#allocation2] sm:$0xff]
          %v4215 = vld [vmem:[%s6] sm:$0x3]
          %4217 = vset.pattern.permute.xlu0 0
          %4218 = vperm.xlu0 %4217, %v4215
          %v4219 = vpop.permute.xlu0 %4218
          %v4221 = vunpack.c.l.s4 269488144
          %v4222 = vunpack.c.0.s8 %v4221
          %v4223 = vperm.slane %v4219, %v4222
          %v4225 = vmul.f32 %v4214, %v4223
          %4226 = vst [vmem:[#allocation36] sm:$0xff] %v4225
          %v4227 = vld [vmem:[#allocation3] sm:$0xff]
          %v4228 = vld [vmem:[%s7] sm:$0x3]
          %4230 = vset.pattern.permute.xlu0 0
          %4231 = vperm.xlu0 %4230, %v4228
          %v4232 = vpop.permute.xlu0 %4231
          %v4234 = vunpack.c.l.s4 269488144
          %v4235 = vunpack.c.0.s8 %v4234
          %v4236 = vperm.slane %v4232, %v4235
          %v4238 = vmul.f32 %v4227, %v4236
          %4239 = vst [vmem:[#allocation36 + $0x8] sm:$0xff] %v4238
          %v4240 = vld [vmem:[#allocation36] sm:$0xff]
          %v4241 = vld [vmem:[#allocation36 + $0x8] sm:$0xff]
          %4244 = vst [vmem:[#allocation1] ss:$4 sm:$0xff] %v4240
          %s4245 = scalar_lea.vmem [#allocation1], 32
          %4246 = vst [vmem:[%s4245] ss:$4 sm:$0xff] %v4241
          %v4247 = vld.sshfl [vmem:[#allocation1] sm:$0xff pattern:$0x73625140]
          %v4248 = vld.sshfl [vmem:[#allocation1 + $0x8] sm:$0xff pattern:$0x73625140]
          %v4249 = vld.sshfl [vmem:[#allocation1 + $0x10] sm:$0xff pattern:$0x73625140]
          %v4250 = vld.sshfl [vmem:[#allocation1 + $0x18] sm:$0xff pattern:$0x73625140]
          %v4251 = vld.sshfl [vmem:[#allocation1 + $0x20] sm:$0xff pattern:$0x73625140]
          %v4252 = vld.sshfl [vmem:[#allocation1 + $0x28] sm:$0xff pattern:$0x73625140]
          %v4253 = vld.sshfl [vmem:[#allocation1 + $0x30] sm:$0xff pattern:$0x73625140]
          %v4254 = vld.sshfl [vmem:[#allocation1 + $0x38] sm:$0xff pattern:$0x73625140]
          %v4263 = vpack.c.bf16 %v4247, %v4247
          %v4264 = vpack.c.bf16 %v4248, %v4248
          %v4265 = vpack.c.bf16 %v4249, %v4249
          %v4266 = vpack.c.bf16 %v4250, %v4250
          %v4267 = vpack.c.bf16 %v4251, %v4251
          %v4268 = vpack.c.bf16 %v4252, %v4252
          %v4269 = vpack.c.bf16 %v4253, %v4253
          %v4270 = vpack.c.bf16 %v4254, %v4254
          %v4271 = vld [vmem:[#allocation12] sm:$0xff]
          %v4272 = vld [vmem:[#allocation12 + $0x8] sm:$0xff]
          %v4273 = vld [vmem:[#allocation12 + $0x10] sm:$0xff]
          %v4274 = vld [vmem:[#allocation12 + $0x18] sm:$0xff]
          %v4275 = vld [vmem:[#allocation12 + $0x20] sm:$0xff]
          %v4276 = vld [vmem:[#allocation12 + $0x28] sm:$0xff]
          %v4277 = vld [vmem:[#allocation12 + $0x30] sm:$0xff]
          %v4278 = vld [vmem:[#allocation12 + $0x38] sm:$0xff]
          %v4279 = vld [vmem:[#allocation12 + $0x40] sm:$0xff]
          %v4280 = vld [vmem:[#allocation12 + $0x48] sm:$0xff]
          %v4281 = vld [vmem:[#allocation12 + $0x50] sm:$0xff]
          %v4282 = vld [vmem:[#allocation12 + $0x58] sm:$0xff]
          %v4283 = vld [vmem:[#allocation12 + $0x60] sm:$0xff]
          %v4284 = vld [vmem:[#allocation12 + $0x68] sm:$0xff]
          %v4285 = vld [vmem:[#allocation12 + $0x70] sm:$0xff]
          %v4286 = vld [vmem:[#allocation12 + $0x78] sm:$0xff]
          %v4287 = vld [vmem:[#allocation12 + $0x80] sm:$0xff]
          %v4288 = vld [vmem:[#allocation12 + $0x88] sm:$0xff]
          %v4289 = vld [vmem:[#allocation12 + $0x90] sm:$0xff]
          %v4290 = vld [vmem:[#allocation12 + $0x98] sm:$0xff]
          %v4291 = vld [vmem:[#allocation12 + $0xa0] sm:$0xff]
          %v4292 = vld [vmem:[#allocation12 + $0xa8] sm:$0xff]
          %v4293 = vld [vmem:[#allocation12 + $0xb0] sm:$0xff]
          %v4294 = vld [vmem:[#allocation12 + $0xb8] sm:$0xff]
          %v4295 = vld [vmem:[#allocation12 + $0xc0] sm:$0xff]
          %v4296 = vld [vmem:[#allocation12 + $0xc8] sm:$0xff]
          %v4297 = vld [vmem:[#allocation12 + $0xd0] sm:$0xff]
          %v4298 = vld [vmem:[#allocation12 + $0xd8] sm:$0xff]
          %v4299 = vld [vmem:[#allocation12 + $0xe0] sm:$0xff]
          %v4300 = vld [vmem:[#allocation12 + $0xe8] sm:$0xff]
          %v4301 = vld [vmem:[#allocation12 + $0xf0] sm:$0xff]
          %v4302 = vld [vmem:[#allocation12 + $0xf8] sm:$0xff]
          %v4303 = vld [vmem:[#allocation12 + $0x100] sm:$0xff]
          %v4304 = vld [vmem:[#allocation12 + $0x108] sm:$0xff]
          %v4305 = vld [vmem:[#allocation12 + $0x110] sm:$0xff]
          %v4306 = vld [vmem:[#allocation12 + $0x118] sm:$0xff]
          %v4307 = vld [vmem:[#allocation12 + $0x120] sm:$0xff]
          %v4308 = vld [vmem:[#allocation12 + $0x128] sm:$0xff]
          %v4309 = vld [vmem:[#allocation12 + $0x130] sm:$0xff]
          %v4310 = vld [vmem:[#allocation12 + $0x138] sm:$0xff]
          %v4311 = vld [vmem:[#allocation12 + $0x140] sm:$0xff]
          %v4312 = vld [vmem:[#allocation12 + $0x148] sm:$0xff]
          %v4313 = vld [vmem:[#allocation12 + $0x150] sm:$0xff]
          %v4314 = vld [vmem:[#allocation12 + $0x158] sm:$0xff]
          %v4315 = vld [vmem:[#allocation12 + $0x160] sm:$0xff]
          %v4316 = vld [vmem:[#allocation12 + $0x168] sm:$0xff]
          %v4317 = vld [vmem:[#allocation12 + $0x170] sm:$0xff]
          %v4318 = vld [vmem:[#allocation12 + $0x178] sm:$0xff]
          %v4319 = vld [vmem:[#allocation12 + $0x180] sm:$0xff]
          %v4320 = vld [vmem:[#allocation12 + $0x188] sm:$0xff]
          %v4321 = vld [vmem:[#allocation12 + $0x190] sm:$0xff]
          %v4322 = vld [vmem:[#allocation12 + $0x198] sm:$0xff]
          %v4323 = vld [vmem:[#allocation12 + $0x1a0] sm:$0xff]
          %v4324 = vld [vmem:[#allocation12 + $0x1a8] sm:$0xff]
          %v4325 = vld [vmem:[#allocation12 + $0x1b0] sm:$0xff]
          %v4326 = vld [vmem:[#allocation12 + $0x1b8] sm:$0xff]
          %v4327 = vld [vmem:[#allocation12 + $0x1c0] sm:$0xff]
          %v4328 = vld [vmem:[#allocation12 + $0x1c8] sm:$0xff]
          %v4329 = vld [vmem:[#allocation12 + $0x1d0] sm:$0xff]
          %v4330 = vld [vmem:[#allocation12 + $0x1d8] sm:$0xff]
          %v4331 = vld [vmem:[#allocation12 + $0x1e0] sm:$0xff]
          %v4332 = vld [vmem:[#allocation12 + $0x1e8] sm:$0xff]
          %v4333 = vld [vmem:[#allocation12 + $0x1f0] sm:$0xff]
          %v4334 = vld [vmem:[#allocation12 + $0x1f8] sm:$0xff]
          %v4335 = vld [vmem:[#allocation12 + $0x200] sm:$0xff]
          %v4336 = vld [vmem:[#allocation12 + $0x208] sm:$0xff]
          %v4337 = vld [vmem:[#allocation12 + $0x210] sm:$0xff]
          %v4338 = vld [vmem:[#allocation12 + $0x218] sm:$0xff]
          %v4339 = vld [vmem:[#allocation12 + $0x220] sm:$0xff]
          %v4340 = vld [vmem:[#allocation12 + $0x228] sm:$0xff]
          %v4341 = vld [vmem:[#allocation12 + $0x230] sm:$0xff]
          %v4342 = vld [vmem:[#allocation12 + $0x238] sm:$0xff]
          %v4343 = vld [vmem:[#allocation12 + $0x240] sm:$0xff]
          %v4344 = vld [vmem:[#allocation12 + $0x248] sm:$0xff]
          %v4345 = vld [vmem:[#allocation12 + $0x250] sm:$0xff]
          %v4346 = vld [vmem:[#allocation12 + $0x258] sm:$0xff]
          %v4347 = vld [vmem:[#allocation12 + $0x260] sm:$0xff]
          %v4348 = vld [vmem:[#allocation12 + $0x268] sm:$0xff]
          %v4349 = vld [vmem:[#allocation12 + $0x270] sm:$0xff]
          %v4350 = vld [vmem:[#allocation12 + $0x278] sm:$0xff]
          %v4351 = vld [vmem:[#allocation12 + $0x280] sm:$0xff]
          %v4352 = vld [vmem:[#allocation12 + $0x288] sm:$0xff]
          %v4353 = vld [vmem:[#allocation12 + $0x290] sm:$0xff]
          %v4354 = vld [vmem:[#allocation12 + $0x298] sm:$0xff]
          %v4355 = vld [vmem:[#allocation12 + $0x2a0] sm:$0xff]
          %v4356 = vld [vmem:[#allocation12 + $0x2a8] sm:$0xff]
          %v4357 = vld [vmem:[#allocation12 + $0x2b0] sm:$0xff]
          %v4358 = vld [vmem:[#allocation12 + $0x2b8] sm:$0xff]
          %v4359 = vld [vmem:[#allocation12 + $0x2c0] sm:$0xff]
          %v4360 = vld [vmem:[#allocation12 + $0x2c8] sm:$0xff]
          %v4361 = vld [vmem:[#allocation12 + $0x2d0] sm:$0xff]
          %v4362 = vld [vmem:[#allocation12 + $0x2d8] sm:$0xff]
          %v4363 = vld [vmem:[#allocation12 + $0x2e0] sm:$0xff]
          %v4364 = vld [vmem:[#allocation12 + $0x2e8] sm:$0xff]
          %v4365 = vld [vmem:[#allocation12 + $0x2f0] sm:$0xff]
          %v4366 = vld [vmem:[#allocation12 + $0x2f8] sm:$0xff]
          %v4367 = vld [vmem:[#allocation12 + $0x300] sm:$0xff]
          %v4368 = vld [vmem:[#allocation12 + $0x308] sm:$0xff]
          %v4369 = vld [vmem:[#allocation12 + $0x310] sm:$0xff]
          %v4370 = vld [vmem:[#allocation12 + $0x318] sm:$0xff]
          %v4371 = vld [vmem:[#allocation12 + $0x320] sm:$0xff]
          %v4372 = vld [vmem:[#allocation12 + $0x328] sm:$0xff]
          %v4373 = vld [vmem:[#allocation12 + $0x330] sm:$0xff]
          %v4374 = vld [vmem:[#allocation12 + $0x338] sm:$0xff]
          %v4375 = vld [vmem:[#allocation12 + $0x340] sm:$0xff]
          %v4376 = vld [vmem:[#allocation12 + $0x348] sm:$0xff]
          %v4377 = vld [vmem:[#allocation12 + $0x350] sm:$0xff]
          %v4378 = vld [vmem:[#allocation12 + $0x358] sm:$0xff]
          %v4379 = vld [vmem:[#allocation12 + $0x360] sm:$0xff]
          %v4380 = vld [vmem:[#allocation12 + $0x368] sm:$0xff]
          %v4381 = vld [vmem:[#allocation12 + $0x370] sm:$0xff]
          %v4382 = vld [vmem:[#allocation12 + $0x378] sm:$0xff]
          %v4383 = vld [vmem:[#allocation12 + $0x380] sm:$0xff]
          %v4384 = vld [vmem:[#allocation12 + $0x388] sm:$0xff]
          %v4385 = vld [vmem:[#allocation12 + $0x390] sm:$0xff]
          %v4386 = vld [vmem:[#allocation12 + $0x398] sm:$0xff]
          %v4387 = vld [vmem:[#allocation12 + $0x3a0] sm:$0xff]
          %v4388 = vld [vmem:[#allocation12 + $0x3a8] sm:$0xff]
          %v4389 = vld [vmem:[#allocation12 + $0x3b0] sm:$0xff]
          %v4390 = vld [vmem:[#allocation12 + $0x3b8] sm:$0xff]
          %v4391 = vld [vmem:[#allocation12 + $0x3c0] sm:$0xff]
          %v4392 = vld [vmem:[#allocation12 + $0x3c8] sm:$0xff]
          %v4393 = vld [vmem:[#allocation12 + $0x3d0] sm:$0xff]
          %v4394 = vld [vmem:[#allocation12 + $0x3d8] sm:$0xff]
          %v4395 = vld [vmem:[#allocation12 + $0x3e0] sm:$0xff]
          %v4396 = vld [vmem:[#allocation12 + $0x3e8] sm:$0xff]
          %v4397 = vld [vmem:[#allocation12 + $0x3f0] sm:$0xff]
          %v4398 = vld [vmem:[#allocation12 + $0x3f8] sm:$0xff]
          %v4399 = vld [vmem:[#allocation12 + $0x400] sm:$0xff]
          %v4400 = vld [vmem:[#allocation12 + $0x408] sm:$0xff]
          %v4401 = vld [vmem:[#allocation12 + $0x410] sm:$0xff]
          %v4402 = vld [vmem:[#allocation12 + $0x418] sm:$0xff]
          %v4403 = vld [vmem:[#allocation12 + $0x420] sm:$0xff]
          %v4404 = vld [vmem:[#allocation12 + $0x428] sm:$0xff]
          %v4405 = vld [vmem:[#allocation12 + $0x430] sm:$0xff]
          %v4406 = vld [vmem:[#allocation12 + $0x438] sm:$0xff]
          %v4407 = vld [vmem:[#allocation12 + $0x440] sm:$0xff]
          %v4408 = vld [vmem:[#allocation12 + $0x448] sm:$0xff]
          %v4409 = vld [vmem:[#allocation12 + $0x450] sm:$0xff]
          %v4410 = vld [vmem:[#allocation12 + $0x458] sm:$0xff]
          %v4411 = vld [vmem:[#allocation12 + $0x460] sm:$0xff]
          %v4412 = vld [vmem:[#allocation12 + $0x468] sm:$0xff]
          %v4413 = vld [vmem:[#allocation12 + $0x470] sm:$0xff]
          %v4414 = vld [vmem:[#allocation12 + $0x478] sm:$0xff]
          %v4415 = vld [vmem:[#allocation12 + $0x480] sm:$0xff]
          %v4416 = vld [vmem:[#allocation12 + $0x488] sm:$0xff]
          %v4417 = vld [vmem:[#allocation12 + $0x490] sm:$0xff]
          %v4418 = vld [vmem:[#allocation12 + $0x498] sm:$0xff]
          %v4419 = vld [vmem:[#allocation12 + $0x4a0] sm:$0xff]
          %v4420 = vld [vmem:[#allocation12 + $0x4a8] sm:$0xff]
          %v4421 = vld [vmem:[#allocation12 + $0x4b0] sm:$0xff]
          %v4422 = vld [vmem:[#allocation12 + $0x4b8] sm:$0xff]
          %v4423 = vld [vmem:[#allocation12 + $0x4c0] sm:$0xff]
          %v4424 = vld [vmem:[#allocation12 + $0x4c8] sm:$0xff]
          %v4425 = vld [vmem:[#allocation12 + $0x4d0] sm:$0xff]
          %v4426 = vld [vmem:[#allocation12 + $0x4d8] sm:$0xff]
          %v4427 = vld [vmem:[#allocation12 + $0x4e0] sm:$0xff]
          %v4428 = vld [vmem:[#allocation12 + $0x4e8] sm:$0xff]
          %v4429 = vld [vmem:[#allocation12 + $0x4f0] sm:$0xff]
          %v4430 = vld [vmem:[#allocation12 + $0x4f8] sm:$0xff]
          %v4431 = vld [vmem:[#allocation12 + $0x500] sm:$0xff]
          %v4432 = vld [vmem:[#allocation12 + $0x508] sm:$0xff]
          %v4433 = vld [vmem:[#allocation12 + $0x510] sm:$0xff]
          %v4434 = vld [vmem:[#allocation12 + $0x518] sm:$0xff]
          %v4435 = vld [vmem:[#allocation12 + $0x520] sm:$0xff]
          %v4436 = vld [vmem:[#allocation12 + $0x528] sm:$0xff]
          %v4437 = vld [vmem:[#allocation12 + $0x530] sm:$0xff]
          %v4438 = vld [vmem:[#allocation12 + $0x538] sm:$0xff]
          %v4439 = vld [vmem:[#allocation12 + $0x540] sm:$0xff]
          %v4440 = vld [vmem:[#allocation12 + $0x548] sm:$0xff]
          %v4441 = vld [vmem:[#allocation12 + $0x550] sm:$0xff]
          %v4442 = vld [vmem:[#allocation12 + $0x558] sm:$0xff]
          %v4443 = vld [vmem:[#allocation12 + $0x560] sm:$0xff]
          %v4444 = vld [vmem:[#allocation12 + $0x568] sm:$0xff]
          %v4445 = vld [vmem:[#allocation12 + $0x570] sm:$0xff]
          %v4446 = vld [vmem:[#allocation12 + $0x578] sm:$0xff]
          %v4447 = vld [vmem:[#allocation12 + $0x580] sm:$0xff]
          %v4448 = vld [vmem:[#allocation12 + $0x588] sm:$0xff]
          %v4449 = vld [vmem:[#allocation12 + $0x590] sm:$0xff]
          %v4450 = vld [vmem:[#allocation12 + $0x598] sm:$0xff]
          %v4451 = vld [vmem:[#allocation12 + $0x5a0] sm:$0xff]
          %v4452 = vld [vmem:[#allocation12 + $0x5a8] sm:$0xff]
          %v4453 = vld [vmem:[#allocation12 + $0x5b0] sm:$0xff]
          %v4454 = vld [vmem:[#allocation12 + $0x5b8] sm:$0xff]
          %v4455 = vld [vmem:[#allocation12 + $0x5c0] sm:$0xff]
          %v4456 = vld [vmem:[#allocation12 + $0x5c8] sm:$0xff]
          %v4457 = vld [vmem:[#allocation12 + $0x5d0] sm:$0xff]
          %v4458 = vld [vmem:[#allocation12 + $0x5d8] sm:$0xff]
          %v4459 = vld [vmem:[#allocation12 + $0x5e0] sm:$0xff]
          %v4460 = vld [vmem:[#allocation12 + $0x5e8] sm:$0xff]
          %v4461 = vld [vmem:[#allocation12 + $0x5f0] sm:$0xff]
          %v4462 = vld [vmem:[#allocation12 + $0x5f8] sm:$0xff]
          %v4463 = vld [vmem:[#allocation12 + $0x600] sm:$0xff]
          %v4464 = vld [vmem:[#allocation12 + $0x608] sm:$0xff]
          %v4465 = vld [vmem:[#allocation12 + $0x610] sm:$0xff]
          %v4466 = vld [vmem:[#allocation12 + $0x618] sm:$0xff]
          %v4467 = vld [vmem:[#allocation12 + $0x620] sm:$0xff]
          %v4468 = vld [vmem:[#allocation12 + $0x628] sm:$0xff]
          %v4469 = vld [vmem:[#allocation12 + $0x630] sm:$0xff]
          %v4470 = vld [vmem:[#allocation12 + $0x638] sm:$0xff]
          %v4471 = vld [vmem:[#allocation12 + $0x640] sm:$0xff]
          %v4472 = vld [vmem:[#allocation12 + $0x648] sm:$0xff]
          %v4473 = vld [vmem:[#allocation12 + $0x650] sm:$0xff]
          %v4474 = vld [vmem:[#allocation12 + $0x658] sm:$0xff]
          %v4475 = vld [vmem:[#allocation12 + $0x660] sm:$0xff]
          %v4476 = vld [vmem:[#allocation12 + $0x668] sm:$0xff]
          %v4477 = vld [vmem:[#allocation12 + $0x670] sm:$0xff]
          %v4478 = vld [vmem:[#allocation12 + $0x678] sm:$0xff]
          %v4479 = vld [vmem:[#allocation12 + $0x680] sm:$0xff]
          %v4480 = vld [vmem:[#allocation12 + $0x688] sm:$0xff]
          %v4481 = vld [vmem:[#allocation12 + $0x690] sm:$0xff]
          %v4482 = vld [vmem:[#allocation12 + $0x698] sm:$0xff]
          %v4483 = vld [vmem:[#allocation12 + $0x6a0] sm:$0xff]
          %v4484 = vld [vmem:[#allocation12 + $0x6a8] sm:$0xff]
          %v4485 = vld [vmem:[#allocation12 + $0x6b0] sm:$0xff]
          %v4486 = vld [vmem:[#allocation12 + $0x6b8] sm:$0xff]
          %v4487 = vld [vmem:[#allocation12 + $0x6c0] sm:$0xff]
          %v4488 = vld [vmem:[#allocation12 + $0x6c8] sm:$0xff]
          %v4489 = vld [vmem:[#allocation12 + $0x6d0] sm:$0xff]
          %v4490 = vld [vmem:[#allocation12 + $0x6d8] sm:$0xff]
          %v4491 = vld [vmem:[#allocation12 + $0x6e0] sm:$0xff]
          %v4492 = vld [vmem:[#allocation12 + $0x6e8] sm:$0xff]
          %v4493 = vld [vmem:[#allocation12 + $0x6f0] sm:$0xff]
          %v4494 = vld [vmem:[#allocation12 + $0x6f8] sm:$0xff]
          %v4495 = vld [vmem:[#allocation12 + $0x700] sm:$0xff]
          %v4496 = vld [vmem:[#allocation12 + $0x708] sm:$0xff]
          %v4497 = vld [vmem:[#allocation12 + $0x710] sm:$0xff]
          %v4498 = vld [vmem:[#allocation12 + $0x718] sm:$0xff]
          %v4499 = vld [vmem:[#allocation12 + $0x720] sm:$0xff]
          %v4500 = vld [vmem:[#allocation12 + $0x728] sm:$0xff]
          %v4501 = vld [vmem:[#allocation12 + $0x730] sm:$0xff]
          %v4502 = vld [vmem:[#allocation12 + $0x738] sm:$0xff]
          %v4503 = vld [vmem:[#allocation12 + $0x740] sm:$0xff]
          %v4504 = vld [vmem:[#allocation12 + $0x748] sm:$0xff]
          %v4505 = vld [vmem:[#allocation12 + $0x750] sm:$0xff]
          %v4506 = vld [vmem:[#allocation12 + $0x758] sm:$0xff]
          %v4507 = vld [vmem:[#allocation12 + $0x760] sm:$0xff]
          %v4508 = vld [vmem:[#allocation12 + $0x768] sm:$0xff]
          %v4509 = vld [vmem:[#allocation12 + $0x770] sm:$0xff]
          %v4510 = vld [vmem:[#allocation12 + $0x778] sm:$0xff]
          %v4511 = vld [vmem:[#allocation12 + $0x780] sm:$0xff]
          %v4512 = vld [vmem:[#allocation12 + $0x788] sm:$0xff]
          %v4513 = vld [vmem:[#allocation12 + $0x790] sm:$0xff]
          %v4514 = vld [vmem:[#allocation12 + $0x798] sm:$0xff]
          %v4515 = vld [vmem:[#allocation12 + $0x7a0] sm:$0xff]
          %v4516 = vld [vmem:[#allocation12 + $0x7a8] sm:$0xff]
          %v4517 = vld [vmem:[#allocation12 + $0x7b0] sm:$0xff]
          %v4518 = vld [vmem:[#allocation12 + $0x7b8] sm:$0xff]
          %v4519 = vld [vmem:[#allocation12 + $0x7c0] sm:$0xff]
          %v4520 = vld [vmem:[#allocation12 + $0x7c8] sm:$0xff]
          %v4521 = vld [vmem:[#allocation12 + $0x7d0] sm:$0xff]
          %v4522 = vld [vmem:[#allocation12 + $0x7d8] sm:$0xff]
          %v4523 = vld [vmem:[#allocation12 + $0x7e0] sm:$0xff]
          %v4524 = vld [vmem:[#allocation12 + $0x7e8] sm:$0xff]
          %v4525 = vld [vmem:[#allocation12 + $0x7f0] sm:$0xff]
          %v4526 = vld [vmem:[#allocation12 + $0x7f8] sm:$0xff]
          %v4527 = vld [vmem:[#allocation13] sm:$0xf]
          %v4529 = vperm.slane %v4527, 0
          %v4530 = vperm.slane %v4527, 1
          %v4531 = vperm.slane %v4527, 2
          %v4532 = vperm.slane %v4527, 3
          %v4793 = vunpack.c.l.b16 %v4271
          %v4794 = vunpack.c.h.b16 %v4271
          %v4795 = vunpack.c.l.b16 %v4272
          %v4796 = vunpack.c.h.b16 %v4272
          %v4797 = vunpack.c.l.b16 %v4273
          %v4798 = vunpack.c.h.b16 %v4273
          %v4799 = vunpack.c.l.b16 %v4274
          %v4800 = vunpack.c.h.b16 %v4274
          %v4801 = vunpack.c.l.b16 %v4275
          %v4802 = vunpack.c.h.b16 %v4275
          %v4803 = vunpack.c.l.b16 %v4276
          %v4804 = vunpack.c.h.b16 %v4276
          %v4805 = vunpack.c.l.b16 %v4277
          %v4806 = vunpack.c.h.b16 %v4277
          %v4807 = vunpack.c.l.b16 %v4278
          %v4808 = vunpack.c.h.b16 %v4278
          %v4809 = vunpack.c.l.b16 %v4279
          %v4810 = vunpack.c.h.b16 %v4279
          %v4811 = vunpack.c.l.b16 %v4280
          %v4812 = vunpack.c.h.b16 %v4280
          %v4813 = vunpack.c.l.b16 %v4281
          %v4814 = vunpack.c.h.b16 %v4281
          %v4815 = vunpack.c.l.b16 %v4282
          %v4816 = vunpack.c.h.b16 %v4282
          %v4817 = vunpack.c.l.b16 %v4283
          %v4818 = vunpack.c.h.b16 %v4283
          %v4819 = vunpack.c.l.b16 %v4284
          %v4820 = vunpack.c.h.b16 %v4284
          %v4821 = vunpack.c.l.b16 %v4285
          %v4822 = vunpack.c.h.b16 %v4285
          %v4823 = vunpack.c.l.b16 %v4286
          %v4824 = vunpack.c.h.b16 %v4286
          %v4825 = vunpack.c.l.b16 %v4287
          %v4826 = vunpack.c.h.b16 %v4287
          %v4827 = vunpack.c.l.b16 %v4288
          %v4828 = vunpack.c.h.b16 %v4288
          %v4829 = vunpack.c.l.b16 %v4289
          %v4830 = vunpack.c.h.b16 %v4289
          %v4831 = vunpack.c.l.b16 %v4290
          %v4832 = vunpack.c.h.b16 %v4290
          %v4833 = vunpack.c.l.b16 %v4291
          %v4834 = vunpack.c.h.b16 %v4291
          %v4835 = vunpack.c.l.b16 %v4292
          %v4836 = vunpack.c.h.b16 %v4292
          %v4837 = vunpack.c.l.b16 %v4293
          %v4838 = vunpack.c.h.b16 %v4293
          %v4839 = vunpack.c.l.b16 %v4294
          %v4840 = vunpack.c.h.b16 %v4294
          %v4841 = vunpack.c.l.b16 %v4295
          %v4842 = vunpack.c.h.b16 %v4295
          %v4843 = vunpack.c.l.b16 %v4296
          %v4844 = vunpack.c.h.b16 %v4296
          %v4845 = vunpack.c.l.b16 %v4297
          %v4846 = vunpack.c.h.b16 %v4297
          %v4847 = vunpack.c.l.b16 %v4298
          %v4848 = vunpack.c.h.b16 %v4298
          %v4849 = vunpack.c.l.b16 %v4299
          %v4850 = vunpack.c.h.b16 %v4299
          %v4851 = vunpack.c.l.b16 %v4300
          %v4852 = vunpack.c.h.b16 %v4300
          %v4853 = vunpack.c.l.b16 %v4301
          %v4854 = vunpack.c.h.b16 %v4301
          %v4855 = vunpack.c.l.b16 %v4302
          %v4856 = vunpack.c.h.b16 %v4302
          %v4857 = vunpack.c.l.b16 %v4303
          %v4858 = vunpack.c.h.b16 %v4303
          %v4859 = vunpack.c.l.b16 %v4304
          %v4860 = vunpack.c.h.b16 %v4304
          %v4861 = vunpack.c.l.b16 %v4305
          %v4862 = vunpack.c.h.b16 %v4305
          %v4863 = vunpack.c.l.b16 %v4306
          %v4864 = vunpack.c.h.b16 %v4306
          %v4865 = vunpack.c.l.b16 %v4307
          %v4866 = vunpack.c.h.b16 %v4307
          %v4867 = vunpack.c.l.b16 %v4308
          %v4868 = vunpack.c.h.b16 %v4308
          %v4869 = vunpack.c.l.b16 %v4309
          %v4870 = vunpack.c.h.b16 %v4309
          %v4871 = vunpack.c.l.b16 %v4310
          %v4872 = vunpack.c.h.b16 %v4310
          %v4873 = vunpack.c.l.b16 %v4311
          %v4874 = vunpack.c.h.b16 %v4311
          %v4875 = vunpack.c.l.b16 %v4312
          %v4876 = vunpack.c.h.b16 %v4312
          %v4877 = vunpack.c.l.b16 %v4313
          %v4878 = vunpack.c.h.b16 %v4313
          %v4879 = vunpack.c.l.b16 %v4314
          %v4880 = vunpack.c.h.b16 %v4314
          %v4881 = vunpack.c.l.b16 %v4315
          %v4882 = vunpack.c.h.b16 %v4315
          %v4883 = vunpack.c.l.b16 %v4316
          %v4884 = vunpack.c.h.b16 %v4316
          %v4885 = vunpack.c.l.b16 %v4317
          %v4886 = vunpack.c.h.b16 %v4317
          %v4887 = vunpack.c.l.b16 %v4318
          %v4888 = vunpack.c.h.b16 %v4318
          %v4889 = vunpack.c.l.b16 %v4319
          %v4890 = vunpack.c.h.b16 %v4319
          %v4891 = vunpack.c.l.b16 %v4320
          %v4892 = vunpack.c.h.b16 %v4320
          %v4893 = vunpack.c.l.b16 %v4321
          %v4894 = vunpack.c.h.b16 %v4321
          %v4895 = vunpack.c.l.b16 %v4322
          %v4896 = vunpack.c.h.b16 %v4322
          %v4897 = vunpack.c.l.b16 %v4323
          %v4898 = vunpack.c.h.b16 %v4323
          %v4899 = vunpack.c.l.b16 %v4324
          %v4900 = vunpack.c.h.b16 %v4324
          %v4901 = vunpack.c.l.b16 %v4325
          %v4902 = vunpack.c.h.b16 %v4325
          %v4903 = vunpack.c.l.b16 %v4326
          %v4904 = vunpack.c.h.b16 %v4326
          %v4905 = vunpack.c.l.b16 %v4327
          %v4906 = vunpack.c.h.b16 %v4327
          %v4907 = vunpack.c.l.b16 %v4328
          %v4908 = vunpack.c.h.b16 %v4328
          %v4909 = vunpack.c.l.b16 %v4329
          %v4910 = vunpack.c.h.b16 %v4329
          %v4911 = vunpack.c.l.b16 %v4330
          %v4912 = vunpack.c.h.b16 %v4330
          %v4913 = vunpack.c.l.b16 %v4331
          %v4914 = vunpack.c.h.b16 %v4331
          %v4915 = vunpack.c.l.b16 %v4332
          %v4916 = vunpack.c.h.b16 %v4332
          %v4917 = vunpack.c.l.b16 %v4333
          %v4918 = vunpack.c.h.b16 %v4333
          %v4919 = vunpack.c.l.b16 %v4334
          %v4920 = vunpack.c.h.b16 %v4334
          %v4921 = vunpack.c.l.b16 %v4335
          %v4922 = vunpack.c.h.b16 %v4335
          %v4923 = vunpack.c.l.b16 %v4336
          %v4924 = vunpack.c.h.b16 %v4336
          %v4925 = vunpack.c.l.b16 %v4337
          %v4926 = vunpack.c.h.b16 %v4337
          %v4927 = vunpack.c.l.b16 %v4338
          %v4928 = vunpack.c.h.b16 %v4338
          %v4929 = vunpack.c.l.b16 %v4339
          %v4930 = vunpack.c.h.b16 %v4339
          %v4931 = vunpack.c.l.b16 %v4340
          %v4932 = vunpack.c.h.b16 %v4340
          %v4933 = vunpack.c.l.b16 %v4341
          %v4934 = vunpack.c.h.b16 %v4341
          %v4935 = vunpack.c.l.b16 %v4342
          %v4936 = vunpack.c.h.b16 %v4342
          %v4937 = vunpack.c.l.b16 %v4343
          %v4938 = vunpack.c.h.b16 %v4343
          %v4939 = vunpack.c.l.b16 %v4344
          %v4940 = vunpack.c.h.b16 %v4344
          %v4941 = vunpack.c.l.b16 %v4345
          %v4942 = vunpack.c.h.b16 %v4345
          %v4943 = vunpack.c.l.b16 %v4346
          %v4944 = vunpack.c.h.b16 %v4346
          %v4945 = vunpack.c.l.b16 %v4347
          %v4946 = vunpack.c.h.b16 %v4347
          %v4947 = vunpack.c.l.b16 %v4348
          %v4948 = vunpack.c.h.b16 %v4348
          %v4949 = vunpack.c.l.b16 %v4349
          %v4950 = vunpack.c.h.b16 %v4349
          %v4951 = vunpack.c.l.b16 %v4350
          %v4952 = vunpack.c.h.b16 %v4350
          %v4953 = vunpack.c.l.b16 %v4351
          %v4954 = vunpack.c.h.b16 %v4351
          %v4955 = vunpack.c.l.b16 %v4352
          %v4956 = vunpack.c.h.b16 %v4352
          %v4957 = vunpack.c.l.b16 %v4353
          %v4958 = vunpack.c.h.b16 %v4353
          %v4959 = vunpack.c.l.b16 %v4354
          %v4960 = vunpack.c.h.b16 %v4354
          %v4961 = vunpack.c.l.b16 %v4355
          %v4962 = vunpack.c.h.b16 %v4355
          %v4963 = vunpack.c.l.b16 %v4356
          %v4964 = vunpack.c.h.b16 %v4356
          %v4965 = vunpack.c.l.b16 %v4357
          %v4966 = vunpack.c.h.b16 %v4357
          %v4967 = vunpack.c.l.b16 %v4358
          %v4968 = vunpack.c.h.b16 %v4358
          %v4969 = vunpack.c.l.b16 %v4359
          %v4970 = vunpack.c.h.b16 %v4359
          %v4971 = vunpack.c.l.b16 %v4360
          %v4972 = vunpack.c.h.b16 %v4360
          %v4973 = vunpack.c.l.b16 %v4361
          %v4974 = vunpack.c.h.b16 %v4361
          %v4975 = vunpack.c.l.b16 %v4362
          %v4976 = vunpack.c.h.b16 %v4362
          %v4977 = vunpack.c.l.b16 %v4363
          %v4978 = vunpack.c.h.b16 %v4363
          %v4979 = vunpack.c.l.b16 %v4364
          %v4980 = vunpack.c.h.b16 %v4364
          %v4981 = vunpack.c.l.b16 %v4365
          %v4982 = vunpack.c.h.b16 %v4365
          %v4983 = vunpack.c.l.b16 %v4366
          %v4984 = vunpack.c.h.b16 %v4366
          %v4985 = vunpack.c.l.b16 %v4367
          %v4986 = vunpack.c.h.b16 %v4367
          %v4987 = vunpack.c.l.b16 %v4368
          %v4988 = vunpack.c.h.b16 %v4368
          %v4989 = vunpack.c.l.b16 %v4369
          %v4990 = vunpack.c.h.b16 %v4369
          %v4991 = vunpack.c.l.b16 %v4370
          %v4992 = vunpack.c.h.b16 %v4370
          %v4993 = vunpack.c.l.b16 %v4371
          %v4994 = vunpack.c.h.b16 %v4371
          %v4995 = vunpack.c.l.b16 %v4372
          %v4996 = vunpack.c.h.b16 %v4372
          %v4997 = vunpack.c.l.b16 %v4373
          %v4998 = vunpack.c.h.b16 %v4373
          %v4999 = vunpack.c.l.b16 %v4374
          %v5000 = vunpack.c.h.b16 %v4374
          %v5001 = vunpack.c.l.b16 %v4375
          %v5002 = vunpack.c.h.b16 %v4375
          %v5003 = vunpack.c.l.b16 %v4376
          %v5004 = vunpack.c.h.b16 %v4376
          %v5005 = vunpack.c.l.b16 %v4377
          %v5006 = vunpack.c.h.b16 %v4377
          %v5007 = vunpack.c.l.b16 %v4378
          %v5008 = vunpack.c.h.b16 %v4378
          %v5009 = vunpack.c.l.b16 %v4379
          %v5010 = vunpack.c.h.b16 %v4379
          %v5011 = vunpack.c.l.b16 %v4380
          %v5012 = vunpack.c.h.b16 %v4380
          %v5013 = vunpack.c.l.b16 %v4381
          %v5014 = vunpack.c.h.b16 %v4381
          %v5015 = vunpack.c.l.b16 %v4382
          %v5016 = vunpack.c.h.b16 %v4382
          %v5017 = vunpack.c.l.b16 %v4383
          %v5018 = vunpack.c.h.b16 %v4383
          %v5019 = vunpack.c.l.b16 %v4384
          %v5020 = vunpack.c.h.b16 %v4384
          %v5021 = vunpack.c.l.b16 %v4385
          %v5022 = vunpack.c.h.b16 %v4385
          %v5023 = vunpack.c.l.b16 %v4386
          %v5024 = vunpack.c.h.b16 %v4386
          %v5025 = vunpack.c.l.b16 %v4387
          %v5026 = vunpack.c.h.b16 %v4387
          %v5027 = vunpack.c.l.b16 %v4388
          %v5028 = vunpack.c.h.b16 %v4388
          %v5029 = vunpack.c.l.b16 %v4389
          %v5030 = vunpack.c.h.b16 %v4389
          %v5031 = vunpack.c.l.b16 %v4390
          %v5032 = vunpack.c.h.b16 %v4390
          %v5033 = vunpack.c.l.b16 %v4391
          %v5034 = vunpack.c.h.b16 %v4391
          %v5035 = vunpack.c.l.b16 %v4392
          %v5036 = vunpack.c.h.b16 %v4392
          %v5037 = vunpack.c.l.b16 %v4393
          %v5038 = vunpack.c.h.b16 %v4393
          %v5039 = vunpack.c.l.b16 %v4394
          %v5040 = vunpack.c.h.b16 %v4394
          %v5041 = vunpack.c.l.b16 %v4395
          %v5042 = vunpack.c.h.b16 %v4395
          %v5043 = vunpack.c.l.b16 %v4396
          %v5044 = vunpack.c.h.b16 %v4396
          %v5045 = vunpack.c.l.b16 %v4397
          %v5046 = vunpack.c.h.b16 %v4397
          %v5047 = vunpack.c.l.b16 %v4398
          %v5048 = vunpack.c.h.b16 %v4398
          %v5049 = vunpack.c.l.b16 %v4399
          %v5050 = vunpack.c.h.b16 %v4399
          %v5051 = vunpack.c.l.b16 %v4400
          %v5052 = vunpack.c.h.b16 %v4400
          %v5053 = vunpack.c.l.b16 %v4401
          %v5054 = vunpack.c.h.b16 %v4401
          %v5055 = vunpack.c.l.b16 %v4402
          %v5056 = vunpack.c.h.b16 %v4402
          %v5057 = vunpack.c.l.b16 %v4403
          %v5058 = vunpack.c.h.b16 %v4403
          %v5059 = vunpack.c.l.b16 %v4404
          %v5060 = vunpack.c.h.b16 %v4404
          %v5061 = vunpack.c.l.b16 %v4405
          %v5062 = vunpack.c.h.b16 %v4405
          %v5063 = vunpack.c.l.b16 %v4406
          %v5064 = vunpack.c.h.b16 %v4406
          %v5065 = vunpack.c.l.b16 %v4407
          %v5066 = vunpack.c.h.b16 %v4407
          %v5067 = vunpack.c.l.b16 %v4408
          %v5068 = vunpack.c.h.b16 %v4408
          %v5069 = vunpack.c.l.b16 %v4409
          %v5070 = vunpack.c.h.b16 %v4409
          %v5071 = vunpack.c.l.b16 %v4410
          %v5072 = vunpack.c.h.b16 %v4410
          %v5073 = vunpack.c.l.b16 %v4411
          %v5074 = vunpack.c.h.b16 %v4411
          %v5075 = vunpack.c.l.b16 %v4412
          %v5076 = vunpack.c.h.b16 %v4412
          %v5077 = vunpack.c.l.b16 %v4413
          %v5078 = vunpack.c.h.b16 %v4413
          %v5079 = vunpack.c.l.b16 %v4414
          %v5080 = vunpack.c.h.b16 %v4414
          %v5081 = vunpack.c.l.b16 %v4415
          %v5082 = vunpack.c.h.b16 %v4415
          %v5083 = vunpack.c.l.b16 %v4416
          %v5084 = vunpack.c.h.b16 %v4416
          %v5085 = vunpack.c.l.b16 %v4417
          %v5086 = vunpack.c.h.b16 %v4417
          %v5087 = vunpack.c.l.b16 %v4418
          %v5088 = vunpack.c.h.b16 %v4418
          %v5089 = vunpack.c.l.b16 %v4419
          %v5090 = vunpack.c.h.b16 %v4419
          %v5091 = vunpack.c.l.b16 %v4420
          %v5092 = vunpack.c.h.b16 %v4420
          %v5093 = vunpack.c.l.b16 %v4421
          %v5094 = vunpack.c.h.b16 %v4421
          %v5095 = vunpack.c.l.b16 %v4422
          %v5096 = vunpack.c.h.b16 %v4422
          %v5097 = vunpack.c.l.b16 %v4423
          %v5098 = vunpack.c.h.b16 %v4423
          %v5099 = vunpack.c.l.b16 %v4424
          %v5100 = vunpack.c.h.b16 %v4424
          %v5101 = vunpack.c.l.b16 %v4425
          %v5102 = vunpack.c.h.b16 %v4425
          %v5103 = vunpack.c.l.b16 %v4426
          %v5104 = vunpack.c.h.b16 %v4426
          %v5105 = vunpack.c.l.b16 %v4427
          %v5106 = vunpack.c.h.b16 %v4427
          %v5107 = vunpack.c.l.b16 %v4428
          %v5108 = vunpack.c.h.b16 %v4428
          %v5109 = vunpack.c.l.b16 %v4429
          %v5110 = vunpack.c.h.b16 %v4429
          %v5111 = vunpack.c.l.b16 %v4430
          %v5112 = vunpack.c.h.b16 %v4430
          %v5113 = vunpack.c.l.b16 %v4431
          %v5114 = vunpack.c.h.b16 %v4431
          %v5115 = vunpack.c.l.b16 %v4432
          %v5116 = vunpack.c.h.b16 %v4432
          %v5117 = vunpack.c.l.b16 %v4433
          %v5118 = vunpack.c.h.b16 %v4433
          %v5119 = vunpack.c.l.b16 %v4434
          %v5120 = vunpack.c.h.b16 %v4434
          %v5121 = vunpack.c.l.b16 %v4435
          %v5122 = vunpack.c.h.b16 %v4435
          %v5123 = vunpack.c.l.b16 %v4436
          %v5124 = vunpack.c.h.b16 %v4436
          %v5125 = vunpack.c.l.b16 %v4437
          %v5126 = vunpack.c.h.b16 %v4437
          %v5127 = vunpack.c.l.b16 %v4438
          %v5128 = vunpack.c.h.b16 %v4438
          %v5129 = vunpack.c.l.b16 %v4439
          %v5130 = vunpack.c.h.b16 %v4439
          %v5131 = vunpack.c.l.b16 %v4440
          %v5132 = vunpack.c.h.b16 %v4440
          %v5133 = vunpack.c.l.b16 %v4441
          %v5134 = vunpack.c.h.b16 %v4441
          %v5135 = vunpack.c.l.b16 %v4442
          %v5136 = vunpack.c.h.b16 %v4442
          %v5137 = vunpack.c.l.b16 %v4443
          %v5138 = vunpack.c.h.b16 %v4443
          %v5139 = vunpack.c.l.b16 %v4444
          %v5140 = vunpack.c.h.b16 %v4444
          %v5141 = vunpack.c.l.b16 %v4445
          %v5142 = vunpack.c.h.b16 %v4445
          %v5143 = vunpack.c.l.b16 %v4446
          %v5144 = vunpack.c.h.b16 %v4446
          %v5145 = vunpack.c.l.b16 %v4447
          %v5146 = vunpack.c.h.b16 %v4447
          %v5147 = vunpack.c.l.b16 %v4448
          %v5148 = vunpack.c.h.b16 %v4448
          %v5149 = vunpack.c.l.b16 %v4449
          %v5150 = vunpack.c.h.b16 %v4449
          %v5151 = vunpack.c.l.b16 %v4450
          %v5152 = vunpack.c.h.b16 %v4450
          %v5153 = vunpack.c.l.b16 %v4451
          %v5154 = vunpack.c.h.b16 %v4451
          %v5155 = vunpack.c.l.b16 %v4452
          %v5156 = vunpack.c.h.b16 %v4452
          %v5157 = vunpack.c.l.b16 %v4453
          %v5158 = vunpack.c.h.b16 %v4453
          %v5159 = vunpack.c.l.b16 %v4454
          %v5160 = vunpack.c.h.b16 %v4454
          %v5161 = vunpack.c.l.b16 %v4455
          %v5162 = vunpack.c.h.b16 %v4455
          %v5163 = vunpack.c.l.b16 %v4456
          %v5164 = vunpack.c.h.b16 %v4456
          %v5165 = vunpack.c.l.b16 %v4457
          %v5166 = vunpack.c.h.b16 %v4457
          %v5167 = vunpack.c.l.b16 %v4458
          %v5168 = vunpack.c.h.b16 %v4458
          %v5169 = vunpack.c.l.b16 %v4459
          %v5170 = vunpack.c.h.b16 %v4459
          %v5171 = vunpack.c.l.b16 %v4460
          %v5172 = vunpack.c.h.b16 %v4460
          %v5173 = vunpack.c.l.b16 %v4461
          %v5174 = vunpack.c.h.b16 %v4461
          %v5175 = vunpack.c.l.b16 %v4462
          %v5176 = vunpack.c.h.b16 %v4462
          %v5177 = vunpack.c.l.b16 %v4463
          %v5178 = vunpack.c.h.b16 %v4463
          %v5179 = vunpack.c.l.b16 %v4464
          %v5180 = vunpack.c.h.b16 %v4464
          %v5181 = vunpack.c.l.b16 %v4465
          %v5182 = vunpack.c.h.b16 %v4465
          %v5183 = vunpack.c.l.b16 %v4466
          %v5184 = vunpack.c.h.b16 %v4466
          %v5185 = vunpack.c.l.b16 %v4467
          %v5186 = vunpack.c.h.b16 %v4467
          %v5187 = vunpack.c.l.b16 %v4468
          %v5188 = vunpack.c.h.b16 %v4468
          %v5189 = vunpack.c.l.b16 %v4469
          %v5190 = vunpack.c.h.b16 %v4469
          %v5191 = vunpack.c.l.b16 %v4470
          %v5192 = vunpack.c.h.b16 %v4470
          %v5193 = vunpack.c.l.b16 %v4471
          %v5194 = vunpack.c.h.b16 %v4471
          %v5195 = vunpack.c.l.b16 %v4472
          %v5196 = vunpack.c.h.b16 %v4472
          %v5197 = vunpack.c.l.b16 %v4473
          %v5198 = vunpack.c.h.b16 %v4473
          %v5199 = vunpack.c.l.b16 %v4474
          %v5200 = vunpack.c.h.b16 %v4474
          %v5201 = vunpack.c.l.b16 %v4475
          %v5202 = vunpack.c.h.b16 %v4475
          %v5203 = vunpack.c.l.b16 %v4476
          %v5204 = vunpack.c.h.b16 %v4476
          %v5205 = vunpack.c.l.b16 %v4477
          %v5206 = vunpack.c.h.b16 %v4477
          %v5207 = vunpack.c.l.b16 %v4478
          %v5208 = vunpack.c.h.b16 %v4478
          %v5209 = vunpack.c.l.b16 %v4479
          %v5210 = vunpack.c.h.b16 %v4479
          %v5211 = vunpack.c.l.b16 %v4480
          %v5212 = vunpack.c.h.b16 %v4480
          %v5213 = vunpack.c.l.b16 %v4481
          %v5214 = vunpack.c.h.b16 %v4481
          %v5215 = vunpack.c.l.b16 %v4482
          %v5216 = vunpack.c.h.b16 %v4482
          %v5217 = vunpack.c.l.b16 %v4483
          %v5218 = vunpack.c.h.b16 %v4483
          %v5219 = vunpack.c.l.b16 %v4484
          %v5220 = vunpack.c.h.b16 %v4484
          %v5221 = vunpack.c.l.b16 %v4485
          %v5222 = vunpack.c.h.b16 %v4485
          %v5223 = vunpack.c.l.b16 %v4486
          %v5224 = vunpack.c.h.b16 %v4486
          %v5225 = vunpack.c.l.b16 %v4487
          %v5226 = vunpack.c.h.b16 %v4487
          %v5227 = vunpack.c.l.b16 %v4488
          %v5228 = vunpack.c.h.b16 %v4488
          %v5229 = vunpack.c.l.b16 %v4489
          %v5230 = vunpack.c.h.b16 %v4489
          %v5231 = vunpack.c.l.b16 %v4490
          %v5232 = vunpack.c.h.b16 %v4490
          %v5233 = vunpack.c.l.b16 %v4491
          %v5234 = vunpack.c.h.b16 %v4491
          %v5235 = vunpack.c.l.b16 %v4492
          %v5236 = vunpack.c.h.b16 %v4492
          %v5237 = vunpack.c.l.b16 %v4493
          %v5238 = vunpack.c.h.b16 %v4493
          %v5239 = vunpack.c.l.b16 %v4494
          %v5240 = vunpack.c.h.b16 %v4494
          %v5241 = vunpack.c.l.b16 %v4495
          %v5242 = vunpack.c.h.b16 %v4495
          %v5243 = vunpack.c.l.b16 %v4496
          %v5244 = vunpack.c.h.b16 %v4496
          %v5245 = vunpack.c.l.b16 %v4497
          %v5246 = vunpack.c.h.b16 %v4497
          %v5247 = vunpack.c.l.b16 %v4498
          %v5248 = vunpack.c.h.b16 %v4498
          %v5249 = vunpack.c.l.b16 %v4499
          %v5250 = vunpack.c.h.b16 %v4499
          %v5251 = vunpack.c.l.b16 %v4500
          %v5252 = vunpack.c.h.b16 %v4500
          %v5253 = vunpack.c.l.b16 %v4501
          %v5254 = vunpack.c.h.b16 %v4501
          %v5255 = vunpack.c.l.b16 %v4502
          %v5256 = vunpack.c.h.b16 %v4502
          %v5257 = vunpack.c.l.b16 %v4503
          %v5258 = vunpack.c.h.b16 %v4503
          %v5259 = vunpack.c.l.b16 %v4504
          %v5260 = vunpack.c.h.b16 %v4504
          %v5261 = vunpack.c.l.b16 %v4505
          %v5262 = vunpack.c.h.b16 %v4505
          %v5263 = vunpack.c.l.b16 %v4506
          %v5264 = vunpack.c.h.b16 %v4506
          %v5265 = vunpack.c.l.b16 %v4507
          %v5266 = vunpack.c.h.b16 %v4507
          %v5267 = vunpack.c.l.b16 %v4508
          %v5268 = vunpack.c.h.b16 %v4508
          %v5269 = vunpack.c.l.b16 %v4509
          %v5270 = vunpack.c.h.b16 %v4509
          %v5271 = vunpack.c.l.b16 %v4510
          %v5272 = vunpack.c.h.b16 %v4510
          %v5273 = vunpack.c.l.b16 %v4511
          %v5274 = vunpack.c.h.b16 %v4511
          %v5275 = vunpack.c.l.b16 %v4512
          %v5276 = vunpack.c.h.b16 %v4512
          %v5277 = vunpack.c.l.b16 %v4513
          %v5278 = vunpack.c.h.b16 %v4513
          %v5279 = vunpack.c.l.b16 %v4514
          %v5280 = vunpack.c.h.b16 %v4514
          %v5281 = vunpack.c.l.b16 %v4515
          %v5282 = vunpack.c.h.b16 %v4515
          %v5283 = vunpack.c.l.b16 %v4516
          %v5284 = vunpack.c.h.b16 %v4516
          %v5285 = vunpack.c.l.b16 %v4517
          %v5286 = vunpack.c.h.b16 %v4517
          %v5287 = vunpack.c.l.b16 %v4518
          %v5288 = vunpack.c.h.b16 %v4518
          %v5289 = vunpack.c.l.b16 %v4519
          %v5290 = vunpack.c.h.b16 %v4519
          %v5291 = vunpack.c.l.b16 %v4520
          %v5292 = vunpack.c.h.b16 %v4520
          %v5293 = vunpack.c.l.b16 %v4521
          %v5294 = vunpack.c.h.b16 %v4521
          %v5295 = vunpack.c.l.b16 %v4522
          %v5296 = vunpack.c.h.b16 %v4522
          %v5297 = vunpack.c.l.b16 %v4523
          %v5298 = vunpack.c.h.b16 %v4523
          %v5299 = vunpack.c.l.b16 %v4524
          %v5300 = vunpack.c.h.b16 %v4524
          %v5301 = vunpack.c.l.b16 %v4525
          %v5302 = vunpack.c.h.b16 %v4525
          %v5303 = vunpack.c.l.b16 %v4526
          %v5304 = vunpack.c.h.b16 %v4526
          %v5305 = vpack.c.b16 %v4797, %v4793
          %v5306 = vpack.c.b16 %v4798, %v4794
          %v5307 = vpack.c.b16 %v4799, %v4795
          %v5308 = vpack.c.b16 %v4800, %v4796
          %v5309 = vpack.c.b16 %v4805, %v4801
          %v5310 = vpack.c.b16 %v4806, %v4802
          %v5311 = vpack.c.b16 %v4807, %v4803
          %v5312 = vpack.c.b16 %v4808, %v4804
          %v5313 = vpack.c.b16 %v4813, %v4809
          %v5314 = vpack.c.b16 %v4814, %v4810
          %v5315 = vpack.c.b16 %v4815, %v4811
          %v5316 = vpack.c.b16 %v4816, %v4812
          %v5317 = vpack.c.b16 %v4821, %v4817
          %v5318 = vpack.c.b16 %v4822, %v4818
          %v5319 = vpack.c.b16 %v4823, %v4819
          %v5320 = vpack.c.b16 %v4824, %v4820
          %v5321 = vpack.c.b16 %v4829, %v4825
          %v5322 = vpack.c.b16 %v4830, %v4826
          %v5323 = vpack.c.b16 %v4831, %v4827
          %v5324 = vpack.c.b16 %v4832, %v4828
          %v5325 = vpack.c.b16 %v4837, %v4833
          %v5326 = vpack.c.b16 %v4838, %v4834
          %v5327 = vpack.c.b16 %v4839, %v4835
          %v5328 = vpack.c.b16 %v4840, %v4836
          %v5329 = vpack.c.b16 %v4845, %v4841
          %v5330 = vpack.c.b16 %v4846, %v4842
          %v5331 = vpack.c.b16 %v4847, %v4843
          %v5332 = vpack.c.b16 %v4848, %v4844
          %v5333 = vpack.c.b16 %v4853, %v4849
          %v5334 = vpack.c.b16 %v4854, %v4850
          %v5335 = vpack.c.b16 %v4855, %v4851
          %v5336 = vpack.c.b16 %v4856, %v4852
          %v5337 = vpack.c.b16 %v4861, %v4857
          %v5338 = vpack.c.b16 %v4862, %v4858
          %v5339 = vpack.c.b16 %v4863, %v4859
          %v5340 = vpack.c.b16 %v4864, %v4860
          %v5341 = vpack.c.b16 %v4869, %v4865
          %v5342 = vpack.c.b16 %v4870, %v4866
          %v5343 = vpack.c.b16 %v4871, %v4867
          %v5344 = vpack.c.b16 %v4872, %v4868
          %v5345 = vpack.c.b16 %v4877, %v4873
          %v5346 = vpack.c.b16 %v4878, %v4874
          %v5347 = vpack.c.b16 %v4879, %v4875
          %v5348 = vpack.c.b16 %v4880, %v4876
          %v5349 = vpack.c.b16 %v4885, %v4881
          %v5350 = vpack.c.b16 %v4886, %v4882
          %v5351 = vpack.c.b16 %v4887, %v4883
          %v5352 = vpack.c.b16 %v4888, %v4884
          %v5353 = vpack.c.b16 %v4893, %v4889
          %v5354 = vpack.c.b16 %v4894, %v4890
          %v5355 = vpack.c.b16 %v4895, %v4891
          %v5356 = vpack.c.b16 %v4896, %v4892
          %v5357 = vpack.c.b16 %v4901, %v4897
          %v5358 = vpack.c.b16 %v4902, %v4898
          %v5359 = vpack.c.b16 %v4903, %v4899
          %v5360 = vpack.c.b16 %v4904, %v4900
          %v5361 = vpack.c.b16 %v4909, %v4905
          %v5362 = vpack.c.b16 %v4910, %v4906
          %v5363 = vpack.c.b16 %v4911, %v4907
          %v5364 = vpack.c.b16 %v4912, %v4908
          %v5365 = vpack.c.b16 %v4917, %v4913
          %v5366 = vpack.c.b16 %v4918, %v4914
          %v5367 = vpack.c.b16 %v4919, %v4915
          %v5368 = vpack.c.b16 %v4920, %v4916
          %v5369 = vpack.c.b16 %v4925, %v4921
          %v5370 = vpack.c.b16 %v4926, %v4922
          %v5371 = vpack.c.b16 %v4927, %v4923
          %v5372 = vpack.c.b16 %v4928, %v4924
          %v5373 = vpack.c.b16 %v4933, %v4929
          %v5374 = vpack.c.b16 %v4934, %v4930
          %v5375 = vpack.c.b16 %v4935, %v4931
          %v5376 = vpack.c.b16 %v4936, %v4932
          %v5377 = vpack.c.b16 %v4941, %v4937
          %v5378 = vpack.c.b16 %v4942, %v4938
          %v5379 = vpack.c.b16 %v4943, %v4939
          %v5380 = vpack.c.b16 %v4944, %v4940
          %v5381 = vpack.c.b16 %v4949, %v4945
          %v5382 = vpack.c.b16 %v4950, %v4946
          %v5383 = vpack.c.b16 %v4951, %v4947
          %v5384 = vpack.c.b16 %v4952, %v4948
          %v5385 = vpack.c.b16 %v4957, %v4953
          %v5386 = vpack.c.b16 %v4958, %v4954
          %v5387 = vpack.c.b16 %v4959, %v4955
          %v5388 = vpack.c.b16 %v4960, %v4956
          %v5389 = vpack.c.b16 %v4965, %v4961
          %v5390 = vpack.c.b16 %v4966, %v4962
          %v5391 = vpack.c.b16 %v4967, %v4963
          %v5392 = vpack.c.b16 %v4968, %v4964
          %v5393 = vpack.c.b16 %v4973, %v4969
          %v5394 = vpack.c.b16 %v4974, %v4970
          %v5395 = vpack.c.b16 %v4975, %v4971
          %v5396 = vpack.c.b16 %v4976, %v4972
          %v5397 = vpack.c.b16 %v4981, %v4977
          %v5398 = vpack.c.b16 %v4982, %v4978
          %v5399 = vpack.c.b16 %v4983, %v4979
          %v5400 = vpack.c.b16 %v4984, %v4980
          %v5401 = vpack.c.b16 %v4989, %v4985
          %v5402 = vpack.c.b16 %v4990, %v4986
          %v5403 = vpack.c.b16 %v4991, %v4987
          %v5404 = vpack.c.b16 %v4992, %v4988
          %v5405 = vpack.c.b16 %v4997, %v4993
          %v5406 = vpack.c.b16 %v4998, %v4994
          %v5407 = vpack.c.b16 %v4999, %v4995
          %v5408 = vpack.c.b16 %v5000, %v4996
          %v5409 = vpack.c.b16 %v5005, %v5001
          %v5410 = vpack.c.b16 %v5006, %v5002
          %v5411 = vpack.c.b16 %v5007, %v5003
          %v5412 = vpack.c.b16 %v5008, %v5004
          %v5413 = vpack.c.b16 %v5013, %v5009
          %v5414 = vpack.c.b16 %v5014, %v5010
          %v5415 = vpack.c.b16 %v5015, %v5011
          %v5416 = vpack.c.b16 %v5016, %v5012
          %v5417 = vpack.c.b16 %v5021, %v5017
          %v5418 = vpack.c.b16 %v5022, %v5018
          %v5419 = vpack.c.b16 %v5023, %v5019
          %v5420 = vpack.c.b16 %v5024, %v5020
          %v5421 = vpack.c.b16 %v5029, %v5025
          %v5422 = vpack.c.b16 %v5030, %v5026
          %v5423 = vpack.c.b16 %v5031, %v5027
          %v5424 = vpack.c.b16 %v5032, %v5028
          %v5425 = vpack.c.b16 %v5037, %v5033
          %v5426 = vpack.c.b16 %v5038, %v5034
          %v5427 = vpack.c.b16 %v5039, %v5035
          %v5428 = vpack.c.b16 %v5040, %v5036
          %v5429 = vpack.c.b16 %v5045, %v5041
          %v5430 = vpack.c.b16 %v5046, %v5042
          %v5431 = vpack.c.b16 %v5047, %v5043
          %v5432 = vpack.c.b16 %v5048, %v5044
          %v5433 = vpack.c.b16 %v5053, %v5049
          %v5434 = vpack.c.b16 %v5054, %v5050
          %v5435 = vpack.c.b16 %v5055, %v5051
          %v5436 = vpack.c.b16 %v5056, %v5052
          %v5437 = vpack.c.b16 %v5061, %v5057
          %v5438 = vpack.c.b16 %v5062, %v5058
          %v5439 = vpack.c.b16 %v5063, %v5059
          %v5440 = vpack.c.b16 %v5064, %v5060
          %v5441 = vpack.c.b16 %v5069, %v5065
          %v5442 = vpack.c.b16 %v5070, %v5066
          %v5443 = vpack.c.b16 %v5071, %v5067
          %v5444 = vpack.c.b16 %v5072, %v5068
          %v5445 = vpack.c.b16 %v5077, %v5073
          %v5446 = vpack.c.b16 %v5078, %v5074
          %v5447 = vpack.c.b16 %v5079, %v5075
          %v5448 = vpack.c.b16 %v5080, %v5076
          %v5449 = vpack.c.b16 %v5085, %v5081
          %v5450 = vpack.c.b16 %v5086, %v5082
          %v5451 = vpack.c.b16 %v5087, %v5083
          %v5452 = vpack.c.b16 %v5088, %v5084
          %v5453 = vpack.c.b16 %v5093, %v5089
          %v5454 = vpack.c.b16 %v5094, %v5090
          %v5455 = vpack.c.b16 %v5095, %v5091
          %v5456 = vpack.c.b16 %v5096, %v5092
          %v5457 = vpack.c.b16 %v5101, %v5097
          %v5458 = vpack.c.b16 %v5102, %v5098
          %v5459 = vpack.c.b16 %v5103, %v5099
          %v5460 = vpack.c.b16 %v5104, %v5100
          %v5461 = vpack.c.b16 %v5109, %v5105
          %v5462 = vpack.c.b16 %v5110, %v5106
          %v5463 = vpack.c.b16 %v5111, %v5107
          %v5464 = vpack.c.b16 %v5112, %v5108
          %v5465 = vpack.c.b16 %v5117, %v5113
          %v5466 = vpack.c.b16 %v5118, %v5114
          %v5467 = vpack.c.b16 %v5119, %v5115
          %v5468 = vpack.c.b16 %v5120, %v5116
          %v5469 = vpack.c.b16 %v5125, %v5121
          %v5470 = vpack.c.b16 %v5126, %v5122
          %v5471 = vpack.c.b16 %v5127, %v5123
          %v5472 = vpack.c.b16 %v5128, %v5124
          %v5473 = vpack.c.b16 %v5133, %v5129
          %v5474 = vpack.c.b16 %v5134, %v5130
          %v5475 = vpack.c.b16 %v5135, %v5131
          %v5476 = vpack.c.b16 %v5136, %v5132
          %v5477 = vpack.c.b16 %v5141, %v5137
          %v5478 = vpack.c.b16 %v5142, %v5138
          %v5479 = vpack.c.b16 %v5143, %v5139
          %v5480 = vpack.c.b16 %v5144, %v5140
          %v5481 = vpack.c.b16 %v5149, %v5145
          %v5482 = vpack.c.b16 %v5150, %v5146
          %v5483 = vpack.c.b16 %v5151, %v5147
          %v5484 = vpack.c.b16 %v5152, %v5148
          %v5485 = vpack.c.b16 %v5157, %v5153
          %v5486 = vpack.c.b16 %v5158, %v5154
          %v5487 = vpack.c.b16 %v5159, %v5155
          %v5488 = vpack.c.b16 %v5160, %v5156
          %v5489 = vpack.c.b16 %v5165, %v5161
          %v5490 = vpack.c.b16 %v5166, %v5162
          %v5491 = vpack.c.b16 %v5167, %v5163
          %v5492 = vpack.c.b16 %v5168, %v5164
          %v5493 = vpack.c.b16 %v5173, %v5169
          %v5494 = vpack.c.b16 %v5174, %v5170
          %v5495 = vpack.c.b16 %v5175, %v5171
          %v5496 = vpack.c.b16 %v5176, %v5172
          %v5497 = vpack.c.b16 %v5181, %v5177
          %v5498 = vpack.c.b16 %v5182, %v5178
          %v5499 = vpack.c.b16 %v5183, %v5179
          %v5500 = vpack.c.b16 %v5184, %v5180
          %v5501 = vpack.c.b16 %v5189, %v5185
          %v5502 = vpack.c.b16 %v5190, %v5186
          %v5503 = vpack.c.b16 %v5191, %v5187
          %v5504 = vpack.c.b16 %v5192, %v5188
          %v5505 = vpack.c.b16 %v5197, %v5193
          %v5506 = vpack.c.b16 %v5198, %v5194
          %v5507 = vpack.c.b16 %v5199, %v5195
          %v5508 = vpack.c.b16 %v5200, %v5196
          %v5509 = vpack.c.b16 %v5205, %v5201
          %v5510 = vpack.c.b16 %v5206, %v5202
          %v5511 = vpack.c.b16 %v5207, %v5203
          %v5512 = vpack.c.b16 %v5208, %v5204
          %v5513 = vpack.c.b16 %v5213, %v5209
          %v5514 = vpack.c.b16 %v5214, %v5210
          %v5515 = vpack.c.b16 %v5215, %v5211
          %v5516 = vpack.c.b16 %v5216, %v5212
          %v5517 = vpack.c.b16 %v5221, %v5217
          %v5518 = vpack.c.b16 %v5222, %v5218
          %v5519 = vpack.c.b16 %v5223, %v5219
          %v5520 = vpack.c.b16 %v5224, %v5220
          %v5521 = vpack.c.b16 %v5229, %v5225
          %v5522 = vpack.c.b16 %v5230, %v5226
          %v5523 = vpack.c.b16 %v5231, %v5227
          %v5524 = vpack.c.b16 %v5232, %v5228
          %v5525 = vpack.c.b16 %v5237, %v5233
          %v5526 = vpack.c.b16 %v5238, %v5234
          %v5527 = vpack.c.b16 %v5239, %v5235
          %v5528 = vpack.c.b16 %v5240, %v5236
          %v5529 = vpack.c.b16 %v5245, %v5241
          %v5530 = vpack.c.b16 %v5246, %v5242
          %v5531 = vpack.c.b16 %v5247, %v5243
          %v5532 = vpack.c.b16 %v5248, %v5244
          %v5533 = vpack.c.b16 %v5253, %v5249
          %v5534 = vpack.c.b16 %v5254, %v5250
          %v5535 = vpack.c.b16 %v5255, %v5251
          %v5536 = vpack.c.b16 %v5256, %v5252
          %v5537 = vpack.c.b16 %v5261, %v5257
          %v5538 = vpack.c.b16 %v5262, %v5258
          %v5539 = vpack.c.b16 %v5263, %v5259
          %v5540 = vpack.c.b16 %v5264, %v5260
          %v5541 = vpack.c.b16 %v5269, %v5265
          %v5542 = vpack.c.b16 %v5270, %v5266
          %v5543 = vpack.c.b16 %v5271, %v5267
          %v5544 = vpack.c.b16 %v5272, %v5268
          %v5545 = vpack.c.b16 %v5277, %v5273
          %v5546 = vpack.c.b16 %v5278, %v5274
          %v5547 = vpack.c.b16 %v5279, %v5275
          %v5548 = vpack.c.b16 %v5280, %v5276
          %v5549 = vpack.c.b16 %v5285, %v5281
          %v5550 = vpack.c.b16 %v5286, %v5282
          %v5551 = vpack.c.b16 %v5287, %v5283
          %v5552 = vpack.c.b16 %v5288, %v5284
          %v5553 = vpack.c.b16 %v5293, %v5289
          %v5554 = vpack.c.b16 %v5294, %v5290
          %v5555 = vpack.c.b16 %v5295, %v5291
          %v5556 = vpack.c.b16 %v5296, %v5292
          %v5557 = vpack.c.b16 %v5301, %v5297
          %v5558 = vpack.c.b16 %v5302, %v5298
          %v5559 = vpack.c.b16 %v5303, %v5299
          %v5560 = vpack.c.b16 %v5304, %v5300
          %5817 = vmatpush.bf16.msra.mxu0 %v5333
          %5818 = vmatpush.bf16.msra.mxu0 %v5329
          %5819 = vmatpush.bf16.msra.mxu0 %v5325
          %5820 = vmatpush.bf16.msra.mxu0 %v5321
          %5821 = vmatpush.bf16.msra.mxu0 %v5317
          %5822 = vmatpush.bf16.msra.mxu0 %v5313
          %5823 = vmatpush.bf16.msra.mxu0 %v5309
          %5824 = vmatpush.bf16.msra.mxu0 %v5305
          %5825 = vmatmul.bf16.gmra.mxu0 %v4263
          %v5826 = vpop.f32.mrf.mxu0
          %v5827 = vadd.f32 %v4529, %v5826
          %v5828 = vpop.f32.mrf.mxu0
          %5829 = vdwg.mxu0
          %5830 = vmatpush.bf16.msra.mxu0 %v5365
          %5831 = vmatpush.bf16.msra.mxu0 %v5361
          %5832 = vmatpush.bf16.msra.mxu0 %v5357
          %5833 = vmatpush.bf16.msra.mxu0 %v5353
          %5834 = vmatpush.bf16.msra.mxu0 %v5349
          %5835 = vmatpush.bf16.msra.mxu0 %v5345
          %5836 = vmatpush.bf16.msra.mxu0 %v5341
          %5837 = vmatpush.bf16.msra.mxu0 %v5337
          %5838 = vmatmul.bf16.gmra.mxu0 %v4264
          %v5839 = vpop.f32.mrf.mxu0
          %v5840 = vadd.f32 %v5827, %v5839
          %v5841 = vpop.f32.mrf.mxu0
          %5842 = vdwg.mxu0
          %5843 = vmatpush.bf16.msra.mxu0 %v5397
          %5844 = vmatpush.bf16.msra.mxu0 %v5393
          %5845 = vmatpush.bf16.msra.mxu0 %v5389
          %5846 = vmatpush.bf16.msra.mxu0 %v5385
          %5847 = vmatpush.bf16.msra.mxu0 %v5381
          %5848 = vmatpush.bf16.msra.mxu0 %v5377
          %5849 = vmatpush.bf16.msra.mxu0 %v5373
          %5850 = vmatpush.bf16.msra.mxu0 %v5369
          %5851 = vmatmul.bf16.gmra.mxu0 %v4265
          %v5852 = vpop.f32.mrf.mxu0
          %v5853 = vadd.f32 %v5840, %v5852
          %v5854 = vpop.f32.mrf.mxu0
          %5855 = vdwg.mxu0
          %5856 = vmatpush.bf16.msra.mxu0 %v5429
          %5857 = vmatpush.bf16.msra.mxu0 %v5425
          %5858 = vmatpush.bf16.msra.mxu0 %v5421
          %5859 = vmatpush.bf16.msra.mxu0 %v5417
          %5860 = vmatpush.bf16.msra.mxu0 %v5413
          %5861 = vmatpush.bf16.msra.mxu0 %v5409
          %5862 = vmatpush.bf16.msra.mxu0 %v5405
          %5863 = vmatpush.bf16.msra.mxu0 %v5401
          %5864 = vmatmul.bf16.gmra.mxu0 %v4266
          %v5865 = vpop.f32.mrf.mxu0
          %v5866 = vadd.f32 %v5853, %v5865
          %v5867 = vpop.f32.mrf.mxu0
          %5868 = vdwg.mxu0
          %5869 = vmatpush.bf16.msra.mxu0 %v5461
          %5870 = vmatpush.bf16.msra.mxu0 %v5457
          %5871 = vmatpush.bf16.msra.mxu0 %v5453
          %5872 = vmatpush.bf16.msra.mxu0 %v5449
          %5873 = vmatpush.bf16.msra.mxu0 %v5445
          %5874 = vmatpush.bf16.msra.mxu0 %v5441
          %5875 = vmatpush.bf16.msra.mxu0 %v5437
          %5876 = vmatpush.bf16.msra.mxu0 %v5433
          %5877 = vmatmul.bf16.gmra.mxu0 %v4267
          %v5878 = vpop.f32.mrf.mxu0
          %v5879 = vadd.f32 %v5866, %v5878
          %v5880 = vpop.f32.mrf.mxu0
          %5881 = vdwg.mxu0
          %5882 = vmatpush.bf16.msra.mxu0 %v5493
          %5883 = vmatpush.bf16.msra.mxu0 %v5489
          %5884 = vmatpush.bf16.msra.mxu0 %v5485
          %5885 = vmatpush.bf16.msra.mxu0 %v5481
          %5886 = vmatpush.bf16.msra.mxu0 %v5477
          %5887 = vmatpush.bf16.msra.mxu0 %v5473
          %5888 = vmatpush.bf16.msra.mxu0 %v5469
          %5889 = vmatpush.bf16.msra.mxu0 %v5465
          %5890 = vmatmul.bf16.gmra.mxu0 %v4268
          %v5891 = vpop.f32.mrf.mxu0
          %v5892 = vadd.f32 %v5879, %v5891
          %v5893 = vpop.f32.mrf.mxu0
          %5894 = vdwg.mxu0
          %5895 = vmatpush.bf16.msra.mxu0 %v5525
          %5896 = vmatpush.bf16.msra.mxu0 %v5521
          %5897 = vmatpush.bf16.msra.mxu0 %v5517
          %5898 = vmatpush.bf16.msra.mxu0 %v5513
          %5899 = vmatpush.bf16.msra.mxu0 %v5509
          %5900 = vmatpush.bf16.msra.mxu0 %v5505
          %5901 = vmatpush.bf16.msra.mxu0 %v5501
          %5902 = vmatpush.bf16.msra.mxu0 %v5497
          %5903 = vmatmul.bf16.gmra.mxu0 %v4269
          %v5904 = vpop.f32.mrf.mxu0
          %v5905 = vadd.f32 %v5892, %v5904
          %v5906 = vpop.f32.mrf.mxu0
          %5907 = vdwg.mxu0
          %5908 = vmatpush.bf16.msra.mxu0 %v5557
          %5909 = vmatpush.bf16.msra.mxu0 %v5553
          %5910 = vmatpush.bf16.msra.mxu0 %v5549
          %5911 = vmatpush.bf16.msra.mxu0 %v5545
          %5912 = vmatpush.bf16.msra.mxu0 %v5541
          %5913 = vmatpush.bf16.msra.mxu0 %v5537
          %5914 = vmatpush.bf16.msra.mxu0 %v5533
          %5915 = vmatpush.bf16.msra.mxu0 %v5529
          %5916 = vmatmul.bf16.gmra.mxu0 %v4270
          %v5917 = vpop.f32.mrf.mxu0
          %v5918 = vadd.f32 %v5905, %v5917
          %v5919 = vpop.f32.mrf.mxu0
          %5920 = vdwg.mxu0
          %5921 = vmatpush.bf16.msra.mxu0 %v5334
          %5922 = vmatpush.bf16.msra.mxu0 %v5330
          %5923 = vmatpush.bf16.msra.mxu0 %v5326
          %5924 = vmatpush.bf16.msra.mxu0 %v5322
          %5925 = vmatpush.bf16.msra.mxu0 %v5318
          %5926 = vmatpush.bf16.msra.mxu0 %v5314
          %5927 = vmatpush.bf16.msra.mxu0 %v5310
          %5928 = vmatpush.bf16.msra.mxu0 %v5306
          %5929 = vmatmul.bf16.gmra.mxu0 %v4263
          %v5930 = vpop.f32.mrf.mxu0
          %v5931 = vadd.f32 %v4530, %v5930
          %v5932 = vpop.f32.mrf.mxu0
          %5933 = vdwg.mxu0
          %5934 = vmatpush.bf16.msra.mxu0 %v5366
          %5935 = vmatpush.bf16.msra.mxu0 %v5362
          %5936 = vmatpush.bf16.msra.mxu0 %v5358
          %5937 = vmatpush.bf16.msra.mxu0 %v5354
          %5938 = vmatpush.bf16.msra.mxu0 %v5350
          %5939 = vmatpush.bf16.msra.mxu0 %v5346
          %5940 = vmatpush.bf16.msra.mxu0 %v5342
          %5941 = vmatpush.bf16.msra.mxu0 %v5338
          %5942 = vmatmul.bf16.gmra.mxu0 %v4264
          %v5943 = vpop.f32.mrf.mxu0
          %v5944 = vadd.f32 %v5931, %v5943
          %v5945 = vpop.f32.mrf.mxu0
          %5946 = vdwg.mxu0
          %5947 = vmatpush.bf16.msra.mxu0 %v5398
          %5948 = vmatpush.bf16.msra.mxu0 %v5394
          %5949 = vmatpush.bf16.msra.mxu0 %v5390
          %5950 = vmatpush.bf16.msra.mxu0 %v5386
          %5951 = vmatpush.bf16.msra.mxu0 %v5382
          %5952 = vmatpush.bf16.msra.mxu0 %v5378
          %5953 = vmatpush.bf16.msra.mxu0 %v5374
          %5954 = vmatpush.bf16.msra.mxu0 %v5370
          %5955 = vmatmul.bf16.gmra.mxu0 %v4265
          %v5956 = vpop.f32.mrf.mxu0
          %v5957 = vadd.f32 %v5944, %v5956
          %v5958 = vpop.f32.mrf.mxu0
          %5959 = vdwg.mxu0
          %5960 = vmatpush.bf16.msra.mxu0 %v5430
          %5961 = vmatpush.bf16.msra.mxu0 %v5426
          %5962 = vmatpush.bf16.msra.mxu0 %v5422
          %5963 = vmatpush.bf16.msra.mxu0 %v5418
          %5964 = vmatpush.bf16.msra.mxu0 %v5414
          %5965 = vmatpush.bf16.msra.mxu0 %v5410
          %5966 = vmatpush.bf16.msra.mxu0 %v5406
          %5967 = vmatpush.bf16.msra.mxu0 %v5402
          %5968 = vmatmul.bf16.gmra.mxu0 %v4266
          %v5969 = vpop.f32.mrf.mxu0
          %v5970 = vadd.f32 %v5957, %v5969
          %v5971 = vpop.f32.mrf.mxu0
          %5972 = vdwg.mxu0
          %5973 = vmatpush.bf16.msra.mxu0 %v5462
          %5974 = vmatpush.bf16.msra.mxu0 %v5458
          %5975 = vmatpush.bf16.msra.mxu0 %v5454
          %5976 = vmatpush.bf16.msra.mxu0 %v5450
          %5977 = vmatpush.bf16.msra.mxu0 %v5446
          %5978 = vmatpush.bf16.msra.mxu0 %v5442
          %5979 = vmatpush.bf16.msra.mxu0 %v5438
          %5980 = vmatpush.bf16.msra.mxu0 %v5434
          %5981 = vmatmul.bf16.gmra.mxu0 %v4267
          %v5982 = vpop.f32.mrf.mxu0
          %v5983 = vadd.f32 %v5970, %v5982
          %v5984 = vpop.f32.mrf.mxu0
          %5985 = vdwg.mxu0
          %5986 = vmatpush.bf16.msra.mxu0 %v5494
          %5987 = vmatpush.bf16.msra.mxu0 %v5490
          %5988 = vmatpush.bf16.msra.mxu0 %v5486
          %5989 = vmatpush.bf16.msra.mxu0 %v5482
          %5990 = vmatpush.bf16.msra.mxu0 %v5478
          %5991 = vmatpush.bf16.msra.mxu0 %v5474
          %5992 = vmatpush.bf16.msra.mxu0 %v5470
          %5993 = vmatpush.bf16.msra.mxu0 %v5466
          %5994 = vmatmul.bf16.gmra.mxu0 %v4268
          %v5995 = vpop.f32.mrf.mxu0
          %v5996 = vadd.f32 %v5983, %v5995
          %v5997 = vpop.f32.mrf.mxu0
          %5998 = vdwg.mxu0
          %5999 = vmatpush.bf16.msra.mxu0 %v5526
          %6000 = vmatpush.bf16.msra.mxu0 %v5522
          %6001 = vmatpush.bf16.msra.mxu0 %v5518
          %6002 = vmatpush.bf16.msra.mxu0 %v5514
          %6003 = vmatpush.bf16.msra.mxu0 %v5510
          %6004 = vmatpush.bf16.msra.mxu0 %v5506
          %6005 = vmatpush.bf16.msra.mxu0 %v5502
          %6006 = vmatpush.bf16.msra.mxu0 %v5498
          %6007 = vmatmul.bf16.gmra.mxu0 %v4269
          %v6008 = vpop.f32.mrf.mxu0
          %v6009 = vadd.f32 %v5996, %v6008
          %v6010 = vpop.f32.mrf.mxu0
          %6011 = vdwg.mxu0
          %6012 = vmatpush.bf16.msra.mxu0 %v5558
          %6013 = vmatpush.bf16.msra.mxu0 %v5554
          %6014 = vmatpush.bf16.msra.mxu0 %v5550
          %6015 = vmatpush.bf16.msra.mxu0 %v5546
          %6016 = vmatpush.bf16.msra.mxu0 %v5542
          %6017 = vmatpush.bf16.msra.mxu0 %v5538
          %6018 = vmatpush.bf16.msra.mxu0 %v5534
          %6019 = vmatpush.bf16.msra.mxu0 %v5530
          %6020 = vmatmul.bf16.gmra.mxu0 %v4270
          %v6021 = vpop.f32.mrf.mxu0
          %v6022 = vadd.f32 %v6009, %v6021
          %v6023 = vpop.f32.mrf.mxu0
          %6024 = vdwg.mxu0
          %6025 = vmatpush.bf16.msra.mxu0 %v5335
          %6026 = vmatpush.bf16.msra.mxu0 %v5331
          %6027 = vmatpush.bf16.msra.mxu0 %v5327
          %6028 = vmatpush.bf16.msra.mxu0 %v5323
          %6029 = vmatpush.bf16.msra.mxu0 %v5319
          %6030 = vmatpush.bf16.msra.mxu0 %v5315
          %6031 = vmatpush.bf16.msra.mxu0 %v5311
          %6032 = vmatpush.bf16.msra.mxu0 %v5307
          %6033 = vmatmul.bf16.gmra.mxu0 %v4263
          %v6034 = vpop.f32.mrf.mxu0
          %v6035 = vadd.f32 %v4531, %v6034
          %v6036 = vpop.f32.mrf.mxu0
          %6037 = vdwg.mxu0
          %6038 = vmatpush.bf16.msra.mxu0 %v5367
          %6039 = vmatpush.bf16.msra.mxu0 %v5363
          %6040 = vmatpush.bf16.msra.mxu0 %v5359
          %6041 = vmatpush.bf16.msra.mxu0 %v5355
          %6042 = vmatpush.bf16.msra.mxu0 %v5351
          %6043 = vmatpush.bf16.msra.mxu0 %v5347
          %6044 = vmatpush.bf16.msra.mxu0 %v5343
          %6045 = vmatpush.bf16.msra.mxu0 %v5339
          %6046 = vmatmul.bf16.gmra.mxu0 %v4264
          %v6047 = vpop.f32.mrf.mxu0
          %v6048 = vadd.f32 %v6035, %v6047
          %v6049 = vpop.f32.mrf.mxu0
          %6050 = vdwg.mxu0
          %6051 = vmatpush.bf16.msra.mxu0 %v5399
          %6052 = vmatpush.bf16.msra.mxu0 %v5395
          %6053 = vmatpush.bf16.msra.mxu0 %v5391
          %6054 = vmatpush.bf16.msra.mxu0 %v5387
          %6055 = vmatpush.bf16.msra.mxu0 %v5383
          %6056 = vmatpush.bf16.msra.mxu0 %v5379
          %6057 = vmatpush.bf16.msra.mxu0 %v5375
          %6058 = vmatpush.bf16.msra.mxu0 %v5371
          %6059 = vmatmul.bf16.gmra.mxu0 %v4265
          %v6060 = vpop.f32.mrf.mxu0
          %v6061 = vadd.f32 %v6048, %v6060
          %v6062 = vpop.f32.mrf.mxu0
          %6063 = vdwg.mxu0
          %6064 = vmatpush.bf16.msra.mxu0 %v5431
          %6065 = vmatpush.bf16.msra.mxu0 %v5427
          %6066 = vmatpush.bf16.msra.mxu0 %v5423
          %6067 = vmatpush.bf16.msra.mxu0 %v5419
          %6068 = vmatpush.bf16.msra.mxu0 %v5415
          %6069 = vmatpush.bf16.msra.mxu0 %v5411
          %6070 = vmatpush.bf16.msra.mxu0 %v5407
          %6071 = vmatpush.bf16.msra.mxu0 %v5403
          %6072 = vmatmul.bf16.gmra.mxu0 %v4266
          %v6073 = vpop.f32.mrf.mxu0
          %v6074 = vadd.f32 %v6061, %v6073
          %v6075 = vpop.f32.mrf.mxu0
          %6076 = vdwg.mxu0
          %6077 = vmatpush.bf16.msra.mxu0 %v5463
          %6078 = vmatpush.bf16.msra.mxu0 %v5459
          %6079 = vmatpush.bf16.msra.mxu0 %v5455
          %6080 = vmatpush.bf16.msra.mxu0 %v5451
          %6081 = vmatpush.bf16.msra.mxu0 %v5447
          %6082 = vmatpush.bf16.msra.mxu0 %v5443
          %6083 = vmatpush.bf16.msra.mxu0 %v5439
          %6084 = vmatpush.bf16.msra.mxu0 %v5435
          %6085 = vmatmul.bf16.gmra.mxu0 %v4267
          %v6086 = vpop.f32.mrf.mxu0
          %v6087 = vadd.f32 %v6074, %v6086
          %v6088 = vpop.f32.mrf.mxu0
          %6089 = vdwg.mxu0
          %6090 = vmatpush.bf16.msra.mxu0 %v5495
          %6091 = vmatpush.bf16.msra.mxu0 %v5491
          %6092 = vmatpush.bf16.msra.mxu0 %v5487
          %6093 = vmatpush.bf16.msra.mxu0 %v5483
          %6094 = vmatpush.bf16.msra.mxu0 %v5479
          %6095 = vmatpush.bf16.msra.mxu0 %v5475
          %6096 = vmatpush.bf16.msra.mxu0 %v5471
          %6097 = vmatpush.bf16.msra.mxu0 %v5467
          %6098 = vmatmul.bf16.gmra.mxu0 %v4268
          %v6099 = vpop.f32.mrf.mxu0
          %v6100 = vadd.f32 %v6087, %v6099
          %v6101 = vpop.f32.mrf.mxu0
          %6102 = vdwg.mxu0
          %6103 = vmatpush.bf16.msra.mxu0 %v5527
          %6104 = vmatpush.bf16.msra.mxu0 %v5523
          %6105 = vmatpush.bf16.msra.mxu0 %v5519
          %6106 = vmatpush.bf16.msra.mxu0 %v5515
          %6107 = vmatpush.bf16.msra.mxu0 %v5511
          %6108 = vmatpush.bf16.msra.mxu0 %v5507
          %6109 = vmatpush.bf16.msra.mxu0 %v5503
          %6110 = vmatpush.bf16.msra.mxu0 %v5499
          %6111 = vmatmul.bf16.gmra.mxu0 %v4269
          %v6112 = vpop.f32.mrf.mxu0
          %v6113 = vadd.f32 %v6100, %v6112
          %v6114 = vpop.f32.mrf.mxu0
          %6115 = vdwg.mxu0
          %6116 = vmatpush.bf16.msra.mxu0 %v5559
          %6117 = vmatpush.bf16.msra.mxu0 %v5555
          %6118 = vmatpush.bf16.msra.mxu0 %v5551
          %6119 = vmatpush.bf16.msra.mxu0 %v5547
          %6120 = vmatpush.bf16.msra.mxu0 %v5543
          %6121 = vmatpush.bf16.msra.mxu0 %v5539
          %6122 = vmatpush.bf16.msra.mxu0 %v5535
          %6123 = vmatpush.bf16.msra.mxu0 %v5531
          %6124 = vmatmul.bf16.gmra.mxu0 %v4270
          %v6125 = vpop.f32.mrf.mxu0
          %v6126 = vadd.f32 %v6113, %v6125
          %v6127 = vpop.f32.mrf.mxu0
          %6128 = vdwg.mxu0
          %6129 = vmatpush.bf16.msra.mxu0 %v5336
          %6130 = vmatpush.bf16.msra.mxu0 %v5332
          %6131 = vmatpush.bf16.msra.mxu0 %v5328
          %6132 = vmatpush.bf16.msra.mxu0 %v5324
          %6133 = vmatpush.bf16.msra.mxu0 %v5320
          %6134 = vmatpush.bf16.msra.mxu0 %v5316
          %6135 = vmatpush.bf16.msra.mxu0 %v5312
          %6136 = vmatpush.bf16.msra.mxu0 %v5308
          %6137 = vmatmul.bf16.gmra.mxu0 %v4263
          %v6138 = vpop.f32.mrf.mxu0
          %v6139 = vadd.f32 %v4532, %v6138
          %v6140 = vpop.f32.mrf.mxu0
          %6141 = vdwg.mxu0
          %6142 = vmatpush.bf16.msra.mxu0 %v5368
          %6143 = vmatpush.bf16.msra.mxu0 %v5364
          %6144 = vmatpush.bf16.msra.mxu0 %v5360
          %6145 = vmatpush.bf16.msra.mxu0 %v5356
          %6146 = vmatpush.bf16.msra.mxu0 %v5352
          %6147 = vmatpush.bf16.msra.mxu0 %v5348
          %6148 = vmatpush.bf16.msra.mxu0 %v5344
          %6149 = vmatpush.bf16.msra.mxu0 %v5340
          %6150 = vmatmul.bf16.gmra.mxu0 %v4264
          %v6151 = vpop.f32.mrf.mxu0
          %v6152 = vadd.f32 %v6139, %v6151
          %v6153 = vpop.f32.mrf.mxu0
          %6154 = vdwg.mxu0
          %6155 = vmatpush.bf16.msra.mxu0 %v5400
          %6156 = vmatpush.bf16.msra.mxu0 %v5396
          %6157 = vmatpush.bf16.msra.mxu0 %v5392
          %6158 = vmatpush.bf16.msra.mxu0 %v5388
          %6159 = vmatpush.bf16.msra.mxu0 %v5384
          %6160 = vmatpush.bf16.msra.mxu0 %v5380
          %6161 = vmatpush.bf16.msra.mxu0 %v5376
          %6162 = vmatpush.bf16.msra.mxu0 %v5372
          %6163 = vmatmul.bf16.gmra.mxu0 %v4265
          %v6164 = vpop.f32.mrf.mxu0
          %v6165 = vadd.f32 %v6152, %v6164
          %v6166 = vpop.f32.mrf.mxu0
          %6167 = vdwg.mxu0
          %6168 = vmatpush.bf16.msra.mxu0 %v5432
          %6169 = vmatpush.bf16.msra.mxu0 %v5428
          %6170 = vmatpush.bf16.msra.mxu0 %v5424
          %6171 = vmatpush.bf16.msra.mxu0 %v5420
          %6172 = vmatpush.bf16.msra.mxu0 %v5416
          %6173 = vmatpush.bf16.msra.mxu0 %v5412
          %6174 = vmatpush.bf16.msra.mxu0 %v5408
          %6175 = vmatpush.bf16.msra.mxu0 %v5404
          %6176 = vmatmul.bf16.gmra.mxu0 %v4266
          %v6177 = vpop.f32.mrf.mxu0
          %v6178 = vadd.f32 %v6165, %v6177
          %v6179 = vpop.f32.mrf.mxu0
          %6180 = vdwg.mxu0
          %6181 = vmatpush.bf16.msra.mxu0 %v5464
          %6182 = vmatpush.bf16.msra.mxu0 %v5460
          %6183 = vmatpush.bf16.msra.mxu0 %v5456
          %6184 = vmatpush.bf16.msra.mxu0 %v5452
          %6185 = vmatpush.bf16.msra.mxu0 %v5448
          %6186 = vmatpush.bf16.msra.mxu0 %v5444
          %6187 = vmatpush.bf16.msra.mxu0 %v5440
          %6188 = vmatpush.bf16.msra.mxu0 %v5436
          %6189 = vmatmul.bf16.gmra.mxu0 %v4267
          %v6190 = vpop.f32.mrf.mxu0
          %v6191 = vadd.f32 %v6178, %v6190
          %v6192 = vpop.f32.mrf.mxu0
          %6193 = vdwg.mxu0
          %6194 = vmatpush.bf16.msra.mxu0 %v5496
          %6195 = vmatpush.bf16.msra.mxu0 %v5492
          %6196 = vmatpush.bf16.msra.mxu0 %v5488
          %6197 = vmatpush.bf16.msra.mxu0 %v5484
          %6198 = vmatpush.bf16.msra.mxu0 %v5480
          %6199 = vmatpush.bf16.msra.mxu0 %v5476
          %6200 = vmatpush.bf16.msra.mxu0 %v5472
          %6201 = vmatpush.bf16.msra.mxu0 %v5468
          %6202 = vmatmul.bf16.gmra.mxu0 %v4268
          %v6203 = vpop.f32.mrf.mxu0
          %v6204 = vadd.f32 %v6191, %v6203
          %v6205 = vpop.f32.mrf.mxu0
          %6206 = vdwg.mxu0
          %6207 = vmatpush.bf16.msra.mxu0 %v5528
          %6208 = vmatpush.bf16.msra.mxu0 %v5524
          %6209 = vmatpush.bf16.msra.mxu0 %v5520
          %6210 = vmatpush.bf16.msra.mxu0 %v5516
          %6211 = vmatpush.bf16.msra.mxu0 %v5512
          %6212 = vmatpush.bf16.msra.mxu0 %v5508
          %6213 = vmatpush.bf16.msra.mxu0 %v5504
          %6214 = vmatpush.bf16.msra.mxu0 %v5500
          %6215 = vmatmul.bf16.gmra.mxu0 %v4269
          %v6216 = vpop.f32.mrf.mxu0
          %v6217 = vadd.f32 %v6204, %v6216
          %v6218 = vpop.f32.mrf.mxu0
          %6219 = vdwg.mxu0
          %6220 = vmatpush.bf16.msra.mxu0 %v5560
          %6221 = vmatpush.bf16.msra.mxu0 %v5556
          %6222 = vmatpush.bf16.msra.mxu0 %v5552
          %6223 = vmatpush.bf16.msra.mxu0 %v5548
          %6224 = vmatpush.bf16.msra.mxu0 %v5544
          %6225 = vmatpush.bf16.msra.mxu0 %v5540
          %6226 = vmatpush.bf16.msra.mxu0 %v5536
          %6227 = vmatpush.bf16.msra.mxu0 %v5532
          %6228 = vmatmul.bf16.gmra.mxu0 %v4270
          %v6229 = vpop.f32.mrf.mxu0
          %v6230 = vadd.f32 %v6217, %v6229
          %v6231 = vpop.f32.mrf.mxu0
          %6232 = vdwg.mxu0
          %v6233 = vmax.f32 %v5918, 0.0
          %v6234 = vmax.f32 %v6022, 0.0
          %v6235 = vmax.f32 %v6126, 0.0
          %v6236 = vmax.f32 %v6230, 0.0
          %v6237 = vpack.c.bf16 %v6233, %v6233
          %v6238 = vpack.c.bf16 %v6234, %v6234
          %v6239 = vpack.c.bf16 %v6235, %v6235
          %v6240 = vpack.c.bf16 %v6236, %v6236
          %v6241 = vld [vmem:[#allocation15] sm:$0xff]
          %v6242 = vld [vmem:[#allocation15 + $0x8] sm:$0xff]
          %v6243 = vld [vmem:[#allocation15 + $0x10] sm:$0xff]
          %v6244 = vld [vmem:[#allocation15 + $0x18] sm:$0xff]
          %v6245 = vld [vmem:[#allocation15 + $0x20] sm:$0xff]
          %v6246 = vld [vmem:[#allocation15 + $0x28] sm:$0xff]
          %v6247 = vld [vmem:[#allocation15 + $0x30] sm:$0xff]
          %v6248 = vld [vmem:[#allocation15 + $0x38] sm:$0xff]
          %v6249 = vld [vmem:[#allocation15 + $0x40] sm:$0xff]
          %v6250 = vld [vmem:[#allocation15 + $0x48] sm:$0xff]
          %v6251 = vld [vmem:[#allocation15 + $0x50] sm:$0xff]
          %v6252 = vld [vmem:[#allocation15 + $0x58] sm:$0xff]
          %v6253 = vld [vmem:[#allocation15 + $0x60] sm:$0xff]
          %v6254 = vld [vmem:[#allocation15 + $0x68] sm:$0xff]
          %v6255 = vld [vmem:[#allocation15 + $0x70] sm:$0xff]
          %v6256 = vld [vmem:[#allocation15 + $0x78] sm:$0xff]
          %v6257 = vld [vmem:[#allocation15 + $0x80] sm:$0xff]
          %v6258 = vld [vmem:[#allocation15 + $0x88] sm:$0xff]
          %v6259 = vld [vmem:[#allocation15 + $0x90] sm:$0xff]
          %v6260 = vld [vmem:[#allocation15 + $0x98] sm:$0xff]
          %v6261 = vld [vmem:[#allocation15 + $0xa0] sm:$0xff]
          %v6262 = vld [vmem:[#allocation15 + $0xa8] sm:$0xff]
          %v6263 = vld [vmem:[#allocation15 + $0xb0] sm:$0xff]
          %v6264 = vld [vmem:[#allocation15 + $0xb8] sm:$0xff]
          %v6265 = vld [vmem:[#allocation15 + $0xc0] sm:$0xff]
          %v6266 = vld [vmem:[#allocation15 + $0xc8] sm:$0xff]
          %v6267 = vld [vmem:[#allocation15 + $0xd0] sm:$0xff]
          %v6268 = vld [vmem:[#allocation15 + $0xd8] sm:$0xff]
          %v6269 = vld [vmem:[#allocation15 + $0xe0] sm:$0xff]
          %v6270 = vld [vmem:[#allocation15 + $0xe8] sm:$0xff]
          %v6271 = vld [vmem:[#allocation15 + $0xf0] sm:$0xff]
          %v6272 = vld [vmem:[#allocation15 + $0xf8] sm:$0xff]
          %v6273 = vld [vmem:[#allocation15 + $0x100] sm:$0xff]
          %v6274 = vld [vmem:[#allocation15 + $0x108] sm:$0xff]
          %v6275 = vld [vmem:[#allocation15 + $0x110] sm:$0xff]
          %v6276 = vld [vmem:[#allocation15 + $0x118] sm:$0xff]
          %v6277 = vld [vmem:[#allocation15 + $0x120] sm:$0xff]
          %v6278 = vld [vmem:[#allocation15 + $0x128] sm:$0xff]
          %v6279 = vld [vmem:[#allocation15 + $0x130] sm:$0xff]
          %v6280 = vld [vmem:[#allocation15 + $0x138] sm:$0xff]
          %v6281 = vld [vmem:[#allocation15 + $0x140] sm:$0xff]
          %v6282 = vld [vmem:[#allocation15 + $0x148] sm:$0xff]
          %v6283 = vld [vmem:[#allocation15 + $0x150] sm:$0xff]
          %v6284 = vld [vmem:[#allocation15 + $0x158] sm:$0xff]
          %v6285 = vld [vmem:[#allocation15 + $0x160] sm:$0xff]
          %v6286 = vld [vmem:[#allocation15 + $0x168] sm:$0xff]
          %v6287 = vld [vmem:[#allocation15 + $0x170] sm:$0xff]
          %v6288 = vld [vmem:[#allocation15 + $0x178] sm:$0xff]
          %v6289 = vld [vmem:[#allocation15 + $0x180] sm:$0xff]
          %v6290 = vld [vmem:[#allocation15 + $0x188] sm:$0xff]
          %v6291 = vld [vmem:[#allocation15 + $0x190] sm:$0xff]
          %v6292 = vld [vmem:[#allocation15 + $0x198] sm:$0xff]
          %v6293 = vld [vmem:[#allocation15 + $0x1a0] sm:$0xff]
          %v6294 = vld [vmem:[#allocation15 + $0x1a8] sm:$0xff]
          %v6295 = vld [vmem:[#allocation15 + $0x1b0] sm:$0xff]
          %v6296 = vld [vmem:[#allocation15 + $0x1b8] sm:$0xff]
          %v6297 = vld [vmem:[#allocation15 + $0x1c0] sm:$0xff]
          %v6298 = vld [vmem:[#allocation15 + $0x1c8] sm:$0xff]
          %v6299 = vld [vmem:[#allocation15 + $0x1d0] sm:$0xff]
          %v6300 = vld [vmem:[#allocation15 + $0x1d8] sm:$0xff]
          %v6301 = vld [vmem:[#allocation15 + $0x1e0] sm:$0xff]
          %v6302 = vld [vmem:[#allocation15 + $0x1e8] sm:$0xff]
          %v6303 = vld [vmem:[#allocation15 + $0x1f0] sm:$0xff]
          %v6304 = vld [vmem:[#allocation15 + $0x1f8] sm:$0xff]
          %v6305 = vld [vmem:[#allocation16] sm:$0x3]
          %v6307 = vperm.slane %v6305, 0
          %v6308 = vperm.slane %v6305, 1
          %v6375 = vunpack.c.l.b16 %v6241
          %v6376 = vunpack.c.h.b16 %v6241
          %v6377 = vunpack.c.l.b16 %v6242
          %v6378 = vunpack.c.h.b16 %v6242
          %v6379 = vunpack.c.l.b16 %v6243
          %v6380 = vunpack.c.h.b16 %v6243
          %v6381 = vunpack.c.l.b16 %v6244
          %v6382 = vunpack.c.h.b16 %v6244
          %v6383 = vunpack.c.l.b16 %v6245
          %v6384 = vunpack.c.h.b16 %v6245
          %v6385 = vunpack.c.l.b16 %v6246
          %v6386 = vunpack.c.h.b16 %v6246
          %v6387 = vunpack.c.l.b16 %v6247
          %v6388 = vunpack.c.h.b16 %v6247
          %v6389 = vunpack.c.l.b16 %v6248
          %v6390 = vunpack.c.h.b16 %v6248
          %v6391 = vunpack.c.l.b16 %v6249
          %v6392 = vunpack.c.h.b16 %v6249
          %v6393 = vunpack.c.l.b16 %v6250
          %v6394 = vunpack.c.h.b16 %v6250
          %v6395 = vunpack.c.l.b16 %v6251
          %v6396 = vunpack.c.h.b16 %v6251
          %v6397 = vunpack.c.l.b16 %v6252
          %v6398 = vunpack.c.h.b16 %v6252
          %v6399 = vunpack.c.l.b16 %v6253
          %v6400 = vunpack.c.h.b16 %v6253
          %v6401 = vunpack.c.l.b16 %v6254
          %v6402 = vunpack.c.h.b16 %v6254
          %v6403 = vunpack.c.l.b16 %v6255
          %v6404 = vunpack.c.h.b16 %v6255
          %v6405 = vunpack.c.l.b16 %v6256
          %v6406 = vunpack.c.h.b16 %v6256
          %v6407 = vunpack.c.l.b16 %v6257
          %v6408 = vunpack.c.h.b16 %v6257
          %v6409 = vunpack.c.l.b16 %v6258
          %v6410 = vunpack.c.h.b16 %v6258
          %v6411 = vunpack.c.l.b16 %v6259
          %v6412 = vunpack.c.h.b16 %v6259
          %v6413 = vunpack.c.l.b16 %v6260
          %v6414 = vunpack.c.h.b16 %v6260
          %v6415 = vunpack.c.l.b16 %v6261
          %v6416 = vunpack.c.h.b16 %v6261
          %v6417 = vunpack.c.l.b16 %v6262
          %v6418 = vunpack.c.h.b16 %v6262
          %v6419 = vunpack.c.l.b16 %v6263
          %v6420 = vunpack.c.h.b16 %v6263
          %v6421 = vunpack.c.l.b16 %v6264
          %v6422 = vunpack.c.h.b16 %v6264
          %v6423 = vunpack.c.l.b16 %v6265
          %v6424 = vunpack.c.h.b16 %v6265
          %v6425 = vunpack.c.l.b16 %v6266
          %v6426 = vunpack.c.h.b16 %v6266
          %v6427 = vunpack.c.l.b16 %v6267
          %v6428 = vunpack.c.h.b16 %v6267
          %v6429 = vunpack.c.l.b16 %v6268
          %v6430 = vunpack.c.h.b16 %v6268
          %v6431 = vunpack.c.l.b16 %v6269
          %v6432 = vunpack.c.h.b16 %v6269
          %v6433 = vunpack.c.l.b16 %v6270
          %v6434 = vunpack.c.h.b16 %v6270
          %v6435 = vunpack.c.l.b16 %v6271
          %v6436 = vunpack.c.h.b16 %v6271
          %v6437 = vunpack.c.l.b16 %v6272
          %v6438 = vunpack.c.h.b16 %v6272
          %v6439 = vunpack.c.l.b16 %v6273
          %v6440 = vunpack.c.h.b16 %v6273
          %v6441 = vunpack.c.l.b16 %v6274
          %v6442 = vunpack.c.h.b16 %v6274
          %v6443 = vunpack.c.l.b16 %v6275
          %v6444 = vunpack.c.h.b16 %v6275
          %v6445 = vunpack.c.l.b16 %v6276
          %v6446 = vunpack.c.h.b16 %v6276
          %v6447 = vunpack.c.l.b16 %v6277
          %v6448 = vunpack.c.h.b16 %v6277
          %v6449 = vunpack.c.l.b16 %v6278
          %v6450 = vunpack.c.h.b16 %v6278
          %v6451 = vunpack.c.l.b16 %v6279
          %v6452 = vunpack.c.h.b16 %v6279
          %v6453 = vunpack.c.l.b16 %v6280
          %v6454 = vunpack.c.h.b16 %v6280
          %v6455 = vunpack.c.l.b16 %v6281
          %v6456 = vunpack.c.h.b16 %v6281
          %v6457 = vunpack.c.l.b16 %v6282
          %v6458 = vunpack.c.h.b16 %v6282
          %v6459 = vunpack.c.l.b16 %v6283
          %v6460 = vunpack.c.h.b16 %v6283
          %v6461 = vunpack.c.l.b16 %v6284
          %v6462 = vunpack.c.h.b16 %v6284
          %v6463 = vunpack.c.l.b16 %v6285
          %v6464 = vunpack.c.h.b16 %v6285
          %v6465 = vunpack.c.l.b16 %v6286
          %v6466 = vunpack.c.h.b16 %v6286
          %v6467 = vunpack.c.l.b16 %v6287
          %v6468 = vunpack.c.h.b16 %v6287
          %v6469 = vunpack.c.l.b16 %v6288
          %v6470 = vunpack.c.h.b16 %v6288
          %v6471 = vunpack.c.l.b16 %v6289
          %v6472 = vunpack.c.h.b16 %v6289
          %v6473 = vunpack.c.l.b16 %v6290
          %v6474 = vunpack.c.h.b16 %v6290
          %v6475 = vunpack.c.l.b16 %v6291
          %v6476 = vunpack.c.h.b16 %v6291
          %v6477 = vunpack.c.l.b16 %v6292
          %v6478 = vunpack.c.h.b16 %v6292
          %v6479 = vunpack.c.l.b16 %v6293
          %v6480 = vunpack.c.h.b16 %v6293
          %v6481 = vunpack.c.l.b16 %v6294
          %v6482 = vunpack.c.h.b16 %v6294
          %v6483 = vunpack.c.l.b16 %v6295
          %v6484 = vunpack.c.h.b16 %v6295
          %v6485 = vunpack.c.l.b16 %v6296
          %v6486 = vunpack.c.h.b16 %v6296
          %v6487 = vunpack.c.l.b16 %v6297
          %v6488 = vunpack.c.h.b16 %v6297
          %v6489 = vunpack.c.l.b16 %v6298
          %v6490 = vunpack.c.h.b16 %v6298
          %v6491 = vunpack.c.l.b16 %v6299
          %v6492 = vunpack.c.h.b16 %v6299
          %v6493 = vunpack.c.l.b16 %v6300
          %v6494 = vunpack.c.h.b16 %v6300
          %v6495 = vunpack.c.l.b16 %v6301
          %v6496 = vunpack.c.h.b16 %v6301
          %v6497 = vunpack.c.l.b16 %v6302
          %v6498 = vunpack.c.h.b16 %v6302
          %v6499 = vunpack.c.l.b16 %v6303
          %v6500 = vunpack.c.h.b16 %v6303
          %v6501 = vunpack.c.l.b16 %v6304
          %v6502 = vunpack.c.h.b16 %v6304
          %v6503 = vpack.c.b16 %v6377, %v6375
          %v6504 = vpack.c.b16 %v6378, %v6376
          %v6505 = vpack.c.b16 %v6381, %v6379
          %v6506 = vpack.c.b16 %v6382, %v6380
          %v6507 = vpack.c.b16 %v6385, %v6383
          %v6508 = vpack.c.b16 %v6386, %v6384
          %v6509 = vpack.c.b16 %v6389, %v6387
          %v6510 = vpack.c.b16 %v6390, %v6388
          %v6511 = vpack.c.b16 %v6393, %v6391
          %v6512 = vpack.c.b16 %v6394, %v6392
          %v6513 = vpack.c.b16 %v6397, %v6395
          %v6514 = vpack.c.b16 %v6398, %v6396
          %v6515 = vpack.c.b16 %v6401, %v6399
          %v6516 = vpack.c.b16 %v6402, %v6400
          %v6517 = vpack.c.b16 %v6405, %v6403
          %v6518 = vpack.c.b16 %v6406, %v6404
          %v6519 = vpack.c.b16 %v6409, %v6407
          %v6520 = vpack.c.b16 %v6410, %v6408
          %v6521 = vpack.c.b16 %v6413, %v6411
          %v6522 = vpack.c.b16 %v6414, %v6412
          %v6523 = vpack.c.b16 %v6417, %v6415
          %v6524 = vpack.c.b16 %v6418, %v6416
          %v6525 = vpack.c.b16 %v6421, %v6419
          %v6526 = vpack.c.b16 %v6422, %v6420
          %v6527 = vpack.c.b16 %v6425, %v6423
          %v6528 = vpack.c.b16 %v6426, %v6424
          %v6529 = vpack.c.b16 %v6429, %v6427
          %v6530 = vpack.c.b16 %v6430, %v6428
          %v6531 = vpack.c.b16 %v6433, %v6431
          %v6532 = vpack.c.b16 %v6434, %v6432
          %v6533 = vpack.c.b16 %v6437, %v6435
          %v6534 = vpack.c.b16 %v6438, %v6436
          %v6535 = vpack.c.b16 %v6441, %v6439
          %v6536 = vpack.c.b16 %v6442, %v6440
          %v6537 = vpack.c.b16 %v6445, %v6443
          %v6538 = vpack.c.b16 %v6446, %v6444
          %v6539 = vpack.c.b16 %v6449, %v6447
          %v6540 = vpack.c.b16 %v6450, %v6448
          %v6541 = vpack.c.b16 %v6453, %v6451
          %v6542 = vpack.c.b16 %v6454, %v6452
          %v6543 = vpack.c.b16 %v6457, %v6455
          %v6544 = vpack.c.b16 %v6458, %v6456
          %v6545 = vpack.c.b16 %v6461, %v6459
          %v6546 = vpack.c.b16 %v6462, %v6460
          %v6547 = vpack.c.b16 %v6465, %v6463
          %v6548 = vpack.c.b16 %v6466, %v6464
          %v6549 = vpack.c.b16 %v6469, %v6467
          %v6550 = vpack.c.b16 %v6470, %v6468
          %v6551 = vpack.c.b16 %v6473, %v6471
          %v6552 = vpack.c.b16 %v6474, %v6472
          %v6553 = vpack.c.b16 %v6477, %v6475
          %v6554 = vpack.c.b16 %v6478, %v6476
          %v6555 = vpack.c.b16 %v6481, %v6479
          %v6556 = vpack.c.b16 %v6482, %v6480
          %v6557 = vpack.c.b16 %v6485, %v6483
          %v6558 = vpack.c.b16 %v6486, %v6484
          %v6559 = vpack.c.b16 %v6489, %v6487
          %v6560 = vpack.c.b16 %v6490, %v6488
          %v6561 = vpack.c.b16 %v6493, %v6491
          %v6562 = vpack.c.b16 %v6494, %v6492
          %v6563 = vpack.c.b16 %v6497, %v6495
          %v6564 = vpack.c.b16 %v6498, %v6496
          %v6565 = vpack.c.b16 %v6501, %v6499
          %v6566 = vpack.c.b16 %v6502, %v6500
          %6631 = vmatpush.bf16.msra.mxu0 %v6517
          %6632 = vmatpush.bf16.msra.mxu0 %v6515
          %6633 = vmatpush.bf16.msra.mxu0 %v6513
          %6634 = vmatpush.bf16.msra.mxu0 %v6511
          %6635 = vmatpush.bf16.msra.mxu0 %v6509
          %6636 = vmatpush.bf16.msra.mxu0 %v6507
          %6637 = vmatpush.bf16.msra.mxu0 %v6505
          %6638 = vmatpush.bf16.msra.mxu0 %v6503
          %6639 = vmatmul.bf16.gmra.mxu0 %v6237
          %v6640 = vpop.f32.mrf.mxu0
          %v6641 = vadd.f32 %v6307, %v6640
          %v6642 = vpop.f32.mrf.mxu0
          %6643 = vdwg.mxu0
          %6644 = vmatpush.bf16.msra.mxu0 %v6533
          %6645 = vmatpush.bf16.msra.mxu0 %v6531
          %6646 = vmatpush.bf16.msra.mxu0 %v6529
          %6647 = vmatpush.bf16.msra.mxu0 %v6527
          %6648 = vmatpush.bf16.msra.mxu0 %v6525
          %6649 = vmatpush.bf16.msra.mxu0 %v6523
          %6650 = vmatpush.bf16.msra.mxu0 %v6521
          %6651 = vmatpush.bf16.msra.mxu0 %v6519
          %6652 = vmatmul.bf16.gmra.mxu0 %v6238
          %v6653 = vpop.f32.mrf.mxu0
          %v6654 = vadd.f32 %v6641, %v6653
          %v6655 = vpop.f32.mrf.mxu0
          %6656 = vdwg.mxu0
          %6657 = vmatpush.bf16.msra.mxu0 %v6549
          %6658 = vmatpush.bf16.msra.mxu0 %v6547
          %6659 = vmatpush.bf16.msra.mxu0 %v6545
          %6660 = vmatpush.bf16.msra.mxu0 %v6543
          %6661 = vmatpush.bf16.msra.mxu0 %v6541
          %6662 = vmatpush.bf16.msra.mxu0 %v6539
          %6663 = vmatpush.bf16.msra.mxu0 %v6537
          %6664 = vmatpush.bf16.msra.mxu0 %v6535
          %6665 = vmatmul.bf16.gmra.mxu0 %v6239
          %v6666 = vpop.f32.mrf.mxu0
          %v6667 = vadd.f32 %v6654, %v6666
          %v6668 = vpop.f32.mrf.mxu0
          %6669 = vdwg.mxu0
          %6670 = vmatpush.bf16.msra.mxu0 %v6565
          %6671 = vmatpush.bf16.msra.mxu0 %v6563
          %6672 = vmatpush.bf16.msra.mxu0 %v6561
          %6673 = vmatpush.bf16.msra.mxu0 %v6559
          %6674 = vmatpush.bf16.msra.mxu0 %v6557
          %6675 = vmatpush.bf16.msra.mxu0 %v6555
          %6676 = vmatpush.bf16.msra.mxu0 %v6553
          %6677 = vmatpush.bf16.msra.mxu0 %v6551
          %6678 = vmatmul.bf16.gmra.mxu0 %v6240
          %v6679 = vpop.f32.mrf.mxu0
          %v6680 = vadd.f32 %v6667, %v6679
          %v6681 = vpop.f32.mrf.mxu0
          %6682 = vdwg.mxu0
          %6683 = vmatpush.bf16.msra.mxu0 %v6518
          %6684 = vmatpush.bf16.msra.mxu0 %v6516
          %6685 = vmatpush.bf16.msra.mxu0 %v6514
          %6686 = vmatpush.bf16.msra.mxu0 %v6512
          %6687 = vmatpush.bf16.msra.mxu0 %v6510
          %6688 = vmatpush.bf16.msra.mxu0 %v6508
          %6689 = vmatpush.bf16.msra.mxu0 %v6506
          %6690 = vmatpush.bf16.msra.mxu0 %v6504
          %6691 = vmatmul.bf16.gmra.mxu0 %v6237
          %v6692 = vpop.f32.mrf.mxu0
          %v6693 = vadd.f32 %v6308, %v6692
          %v6694 = vpop.f32.mrf.mxu0
          %6695 = vdwg.mxu0
          %6696 = vmatpush.bf16.msra.mxu0 %v6534
          %6697 = vmatpush.bf16.msra.mxu0 %v6532
          %6698 = vmatpush.bf16.msra.mxu0 %v6530
          %6699 = vmatpush.bf16.msra.mxu0 %v6528
          %6700 = vmatpush.bf16.msra.mxu0 %v6526
          %6701 = vmatpush.bf16.msra.mxu0 %v6524
          %6702 = vmatpush.bf16.msra.mxu0 %v6522
          %6703 = vmatpush.bf16.msra.mxu0 %v6520
          %6704 = vmatmul.bf16.gmra.mxu0 %v6238
          %v6705 = vpop.f32.mrf.mxu0
          %v6706 = vadd.f32 %v6693, %v6705
          %v6707 = vpop.f32.mrf.mxu0
          %6708 = vdwg.mxu0
          %6709 = vmatpush.bf16.msra.mxu0 %v6550
          %6710 = vmatpush.bf16.msra.mxu0 %v6548
          %6711 = vmatpush.bf16.msra.mxu0 %v6546
          %6712 = vmatpush.bf16.msra.mxu0 %v6544
          %6713 = vmatpush.bf16.msra.mxu0 %v6542
          %6714 = vmatpush.bf16.msra.mxu0 %v6540
          %6715 = vmatpush.bf16.msra.mxu0 %v6538
          %6716 = vmatpush.bf16.msra.mxu0 %v6536
          %6717 = vmatmul.bf16.gmra.mxu0 %v6239
          %v6718 = vpop.f32.mrf.mxu0
          %v6719 = vadd.f32 %v6706, %v6718
          %v6720 = vpop.f32.mrf.mxu0
          %6721 = vdwg.mxu0
          %6722 = vmatpush.bf16.msra.mxu0 %v6566
          %6723 = vmatpush.bf16.msra.mxu0 %v6564
          %6724 = vmatpush.bf16.msra.mxu0 %v6562
          %6725 = vmatpush.bf16.msra.mxu0 %v6560
          %6726 = vmatpush.bf16.msra.mxu0 %v6558
          %6727 = vmatpush.bf16.msra.mxu0 %v6556
          %6728 = vmatpush.bf16.msra.mxu0 %v6554
          %6729 = vmatpush.bf16.msra.mxu0 %v6552
          %6730 = vmatmul.bf16.gmra.mxu0 %v6240
          %v6731 = vpop.f32.mrf.mxu0
          %v6732 = vadd.f32 %v6719, %v6731
          %v6733 = vpop.f32.mrf.mxu0
          %6734 = vdwg.mxu0
          %v6735 = vmax.f32 %v6680, 0.0
          %v6736 = vmax.f32 %v6732, 0.0
          %v6737 = vpack.c.bf16 %v6735, %v6735
          %v6738 = vpack.c.bf16 %v6736, %v6736
          %v6739 = vld [vmem:[#allocation18] sm:$0xf]
          %v6740 = vld [vmem:[#allocation18 + $0x4] sm:$0xf]
          %v6741 = vld [vmem:[#allocation18 + $0x8] sm:$0xf]
          %v6742 = vld [vmem:[#allocation18 + $0xc] sm:$0xf]
          %v6743 = vld [vmem:[#allocation18 + $0x10] sm:$0xf]
          %v6744 = vld [vmem:[#allocation18 + $0x14] sm:$0xf]
          %v6745 = vld [vmem:[#allocation18 + $0x18] sm:$0xf]
          %v6746 = vld [vmem:[#allocation18 + $0x1c] sm:$0xf]
          %v6747 = vld [vmem:[#allocation18 + $0x20] sm:$0xf]
          %v6748 = vld [vmem:[#allocation18 + $0x24] sm:$0xf]
          %v6749 = vld [vmem:[#allocation18 + $0x28] sm:$0xf]
          %v6750 = vld [vmem:[#allocation18 + $0x2c] sm:$0xf]
          %v6751 = vld [vmem:[#allocation18 + $0x30] sm:$0xf]
          %v6752 = vld [vmem:[#allocation18 + $0x34] sm:$0xf]
          %v6753 = vld [vmem:[#allocation18 + $0x38] sm:$0xf]
          %v6754 = vld [vmem:[#allocation18 + $0x3c] sm:$0xf]
          %v6755 = vld [vmem:[#allocation18 + $0x40] sm:$0xf]
          %v6756 = vld [vmem:[#allocation18 + $0x44] sm:$0xf]
          %v6757 = vld [vmem:[#allocation18 + $0x48] sm:$0xf]
          %v6758 = vld [vmem:[#allocation18 + $0x4c] sm:$0xf]
          %v6759 = vld [vmem:[#allocation18 + $0x50] sm:$0xf]
          %v6760 = vld [vmem:[#allocation18 + $0x54] sm:$0xf]
          %v6761 = vld [vmem:[#allocation18 + $0x58] sm:$0xf]
          %v6762 = vld [vmem:[#allocation18 + $0x5c] sm:$0xf]
          %v6763 = vld [vmem:[#allocation18 + $0x60] sm:$0xf]
          %v6764 = vld [vmem:[#allocation18 + $0x64] sm:$0xf]
          %v6765 = vld [vmem:[#allocation18 + $0x68] sm:$0xf]
          %v6766 = vld [vmem:[#allocation18 + $0x6c] sm:$0xf]
          %v6767 = vld [vmem:[#allocation18 + $0x70] sm:$0xf]
          %v6768 = vld [vmem:[#allocation18 + $0x74] sm:$0xf]
          %v6769 = vld [vmem:[#allocation18 + $0x78] sm:$0xf]
          %v6770 = vld [vmem:[#allocation18 + $0x7c] sm:$0xf]
          %v6771 = vld [vmem:[#allocation19] sm:$0x1]
          %v6773 = vperm.slane %v6771, 0
          %v6807 = vunpack.c.l.b16 %v6739
          %v6808 = vunpack.c.l.b16 %v6740
          %v6809 = vunpack.c.l.b16 %v6741
          %v6810 = vunpack.c.l.b16 %v6742
          %v6811 = vunpack.c.l.b16 %v6743
          %v6812 = vunpack.c.l.b16 %v6744
          %v6813 = vunpack.c.l.b16 %v6745
          %v6814 = vunpack.c.l.b16 %v6746
          %v6815 = vunpack.c.l.b16 %v6747
          %v6816 = vunpack.c.l.b16 %v6748
          %v6817 = vunpack.c.l.b16 %v6749
          %v6818 = vunpack.c.l.b16 %v6750
          %v6819 = vunpack.c.l.b16 %v6751
          %v6820 = vunpack.c.l.b16 %v6752
          %v6821 = vunpack.c.l.b16 %v6753
          %v6822 = vunpack.c.l.b16 %v6754
          %v6823 = vunpack.c.l.b16 %v6755
          %v6824 = vunpack.c.l.b16 %v6756
          %v6825 = vunpack.c.l.b16 %v6757
          %v6826 = vunpack.c.l.b16 %v6758
          %v6827 = vunpack.c.l.b16 %v6759
          %v6828 = vunpack.c.l.b16 %v6760
          %v6829 = vunpack.c.l.b16 %v6761
          %v6830 = vunpack.c.l.b16 %v6762
          %v6831 = vunpack.c.l.b16 %v6763
          %v6832 = vunpack.c.l.b16 %v6764
          %v6833 = vunpack.c.l.b16 %v6765
          %v6834 = vunpack.c.l.b16 %v6766
          %v6835 = vunpack.c.l.b16 %v6767
          %v6836 = vunpack.c.l.b16 %v6768
          %v6837 = vunpack.c.l.b16 %v6769
          %v6838 = vunpack.c.l.b16 %v6770
          %v6839 = vpack.c.b16 %v6808, %v6807
          %v6840 = vpack.c.b16 %v6810, %v6809
          %v6841 = vpack.c.b16 %v6812, %v6811
          %v6842 = vpack.c.b16 %v6814, %v6813
          %v6843 = vpack.c.b16 %v6816, %v6815
          %v6844 = vpack.c.b16 %v6818, %v6817
          %v6845 = vpack.c.b16 %v6820, %v6819
          %v6846 = vpack.c.b16 %v6822, %v6821
          %v6847 = vpack.c.b16 %v6824, %v6823
          %v6848 = vpack.c.b16 %v6826, %v6825
          %v6849 = vpack.c.b16 %v6828, %v6827
          %v6850 = vpack.c.b16 %v6830, %v6829
          %v6851 = vpack.c.b16 %v6832, %v6831
          %v6852 = vpack.c.b16 %v6834, %v6833
          %v6853 = vpack.c.b16 %v6836, %v6835
          %v6854 = vpack.c.b16 %v6838, %v6837
          %6871 = vmatpush.bf16.msra.mxu0 %v6846
          %6872 = vmatpush.bf16.msra.mxu0 %v6845
          %6873 = vmatpush.bf16.msra.mxu0 %v6844
          %6874 = vmatpush.bf16.msra.mxu0 %v6843
          %6875 = vmatpush.bf16.msra.mxu0 %v6842
          %6876 = vmatpush.bf16.msra.mxu0 %v6841
          %6877 = vmatpush.bf16.msra.mxu0 %v6840
          %6878 = vmatpush.bf16.msra.mxu0 %v6839
          %6879 = vmatmul.bf16.gmra.mxu0 %v6737
          %v6880 = vpop.f32.mrf.mxu0
          %v6881 = vadd.f32 %v6773, %v6880
          %v6882 = vpop.f32.mrf.mxu0
          %6883 = vdwg.mxu0
          %6884 = vmatpush.bf16.msra.mxu0 %v6854
          %6885 = vmatpush.bf16.msra.mxu0 %v6853
          %6886 = vmatpush.bf16.msra.mxu0 %v6852
          %6887 = vmatpush.bf16.msra.mxu0 %v6851
          %6888 = vmatpush.bf16.msra.mxu0 %v6850
          %6889 = vmatpush.bf16.msra.mxu0 %v6849
          %6890 = vmatpush.bf16.msra.mxu0 %v6848
          %6891 = vmatpush.bf16.msra.mxu0 %v6847
          %6892 = vmatmul.bf16.gmra.mxu0 %v6738
          %v6893 = vpop.f32.mrf.mxu0
          %v6894 = vadd.f32 %v6881, %v6893
          %v6895 = vpop.f32.mrf.mxu0
          %6896 = vdwg.mxu0
          %v6897 = vmax.f32 %v6894, 0.0
          %6898 = vst [vmem:[#allocation33] sm:$0x3] %v6897
          %v6899 = vpack.c.bf16 %v6897, %v6897
          %v6900 = vld [vmem:[#allocation21] sm:$0xff]
          %v6901 = vld [vmem:[#allocation21 + $0x8] sm:$0xff]
          %v6902 = vld [vmem:[#allocation21 + $0x10] sm:$0xff]
          %v6903 = vld [vmem:[#allocation21 + $0x18] sm:$0xff]
          %v6904 = vld [vmem:[#allocation21 + $0x20] sm:$0xff]
          %v6905 = vld [vmem:[#allocation21 + $0x28] sm:$0xff]
          %v6906 = vld [vmem:[#allocation21 + $0x30] sm:$0xff]
          %v6907 = vld [vmem:[#allocation21 + $0x38] sm:$0xff]
          %v6908 = vld [vmem:[#allocation21 + $0x40] sm:$0xff]
          %v6909 = vld [vmem:[#allocation21 + $0x48] sm:$0xff]
          %v6910 = vld [vmem:[#allocation21 + $0x50] sm:$0xff]
          %v6911 = vld [vmem:[#allocation21 + $0x58] sm:$0xff]
          %v6912 = vld [vmem:[#allocation21 + $0x60] sm:$0xff]
          %v6913 = vld [vmem:[#allocation21 + $0x68] sm:$0xff]
          %v6914 = vld [vmem:[#allocation21 + $0x70] sm:$0xff]
          %v6915 = vld [vmem:[#allocation21 + $0x78] sm:$0xff]
          %v6916 = vld [vmem:[#allocation22] sm:$0x3]
          %v6918 = vperm.slane %v6916, 0
          %v6919 = vperm.slane %v6916, 1
          %v6938 = vunpack.c.l.b16 %v6900
          %v6939 = vunpack.c.h.b16 %v6900
          %v6940 = vunpack.c.l.b16 %v6901
          %v6941 = vunpack.c.h.b16 %v6901
          %v6942 = vunpack.c.l.b16 %v6902
          %v6943 = vunpack.c.h.b16 %v6902
          %v6944 = vunpack.c.l.b16 %v6903
          %v6945 = vunpack.c.h.b16 %v6903
          %v6946 = vunpack.c.l.b16 %v6904
          %v6947 = vunpack.c.h.b16 %v6904
          %v6948 = vunpack.c.l.b16 %v6905
          %v6949 = vunpack.c.h.b16 %v6905
          %v6950 = vunpack.c.l.b16 %v6906
          %v6951 = vunpack.c.h.b16 %v6906
          %v6952 = vunpack.c.l.b16 %v6907
          %v6953 = vunpack.c.h.b16 %v6907
          %v6954 = vunpack.c.l.b16 %v6908
          %v6955 = vunpack.c.h.b16 %v6908
          %v6956 = vunpack.c.l.b16 %v6909
          %v6957 = vunpack.c.h.b16 %v6909
          %v6958 = vunpack.c.l.b16 %v6910
          %v6959 = vunpack.c.h.b16 %v6910
          %v6960 = vunpack.c.l.b16 %v6911
          %v6961 = vunpack.c.h.b16 %v6911
          %v6962 = vunpack.c.l.b16 %v6912
          %v6963 = vunpack.c.h.b16 %v6912
          %v6964 = vunpack.c.l.b16 %v6913
          %v6965 = vunpack.c.h.b16 %v6913
          %v6966 = vunpack.c.l.b16 %v6914
          %v6967 = vunpack.c.h.b16 %v6914
          %v6968 = vunpack.c.l.b16 %v6915
          %v6969 = vunpack.c.h.b16 %v6915
          %v6970 = vpack.c.b16 %v6940, %v6938
          %v6971 = vpack.c.b16 %v6941, %v6939
          %v6972 = vpack.c.b16 %v6944, %v6942
          %v6973 = vpack.c.b16 %v6945, %v6943
          %v6974 = vpack.c.b16 %v6948, %v6946
          %v6975 = vpack.c.b16 %v6949, %v6947
          %v6976 = vpack.c.b16 %v6952, %v6950
          %v6977 = vpack.c.b16 %v6953, %v6951
          %v6978 = vpack.c.b16 %v6956, %v6954
          %v6979 = vpack.c.b16 %v6957, %v6955
          %v6980 = vpack.c.b16 %v6960, %v6958
          %v6981 = vpack.c.b16 %v6961, %v6959
          %v6982 = vpack.c.b16 %v6964, %v6962
          %v6983 = vpack.c.b16 %v6965, %v6963
          %v6984 = vpack.c.b16 %v6968, %v6966
          %v6985 = vpack.c.b16 %v6969, %v6967
          %7002 = vmatpush.bf16.msra.mxu0 %v6984
          %7003 = vmatpush.bf16.msra.mxu0 %v6982
          %7004 = vmatpush.bf16.msra.mxu0 %v6980
          %7005 = vmatpush.bf16.msra.mxu0 %v6978
          %7006 = vmatpush.bf16.msra.mxu0 %v6976
          %7007 = vmatpush.bf16.msra.mxu0 %v6974
          %7008 = vmatpush.bf16.msra.mxu0 %v6972
          %7009 = vmatpush.bf16.msra.mxu0 %v6970
          %7010 = vmatmul.bf16.gmra.mxu0 %v6899
          %v7011 = vpop.f32.mrf.mxu0
          %v7012 = vadd.f32 %v6918, %v7011
          %v7013 = vpop.f32.mrf.mxu0
          %7014 = vdwg.mxu0
          %7015 = vmatpush.bf16.msra.mxu0 %v6985
          %7016 = vmatpush.bf16.msra.mxu0 %v6983
          %7017 = vmatpush.bf16.msra.mxu0 %v6981
          %7018 = vmatpush.bf16.msra.mxu0 %v6979
          %7019 = vmatpush.bf16.msra.mxu0 %v6977
          %7020 = vmatpush.bf16.msra.mxu0 %v6975
          %7021 = vmatpush.bf16.msra.mxu0 %v6973
          %7022 = vmatpush.bf16.msra.mxu0 %v6971
          %7023 = vmatmul.bf16.gmra.mxu0 %v6899
          %v7024 = vpop.f32.mrf.mxu0
          %v7025 = vadd.f32 %v6919, %v7024
          %v7026 = vpop.f32.mrf.mxu0
          %7027 = vdwg.mxu0
          %v7028 = vmax.f32 %v7012, 0.0
          %v7029 = vmax.f32 %v7025, 0.0
          %v7030 = vpack.c.bf16 %v7028, %v7028
          %v7031 = vpack.c.bf16 %v7029, %v7029
          %v7032 = vld [vmem:[#allocation24] sm:$0xff]
          %v7033 = vld [vmem:[#allocation24 + $0x8] sm:$0xff]
          %v7034 = vld [vmem:[#allocation24 + $0x10] sm:$0xff]
          %v7035 = vld [vmem:[#allocation24 + $0x18] sm:$0xff]
          %v7036 = vld [vmem:[#allocation24 + $0x20] sm:$0xff]
          %v7037 = vld [vmem:[#allocation24 + $0x28] sm:$0xff]
          %v7038 = vld [vmem:[#allocation24 + $0x30] sm:$0xff]
          %v7039 = vld [vmem:[#allocation24 + $0x38] sm:$0xff]
          %v7040 = vld [vmem:[#allocation24 + $0x40] sm:$0xff]
          %v7041 = vld [vmem:[#allocation24 + $0x48] sm:$0xff]
          %v7042 = vld [vmem:[#allocation24 + $0x50] sm:$0xff]
          %v7043 = vld [vmem:[#allocation24 + $0x58] sm:$0xff]
          %v7044 = vld [vmem:[#allocation24 + $0x60] sm:$0xff]
          %v7045 = vld [vmem:[#allocation24 + $0x68] sm:$0xff]
          %v7046 = vld [vmem:[#allocation24 + $0x70] sm:$0xff]
          %v7047 = vld [vmem:[#allocation24 + $0x78] sm:$0xff]
          %v7048 = vld [vmem:[#allocation24 + $0x80] sm:$0xff]
          %v7049 = vld [vmem:[#allocation24 + $0x88] sm:$0xff]
          %v7050 = vld [vmem:[#allocation24 + $0x90] sm:$0xff]
          %v7051 = vld [vmem:[#allocation24 + $0x98] sm:$0xff]
          %v7052 = vld [vmem:[#allocation24 + $0xa0] sm:$0xff]
          %v7053 = vld [vmem:[#allocation24 + $0xa8] sm:$0xff]
          %v7054 = vld [vmem:[#allocation24 + $0xb0] sm:$0xff]
          %v7055 = vld [vmem:[#allocation24 + $0xb8] sm:$0xff]
          %v7056 = vld [vmem:[#allocation24 + $0xc0] sm:$0xff]
          %v7057 = vld [vmem:[#allocation24 + $0xc8] sm:$0xff]
          %v7058 = vld [vmem:[#allocation24 + $0xd0] sm:$0xff]
          %v7059 = vld [vmem:[#allocation24 + $0xd8] sm:$0xff]
          %v7060 = vld [vmem:[#allocation24 + $0xe0] sm:$0xff]
          %v7061 = vld [vmem:[#allocation24 + $0xe8] sm:$0xff]
          %v7062 = vld [vmem:[#allocation24 + $0xf0] sm:$0xff]
          %v7063 = vld [vmem:[#allocation24 + $0xf8] sm:$0xff]
          %v7064 = vld [vmem:[#allocation24 + $0x100] sm:$0xff]
          %v7065 = vld [vmem:[#allocation24 + $0x108] sm:$0xff]
          %v7066 = vld [vmem:[#allocation24 + $0x110] sm:$0xff]
          %v7067 = vld [vmem:[#allocation24 + $0x118] sm:$0xff]
          %v7068 = vld [vmem:[#allocation24 + $0x120] sm:$0xff]
          %v7069 = vld [vmem:[#allocation24 + $0x128] sm:$0xff]
          %v7070 = vld [vmem:[#allocation24 + $0x130] sm:$0xff]
          %v7071 = vld [vmem:[#allocation24 + $0x138] sm:$0xff]
          %v7072 = vld [vmem:[#allocation24 + $0x140] sm:$0xff]
          %v7073 = vld [vmem:[#allocation24 + $0x148] sm:$0xff]
          %v7074 = vld [vmem:[#allocation24 + $0x150] sm:$0xff]
          %v7075 = vld [vmem:[#allocation24 + $0x158] sm:$0xff]
          %v7076 = vld [vmem:[#allocation24 + $0x160] sm:$0xff]
          %v7077 = vld [vmem:[#allocation24 + $0x168] sm:$0xff]
          %v7078 = vld [vmem:[#allocation24 + $0x170] sm:$0xff]
          %v7079 = vld [vmem:[#allocation24 + $0x178] sm:$0xff]
          %v7080 = vld [vmem:[#allocation24 + $0x180] sm:$0xff]
          %v7081 = vld [vmem:[#allocation24 + $0x188] sm:$0xff]
          %v7082 = vld [vmem:[#allocation24 + $0x190] sm:$0xff]
          %v7083 = vld [vmem:[#allocation24 + $0x198] sm:$0xff]
          %v7084 = vld [vmem:[#allocation24 + $0x1a0] sm:$0xff]
          %v7085 = vld [vmem:[#allocation24 + $0x1a8] sm:$0xff]
          %v7086 = vld [vmem:[#allocation24 + $0x1b0] sm:$0xff]
          %v7087 = vld [vmem:[#allocation24 + $0x1b8] sm:$0xff]
          %v7088 = vld [vmem:[#allocation24 + $0x1c0] sm:$0xff]
          %v7089 = vld [vmem:[#allocation24 + $0x1c8] sm:$0xff]
          %v7090 = vld [vmem:[#allocation24 + $0x1d0] sm:$0xff]
          %v7091 = vld [vmem:[#allocation24 + $0x1d8] sm:$0xff]
          %v7092 = vld [vmem:[#allocation24 + $0x1e0] sm:$0xff]
          %v7093 = vld [vmem:[#allocation24 + $0x1e8] sm:$0xff]
          %v7094 = vld [vmem:[#allocation24 + $0x1f0] sm:$0xff]
          %v7095 = vld [vmem:[#allocation24 + $0x1f8] sm:$0xff]
          %v7096 = vld [vmem:[#allocation25] sm:$0xf]
          %v7098 = vperm.slane %v7096, 0
          %v7099 = vperm.slane %v7096, 1
          %v7100 = vperm.slane %v7096, 2
          %v7101 = vperm.slane %v7096, 3
          %v7170 = vunpack.c.l.b16 %v7032
          %v7171 = vunpack.c.h.b16 %v7032
          %v7172 = vunpack.c.l.b16 %v7033
          %v7173 = vunpack.c.h.b16 %v7033
          %v7174 = vunpack.c.l.b16 %v7034
          %v7175 = vunpack.c.h.b16 %v7034
          %v7176 = vunpack.c.l.b16 %v7035
          %v7177 = vunpack.c.h.b16 %v7035
          %v7178 = vunpack.c.l.b16 %v7036
          %v7179 = vunpack.c.h.b16 %v7036
          %v7180 = vunpack.c.l.b16 %v7037
          %v7181 = vunpack.c.h.b16 %v7037
          %v7182 = vunpack.c.l.b16 %v7038
          %v7183 = vunpack.c.h.b16 %v7038
          %v7184 = vunpack.c.l.b16 %v7039
          %v7185 = vunpack.c.h.b16 %v7039
          %v7186 = vunpack.c.l.b16 %v7040
          %v7187 = vunpack.c.h.b16 %v7040
          %v7188 = vunpack.c.l.b16 %v7041
          %v7189 = vunpack.c.h.b16 %v7041
          %v7190 = vunpack.c.l.b16 %v7042
          %v7191 = vunpack.c.h.b16 %v7042
          %v7192 = vunpack.c.l.b16 %v7043
          %v7193 = vunpack.c.h.b16 %v7043
          %v7194 = vunpack.c.l.b16 %v7044
          %v7195 = vunpack.c.h.b16 %v7044
          %v7196 = vunpack.c.l.b16 %v7045
          %v7197 = vunpack.c.h.b16 %v7045
          %v7198 = vunpack.c.l.b16 %v7046
          %v7199 = vunpack.c.h.b16 %v7046
          %v7200 = vunpack.c.l.b16 %v7047
          %v7201 = vunpack.c.h.b16 %v7047
          %v7202 = vunpack.c.l.b16 %v7048
          %v7203 = vunpack.c.h.b16 %v7048
          %v7204 = vunpack.c.l.b16 %v7049
          %v7205 = vunpack.c.h.b16 %v7049
          %v7206 = vunpack.c.l.b16 %v7050
          %v7207 = vunpack.c.h.b16 %v7050
          %v7208 = vunpack.c.l.b16 %v7051
          %v7209 = vunpack.c.h.b16 %v7051
          %v7210 = vunpack.c.l.b16 %v7052
          %v7211 = vunpack.c.h.b16 %v7052
          %v7212 = vunpack.c.l.b16 %v7053
          %v7213 = vunpack.c.h.b16 %v7053
          %v7214 = vunpack.c.l.b16 %v7054
          %v7215 = vunpack.c.h.b16 %v7054
          %v7216 = vunpack.c.l.b16 %v7055
          %v7217 = vunpack.c.h.b16 %v7055
          %v7218 = vunpack.c.l.b16 %v7056
          %v7219 = vunpack.c.h.b16 %v7056
          %v7220 = vunpack.c.l.b16 %v7057
          %v7221 = vunpack.c.h.b16 %v7057
          %v7222 = vunpack.c.l.b16 %v7058
          %v7223 = vunpack.c.h.b16 %v7058
          %v7224 = vunpack.c.l.b16 %v7059
          %v7225 = vunpack.c.h.b16 %v7059
          %v7226 = vunpack.c.l.b16 %v7060
          %v7227 = vunpack.c.h.b16 %v7060
          %v7228 = vunpack.c.l.b16 %v7061
          %v7229 = vunpack.c.h.b16 %v7061
          %v7230 = vunpack.c.l.b16 %v7062
          %v7231 = vunpack.c.h.b16 %v7062
          %v7232 = vunpack.c.l.b16 %v7063
          %v7233 = vunpack.c.h.b16 %v7063
          %v7234 = vunpack.c.l.b16 %v7064
          %v7235 = vunpack.c.h.b16 %v7064
          %v7236 = vunpack.c.l.b16 %v7065
          %v7237 = vunpack.c.h.b16 %v7065
          %v7238 = vunpack.c.l.b16 %v7066
          %v7239 = vunpack.c.h.b16 %v7066
          %v7240 = vunpack.c.l.b16 %v7067
          %v7241 = vunpack.c.h.b16 %v7067
          %v7242 = vunpack.c.l.b16 %v7068
          %v7243 = vunpack.c.h.b16 %v7068
          %v7244 = vunpack.c.l.b16 %v7069
          %v7245 = vunpack.c.h.b16 %v7069
          %v7246 = vunpack.c.l.b16 %v7070
          %v7247 = vunpack.c.h.b16 %v7070
          %v7248 = vunpack.c.l.b16 %v7071
          %v7249 = vunpack.c.h.b16 %v7071
          %v7250 = vunpack.c.l.b16 %v7072
          %v7251 = vunpack.c.h.b16 %v7072
          %v7252 = vunpack.c.l.b16 %v7073
          %v7253 = vunpack.c.h.b16 %v7073
          %v7254 = vunpack.c.l.b16 %v7074
          %v7255 = vunpack.c.h.b16 %v7074
          %v7256 = vunpack.c.l.b16 %v7075
          %v7257 = vunpack.c.h.b16 %v7075
          %v7258 = vunpack.c.l.b16 %v7076
          %v7259 = vunpack.c.h.b16 %v7076
          %v7260 = vunpack.c.l.b16 %v7077
          %v7261 = vunpack.c.h.b16 %v7077
          %v7262 = vunpack.c.l.b16 %v7078
          %v7263 = vunpack.c.h.b16 %v7078
          %v7264 = vunpack.c.l.b16 %v7079
          %v7265 = vunpack.c.h.b16 %v7079
          %v7266 = vunpack.c.l.b16 %v7080
          %v7267 = vunpack.c.h.b16 %v7080
          %v7268 = vunpack.c.l.b16 %v7081
          %v7269 = vunpack.c.h.b16 %v7081
          %v7270 = vunpack.c.l.b16 %v7082
          %v7271 = vunpack.c.h.b16 %v7082
          %v7272 = vunpack.c.l.b16 %v7083
          %v7273 = vunpack.c.h.b16 %v7083
          %v7274 = vunpack.c.l.b16 %v7084
          %v7275 = vunpack.c.h.b16 %v7084
          %v7276 = vunpack.c.l.b16 %v7085
          %v7277 = vunpack.c.h.b16 %v7085
          %v7278 = vunpack.c.l.b16 %v7086
          %v7279 = vunpack.c.h.b16 %v7086
          %v7280 = vunpack.c.l.b16 %v7087
          %v7281 = vunpack.c.h.b16 %v7087
          %v7282 = vunpack.c.l.b16 %v7088
          %v7283 = vunpack.c.h.b16 %v7088
          %v7284 = vunpack.c.l.b16 %v7089
          %v7285 = vunpack.c.h.b16 %v7089
          %v7286 = vunpack.c.l.b16 %v7090
          %v7287 = vunpack.c.h.b16 %v7090
          %v7288 = vunpack.c.l.b16 %v7091
          %v7289 = vunpack.c.h.b16 %v7091
          %v7290 = vunpack.c.l.b16 %v7092
          %v7291 = vunpack.c.h.b16 %v7092
          %v7292 = vunpack.c.l.b16 %v7093
          %v7293 = vunpack.c.h.b16 %v7093
          %v7294 = vunpack.c.l.b16 %v7094
          %v7295 = vunpack.c.h.b16 %v7094
          %v7296 = vunpack.c.l.b16 %v7095
          %v7297 = vunpack.c.h.b16 %v7095
          %v7298 = vpack.c.b16 %v7174, %v7170
          %v7299 = vpack.c.b16 %v7175, %v7171
          %v7300 = vpack.c.b16 %v7176, %v7172
          %v7301 = vpack.c.b16 %v7177, %v7173
          %v7302 = vpack.c.b16 %v7182, %v7178
          %v7303 = vpack.c.b16 %v7183, %v7179
          %v7304 = vpack.c.b16 %v7184, %v7180
          %v7305 = vpack.c.b16 %v7185, %v7181
          %v7306 = vpack.c.b16 %v7190, %v7186
          %v7307 = vpack.c.b16 %v7191, %v7187
          %v7308 = vpack.c.b16 %v7192, %v7188
          %v7309 = vpack.c.b16 %v7193, %v7189
          %v7310 = vpack.c.b16 %v7198, %v7194
          %v7311 = vpack.c.b16 %v7199, %v7195
          %v7312 = vpack.c.b16 %v7200, %v7196
          %v7313 = vpack.c.b16 %v7201, %v7197
          %v7314 = vpack.c.b16 %v7206, %v7202
          %v7315 = vpack.c.b16 %v7207, %v7203
          %v7316 = vpack.c.b16 %v7208, %v7204
          %v7317 = vpack.c.b16 %v7209, %v7205
          %v7318 = vpack.c.b16 %v7214, %v7210
          %v7319 = vpack.c.b16 %v7215, %v7211
          %v7320 = vpack.c.b16 %v7216, %v7212
          %v7321 = vpack.c.b16 %v7217, %v7213
          %v7322 = vpack.c.b16 %v7222, %v7218
          %v7323 = vpack.c.b16 %v7223, %v7219
          %v7324 = vpack.c.b16 %v7224, %v7220
          %v7325 = vpack.c.b16 %v7225, %v7221
          %v7326 = vpack.c.b16 %v7230, %v7226
          %v7327 = vpack.c.b16 %v7231, %v7227
          %v7328 = vpack.c.b16 %v7232, %v7228
          %v7329 = vpack.c.b16 %v7233, %v7229
          %v7330 = vpack.c.b16 %v7238, %v7234
          %v7331 = vpack.c.b16 %v7239, %v7235
          %v7332 = vpack.c.b16 %v7240, %v7236
          %v7333 = vpack.c.b16 %v7241, %v7237
          %v7334 = vpack.c.b16 %v7246, %v7242
          %v7335 = vpack.c.b16 %v7247, %v7243
          %v7336 = vpack.c.b16 %v7248, %v7244
          %v7337 = vpack.c.b16 %v7249, %v7245
          %v7338 = vpack.c.b16 %v7254, %v7250
          %v7339 = vpack.c.b16 %v7255, %v7251
          %v7340 = vpack.c.b16 %v7256, %v7252
          %v7341 = vpack.c.b16 %v7257, %v7253
          %v7342 = vpack.c.b16 %v7262, %v7258
          %v7343 = vpack.c.b16 %v7263, %v7259
          %v7344 = vpack.c.b16 %v7264, %v7260
          %v7345 = vpack.c.b16 %v7265, %v7261
          %v7346 = vpack.c.b16 %v7270, %v7266
          %v7347 = vpack.c.b16 %v7271, %v7267
          %v7348 = vpack.c.b16 %v7272, %v7268
          %v7349 = vpack.c.b16 %v7273, %v7269
          %v7350 = vpack.c.b16 %v7278, %v7274
          %v7351 = vpack.c.b16 %v7279, %v7275
          %v7352 = vpack.c.b16 %v7280, %v7276
          %v7353 = vpack.c.b16 %v7281, %v7277
          %v7354 = vpack.c.b16 %v7286, %v7282
          %v7355 = vpack.c.b16 %v7287, %v7283
          %v7356 = vpack.c.b16 %v7288, %v7284
          %v7357 = vpack.c.b16 %v7289, %v7285
          %v7358 = vpack.c.b16 %v7294, %v7290
          %v7359 = vpack.c.b16 %v7295, %v7291
          %v7360 = vpack.c.b16 %v7296, %v7292
          %v7361 = vpack.c.b16 %v7297, %v7293
          %7426 = vmatpush.bf16.msra.mxu0 %v7326
          %7427 = vmatpush.bf16.msra.mxu0 %v7322
          %7428 = vmatpush.bf16.msra.mxu0 %v7318
          %7429 = vmatpush.bf16.msra.mxu0 %v7314
          %7430 = vmatpush.bf16.msra.mxu0 %v7310
          %7431 = vmatpush.bf16.msra.mxu0 %v7306
          %7432 = vmatpush.bf16.msra.mxu0 %v7302
          %7433 = vmatpush.bf16.msra.mxu0 %v7298
          %7434 = vmatmul.bf16.gmra.mxu0 %v7030
          %v7435 = vpop.f32.mrf.mxu0
          %v7436 = vadd.f32 %v7098, %v7435
          %v7437 = vpop.f32.mrf.mxu0
          %7438 = vdwg.mxu0
          %7439 = vmatpush.bf16.msra.mxu0 %v7358
          %7440 = vmatpush.bf16.msra.mxu0 %v7354
          %7441 = vmatpush.bf16.msra.mxu0 %v7350
          %7442 = vmatpush.bf16.msra.mxu0 %v7346
          %7443 = vmatpush.bf16.msra.mxu0 %v7342
          %7444 = vmatpush.bf16.msra.mxu0 %v7338
          %7445 = vmatpush.bf16.msra.mxu0 %v7334
          %7446 = vmatpush.bf16.msra.mxu0 %v7330
          %7447 = vmatmul.bf16.gmra.mxu0 %v7031
          %v7448 = vpop.f32.mrf.mxu0
          %v7449 = vadd.f32 %v7436, %v7448
          %v7450 = vpop.f32.mrf.mxu0
          %7451 = vdwg.mxu0
          %7452 = vmatpush.bf16.msra.mxu0 %v7327
          %7453 = vmatpush.bf16.msra.mxu0 %v7323
          %7454 = vmatpush.bf16.msra.mxu0 %v7319
          %7455 = vmatpush.bf16.msra.mxu0 %v7315
          %7456 = vmatpush.bf16.msra.mxu0 %v7311
          %7457 = vmatpush.bf16.msra.mxu0 %v7307
          %7458 = vmatpush.bf16.msra.mxu0 %v7303
          %7459 = vmatpush.bf16.msra.mxu0 %v7299
          %7460 = vmatmul.bf16.gmra.mxu0 %v7030
          %v7461 = vpop.f32.mrf.mxu0
          %v7462 = vadd.f32 %v7099, %v7461
          %v7463 = vpop.f32.mrf.mxu0
          %7464 = vdwg.mxu0
          %7465 = vmatpush.bf16.msra.mxu0 %v7359
          %7466 = vmatpush.bf16.msra.mxu0 %v7355
          %7467 = vmatpush.bf16.msra.mxu0 %v7351
          %7468 = vmatpush.bf16.msra.mxu0 %v7347
          %7469 = vmatpush.bf16.msra.mxu0 %v7343
          %7470 = vmatpush.bf16.msra.mxu0 %v7339
          %7471 = vmatpush.bf16.msra.mxu0 %v7335
          %7472 = vmatpush.bf16.msra.mxu0 %v7331
          %7473 = vmatmul.bf16.gmra.mxu0 %v7031
          %v7474 = vpop.f32.mrf.mxu0
          %v7475 = vadd.f32 %v7462, %v7474
          %v7476 = vpop.f32.mrf.mxu0
          %7477 = vdwg.mxu0
          %7478 = vmatpush.bf16.msra.mxu0 %v7328
          %7479 = vmatpush.bf16.msra.mxu0 %v7324
          %7480 = vmatpush.bf16.msra.mxu0 %v7320
          %7481 = vmatpush.bf16.msra.mxu0 %v7316
          %7482 = vmatpush.bf16.msra.mxu0 %v7312
          %7483 = vmatpush.bf16.msra.mxu0 %v7308
          %7484 = vmatpush.bf16.msra.mxu0 %v7304
          %7485 = vmatpush.bf16.msra.mxu0 %v7300
          %7486 = vmatmul.bf16.gmra.mxu0 %v7030
          %v7487 = vpop.f32.mrf.mxu0
          %v7488 = vadd.f32 %v7100, %v7487
          %v7489 = vpop.f32.mrf.mxu0
          %7490 = vdwg.mxu0
          %7491 = vmatpush.bf16.msra.mxu0 %v7360
          %7492 = vmatpush.bf16.msra.mxu0 %v7356
          %7493 = vmatpush.bf16.msra.mxu0 %v7352
          %7494 = vmatpush.bf16.msra.mxu0 %v7348
          %7495 = vmatpush.bf16.msra.mxu0 %v7344
          %7496 = vmatpush.bf16.msra.mxu0 %v7340
          %7497 = vmatpush.bf16.msra.mxu0 %v7336
          %7498 = vmatpush.bf16.msra.mxu0 %v7332
          %7499 = vmatmul.bf16.gmra.mxu0 %v7031
          %v7500 = vpop.f32.mrf.mxu0
          %v7501 = vadd.f32 %v7488, %v7500
          %v7502 = vpop.f32.mrf.mxu0
          %7503 = vdwg.mxu0
          %7504 = vmatpush.bf16.msra.mxu0 %v7329
          %7505 = vmatpush.bf16.msra.mxu0 %v7325
          %7506 = vmatpush.bf16.msra.mxu0 %v7321
          %7507 = vmatpush.bf16.msra.mxu0 %v7317
          %7508 = vmatpush.bf16.msra.mxu0 %v7313
          %7509 = vmatpush.bf16.msra.mxu0 %v7309
          %7510 = vmatpush.bf16.msra.mxu0 %v7305
          %7511 = vmatpush.bf16.msra.mxu0 %v7301
          %7512 = vmatmul.bf16.gmra.mxu0 %v7030
          %v7513 = vpop.f32.mrf.mxu0
          %v7514 = vadd.f32 %v7101, %v7513
          %v7515 = vpop.f32.mrf.mxu0
          %7516 = vdwg.mxu0
          %7517 = vmatpush.bf16.msra.mxu0 %v7361
          %7518 = vmatpush.bf16.msra.mxu0 %v7357
          %7519 = vmatpush.bf16.msra.mxu0 %v7353
          %7520 = vmatpush.bf16.msra.mxu0 %v7349
          %7521 = vmatpush.bf16.msra.mxu0 %v7345
          %7522 = vmatpush.bf16.msra.mxu0 %v7341
          %7523 = vmatpush.bf16.msra.mxu0 %v7337
          %7524 = vmatpush.bf16.msra.mxu0 %v7333
          %7525 = vmatmul.bf16.gmra.mxu0 %v7031
          %v7526 = vpop.f32.mrf.mxu0
          %v7527 = vadd.f32 %v7514, %v7526
          %v7528 = vpop.f32.mrf.mxu0
          %7529 = vdwg.mxu0
          %v7530 = vmax.f32 %v7449, 0.0
          %v7531 = vmax.f32 %v7475, 0.0
          %v7532 = vmax.f32 %v7501, 0.0
          %v7533 = vmax.f32 %v7527, 0.0
          %v7534 = vpack.c.bf16 %v7530, %v7530
          %v7535 = vpack.c.bf16 %v7531, %v7531
          %v7536 = vpack.c.bf16 %v7532, %v7532
          %v7537 = vpack.c.bf16 %v7533, %v7533
          %v7538 = vld [vmem:[#allocation27] sm:$0xff]
          %v7539 = vld [vmem:[#allocation27 + $0x8] sm:$0xff]
          %v7540 = vld [vmem:[#allocation27 + $0x10] sm:$0xff]
          %v7541 = vld [vmem:[#allocation27 + $0x18] sm:$0xff]
          %v7542 = vld [vmem:[#allocation27 + $0x20] sm:$0xff]
          %v7543 = vld [vmem:[#allocation27 + $0x28] sm:$0xff]
          %v7544 = vld [vmem:[#allocation27 + $0x30] sm:$0xff]
          %v7545 = vld [vmem:[#allocation27 + $0x38] sm:$0xff]
          %v7546 = vld [vmem:[#allocation27 + $0x40] sm:$0xff]
          %v7547 = vld [vmem:[#allocation27 + $0x48] sm:$0xff]
          %v7548 = vld [vmem:[#allocation27 + $0x50] sm:$0xff]
          %v7549 = vld [vmem:[#allocation27 + $0x58] sm:$0xff]
          %v7550 = vld [vmem:[#allocation27 + $0x60] sm:$0xff]
          %v7551 = vld [vmem:[#allocation27 + $0x68] sm:$0xff]
          %v7552 = vld [vmem:[#allocation27 + $0x70] sm:$0xff]
          %v7553 = vld [vmem:[#allocation27 + $0x78] sm:$0xff]
          %v7554 = vld [vmem:[#allocation27 + $0x80] sm:$0xff]
          %v7555 = vld [vmem:[#allocation27 + $0x88] sm:$0xff]
          %v7556 = vld [vmem:[#allocation27 + $0x90] sm:$0xff]
          %v7557 = vld [vmem:[#allocation27 + $0x98] sm:$0xff]
          %v7558 = vld [vmem:[#allocation27 + $0xa0] sm:$0xff]
          %v7559 = vld [vmem:[#allocation27 + $0xa8] sm:$0xff]
          %v7560 = vld [vmem:[#allocation27 + $0xb0] sm:$0xff]
          %v7561 = vld [vmem:[#allocation27 + $0xb8] sm:$0xff]
          %v7562 = vld [vmem:[#allocation27 + $0xc0] sm:$0xff]
          %v7563 = vld [vmem:[#allocation27 + $0xc8] sm:$0xff]
          %v7564 = vld [vmem:[#allocation27 + $0xd0] sm:$0xff]
          %v7565 = vld [vmem:[#allocation27 + $0xd8] sm:$0xff]
          %v7566 = vld [vmem:[#allocation27 + $0xe0] sm:$0xff]
          %v7567 = vld [vmem:[#allocation27 + $0xe8] sm:$0xff]
          %v7568 = vld [vmem:[#allocation27 + $0xf0] sm:$0xff]
          %v7569 = vld [vmem:[#allocation27 + $0xf8] sm:$0xff]
          %v7570 = vld [vmem:[#allocation27 + $0x100] sm:$0xff]
          %v7571 = vld [vmem:[#allocation27 + $0x108] sm:$0xff]
          %v7572 = vld [vmem:[#allocation27 + $0x110] sm:$0xff]
          %v7573 = vld [vmem:[#allocation27 + $0x118] sm:$0xff]
          %v7574 = vld [vmem:[#allocation27 + $0x120] sm:$0xff]
          %v7575 = vld [vmem:[#allocation27 + $0x128] sm:$0xff]
          %v7576 = vld [vmem:[#allocation27 + $0x130] sm:$0xff]
          %v7577 = vld [vmem:[#allocation27 + $0x138] sm:$0xff]
          %v7578 = vld [vmem:[#allocation27 + $0x140] sm:$0xff]
          %v7579 = vld [vmem:[#allocation27 + $0x148] sm:$0xff]
          %v7580 = vld [vmem:[#allocation27 + $0x150] sm:$0xff]
          %v7581 = vld [vmem:[#allocation27 + $0x158] sm:$0xff]
          %v7582 = vld [vmem:[#allocation27 + $0x160] sm:$0xff]
          %v7583 = vld [vmem:[#allocation27 + $0x168] sm:$0xff]
          %v7584 = vld [vmem:[#allocation27 + $0x170] sm:$0xff]
          %v7585 = vld [vmem:[#allocation27 + $0x178] sm:$0xff]
          %v7586 = vld [vmem:[#allocation27 + $0x180] sm:$0xff]
          %v7587 = vld [vmem:[#allocation27 + $0x188] sm:$0xff]
          %v7588 = vld [vmem:[#allocation27 + $0x190] sm:$0xff]
          %v7589 = vld [vmem:[#allocation27 + $0x198] sm:$0xff]
          %v7590 = vld [vmem:[#allocation27 + $0x1a0] sm:$0xff]
          %v7591 = vld [vmem:[#allocation27 + $0x1a8] sm:$0xff]
          %v7592 = vld [vmem:[#allocation27 + $0x1b0] sm:$0xff]
          %v7593 = vld [vmem:[#allocation27 + $0x1b8] sm:$0xff]
          %v7594 = vld [vmem:[#allocation27 + $0x1c0] sm:$0xff]
          %v7595 = vld [vmem:[#allocation27 + $0x1c8] sm:$0xff]
          %v7596 = vld [vmem:[#allocation27 + $0x1d0] sm:$0xff]
          %v7597 = vld [vmem:[#allocation27 + $0x1d8] sm:$0xff]
          %v7598 = vld [vmem:[#allocation27 + $0x1e0] sm:$0xff]
          %v7599 = vld [vmem:[#allocation27 + $0x1e8] sm:$0xff]
          %v7600 = vld [vmem:[#allocation27 + $0x1f0] sm:$0xff]
          %v7601 = vld [vmem:[#allocation27 + $0x1f8] sm:$0xff]
          %v7602 = vld [vmem:[#allocation27 + $0x200] sm:$0xff]
          %v7603 = vld [vmem:[#allocation27 + $0x208] sm:$0xff]
          %v7604 = vld [vmem:[#allocation27 + $0x210] sm:$0xff]
          %v7605 = vld [vmem:[#allocation27 + $0x218] sm:$0xff]
          %v7606 = vld [vmem:[#allocation27 + $0x220] sm:$0xff]
          %v7607 = vld [vmem:[#allocation27 + $0x228] sm:$0xff]
          %v7608 = vld [vmem:[#allocation27 + $0x230] sm:$0xff]
          %v7609 = vld [vmem:[#allocation27 + $0x238] sm:$0xff]
          %v7610 = vld [vmem:[#allocation27 + $0x240] sm:$0xff]
          %v7611 = vld [vmem:[#allocation27 + $0x248] sm:$0xff]
          %v7612 = vld [vmem:[#allocation27 + $0x250] sm:$0xff]
          %v7613 = vld [vmem:[#allocation27 + $0x258] sm:$0xff]
          %v7614 = vld [vmem:[#allocation27 + $0x260] sm:$0xff]
          %v7615 = vld [vmem:[#allocation27 + $0x268] sm:$0xff]
          %v7616 = vld [vmem:[#allocation27 + $0x270] sm:$0xff]
          %v7617 = vld [vmem:[#allocation27 + $0x278] sm:$0xff]
          %v7618 = vld [vmem:[#allocation27 + $0x280] sm:$0xff]
          %v7619 = vld [vmem:[#allocation27 + $0x288] sm:$0xff]
          %v7620 = vld [vmem:[#allocation27 + $0x290] sm:$0xff]
          %v7621 = vld [vmem:[#allocation27 + $0x298] sm:$0xff]
          %v7622 = vld [vmem:[#allocation27 + $0x2a0] sm:$0xff]
          %v7623 = vld [vmem:[#allocation27 + $0x2a8] sm:$0xff]
          %v7624 = vld [vmem:[#allocation27 + $0x2b0] sm:$0xff]
          %v7625 = vld [vmem:[#allocation27 + $0x2b8] sm:$0xff]
          %v7626 = vld [vmem:[#allocation27 + $0x2c0] sm:$0xff]
          %v7627 = vld [vmem:[#allocation27 + $0x2c8] sm:$0xff]
          %v7628 = vld [vmem:[#allocation27 + $0x2d0] sm:$0xff]
          %v7629 = vld [vmem:[#allocation27 + $0x2d8] sm:$0xff]
          %v7630 = vld [vmem:[#allocation27 + $0x2e0] sm:$0xff]
          %v7631 = vld [vmem:[#allocation27 + $0x2e8] sm:$0xff]
          %v7632 = vld [vmem:[#allocation27 + $0x2f0] sm:$0xff]
          %v7633 = vld [vmem:[#allocation27 + $0x2f8] sm:$0xff]
          %v7634 = vld [vmem:[#allocation27 + $0x300] sm:$0xff]
          %v7635 = vld [vmem:[#allocation27 + $0x308] sm:$0xff]
          %v7636 = vld [vmem:[#allocation27 + $0x310] sm:$0xff]
          %v7637 = vld [vmem:[#allocation27 + $0x318] sm:$0xff]
          %v7638 = vld [vmem:[#allocation27 + $0x320] sm:$0xff]
          %v7639 = vld [vmem:[#allocation27 + $0x328] sm:$0xff]
          %v7640 = vld [vmem:[#allocation27 + $0x330] sm:$0xff]
          %v7641 = vld [vmem:[#allocation27 + $0x338] sm:$0xff]
          %v7642 = vld [vmem:[#allocation27 + $0x340] sm:$0xff]
          %v7643 = vld [vmem:[#allocation27 + $0x348] sm:$0xff]
          %v7644 = vld [vmem:[#allocation27 + $0x350] sm:$0xff]
          %v7645 = vld [vmem:[#allocation27 + $0x358] sm:$0xff]
          %v7646 = vld [vmem:[#allocation27 + $0x360] sm:$0xff]
          %v7647 = vld [vmem:[#allocation27 + $0x368] sm:$0xff]
          %v7648 = vld [vmem:[#allocation27 + $0x370] sm:$0xff]
          %v7649 = vld [vmem:[#allocation27 + $0x378] sm:$0xff]
          %v7650 = vld [vmem:[#allocation27 + $0x380] sm:$0xff]
          %v7651 = vld [vmem:[#allocation27 + $0x388] sm:$0xff]
          %v7652 = vld [vmem:[#allocation27 + $0x390] sm:$0xff]
          %v7653 = vld [vmem:[#allocation27 + $0x398] sm:$0xff]
          %v7654 = vld [vmem:[#allocation27 + $0x3a0] sm:$0xff]
          %v7655 = vld [vmem:[#allocation27 + $0x3a8] sm:$0xff]
          %v7656 = vld [vmem:[#allocation27 + $0x3b0] sm:$0xff]
          %v7657 = vld [vmem:[#allocation27 + $0x3b8] sm:$0xff]
          %v7658 = vld [vmem:[#allocation27 + $0x3c0] sm:$0xff]
          %v7659 = vld [vmem:[#allocation27 + $0x3c8] sm:$0xff]
          %v7660 = vld [vmem:[#allocation27 + $0x3d0] sm:$0xff]
          %v7661 = vld [vmem:[#allocation27 + $0x3d8] sm:$0xff]
          %v7662 = vld [vmem:[#allocation27 + $0x3e0] sm:$0xff]
          %v7663 = vld [vmem:[#allocation27 + $0x3e8] sm:$0xff]
          %v7664 = vld [vmem:[#allocation27 + $0x3f0] sm:$0xff]
          %v7665 = vld [vmem:[#allocation27 + $0x3f8] sm:$0xff]
          %v7666 = vld [vmem:[#allocation27 + $0x400] sm:$0xff]
          %v7667 = vld [vmem:[#allocation27 + $0x408] sm:$0xff]
          %v7668 = vld [vmem:[#allocation27 + $0x410] sm:$0xff]
          %v7669 = vld [vmem:[#allocation27 + $0x418] sm:$0xff]
          %v7670 = vld [vmem:[#allocation27 + $0x420] sm:$0xff]
          %v7671 = vld [vmem:[#allocation27 + $0x428] sm:$0xff]
          %v7672 = vld [vmem:[#allocation27 + $0x430] sm:$0xff]
          %v7673 = vld [vmem:[#allocation27 + $0x438] sm:$0xff]
          %v7674 = vld [vmem:[#allocation27 + $0x440] sm:$0xff]
          %v7675 = vld [vmem:[#allocation27 + $0x448] sm:$0xff]
          %v7676 = vld [vmem:[#allocation27 + $0x450] sm:$0xff]
          %v7677 = vld [vmem:[#allocation27 + $0x458] sm:$0xff]
          %v7678 = vld [vmem:[#allocation27 + $0x460] sm:$0xff]
          %v7679 = vld [vmem:[#allocation27 + $0x468] sm:$0xff]
          %v7680 = vld [vmem:[#allocation27 + $0x470] sm:$0xff]
          %v7681 = vld [vmem:[#allocation27 + $0x478] sm:$0xff]
          %v7682 = vld [vmem:[#allocation27 + $0x480] sm:$0xff]
          %v7683 = vld [vmem:[#allocation27 + $0x488] sm:$0xff]
          %v7684 = vld [vmem:[#allocation27 + $0x490] sm:$0xff]
          %v7685 = vld [vmem:[#allocation27 + $0x498] sm:$0xff]
          %v7686 = vld [vmem:[#allocation27 + $0x4a0] sm:$0xff]
          %v7687 = vld [vmem:[#allocation27 + $0x4a8] sm:$0xff]
          %v7688 = vld [vmem:[#allocation27 + $0x4b0] sm:$0xff]
          %v7689 = vld [vmem:[#allocation27 + $0x4b8] sm:$0xff]
          %v7690 = vld [vmem:[#allocation27 + $0x4c0] sm:$0xff]
          %v7691 = vld [vmem:[#allocation27 + $0x4c8] sm:$0xff]
          %v7692 = vld [vmem:[#allocation27 + $0x4d0] sm:$0xff]
          %v7693 = vld [vmem:[#allocation27 + $0x4d8] sm:$0xff]
          %v7694 = vld [vmem:[#allocation27 + $0x4e0] sm:$0xff]
          %v7695 = vld [vmem:[#allocation27 + $0x4e8] sm:$0xff]
          %v7696 = vld [vmem:[#allocation27 + $0x4f0] sm:$0xff]
          %v7697 = vld [vmem:[#allocation27 + $0x4f8] sm:$0xff]
          %v7698 = vld [vmem:[#allocation27 + $0x500] sm:$0xff]
          %v7699 = vld [vmem:[#allocation27 + $0x508] sm:$0xff]
          %v7700 = vld [vmem:[#allocation27 + $0x510] sm:$0xff]
          %v7701 = vld [vmem:[#allocation27 + $0x518] sm:$0xff]
          %v7702 = vld [vmem:[#allocation27 + $0x520] sm:$0xff]
          %v7703 = vld [vmem:[#allocation27 + $0x528] sm:$0xff]
          %v7704 = vld [vmem:[#allocation27 + $0x530] sm:$0xff]
          %v7705 = vld [vmem:[#allocation27 + $0x538] sm:$0xff]
          %v7706 = vld [vmem:[#allocation27 + $0x540] sm:$0xff]
          %v7707 = vld [vmem:[#allocation27 + $0x548] sm:$0xff]
          %v7708 = vld [vmem:[#allocation27 + $0x550] sm:$0xff]
          %v7709 = vld [vmem:[#allocation27 + $0x558] sm:$0xff]
          %v7710 = vld [vmem:[#allocation27 + $0x560] sm:$0xff]
          %v7711 = vld [vmem:[#allocation27 + $0x568] sm:$0xff]
          %v7712 = vld [vmem:[#allocation27 + $0x570] sm:$0xff]
          %v7713 = vld [vmem:[#allocation27 + $0x578] sm:$0xff]
          %v7714 = vld [vmem:[#allocation27 + $0x580] sm:$0xff]
          %v7715 = vld [vmem:[#allocation27 + $0x588] sm:$0xff]
          %v7716 = vld [vmem:[#allocation27 + $0x590] sm:$0xff]
          %v7717 = vld [vmem:[#allocation27 + $0x598] sm:$0xff]
          %v7718 = vld [vmem:[#allocation27 + $0x5a0] sm:$0xff]
          %v7719 = vld [vmem:[#allocation27 + $0x5a8] sm:$0xff]
          %v7720 = vld [vmem:[#allocation27 + $0x5b0] sm:$0xff]
          %v7721 = vld [vmem:[#allocation27 + $0x5b8] sm:$0xff]
          %v7722 = vld [vmem:[#allocation27 + $0x5c0] sm:$0xff]
          %v7723 = vld [vmem:[#allocation27 + $0x5c8] sm:$0xff]
          %v7724 = vld [vmem:[#allocation27 + $0x5d0] sm:$0xff]
          %v7725 = vld [vmem:[#allocation27 + $0x5d8] sm:$0xff]
          %v7726 = vld [vmem:[#allocation27 + $0x5e0] sm:$0xff]
          %v7727 = vld [vmem:[#allocation27 + $0x5e8] sm:$0xff]
          %v7728 = vld [vmem:[#allocation27 + $0x5f0] sm:$0xff]
          %v7729 = vld [vmem:[#allocation27 + $0x5f8] sm:$0xff]
          %v7730 = vld [vmem:[#allocation27 + $0x600] sm:$0xff]
          %v7731 = vld [vmem:[#allocation27 + $0x608] sm:$0xff]
          %v7732 = vld [vmem:[#allocation27 + $0x610] sm:$0xff]
          %v7733 = vld [vmem:[#allocation27 + $0x618] sm:$0xff]
          %v7734 = vld [vmem:[#allocation27 + $0x620] sm:$0xff]
          %v7735 = vld [vmem:[#allocation27 + $0x628] sm:$0xff]
          %v7736 = vld [vmem:[#allocation27 + $0x630] sm:$0xff]
          %v7737 = vld [vmem:[#allocation27 + $0x638] sm:$0xff]
          %v7738 = vld [vmem:[#allocation27 + $0x640] sm:$0xff]
          %v7739 = vld [vmem:[#allocation27 + $0x648] sm:$0xff]
          %v7740 = vld [vmem:[#allocation27 + $0x650] sm:$0xff]
          %v7741 = vld [vmem:[#allocation27 + $0x658] sm:$0xff]
          %v7742 = vld [vmem:[#allocation27 + $0x660] sm:$0xff]
          %v7743 = vld [vmem:[#allocation27 + $0x668] sm:$0xff]
          %v7744 = vld [vmem:[#allocation27 + $0x670] sm:$0xff]
          %v7745 = vld [vmem:[#allocation27 + $0x678] sm:$0xff]
          %v7746 = vld [vmem:[#allocation27 + $0x680] sm:$0xff]
          %v7747 = vld [vmem:[#allocation27 + $0x688] sm:$0xff]
          %v7748 = vld [vmem:[#allocation27 + $0x690] sm:$0xff]
          %v7749 = vld [vmem:[#allocation27 + $0x698] sm:$0xff]
          %v7750 = vld [vmem:[#allocation27 + $0x6a0] sm:$0xff]
          %v7751 = vld [vmem:[#allocation27 + $0x6a8] sm:$0xff]
          %v7752 = vld [vmem:[#allocation27 + $0x6b0] sm:$0xff]
          %v7753 = vld [vmem:[#allocation27 + $0x6b8] sm:$0xff]
          %v7754 = vld [vmem:[#allocation27 + $0x6c0] sm:$0xff]
          %v7755 = vld [vmem:[#allocation27 + $0x6c8] sm:$0xff]
          %v7756 = vld [vmem:[#allocation27 + $0x6d0] sm:$0xff]
          %v7757 = vld [vmem:[#allocation27 + $0x6d8] sm:$0xff]
          %v7758 = vld [vmem:[#allocation27 + $0x6e0] sm:$0xff]
          %v7759 = vld [vmem:[#allocation27 + $0x6e8] sm:$0xff]
          %v7760 = vld [vmem:[#allocation27 + $0x6f0] sm:$0xff]
          %v7761 = vld [vmem:[#allocation27 + $0x6f8] sm:$0xff]
          %v7762 = vld [vmem:[#allocation27 + $0x700] sm:$0xff]
          %v7763 = vld [vmem:[#allocation27 + $0x708] sm:$0xff]
          %v7764 = vld [vmem:[#allocation27 + $0x710] sm:$0xff]
          %v7765 = vld [vmem:[#allocation27 + $0x718] sm:$0xff]
          %v7766 = vld [vmem:[#allocation27 + $0x720] sm:$0xff]
          %v7767 = vld [vmem:[#allocation27 + $0x728] sm:$0xff]
          %v7768 = vld [vmem:[#allocation27 + $0x730] sm:$0xff]
          %v7769 = vld [vmem:[#allocation27 + $0x738] sm:$0xff]
          %v7770 = vld [vmem:[#allocation27 + $0x740] sm:$0xff]
          %v7771 = vld [vmem:[#allocation27 + $0x748] sm:$0xff]
          %v7772 = vld [vmem:[#allocation27 + $0x750] sm:$0xff]
          %v7773 = vld [vmem:[#allocation27 + $0x758] sm:$0xff]
          %v7774 = vld [vmem:[#allocation27 + $0x760] sm:$0xff]
          %v7775 = vld [vmem:[#allocation27 + $0x768] sm:$0xff]
          %v7776 = vld [vmem:[#allocation27 + $0x770] sm:$0xff]
          %v7777 = vld [vmem:[#allocation27 + $0x778] sm:$0xff]
          %v7778 = vld [vmem:[#allocation27 + $0x780] sm:$0xff]
          %v7779 = vld [vmem:[#allocation27 + $0x788] sm:$0xff]
          %v7780 = vld [vmem:[#allocation27 + $0x790] sm:$0xff]
          %v7781 = vld [vmem:[#allocation27 + $0x798] sm:$0xff]
          %v7782 = vld [vmem:[#allocation27 + $0x7a0] sm:$0xff]
          %v7783 = vld [vmem:[#allocation27 + $0x7a8] sm:$0xff]
          %v7784 = vld [vmem:[#allocation27 + $0x7b0] sm:$0xff]
          %v7785 = vld [vmem:[#allocation27 + $0x7b8] sm:$0xff]
          %v7786 = vld [vmem:[#allocation27 + $0x7c0] sm:$0xff]
          %v7787 = vld [vmem:[#allocation27 + $0x7c8] sm:$0xff]
          %v7788 = vld [vmem:[#allocation27 + $0x7d0] sm:$0xff]
          %v7789 = vld [vmem:[#allocation27 + $0x7d8] sm:$0xff]
          %v7790 = vld [vmem:[#allocation27 + $0x7e0] sm:$0xff]
          %v7791 = vld [vmem:[#allocation27 + $0x7e8] sm:$0xff]
          %v7792 = vld [vmem:[#allocation27 + $0x7f0] sm:$0xff]
          %v7793 = vld [vmem:[#allocation27 + $0x7f8] sm:$0xff]
          %v7794 = vld [vmem:[#allocation28] sm:$0xff]
          %v7796 = vperm.slane %v7794, 0
          %v7797 = vperm.slane %v7794, 1
          %v7798 = vperm.slane %v7794, 2
          %v7799 = vperm.slane %v7794, 3
          %v7800 = vperm.slane %v7794, 4
          %v7801 = vperm.slane %v7794, 5
          %v7802 = vperm.slane %v7794, 6
          %v7803 = vperm.slane %v7794, 7
          %v8068 = vunpack.c.l.b16 %v7538
          %v8069 = vunpack.c.h.b16 %v7538
          %v8070 = vunpack.c.l.b16 %v7539
          %v8071 = vunpack.c.h.b16 %v7539
          %v8072 = vunpack.c.l.b16 %v7540
          %v8073 = vunpack.c.h.b16 %v7540
          %v8074 = vunpack.c.l.b16 %v7541
          %v8075 = vunpack.c.h.b16 %v7541
          %v8076 = vunpack.c.l.b16 %v7542
          %v8077 = vunpack.c.h.b16 %v7542
          %v8078 = vunpack.c.l.b16 %v7543
          %v8079 = vunpack.c.h.b16 %v7543
          %v8080 = vunpack.c.l.b16 %v7544
          %v8081 = vunpack.c.h.b16 %v7544
          %v8082 = vunpack.c.l.b16 %v7545
          %v8083 = vunpack.c.h.b16 %v7545
          %v8084 = vunpack.c.l.b16 %v7546
          %v8085 = vunpack.c.h.b16 %v7546
          %v8086 = vunpack.c.l.b16 %v7547
          %v8087 = vunpack.c.h.b16 %v7547
          %v8088 = vunpack.c.l.b16 %v7548
          %v8089 = vunpack.c.h.b16 %v7548
          %v8090 = vunpack.c.l.b16 %v7549
          %v8091 = vunpack.c.h.b16 %v7549
          %v8092 = vunpack.c.l.b16 %v7550
          %v8093 = vunpack.c.h.b16 %v7550
          %v8094 = vunpack.c.l.b16 %v7551
          %v8095 = vunpack.c.h.b16 %v7551
          %v8096 = vunpack.c.l.b16 %v7552
          %v8097 = vunpack.c.h.b16 %v7552
          %v8098 = vunpack.c.l.b16 %v7553
          %v8099 = vunpack.c.h.b16 %v7553
          %v8100 = vunpack.c.l.b16 %v7554
          %v8101 = vunpack.c.h.b16 %v7554
          %v8102 = vunpack.c.l.b16 %v7555
          %v8103 = vunpack.c.h.b16 %v7555
          %v8104 = vunpack.c.l.b16 %v7556
          %v8105 = vunpack.c.h.b16 %v7556
          %v8106 = vunpack.c.l.b16 %v7557
          %v8107 = vunpack.c.h.b16 %v7557
          %v8108 = vunpack.c.l.b16 %v7558
          %v8109 = vunpack.c.h.b16 %v7558
          %v8110 = vunpack.c.l.b16 %v7559
          %v8111 = vunpack.c.h.b16 %v7559
          %v8112 = vunpack.c.l.b16 %v7560
          %v8113 = vunpack.c.h.b16 %v7560
          %v8114 = vunpack.c.l.b16 %v7561
          %v8115 = vunpack.c.h.b16 %v7561
          %v8116 = vunpack.c.l.b16 %v7562
          %v8117 = vunpack.c.h.b16 %v7562
          %v8118 = vunpack.c.l.b16 %v7563
          %v8119 = vunpack.c.h.b16 %v7563
          %v8120 = vunpack.c.l.b16 %v7564
          %v8121 = vunpack.c.h.b16 %v7564
          %v8122 = vunpack.c.l.b16 %v7565
          %v8123 = vunpack.c.h.b16 %v7565
          %v8124 = vunpack.c.l.b16 %v7566
          %v8125 = vunpack.c.h.b16 %v7566
          %v8126 = vunpack.c.l.b16 %v7567
          %v8127 = vunpack.c.h.b16 %v7567
          %v8128 = vunpack.c.l.b16 %v7568
          %v8129 = vunpack.c.h.b16 %v7568
          %v8130 = vunpack.c.l.b16 %v7569
          %v8131 = vunpack.c.h.b16 %v7569
          %v8132 = vunpack.c.l.b16 %v7570
          %v8133 = vunpack.c.h.b16 %v7570
          %v8134 = vunpack.c.l.b16 %v7571
          %v8135 = vunpack.c.h.b16 %v7571
          %v8136 = vunpack.c.l.b16 %v7572
          %v8137 = vunpack.c.h.b16 %v7572
          %v8138 = vunpack.c.l.b16 %v7573
          %v8139 = vunpack.c.h.b16 %v7573
          %v8140 = vunpack.c.l.b16 %v7574
          %v8141 = vunpack.c.h.b16 %v7574
          %v8142 = vunpack.c.l.b16 %v7575
          %v8143 = vunpack.c.h.b16 %v7575
          %v8144 = vunpack.c.l.b16 %v7576
          %v8145 = vunpack.c.h.b16 %v7576
          %v8146 = vunpack.c.l.b16 %v7577
          %v8147 = vunpack.c.h.b16 %v7577
          %v8148 = vunpack.c.l.b16 %v7578
          %v8149 = vunpack.c.h.b16 %v7578
          %v8150 = vunpack.c.l.b16 %v7579
          %v8151 = vunpack.c.h.b16 %v7579
          %v8152 = vunpack.c.l.b16 %v7580
          %v8153 = vunpack.c.h.b16 %v7580
          %v8154 = vunpack.c.l.b16 %v7581
          %v8155 = vunpack.c.h.b16 %v7581
          %v8156 = vunpack.c.l.b16 %v7582
          %v8157 = vunpack.c.h.b16 %v7582
          %v8158 = vunpack.c.l.b16 %v7583
          %v8159 = vunpack.c.h.b16 %v7583
          %v8160 = vunpack.c.l.b16 %v7584
          %v8161 = vunpack.c.h.b16 %v7584
          %v8162 = vunpack.c.l.b16 %v7585
          %v8163 = vunpack.c.h.b16 %v7585
          %v8164 = vunpack.c.l.b16 %v7586
          %v8165 = vunpack.c.h.b16 %v7586
          %v8166 = vunpack.c.l.b16 %v7587
          %v8167 = vunpack.c.h.b16 %v7587
          %v8168 = vunpack.c.l.b16 %v7588
          %v8169 = vunpack.c.h.b16 %v7588
          %v8170 = vunpack.c.l.b16 %v7589
          %v8171 = vunpack.c.h.b16 %v7589
          %v8172 = vunpack.c.l.b16 %v7590
          %v8173 = vunpack.c.h.b16 %v7590
          %v8174 = vunpack.c.l.b16 %v7591
          %v8175 = vunpack.c.h.b16 %v7591
          %v8176 = vunpack.c.l.b16 %v7592
          %v8177 = vunpack.c.h.b16 %v7592
          %v8178 = vunpack.c.l.b16 %v7593
          %v8179 = vunpack.c.h.b16 %v7593
          %v8180 = vunpack.c.l.b16 %v7594
          %v8181 = vunpack.c.h.b16 %v7594
          %v8182 = vunpack.c.l.b16 %v7595
          %v8183 = vunpack.c.h.b16 %v7595
          %v8184 = vunpack.c.l.b16 %v7596
          %v8185 = vunpack.c.h.b16 %v7596
          %v8186 = vunpack.c.l.b16 %v7597
          %v8187 = vunpack.c.h.b16 %v7597
          %v8188 = vunpack.c.l.b16 %v7598
          %v8189 = vunpack.c.h.b16 %v7598
          %v8190 = vunpack.c.l.b16 %v7599
          %v8191 = vunpack.c.h.b16 %v7599
          %v8192 = vunpack.c.l.b16 %v7600
          %v8193 = vunpack.c.h.b16 %v7600
          %v8194 = vunpack.c.l.b16 %v7601
          %v8195 = vunpack.c.h.b16 %v7601
          %v8196 = vunpack.c.l.b16 %v7602
          %v8197 = vunpack.c.h.b16 %v7602
          %v8198 = vunpack.c.l.b16 %v7603
          %v8199 = vunpack.c.h.b16 %v7603
          %v8200 = vunpack.c.l.b16 %v7604
          %v8201 = vunpack.c.h.b16 %v7604
          %v8202 = vunpack.c.l.b16 %v7605
          %v8203 = vunpack.c.h.b16 %v7605
          %v8204 = vunpack.c.l.b16 %v7606
          %v8205 = vunpack.c.h.b16 %v7606
          %v8206 = vunpack.c.l.b16 %v7607
          %v8207 = vunpack.c.h.b16 %v7607
          %v8208 = vunpack.c.l.b16 %v7608
          %v8209 = vunpack.c.h.b16 %v7608
          %v8210 = vunpack.c.l.b16 %v7609
          %v8211 = vunpack.c.h.b16 %v7609
          %v8212 = vunpack.c.l.b16 %v7610
          %v8213 = vunpack.c.h.b16 %v7610
          %v8214 = vunpack.c.l.b16 %v7611
          %v8215 = vunpack.c.h.b16 %v7611
          %v8216 = vunpack.c.l.b16 %v7612
          %v8217 = vunpack.c.h.b16 %v7612
          %v8218 = vunpack.c.l.b16 %v7613
          %v8219 = vunpack.c.h.b16 %v7613
          %v8220 = vunpack.c.l.b16 %v7614
          %v8221 = vunpack.c.h.b16 %v7614
          %v8222 = vunpack.c.l.b16 %v7615
          %v8223 = vunpack.c.h.b16 %v7615
          %v8224 = vunpack.c.l.b16 %v7616
          %v8225 = vunpack.c.h.b16 %v7616
          %v8226 = vunpack.c.l.b16 %v7617
          %v8227 = vunpack.c.h.b16 %v7617
          %v8228 = vunpack.c.l.b16 %v7618
          %v8229 = vunpack.c.h.b16 %v7618
          %v8230 = vunpack.c.l.b16 %v7619
          %v8231 = vunpack.c.h.b16 %v7619
          %v8232 = vunpack.c.l.b16 %v7620
          %v8233 = vunpack.c.h.b16 %v7620
          %v8234 = vunpack.c.l.b16 %v7621
          %v8235 = vunpack.c.h.b16 %v7621
          %v8236 = vunpack.c.l.b16 %v7622
          %v8237 = vunpack.c.h.b16 %v7622
          %v8238 = vunpack.c.l.b16 %v7623
          %v8239 = vunpack.c.h.b16 %v7623
          %v8240 = vunpack.c.l.b16 %v7624
          %v8241 = vunpack.c.h.b16 %v7624
          %v8242 = vunpack.c.l.b16 %v7625
          %v8243 = vunpack.c.h.b16 %v7625
          %v8244 = vunpack.c.l.b16 %v7626
          %v8245 = vunpack.c.h.b16 %v7626
          %v8246 = vunpack.c.l.b16 %v7627
          %v8247 = vunpack.c.h.b16 %v7627
          %v8248 = vunpack.c.l.b16 %v7628
          %v8249 = vunpack.c.h.b16 %v7628
          %v8250 = vunpack.c.l.b16 %v7629
          %v8251 = vunpack.c.h.b16 %v7629
          %v8252 = vunpack.c.l.b16 %v7630
          %v8253 = vunpack.c.h.b16 %v7630
          %v8254 = vunpack.c.l.b16 %v7631
          %v8255 = vunpack.c.h.b16 %v7631
          %v8256 = vunpack.c.l.b16 %v7632
          %v8257 = vunpack.c.h.b16 %v7632
          %v8258 = vunpack.c.l.b16 %v7633
          %v8259 = vunpack.c.h.b16 %v7633
          %v8260 = vunpack.c.l.b16 %v7634
          %v8261 = vunpack.c.h.b16 %v7634
          %v8262 = vunpack.c.l.b16 %v7635
          %v8263 = vunpack.c.h.b16 %v7635
          %v8264 = vunpack.c.l.b16 %v7636
          %v8265 = vunpack.c.h.b16 %v7636
          %v8266 = vunpack.c.l.b16 %v7637
          %v8267 = vunpack.c.h.b16 %v7637
          %v8268 = vunpack.c.l.b16 %v7638
          %v8269 = vunpack.c.h.b16 %v7638
          %v8270 = vunpack.c.l.b16 %v7639
          %v8271 = vunpack.c.h.b16 %v7639
          %v8272 = vunpack.c.l.b16 %v7640
          %v8273 = vunpack.c.h.b16 %v7640
          %v8274 = vunpack.c.l.b16 %v7641
          %v8275 = vunpack.c.h.b16 %v7641
          %v8276 = vunpack.c.l.b16 %v7642
          %v8277 = vunpack.c.h.b16 %v7642
          %v8278 = vunpack.c.l.b16 %v7643
          %v8279 = vunpack.c.h.b16 %v7643
          %v8280 = vunpack.c.l.b16 %v7644
          %v8281 = vunpack.c.h.b16 %v7644
          %v8282 = vunpack.c.l.b16 %v7645
          %v8283 = vunpack.c.h.b16 %v7645
          %v8284 = vunpack.c.l.b16 %v7646
          %v8285 = vunpack.c.h.b16 %v7646
          %v8286 = vunpack.c.l.b16 %v7647
          %v8287 = vunpack.c.h.b16 %v7647
          %v8288 = vunpack.c.l.b16 %v7648
          %v8289 = vunpack.c.h.b16 %v7648
          %v8290 = vunpack.c.l.b16 %v7649
          %v8291 = vunpack.c.h.b16 %v7649
          %v8292 = vunpack.c.l.b16 %v7650
          %v8293 = vunpack.c.h.b16 %v7650
          %v8294 = vunpack.c.l.b16 %v7651
          %v8295 = vunpack.c.h.b16 %v7651
          %v8296 = vunpack.c.l.b16 %v7652
          %v8297 = vunpack.c.h.b16 %v7652
          %v8298 = vunpack.c.l.b16 %v7653
          %v8299 = vunpack.c.h.b16 %v7653
          %v8300 = vunpack.c.l.b16 %v7654
          %v8301 = vunpack.c.h.b16 %v7654
          %v8302 = vunpack.c.l.b16 %v7655
          %v8303 = vunpack.c.h.b16 %v7655
          %v8304 = vunpack.c.l.b16 %v7656
          %v8305 = vunpack.c.h.b16 %v7656
          %v8306 = vunpack.c.l.b16 %v7657
          %v8307 = vunpack.c.h.b16 %v7657
          %v8308 = vunpack.c.l.b16 %v7658
          %v8309 = vunpack.c.h.b16 %v7658
          %v8310 = vunpack.c.l.b16 %v7659
          %v8311 = vunpack.c.h.b16 %v7659
          %v8312 = vunpack.c.l.b16 %v7660
          %v8313 = vunpack.c.h.b16 %v7660
          %v8314 = vunpack.c.l.b16 %v7661
          %v8315 = vunpack.c.h.b16 %v7661
          %v8316 = vunpack.c.l.b16 %v7662
          %v8317 = vunpack.c.h.b16 %v7662
          %v8318 = vunpack.c.l.b16 %v7663
          %v8319 = vunpack.c.h.b16 %v7663
          %v8320 = vunpack.c.l.b16 %v7664
          %v8321 = vunpack.c.h.b16 %v7664
          %v8322 = vunpack.c.l.b16 %v7665
          %v8323 = vunpack.c.h.b16 %v7665
          %v8324 = vunpack.c.l.b16 %v7666
          %v8325 = vunpack.c.h.b16 %v7666
          %v8326 = vunpack.c.l.b16 %v7667
          %v8327 = vunpack.c.h.b16 %v7667
          %v8328 = vunpack.c.l.b16 %v7668
          %v8329 = vunpack.c.h.b16 %v7668
          %v8330 = vunpack.c.l.b16 %v7669
          %v8331 = vunpack.c.h.b16 %v7669
          %v8332 = vunpack.c.l.b16 %v7670
          %v8333 = vunpack.c.h.b16 %v7670
          %v8334 = vunpack.c.l.b16 %v7671
          %v8335 = vunpack.c.h.b16 %v7671
          %v8336 = vunpack.c.l.b16 %v7672
          %v8337 = vunpack.c.h.b16 %v7672
          %v8338 = vunpack.c.l.b16 %v7673
          %v8339 = vunpack.c.h.b16 %v7673
          %v8340 = vunpack.c.l.b16 %v7674
          %v8341 = vunpack.c.h.b16 %v7674
          %v8342 = vunpack.c.l.b16 %v7675
          %v8343 = vunpack.c.h.b16 %v7675
          %v8344 = vunpack.c.l.b16 %v7676
          %v8345 = vunpack.c.h.b16 %v7676
          %v8346 = vunpack.c.l.b16 %v7677
          %v8347 = vunpack.c.h.b16 %v7677
          %v8348 = vunpack.c.l.b16 %v7678
          %v8349 = vunpack.c.h.b16 %v7678
          %v8350 = vunpack.c.l.b16 %v7679
          %v8351 = vunpack.c.h.b16 %v7679
          %v8352 = vunpack.c.l.b16 %v7680
          %v8353 = vunpack.c.h.b16 %v7680
          %v8354 = vunpack.c.l.b16 %v7681
          %v8355 = vunpack.c.h.b16 %v7681
          %v8356 = vunpack.c.l.b16 %v7682
          %v8357 = vunpack.c.h.b16 %v7682
          %v8358 = vunpack.c.l.b16 %v7683
          %v8359 = vunpack.c.h.b16 %v7683
          %v8360 = vunpack.c.l.b16 %v7684
          %v8361 = vunpack.c.h.b16 %v7684
          %v8362 = vunpack.c.l.b16 %v7685
          %v8363 = vunpack.c.h.b16 %v7685
          %v8364 = vunpack.c.l.b16 %v7686
          %v8365 = vunpack.c.h.b16 %v7686
          %v8366 = vunpack.c.l.b16 %v7687
          %v8367 = vunpack.c.h.b16 %v7687
          %v8368 = vunpack.c.l.b16 %v7688
          %v8369 = vunpack.c.h.b16 %v7688
          %v8370 = vunpack.c.l.b16 %v7689
          %v8371 = vunpack.c.h.b16 %v7689
          %v8372 = vunpack.c.l.b16 %v7690
          %v8373 = vunpack.c.h.b16 %v7690
          %v8374 = vunpack.c.l.b16 %v7691
          %v8375 = vunpack.c.h.b16 %v7691
          %v8376 = vunpack.c.l.b16 %v7692
          %v8377 = vunpack.c.h.b16 %v7692
          %v8378 = vunpack.c.l.b16 %v7693
          %v8379 = vunpack.c.h.b16 %v7693
          %v8380 = vunpack.c.l.b16 %v7694
          %v8381 = vunpack.c.h.b16 %v7694
          %v8382 = vunpack.c.l.b16 %v7695
          %v8383 = vunpack.c.h.b16 %v7695
          %v8384 = vunpack.c.l.b16 %v7696
          %v8385 = vunpack.c.h.b16 %v7696
          %v8386 = vunpack.c.l.b16 %v7697
          %v8387 = vunpack.c.h.b16 %v7697
          %v8388 = vunpack.c.l.b16 %v7698
          %v8389 = vunpack.c.h.b16 %v7698
          %v8390 = vunpack.c.l.b16 %v7699
          %v8391 = vunpack.c.h.b16 %v7699
          %v8392 = vunpack.c.l.b16 %v7700
          %v8393 = vunpack.c.h.b16 %v7700
          %v8394 = vunpack.c.l.b16 %v7701
          %v8395 = vunpack.c.h.b16 %v7701
          %v8396 = vunpack.c.l.b16 %v7702
          %v8397 = vunpack.c.h.b16 %v7702
          %v8398 = vunpack.c.l.b16 %v7703
          %v8399 = vunpack.c.h.b16 %v7703
          %v8400 = vunpack.c.l.b16 %v7704
          %v8401 = vunpack.c.h.b16 %v7704
          %v8402 = vunpack.c.l.b16 %v7705
          %v8403 = vunpack.c.h.b16 %v7705
          %v8404 = vunpack.c.l.b16 %v7706
          %v8405 = vunpack.c.h.b16 %v7706
          %v8406 = vunpack.c.l.b16 %v7707
          %v8407 = vunpack.c.h.b16 %v7707
          %v8408 = vunpack.c.l.b16 %v7708
          %v8409 = vunpack.c.h.b16 %v7708
          %v8410 = vunpack.c.l.b16 %v7709
          %v8411 = vunpack.c.h.b16 %v7709
          %v8412 = vunpack.c.l.b16 %v7710
          %v8413 = vunpack.c.h.b16 %v7710
          %v8414 = vunpack.c.l.b16 %v7711
          %v8415 = vunpack.c.h.b16 %v7711
          %v8416 = vunpack.c.l.b16 %v7712
          %v8417 = vunpack.c.h.b16 %v7712
          %v8418 = vunpack.c.l.b16 %v7713
          %v8419 = vunpack.c.h.b16 %v7713
          %v8420 = vunpack.c.l.b16 %v7714
          %v8421 = vunpack.c.h.b16 %v7714
          %v8422 = vunpack.c.l.b16 %v7715
          %v8423 = vunpack.c.h.b16 %v7715
          %v8424 = vunpack.c.l.b16 %v7716
          %v8425 = vunpack.c.h.b16 %v7716
          %v8426 = vunpack.c.l.b16 %v7717
          %v8427 = vunpack.c.h.b16 %v7717
          %v8428 = vunpack.c.l.b16 %v7718
          %v8429 = vunpack.c.h.b16 %v7718
          %v8430 = vunpack.c.l.b16 %v7719
          %v8431 = vunpack.c.h.b16 %v7719
          %v8432 = vunpack.c.l.b16 %v7720
          %v8433 = vunpack.c.h.b16 %v7720
          %v8434 = vunpack.c.l.b16 %v7721
          %v8435 = vunpack.c.h.b16 %v7721
          %v8436 = vunpack.c.l.b16 %v7722
          %v8437 = vunpack.c.h.b16 %v7722
          %v8438 = vunpack.c.l.b16 %v7723
          %v8439 = vunpack.c.h.b16 %v7723
          %v8440 = vunpack.c.l.b16 %v7724
          %v8441 = vunpack.c.h.b16 %v7724
          %v8442 = vunpack.c.l.b16 %v7725
          %v8443 = vunpack.c.h.b16 %v7725
          %v8444 = vunpack.c.l.b16 %v7726
          %v8445 = vunpack.c.h.b16 %v7726
          %v8446 = vunpack.c.l.b16 %v7727
          %v8447 = vunpack.c.h.b16 %v7727
          %v8448 = vunpack.c.l.b16 %v7728
          %v8449 = vunpack.c.h.b16 %v7728
          %v8450 = vunpack.c.l.b16 %v7729
          %v8451 = vunpack.c.h.b16 %v7729
          %v8452 = vunpack.c.l.b16 %v7730
          %v8453 = vunpack.c.h.b16 %v7730
          %v8454 = vunpack.c.l.b16 %v7731
          %v8455 = vunpack.c.h.b16 %v7731
          %v8456 = vunpack.c.l.b16 %v7732
          %v8457 = vunpack.c.h.b16 %v7732
          %v8458 = vunpack.c.l.b16 %v7733
          %v8459 = vunpack.c.h.b16 %v7733
          %v8460 = vunpack.c.l.b16 %v7734
          %v8461 = vunpack.c.h.b16 %v7734
          %v8462 = vunpack.c.l.b16 %v7735
          %v8463 = vunpack.c.h.b16 %v7735
          %v8464 = vunpack.c.l.b16 %v7736
          %v8465 = vunpack.c.h.b16 %v7736
          %v8466 = vunpack.c.l.b16 %v7737
          %v8467 = vunpack.c.h.b16 %v7737
          %v8468 = vunpack.c.l.b16 %v7738
          %v8469 = vunpack.c.h.b16 %v7738
          %v8470 = vunpack.c.l.b16 %v7739
          %v8471 = vunpack.c.h.b16 %v7739
          %v8472 = vunpack.c.l.b16 %v7740
          %v8473 = vunpack.c.h.b16 %v7740
          %v8474 = vunpack.c.l.b16 %v7741
          %v8475 = vunpack.c.h.b16 %v7741
          %v8476 = vunpack.c.l.b16 %v7742
          %v8477 = vunpack.c.h.b16 %v7742
          %v8478 = vunpack.c.l.b16 %v7743
          %v8479 = vunpack.c.h.b16 %v7743
          %v8480 = vunpack.c.l.b16 %v7744
          %v8481 = vunpack.c.h.b16 %v7744
          %v8482 = vunpack.c.l.b16 %v7745
          %v8483 = vunpack.c.h.b16 %v7745
          %v8484 = vunpack.c.l.b16 %v7746
          %v8485 = vunpack.c.h.b16 %v7746
          %v8486 = vunpack.c.l.b16 %v7747
          %v8487 = vunpack.c.h.b16 %v7747
          %v8488 = vunpack.c.l.b16 %v7748
          %v8489 = vunpack.c.h.b16 %v7748
          %v8490 = vunpack.c.l.b16 %v7749
          %v8491 = vunpack.c.h.b16 %v7749
          %v8492 = vunpack.c.l.b16 %v7750
          %v8493 = vunpack.c.h.b16 %v7750
          %v8494 = vunpack.c.l.b16 %v7751
          %v8495 = vunpack.c.h.b16 %v7751
          %v8496 = vunpack.c.l.b16 %v7752
          %v8497 = vunpack.c.h.b16 %v7752
          %v8498 = vunpack.c.l.b16 %v7753
          %v8499 = vunpack.c.h.b16 %v7753
          %v8500 = vunpack.c.l.b16 %v7754
          %v8501 = vunpack.c.h.b16 %v7754
          %v8502 = vunpack.c.l.b16 %v7755
          %v8503 = vunpack.c.h.b16 %v7755
          %v8504 = vunpack.c.l.b16 %v7756
          %v8505 = vunpack.c.h.b16 %v7756
          %v8506 = vunpack.c.l.b16 %v7757
          %v8507 = vunpack.c.h.b16 %v7757
          %v8508 = vunpack.c.l.b16 %v7758
          %v8509 = vunpack.c.h.b16 %v7758
          %v8510 = vunpack.c.l.b16 %v7759
          %v8511 = vunpack.c.h.b16 %v7759
          %v8512 = vunpack.c.l.b16 %v7760
          %v8513 = vunpack.c.h.b16 %v7760
          %v8514 = vunpack.c.l.b16 %v7761
          %v8515 = vunpack.c.h.b16 %v7761
          %v8516 = vunpack.c.l.b16 %v7762
          %v8517 = vunpack.c.h.b16 %v7762
          %v8518 = vunpack.c.l.b16 %v7763
          %v8519 = vunpack.c.h.b16 %v7763
          %v8520 = vunpack.c.l.b16 %v7764
          %v8521 = vunpack.c.h.b16 %v7764
          %v8522 = vunpack.c.l.b16 %v7765
          %v8523 = vunpack.c.h.b16 %v7765
          %v8524 = vunpack.c.l.b16 %v7766
          %v8525 = vunpack.c.h.b16 %v7766
          %v8526 = vunpack.c.l.b16 %v7767
          %v8527 = vunpack.c.h.b16 %v7767
          %v8528 = vunpack.c.l.b16 %v7768
          %v8529 = vunpack.c.h.b16 %v7768
          %v8530 = vunpack.c.l.b16 %v7769
          %v8531 = vunpack.c.h.b16 %v7769
          %v8532 = vunpack.c.l.b16 %v7770
          %v8533 = vunpack.c.h.b16 %v7770
          %v8534 = vunpack.c.l.b16 %v7771
          %v8535 = vunpack.c.h.b16 %v7771
          %v8536 = vunpack.c.l.b16 %v7772
          %v8537 = vunpack.c.h.b16 %v7772
          %v8538 = vunpack.c.l.b16 %v7773
          %v8539 = vunpack.c.h.b16 %v7773
          %v8540 = vunpack.c.l.b16 %v7774
          %v8541 = vunpack.c.h.b16 %v7774
          %v8542 = vunpack.c.l.b16 %v7775
          %v8543 = vunpack.c.h.b16 %v7775
          %v8544 = vunpack.c.l.b16 %v7776
          %v8545 = vunpack.c.h.b16 %v7776
          %v8546 = vunpack.c.l.b16 %v7777
          %v8547 = vunpack.c.h.b16 %v7777
          %v8548 = vunpack.c.l.b16 %v7778
          %v8549 = vunpack.c.h.b16 %v7778
          %v8550 = vunpack.c.l.b16 %v7779
          %v8551 = vunpack.c.h.b16 %v7779
          %v8552 = vunpack.c.l.b16 %v7780
          %v8553 = vunpack.c.h.b16 %v7780
          %v8554 = vunpack.c.l.b16 %v7781
          %v8555 = vunpack.c.h.b16 %v7781
          %v8556 = vunpack.c.l.b16 %v7782
          %v8557 = vunpack.c.h.b16 %v7782
          %v8558 = vunpack.c.l.b16 %v7783
          %v8559 = vunpack.c.h.b16 %v7783
          %v8560 = vunpack.c.l.b16 %v7784
          %v8561 = vunpack.c.h.b16 %v7784
          %v8562 = vunpack.c.l.b16 %v7785
          %v8563 = vunpack.c.h.b16 %v7785
          %v8564 = vunpack.c.l.b16 %v7786
          %v8565 = vunpack.c.h.b16 %v7786
          %v8566 = vunpack.c.l.b16 %v7787
          %v8567 = vunpack.c.h.b16 %v7787
          %v8568 = vunpack.c.l.b16 %v7788
          %v8569 = vunpack.c.h.b16 %v7788
          %v8570 = vunpack.c.l.b16 %v7789
          %v8571 = vunpack.c.h.b16 %v7789
          %v8572 = vunpack.c.l.b16 %v7790
          %v8573 = vunpack.c.h.b16 %v7790
          %v8574 = vunpack.c.l.b16 %v7791
          %v8575 = vunpack.c.h.b16 %v7791
          %v8576 = vunpack.c.l.b16 %v7792
          %v8577 = vunpack.c.h.b16 %v7792
          %v8578 = vunpack.c.l.b16 %v7793
          %v8579 = vunpack.c.h.b16 %v7793
          %v8580 = vpack.c.b16 %v8076, %v8068
          %v8581 = vpack.c.b16 %v8077, %v8069
          %v8582 = vpack.c.b16 %v8078, %v8070
          %v8583 = vpack.c.b16 %v8079, %v8071
          %v8584 = vpack.c.b16 %v8080, %v8072
          %v8585 = vpack.c.b16 %v8081, %v8073
          %v8586 = vpack.c.b16 %v8082, %v8074
          %v8587 = vpack.c.b16 %v8083, %v8075
          %v8588 = vpack.c.b16 %v8092, %v8084
          %v8589 = vpack.c.b16 %v8093, %v8085
          %v8590 = vpack.c.b16 %v8094, %v8086
          %v8591 = vpack.c.b16 %v8095, %v8087
          %v8592 = vpack.c.b16 %v8096, %v8088
          %v8593 = vpack.c.b16 %v8097, %v8089
          %v8594 = vpack.c.b16 %v8098, %v8090
          %v8595 = vpack.c.b16 %v8099, %v8091
          %v8596 = vpack.c.b16 %v8108, %v8100
          %v8597 = vpack.c.b16 %v8109, %v8101
          %v8598 = vpack.c.b16 %v8110, %v8102
          %v8599 = vpack.c.b16 %v8111, %v8103
          %v8600 = vpack.c.b16 %v8112, %v8104
          %v8601 = vpack.c.b16 %v8113, %v8105
          %v8602 = vpack.c.b16 %v8114, %v8106
          %v8603 = vpack.c.b16 %v8115, %v8107
          %v8604 = vpack.c.b16 %v8124, %v8116
          %v8605 = vpack.c.b16 %v8125, %v8117
          %v8606 = vpack.c.b16 %v8126, %v8118
          %v8607 = vpack.c.b16 %v8127, %v8119
          %v8608 = vpack.c.b16 %v8128, %v8120
          %v8609 = vpack.c.b16 %v8129, %v8121
          %v8610 = vpack.c.b16 %v8130, %v8122
          %v8611 = vpack.c.b16 %v8131, %v8123
          %v8612 = vpack.c.b16 %v8140, %v8132
          %v8613 = vpack.c.b16 %v8141, %v8133
          %v8614 = vpack.c.b16 %v8142, %v8134
          %v8615 = vpack.c.b16 %v8143, %v8135
          %v8616 = vpack.c.b16 %v8144, %v8136
          %v8617 = vpack.c.b16 %v8145, %v8137
          %v8618 = vpack.c.b16 %v8146, %v8138
          %v8619 = vpack.c.b16 %v8147, %v8139
          %v8620 = vpack.c.b16 %v8156, %v8148
          %v8621 = vpack.c.b16 %v8157, %v8149
          %v8622 = vpack.c.b16 %v8158, %v8150
          %v8623 = vpack.c.b16 %v8159, %v8151
          %v8624 = vpack.c.b16 %v8160, %v8152
          %v8625 = vpack.c.b16 %v8161, %v8153
          %v8626 = vpack.c.b16 %v8162, %v8154
          %v8627 = vpack.c.b16 %v8163, %v8155
          %v8628 = vpack.c.b16 %v8172, %v8164
          %v8629 = vpack.c.b16 %v8173, %v8165
          %v8630 = vpack.c.b16 %v8174, %v8166
          %v8631 = vpack.c.b16 %v8175, %v8167
          %v8632 = vpack.c.b16 %v8176, %v8168
          %v8633 = vpack.c.b16 %v8177, %v8169
          %v8634 = vpack.c.b16 %v8178, %v8170
          %v8635 = vpack.c.b16 %v8179, %v8171
          %v8636 = vpack.c.b16 %v8188, %v8180
          %v8637 = vpack.c.b16 %v8189, %v8181
          %v8638 = vpack.c.b16 %v8190, %v8182
          %v8639 = vpack.c.b16 %v8191, %v8183
          %v8640 = vpack.c.b16 %v8192, %v8184
          %v8641 = vpack.c.b16 %v8193, %v8185
          %v8642 = vpack.c.b16 %v8194, %v8186
          %v8643 = vpack.c.b16 %v8195, %v8187
          %v8644 = vpack.c.b16 %v8204, %v8196
          %v8645 = vpack.c.b16 %v8205, %v8197
          %v8646 = vpack.c.b16 %v8206, %v8198
          %v8647 = vpack.c.b16 %v8207, %v8199
          %v8648 = vpack.c.b16 %v8208, %v8200
          %v8649 = vpack.c.b16 %v8209, %v8201
          %v8650 = vpack.c.b16 %v8210, %v8202
          %v8651 = vpack.c.b16 %v8211, %v8203
          %v8652 = vpack.c.b16 %v8220, %v8212
          %v8653 = vpack.c.b16 %v8221, %v8213
          %v8654 = vpack.c.b16 %v8222, %v8214
          %v8655 = vpack.c.b16 %v8223, %v8215
          %v8656 = vpack.c.b16 %v8224, %v8216
          %v8657 = vpack.c.b16 %v8225, %v8217
          %v8658 = vpack.c.b16 %v8226, %v8218
          %v8659 = vpack.c.b16 %v8227, %v8219
          %v8660 = vpack.c.b16 %v8236, %v8228
          %v8661 = vpack.c.b16 %v8237, %v8229
          %v8662 = vpack.c.b16 %v8238, %v8230
          %v8663 = vpack.c.b16 %v8239, %v8231
          %v8664 = vpack.c.b16 %v8240, %v8232
          %v8665 = vpack.c.b16 %v8241, %v8233
          %v8666 = vpack.c.b16 %v8242, %v8234
          %v8667 = vpack.c.b16 %v8243, %v8235
          %v8668 = vpack.c.b16 %v8252, %v8244
          %v8669 = vpack.c.b16 %v8253, %v8245
          %v8670 = vpack.c.b16 %v8254, %v8246
          %v8671 = vpack.c.b16 %v8255, %v8247
          %v8672 = vpack.c.b16 %v8256, %v8248
          %v8673 = vpack.c.b16 %v8257, %v8249
          %v8674 = vpack.c.b16 %v8258, %v8250
          %v8675 = vpack.c.b16 %v8259, %v8251
          %v8676 = vpack.c.b16 %v8268, %v8260
          %v8677 = vpack.c.b16 %v8269, %v8261
          %v8678 = vpack.c.b16 %v8270, %v8262
          %v8679 = vpack.c.b16 %v8271, %v8263
          %v8680 = vpack.c.b16 %v8272, %v8264
          %v8681 = vpack.c.b16 %v8273, %v8265
          %v8682 = vpack.c.b16 %v8274, %v8266
          %v8683 = vpack.c.b16 %v8275, %v8267
          %v8684 = vpack.c.b16 %v8284, %v8276
          %v8685 = vpack.c.b16 %v8285, %v8277
          %v8686 = vpack.c.b16 %v8286, %v8278
          %v8687 = vpack.c.b16 %v8287, %v8279
          %v8688 = vpack.c.b16 %v8288, %v8280
          %v8689 = vpack.c.b16 %v8289, %v8281
          %v8690 = vpack.c.b16 %v8290, %v8282
          %v8691 = vpack.c.b16 %v8291, %v8283
          %v8692 = vpack.c.b16 %v8300, %v8292
          %v8693 = vpack.c.b16 %v8301, %v8293
          %v8694 = vpack.c.b16 %v8302, %v8294
          %v8695 = vpack.c.b16 %v8303, %v8295
          %v8696 = vpack.c.b16 %v8304, %v8296
          %v8697 = vpack.c.b16 %v8305, %v8297
          %v8698 = vpack.c.b16 %v8306, %v8298
          %v8699 = vpack.c.b16 %v8307, %v8299
          %v8700 = vpack.c.b16 %v8316, %v8308
          %v8701 = vpack.c.b16 %v8317, %v8309
          %v8702 = vpack.c.b16 %v8318, %v8310
          %v8703 = vpack.c.b16 %v8319, %v8311
          %v8704 = vpack.c.b16 %v8320, %v8312
          %v8705 = vpack.c.b16 %v8321, %v8313
          %v8706 = vpack.c.b16 %v8322, %v8314
          %v8707 = vpack.c.b16 %v8323, %v8315
          %v8708 = vpack.c.b16 %v8332, %v8324
          %v8709 = vpack.c.b16 %v8333, %v8325
          %v8710 = vpack.c.b16 %v8334, %v8326
          %v8711 = vpack.c.b16 %v8335, %v8327
          %v8712 = vpack.c.b16 %v8336, %v8328
          %v8713 = vpack.c.b16 %v8337, %v8329
          %v8714 = vpack.c.b16 %v8338, %v8330
          %v8715 = vpack.c.b16 %v8339, %v8331
          %v8716 = vpack.c.b16 %v8348, %v8340
          %v8717 = vpack.c.b16 %v8349, %v8341
          %v8718 = vpack.c.b16 %v8350, %v8342
          %v8719 = vpack.c.b16 %v8351, %v8343
          %v8720 = vpack.c.b16 %v8352, %v8344
          %v8721 = vpack.c.b16 %v8353, %v8345
          %v8722 = vpack.c.b16 %v8354, %v8346
          %v8723 = vpack.c.b16 %v8355, %v8347
          %v8724 = vpack.c.b16 %v8364, %v8356
          %v8725 = vpack.c.b16 %v8365, %v8357
          %v8726 = vpack.c.b16 %v8366, %v8358
          %v8727 = vpack.c.b16 %v8367, %v8359
          %v8728 = vpack.c.b16 %v8368, %v8360
          %v8729 = vpack.c.b16 %v8369, %v8361
          %v8730 = vpack.c.b16 %v8370, %v8362
          %v8731 = vpack.c.b16 %v8371, %v8363
          %v8732 = vpack.c.b16 %v8380, %v8372
          %v8733 = vpack.c.b16 %v8381, %v8373
          %v8734 = vpack.c.b16 %v8382, %v8374
          %v8735 = vpack.c.b16 %v8383, %v8375
          %v8736 = vpack.c.b16 %v8384, %v8376
          %v8737 = vpack.c.b16 %v8385, %v8377
          %v8738 = vpack.c.b16 %v8386, %v8378
          %v8739 = vpack.c.b16 %v8387, %v8379
          %v8740 = vpack.c.b16 %v8396, %v8388
          %v8741 = vpack.c.b16 %v8397, %v8389
          %v8742 = vpack.c.b16 %v8398, %v8390
          %v8743 = vpack.c.b16 %v8399, %v8391
          %v8744 = vpack.c.b16 %v8400, %v8392
          %v8745 = vpack.c.b16 %v8401, %v8393
          %v8746 = vpack.c.b16 %v8402, %v8394
          %v8747 = vpack.c.b16 %v8403, %v8395
          %v8748 = vpack.c.b16 %v8412, %v8404
          %v8749 = vpack.c.b16 %v8413, %v8405
          %v8750 = vpack.c.b16 %v8414, %v8406
          %v8751 = vpack.c.b16 %v8415, %v8407
          %v8752 = vpack.c.b16 %v8416, %v8408
          %v8753 = vpack.c.b16 %v8417, %v8409
          %v8754 = vpack.c.b16 %v8418, %v8410
          %v8755 = vpack.c.b16 %v8419, %v8411
          %v8756 = vpack.c.b16 %v8428, %v8420
          %v8757 = vpack.c.b16 %v8429, %v8421
          %v8758 = vpack.c.b16 %v8430, %v8422
          %v8759 = vpack.c.b16 %v8431, %v8423
          %v8760 = vpack.c.b16 %v8432, %v8424
          %v8761 = vpack.c.b16 %v8433, %v8425
          %v8762 = vpack.c.b16 %v8434, %v8426
          %v8763 = vpack.c.b16 %v8435, %v8427
          %v8764 = vpack.c.b16 %v8444, %v8436
          %v8765 = vpack.c.b16 %v8445, %v8437
          %v8766 = vpack.c.b16 %v8446, %v8438
          %v8767 = vpack.c.b16 %v8447, %v8439
          %v8768 = vpack.c.b16 %v8448, %v8440
          %v8769 = vpack.c.b16 %v8449, %v8441
          %v8770 = vpack.c.b16 %v8450, %v8442
          %v8771 = vpack.c.b16 %v8451, %v8443
          %v8772 = vpack.c.b16 %v8460, %v8452
          %v8773 = vpack.c.b16 %v8461, %v8453
          %v8774 = vpack.c.b16 %v8462, %v8454
          %v8775 = vpack.c.b16 %v8463, %v8455
          %v8776 = vpack.c.b16 %v8464, %v8456
          %v8777 = vpack.c.b16 %v8465, %v8457
          %v8778 = vpack.c.b16 %v8466, %v8458
          %v8779 = vpack.c.b16 %v8467, %v8459
          %v8780 = vpack.c.b16 %v8476, %v8468
          %v8781 = vpack.c.b16 %v8477, %v8469
          %v8782 = vpack.c.b16 %v8478, %v8470
          %v8783 = vpack.c.b16 %v8479, %v8471
          %v8784 = vpack.c.b16 %v8480, %v8472
          %v8785 = vpack.c.b16 %v8481, %v8473
          %v8786 = vpack.c.b16 %v8482, %v8474
          %v8787 = vpack.c.b16 %v8483, %v8475
          %v8788 = vpack.c.b16 %v8492, %v8484
          %v8789 = vpack.c.b16 %v8493, %v8485
          %v8790 = vpack.c.b16 %v8494, %v8486
          %v8791 = vpack.c.b16 %v8495, %v8487
          %v8792 = vpack.c.b16 %v8496, %v8488
          %v8793 = vpack.c.b16 %v8497, %v8489
          %v8794 = vpack.c.b16 %v8498, %v8490
          %v8795 = vpack.c.b16 %v8499, %v8491
          %v8796 = vpack.c.b16 %v8508, %v8500
          %v8797 = vpack.c.b16 %v8509, %v8501
          %v8798 = vpack.c.b16 %v8510, %v8502
          %v8799 = vpack.c.b16 %v8511, %v8503
          %v8800 = vpack.c.b16 %v8512, %v8504
          %v8801 = vpack.c.b16 %v8513, %v8505
          %v8802 = vpack.c.b16 %v8514, %v8506
          %v8803 = vpack.c.b16 %v8515, %v8507
          %v8804 = vpack.c.b16 %v8524, %v8516
          %v8805 = vpack.c.b16 %v8525, %v8517
          %v8806 = vpack.c.b16 %v8526, %v8518
          %v8807 = vpack.c.b16 %v8527, %v8519
          %v8808 = vpack.c.b16 %v8528, %v8520
          %v8809 = vpack.c.b16 %v8529, %v8521
          %v8810 = vpack.c.b16 %v8530, %v8522
          %v8811 = vpack.c.b16 %v8531, %v8523
          %v8812 = vpack.c.b16 %v8540, %v8532
          %v8813 = vpack.c.b16 %v8541, %v8533
          %v8814 = vpack.c.b16 %v8542, %v8534
          %v8815 = vpack.c.b16 %v8543, %v8535
          %v8816 = vpack.c.b16 %v8544, %v8536
          %v8817 = vpack.c.b16 %v8545, %v8537
          %v8818 = vpack.c.b16 %v8546, %v8538
          %v8819 = vpack.c.b16 %v8547, %v8539
          %v8820 = vpack.c.b16 %v8556, %v8548
          %v8821 = vpack.c.b16 %v8557, %v8549
          %v8822 = vpack.c.b16 %v8558, %v8550
          %v8823 = vpack.c.b16 %v8559, %v8551
          %v8824 = vpack.c.b16 %v8560, %v8552
          %v8825 = vpack.c.b16 %v8561, %v8553
          %v8826 = vpack.c.b16 %v8562, %v8554
          %v8827 = vpack.c.b16 %v8563, %v8555
          %v8828 = vpack.c.b16 %v8572, %v8564
          %v8829 = vpack.c.b16 %v8573, %v8565
          %v8830 = vpack.c.b16 %v8574, %v8566
          %v8831 = vpack.c.b16 %v8575, %v8567
          %v8832 = vpack.c.b16 %v8576, %v8568
          %v8833 = vpack.c.b16 %v8577, %v8569
          %v8834 = vpack.c.b16 %v8578, %v8570
          %v8835 = vpack.c.b16 %v8579, %v8571
          %9092 = vmatpush.bf16.msra.mxu0 %v8636
          %9093 = vmatpush.bf16.msra.mxu0 %v8628
          %9094 = vmatpush.bf16.msra.mxu0 %v8620
          %9095 = vmatpush.bf16.msra.mxu0 %v8612
          %9096 = vmatpush.bf16.msra.mxu0 %v8604
          %9097 = vmatpush.bf16.msra.mxu0 %v8596
          %9098 = vmatpush.bf16.msra.mxu0 %v8588
          %9099 = vmatpush.bf16.msra.mxu0 %v8580
          %9100 = vmatmul.bf16.gmra.mxu0 %v7534
          %v9101 = vpop.f32.mrf.mxu0
          %v9102 = vadd.f32 %v7796, %v9101
          %v9103 = vpop.f32.mrf.mxu0
          %9104 = vdwg.mxu0
          %9105 = vmatpush.bf16.msra.mxu0 %v8700
          %9106 = vmatpush.bf16.msra.mxu0 %v8692
          %9107 = vmatpush.bf16.msra.mxu0 %v8684
          %9108 = vmatpush.bf16.msra.mxu0 %v8676
          %9109 = vmatpush.bf16.msra.mxu0 %v8668
          %9110 = vmatpush.bf16.msra.mxu0 %v8660
          %9111 = vmatpush.bf16.msra.mxu0 %v8652
          %9112 = vmatpush.bf16.msra.mxu0 %v8644
          %9113 = vmatmul.bf16.gmra.mxu0 %v7535
          %v9114 = vpop.f32.mrf.mxu0
          %v9115 = vadd.f32 %v9102, %v9114
          %v9116 = vpop.f32.mrf.mxu0
          %9117 = vdwg.mxu0
          %9118 = vmatpush.bf16.msra.mxu0 %v8764
          %9119 = vmatpush.bf16.msra.mxu0 %v8756
          %9120 = vmatpush.bf16.msra.mxu0 %v8748
          %9121 = vmatpush.bf16.msra.mxu0 %v8740
          %9122 = vmatpush.bf16.msra.mxu0 %v8732
          %9123 = vmatpush.bf16.msra.mxu0 %v8724
          %9124 = vmatpush.bf16.msra.mxu0 %v8716
          %9125 = vmatpush.bf16.msra.mxu0 %v8708
          %9126 = vmatmul.bf16.gmra.mxu0 %v7536
          %v9127 = vpop.f32.mrf.mxu0
          %v9128 = vadd.f32 %v9115, %v9127
          %v9129 = vpop.f32.mrf.mxu0
          %9130 = vdwg.mxu0
          %9131 = vmatpush.bf16.msra.mxu0 %v8828
          %9132 = vmatpush.bf16.msra.mxu0 %v8820
          %9133 = vmatpush.bf16.msra.mxu0 %v8812
          %9134 = vmatpush.bf16.msra.mxu0 %v8804
          %9135 = vmatpush.bf16.msra.mxu0 %v8796
          %9136 = vmatpush.bf16.msra.mxu0 %v8788
          %9137 = vmatpush.bf16.msra.mxu0 %v8780
          %9138 = vmatpush.bf16.msra.mxu0 %v8772
          %9139 = vmatmul.bf16.gmra.mxu0 %v7537
          %v9140 = vpop.f32.mrf.mxu0
          %v9141 = vadd.f32 %v9128, %v9140
          %v9142 = vpop.f32.mrf.mxu0
          %9143 = vdwg.mxu0
          %9144 = vmatpush.bf16.msra.mxu0 %v8637
          %9145 = vmatpush.bf16.msra.mxu0 %v8629
          %9146 = vmatpush.bf16.msra.mxu0 %v8621
          %9147 = vmatpush.bf16.msra.mxu0 %v8613
          %9148 = vmatpush.bf16.msra.mxu0 %v8605
          %9149 = vmatpush.bf16.msra.mxu0 %v8597
          %9150 = vmatpush.bf16.msra.mxu0 %v8589
          %9151 = vmatpush.bf16.msra.mxu0 %v8581
          %9152 = vmatmul.bf16.gmra.mxu0 %v7534
          %v9153 = vpop.f32.mrf.mxu0
          %v9154 = vadd.f32 %v7797, %v9153
          %v9155 = vpop.f32.mrf.mxu0
          %9156 = vdwg.mxu0
          %9157 = vmatpush.bf16.msra.mxu0 %v8701
          %9158 = vmatpush.bf16.msra.mxu0 %v8693
          %9159 = vmatpush.bf16.msra.mxu0 %v8685
          %9160 = vmatpush.bf16.msra.mxu0 %v8677
          %9161 = vmatpush.bf16.msra.mxu0 %v8669
          %9162 = vmatpush.bf16.msra.mxu0 %v8661
          %9163 = vmatpush.bf16.msra.mxu0 %v8653
          %9164 = vmatpush.bf16.msra.mxu0 %v8645
          %9165 = vmatmul.bf16.gmra.mxu0 %v7535
          %v9166 = vpop.f32.mrf.mxu0
          %v9167 = vadd.f32 %v9154, %v9166
          %v9168 = vpop.f32.mrf.mxu0
          %9169 = vdwg.mxu0
          %9170 = vmatpush.bf16.msra.mxu0 %v8765
          %9171 = vmatpush.bf16.msra.mxu0 %v8757
          %9172 = vmatpush.bf16.msra.mxu0 %v8749
          %9173 = vmatpush.bf16.msra.mxu0 %v8741
          %9174 = vmatpush.bf16.msra.mxu0 %v8733
          %9175 = vmatpush.bf16.msra.mxu0 %v8725
          %9176 = vmatpush.bf16.msra.mxu0 %v8717
          %9177 = vmatpush.bf16.msra.mxu0 %v8709
          %9178 = vmatmul.bf16.gmra.mxu0 %v7536
          %v9179 = vpop.f32.mrf.mxu0
          %v9180 = vadd.f32 %v9167, %v9179
          %v9181 = vpop.f32.mrf.mxu0
          %9182 = vdwg.mxu0
          %9183 = vmatpush.bf16.msra.mxu0 %v8829
          %9184 = vmatpush.bf16.msra.mxu0 %v8821
          %9185 = vmatpush.bf16.msra.mxu0 %v8813
          %9186 = vmatpush.bf16.msra.mxu0 %v8805
          %9187 = vmatpush.bf16.msra.mxu0 %v8797
          %9188 = vmatpush.bf16.msra.mxu0 %v8789
          %9189 = vmatpush.bf16.msra.mxu0 %v8781
          %9190 = vmatpush.bf16.msra.mxu0 %v8773
          %9191 = vmatmul.bf16.gmra.mxu0 %v7537
          %v9192 = vpop.f32.mrf.mxu0
          %v9193 = vadd.f32 %v9180, %v9192
          %v9194 = vpop.f32.mrf.mxu0
          %9195 = vdwg.mxu0
          %9196 = vmatpush.bf16.msra.mxu0 %v8638
          %9197 = vmatpush.bf16.msra.mxu0 %v8630
          %9198 = vmatpush.bf16.msra.mxu0 %v8622
          %9199 = vmatpush.bf16.msra.mxu0 %v8614
          %9200 = vmatpush.bf16.msra.mxu0 %v8606
          %9201 = vmatpush.bf16.msra.mxu0 %v8598
          %9202 = vmatpush.bf16.msra.mxu0 %v8590
          %9203 = vmatpush.bf16.msra.mxu0 %v8582
          %9204 = vmatmul.bf16.gmra.mxu0 %v7534
          %v9205 = vpop.f32.mrf.mxu0
          %v9206 = vadd.f32 %v7798, %v9205
          %v9207 = vpop.f32.mrf.mxu0
          %9208 = vdwg.mxu0
          %9209 = vmatpush.bf16.msra.mxu0 %v8702
          %9210 = vmatpush.bf16.msra.mxu0 %v8694
          %9211 = vmatpush.bf16.msra.mxu0 %v8686
          %9212 = vmatpush.bf16.msra.mxu0 %v8678
          %9213 = vmatpush.bf16.msra.mxu0 %v8670
          %9214 = vmatpush.bf16.msra.mxu0 %v8662
          %9215 = vmatpush.bf16.msra.mxu0 %v8654
          %9216 = vmatpush.bf16.msra.mxu0 %v8646
          %9217 = vmatmul.bf16.gmra.mxu0 %v7535
          %v9218 = vpop.f32.mrf.mxu0
          %v9219 = vadd.f32 %v9206, %v9218
          %v9220 = vpop.f32.mrf.mxu0
          %9221 = vdwg.mxu0
          %9222 = vmatpush.bf16.msra.mxu0 %v8766
          %9223 = vmatpush.bf16.msra.mxu0 %v8758
          %9224 = vmatpush.bf16.msra.mxu0 %v8750
          %9225 = vmatpush.bf16.msra.mxu0 %v8742
          %9226 = vmatpush.bf16.msra.mxu0 %v8734
          %9227 = vmatpush.bf16.msra.mxu0 %v8726
          %9228 = vmatpush.bf16.msra.mxu0 %v8718
          %9229 = vmatpush.bf16.msra.mxu0 %v8710
          %9230 = vmatmul.bf16.gmra.mxu0 %v7536
          %v9231 = vpop.f32.mrf.mxu0
          %v9232 = vadd.f32 %v9219, %v9231
          %v9233 = vpop.f32.mrf.mxu0
          %9234 = vdwg.mxu0
          %9235 = vmatpush.bf16.msra.mxu0 %v8830
          %9236 = vmatpush.bf16.msra.mxu0 %v8822
          %9237 = vmatpush.bf16.msra.mxu0 %v8814
          %9238 = vmatpush.bf16.msra.mxu0 %v8806
          %9239 = vmatpush.bf16.msra.mxu0 %v8798
          %9240 = vmatpush.bf16.msra.mxu0 %v8790
          %9241 = vmatpush.bf16.msra.mxu0 %v8782
          %9242 = vmatpush.bf16.msra.mxu0 %v8774
          %9243 = vmatmul.bf16.gmra.mxu0 %v7537
          %v9244 = vpop.f32.mrf.mxu0
          %v9245 = vadd.f32 %v9232, %v9244
          %v9246 = vpop.f32.mrf.mxu0
          %9247 = vdwg.mxu0
          %9248 = vmatpush.bf16.msra.mxu0 %v8639
          %9249 = vmatpush.bf16.msra.mxu0 %v8631
          %9250 = vmatpush.bf16.msra.mxu0 %v8623
          %9251 = vmatpush.bf16.msra.mxu0 %v8615
          %9252 = vmatpush.bf16.msra.mxu0 %v8607
          %9253 = vmatpush.bf16.msra.mxu0 %v8599
          %9254 = vmatpush.bf16.msra.mxu0 %v8591
          %9255 = vmatpush.bf16.msra.mxu0 %v8583
          %9256 = vmatmul.bf16.gmra.mxu0 %v7534
          %v9257 = vpop.f32.mrf.mxu0
          %v9258 = vadd.f32 %v7799, %v9257
          %v9259 = vpop.f32.mrf.mxu0
          %9260 = vdwg.mxu0
          %9261 = vmatpush.bf16.msra.mxu0 %v8703
          %9262 = vmatpush.bf16.msra.mxu0 %v8695
          %9263 = vmatpush.bf16.msra.mxu0 %v8687
          %9264 = vmatpush.bf16.msra.mxu0 %v8679
          %9265 = vmatpush.bf16.msra.mxu0 %v8671
          %9266 = vmatpush.bf16.msra.mxu0 %v8663
          %9267 = vmatpush.bf16.msra.mxu0 %v8655
          %9268 = vmatpush.bf16.msra.mxu0 %v8647
          %9269 = vmatmul.bf16.gmra.mxu0 %v7535
          %v9270 = vpop.f32.mrf.mxu0
          %v9271 = vadd.f32 %v9258, %v9270
          %v9272 = vpop.f32.mrf.mxu0
          %9273 = vdwg.mxu0
          %9274 = vmatpush.bf16.msra.mxu0 %v8767
          %9275 = vmatpush.bf16.msra.mxu0 %v8759
          %9276 = vmatpush.bf16.msra.mxu0 %v8751
          %9277 = vmatpush.bf16.msra.mxu0 %v8743
          %9278 = vmatpush.bf16.msra.mxu0 %v8735
          %9279 = vmatpush.bf16.msra.mxu0 %v8727
          %9280 = vmatpush.bf16.msra.mxu0 %v8719
          %9281 = vmatpush.bf16.msra.mxu0 %v8711
          %9282 = vmatmul.bf16.gmra.mxu0 %v7536
          %v9283 = vpop.f32.mrf.mxu0
          %v9284 = vadd.f32 %v9271, %v9283
          %v9285 = vpop.f32.mrf.mxu0
          %9286 = vdwg.mxu0
          %9287 = vmatpush.bf16.msra.mxu0 %v8831
          %9288 = vmatpush.bf16.msra.mxu0 %v8823
          %9289 = vmatpush.bf16.msra.mxu0 %v8815
          %9290 = vmatpush.bf16.msra.mxu0 %v8807
          %9291 = vmatpush.bf16.msra.mxu0 %v8799
          %9292 = vmatpush.bf16.msra.mxu0 %v8791
          %9293 = vmatpush.bf16.msra.mxu0 %v8783
          %9294 = vmatpush.bf16.msra.mxu0 %v8775
          %9295 = vmatmul.bf16.gmra.mxu0 %v7537
          %v9296 = vpop.f32.mrf.mxu0
          %v9297 = vadd.f32 %v9284, %v9296
          %v9298 = vpop.f32.mrf.mxu0
          %9299 = vdwg.mxu0
          %9300 = vmatpush.bf16.msra.mxu0 %v8640
          %9301 = vmatpush.bf16.msra.mxu0 %v8632
          %9302 = vmatpush.bf16.msra.mxu0 %v8624
          %9303 = vmatpush.bf16.msra.mxu0 %v8616
          %9304 = vmatpush.bf16.msra.mxu0 %v8608
          %9305 = vmatpush.bf16.msra.mxu0 %v8600
          %9306 = vmatpush.bf16.msra.mxu0 %v8592
          %9307 = vmatpush.bf16.msra.mxu0 %v8584
          %9308 = vmatmul.bf16.gmra.mxu0 %v7534
          %v9309 = vpop.f32.mrf.mxu0
          %v9310 = vadd.f32 %v7800, %v9309
          %v9311 = vpop.f32.mrf.mxu0
          %9312 = vdwg.mxu0
          %9313 = vmatpush.bf16.msra.mxu0 %v8704
          %9314 = vmatpush.bf16.msra.mxu0 %v8696
          %9315 = vmatpush.bf16.msra.mxu0 %v8688
          %9316 = vmatpush.bf16.msra.mxu0 %v8680
          %9317 = vmatpush.bf16.msra.mxu0 %v8672
          %9318 = vmatpush.bf16.msra.mxu0 %v8664
          %9319 = vmatpush.bf16.msra.mxu0 %v8656
          %9320 = vmatpush.bf16.msra.mxu0 %v8648
          %9321 = vmatmul.bf16.gmra.mxu0 %v7535
          %v9322 = vpop.f32.mrf.mxu0
          %v9323 = vadd.f32 %v9310, %v9322
          %v9324 = vpop.f32.mrf.mxu0
          %9325 = vdwg.mxu0
          %9326 = vmatpush.bf16.msra.mxu0 %v8768
          %9327 = vmatpush.bf16.msra.mxu0 %v8760
          %9328 = vmatpush.bf16.msra.mxu0 %v8752
          %9329 = vmatpush.bf16.msra.mxu0 %v8744
          %9330 = vmatpush.bf16.msra.mxu0 %v8736
          %9331 = vmatpush.bf16.msra.mxu0 %v8728
          %9332 = vmatpush.bf16.msra.mxu0 %v8720
          %9333 = vmatpush.bf16.msra.mxu0 %v8712
          %9334 = vmatmul.bf16.gmra.mxu0 %v7536
          %v9335 = vpop.f32.mrf.mxu0
          %v9336 = vadd.f32 %v9323, %v9335
          %v9337 = vpop.f32.mrf.mxu0
          %9338 = vdwg.mxu0
          %9339 = vmatpush.bf16.msra.mxu0 %v8832
          %9340 = vmatpush.bf16.msra.mxu0 %v8824
          %9341 = vmatpush.bf16.msra.mxu0 %v8816
          %9342 = vmatpush.bf16.msra.mxu0 %v8808
          %9343 = vmatpush.bf16.msra.mxu0 %v8800
          %9344 = vmatpush.bf16.msra.mxu0 %v8792
          %9345 = vmatpush.bf16.msra.mxu0 %v8784
          %9346 = vmatpush.bf16.msra.mxu0 %v8776
          %9347 = vmatmul.bf16.gmra.mxu0 %v7537
          %v9348 = vpop.f32.mrf.mxu0
          %v9349 = vadd.f32 %v9336, %v9348
          %v9350 = vpop.f32.mrf.mxu0
          %9351 = vdwg.mxu0
          %9352 = vmatpush.bf16.msra.mxu0 %v8641
          %9353 = vmatpush.bf16.msra.mxu0 %v8633
          %9354 = vmatpush.bf16.msra.mxu0 %v8625
          %9355 = vmatpush.bf16.msra.mxu0 %v8617
          %9356 = vmatpush.bf16.msra.mxu0 %v8609
          %9357 = vmatpush.bf16.msra.mxu0 %v8601
          %9358 = vmatpush.bf16.msra.mxu0 %v8593
          %9359 = vmatpush.bf16.msra.mxu0 %v8585
          %9360 = vmatmul.bf16.gmra.mxu0 %v7534
          %v9361 = vpop.f32.mrf.mxu0
          %v9362 = vadd.f32 %v7801, %v9361
          %v9363 = vpop.f32.mrf.mxu0
          %9364 = vdwg.mxu0
          %9365 = vmatpush.bf16.msra.mxu0 %v8705
          %9366 = vmatpush.bf16.msra.mxu0 %v8697
          %9367 = vmatpush.bf16.msra.mxu0 %v8689
          %9368 = vmatpush.bf16.msra.mxu0 %v8681
          %9369 = vmatpush.bf16.msra.mxu0 %v8673
          %9370 = vmatpush.bf16.msra.mxu0 %v8665
          %9371 = vmatpush.bf16.msra.mxu0 %v8657
          %9372 = vmatpush.bf16.msra.mxu0 %v8649
          %9373 = vmatmul.bf16.gmra.mxu0 %v7535
          %v9374 = vpop.f32.mrf.mxu0
          %v9375 = vadd.f32 %v9362, %v9374
          %v9376 = vpop.f32.mrf.mxu0
          %9377 = vdwg.mxu0
          %9378 = vmatpush.bf16.msra.mxu0 %v8769
          %9379 = vmatpush.bf16.msra.mxu0 %v8761
          %9380 = vmatpush.bf16.msra.mxu0 %v8753
          %9381 = vmatpush.bf16.msra.mxu0 %v8745
          %9382 = vmatpush.bf16.msra.mxu0 %v8737
          %9383 = vmatpush.bf16.msra.mxu0 %v8729
          %9384 = vmatpush.bf16.msra.mxu0 %v8721
          %9385 = vmatpush.bf16.msra.mxu0 %v8713
          %9386 = vmatmul.bf16.gmra.mxu0 %v7536
          %v9387 = vpop.f32.mrf.mxu0
          %v9388 = vadd.f32 %v9375, %v9387
          %v9389 = vpop.f32.mrf.mxu0
          %9390 = vdwg.mxu0
          %9391 = vmatpush.bf16.msra.mxu0 %v8833
          %9392 = vmatpush.bf16.msra.mxu0 %v8825
          %9393 = vmatpush.bf16.msra.mxu0 %v8817
          %9394 = vmatpush.bf16.msra.mxu0 %v8809
          %9395 = vmatpush.bf16.msra.mxu0 %v8801
          %9396 = vmatpush.bf16.msra.mxu0 %v8793
          %9397 = vmatpush.bf16.msra.mxu0 %v8785
          %9398 = vmatpush.bf16.msra.mxu0 %v8777
          %9399 = vmatmul.bf16.gmra.mxu0 %v7537
          %v9400 = vpop.f32.mrf.mxu0
          %v9401 = vadd.f32 %v9388, %v9400
          %v9402 = vpop.f32.mrf.mxu0
          %9403 = vdwg.mxu0
          %9404 = vmatpush.bf16.msra.mxu0 %v8642
          %9405 = vmatpush.bf16.msra.mxu0 %v8634
          %9406 = vmatpush.bf16.msra.mxu0 %v8626
          %9407 = vmatpush.bf16.msra.mxu0 %v8618
          %9408 = vmatpush.bf16.msra.mxu0 %v8610
          %9409 = vmatpush.bf16.msra.mxu0 %v8602
          %9410 = vmatpush.bf16.msra.mxu0 %v8594
          %9411 = vmatpush.bf16.msra.mxu0 %v8586
          %9412 = vmatmul.bf16.gmra.mxu0 %v7534
          %v9413 = vpop.f32.mrf.mxu0
          %v9414 = vadd.f32 %v7802, %v9413
          %v9415 = vpop.f32.mrf.mxu0
          %9416 = vdwg.mxu0
          %9417 = vmatpush.bf16.msra.mxu0 %v8706
          %9418 = vmatpush.bf16.msra.mxu0 %v8698
          %9419 = vmatpush.bf16.msra.mxu0 %v8690
          %9420 = vmatpush.bf16.msra.mxu0 %v8682
          %9421 = vmatpush.bf16.msra.mxu0 %v8674
          %9422 = vmatpush.bf16.msra.mxu0 %v8666
          %9423 = vmatpush.bf16.msra.mxu0 %v8658
          %9424 = vmatpush.bf16.msra.mxu0 %v8650
          %9425 = vmatmul.bf16.gmra.mxu0 %v7535
          %v9426 = vpop.f32.mrf.mxu0
          %v9427 = vadd.f32 %v9414, %v9426
          %v9428 = vpop.f32.mrf.mxu0
          %9429 = vdwg.mxu0
          %9430 = vmatpush.bf16.msra.mxu0 %v8770
          %9431 = vmatpush.bf16.msra.mxu0 %v8762
          %9432 = vmatpush.bf16.msra.mxu0 %v8754
          %9433 = vmatpush.bf16.msra.mxu0 %v8746
          %9434 = vmatpush.bf16.msra.mxu0 %v8738
          %9435 = vmatpush.bf16.msra.mxu0 %v8730
          %9436 = vmatpush.bf16.msra.mxu0 %v8722
          %9437 = vmatpush.bf16.msra.mxu0 %v8714
          %9438 = vmatmul.bf16.gmra.mxu0 %v7536
          %v9439 = vpop.f32.mrf.mxu0
          %v9440 = vadd.f32 %v9427, %v9439
          %v9441 = vpop.f32.mrf.mxu0
          %9442 = vdwg.mxu0
          %9443 = vmatpush.bf16.msra.mxu0 %v8834
          %9444 = vmatpush.bf16.msra.mxu0 %v8826
          %9445 = vmatpush.bf16.msra.mxu0 %v8818
          %9446 = vmatpush.bf16.msra.mxu0 %v8810
          %9447 = vmatpush.bf16.msra.mxu0 %v8802
          %9448 = vmatpush.bf16.msra.mxu0 %v8794
          %9449 = vmatpush.bf16.msra.mxu0 %v8786
          %9450 = vmatpush.bf16.msra.mxu0 %v8778
          %9451 = vmatmul.bf16.gmra.mxu0 %v7537
          %v9452 = vpop.f32.mrf.mxu0
          %v9453 = vadd.f32 %v9440, %v9452
          %v9454 = vpop.f32.mrf.mxu0
          %9455 = vdwg.mxu0
          %9456 = vmatpush.bf16.msra.mxu0 %v8643
          %9457 = vmatpush.bf16.msra.mxu0 %v8635
          %9458 = vmatpush.bf16.msra.mxu0 %v8627
          %9459 = vmatpush.bf16.msra.mxu0 %v8619
          %9460 = vmatpush.bf16.msra.mxu0 %v8611
          %9461 = vmatpush.bf16.msra.mxu0 %v8603
          %9462 = vmatpush.bf16.msra.mxu0 %v8595
          %9463 = vmatpush.bf16.msra.mxu0 %v8587
          %9464 = vmatmul.bf16.gmra.mxu0 %v7534
          %v9465 = vpop.f32.mrf.mxu0
          %v9466 = vadd.f32 %v7803, %v9465
          %v9467 = vpop.f32.mrf.mxu0
          %9468 = vdwg.mxu0
          %9469 = vmatpush.bf16.msra.mxu0 %v8707
          %9470 = vmatpush.bf16.msra.mxu0 %v8699
          %9471 = vmatpush.bf16.msra.mxu0 %v8691
          %9472 = vmatpush.bf16.msra.mxu0 %v8683
          %9473 = vmatpush.bf16.msra.mxu0 %v8675
          %9474 = vmatpush.bf16.msra.mxu0 %v8667
          %9475 = vmatpush.bf16.msra.mxu0 %v8659
          %9476 = vmatpush.bf16.msra.mxu0 %v8651
          %9477 = vmatmul.bf16.gmra.mxu0 %v7535
          %v9478 = vpop.f32.mrf.mxu0
          %v9479 = vadd.f32 %v9466, %v9478
          %v9480 = vpop.f32.mrf.mxu0
          %9481 = vdwg.mxu0
          %9482 = vmatpush.bf16.msra.mxu0 %v8771
          %9483 = vmatpush.bf16.msra.mxu0 %v8763
          %9484 = vmatpush.bf16.msra.mxu0 %v8755
          %9485 = vmatpush.bf16.msra.mxu0 %v8747
          %9486 = vmatpush.bf16.msra.mxu0 %v8739
          %9487 = vmatpush.bf16.msra.mxu0 %v8731
          %9488 = vmatpush.bf16.msra.mxu0 %v8723
          %9489 = vmatpush.bf16.msra.mxu0 %v8715
          %9490 = vmatmul.bf16.gmra.mxu0 %v7536
          %v9491 = vpop.f32.mrf.mxu0
          %v9492 = vadd.f32 %v9479, %v9491
          %v9493 = vpop.f32.mrf.mxu0
          %9494 = vdwg.mxu0
          %9495 = vmatpush.bf16.msra.mxu0 %v8835
          %9496 = vmatpush.bf16.msra.mxu0 %v8827
          %9497 = vmatpush.bf16.msra.mxu0 %v8819
          %9498 = vmatpush.bf16.msra.mxu0 %v8811
          %9499 = vmatpush.bf16.msra.mxu0 %v8803
          %9500 = vmatpush.bf16.msra.mxu0 %v8795
          %9501 = vmatpush.bf16.msra.mxu0 %v8787
          %9502 = vmatpush.bf16.msra.mxu0 %v8779
          %9503 = vmatmul.bf16.gmra.mxu0 %v7537
          %v9504 = vpop.f32.mrf.mxu0
          %v9505 = vadd.f32 %v9492, %v9504
          %v9506 = vpop.f32.mrf.mxu0
          %9507 = vdwg.mxu0
          %v9508 = vsub.f32 0.0, %v9141
          %v9509 = vsub.f32 0.0, %v9193
          %v9510 = vsub.f32 0.0, %v9245
          %v9511 = vsub.f32 0.0, %v9297
          %v9512 = vsub.f32 0.0, %v9349
          %v9513 = vsub.f32 0.0, %v9401
          %v9514 = vsub.f32 0.0, %v9453
          %v9515 = vsub.f32 0.0, %v9505
          %v9516 = vmul.f32 %v9508, 1.442695
          %v9517 = vpow.pop %v9516
          %v9518 = vmul.f32 %v9509, 1.442695
          %v9519 = vpow.pop %v9518
          %v9520 = vmul.f32 %v9510, 1.442695
          %v9521 = vpow.pop %v9520
          %v9522 = vmul.f32 %v9511, 1.442695
          %v9523 = vpow.pop %v9522
          %v9524 = vmul.f32 %v9512, 1.442695
          %v9525 = vpow.pop %v9524
          %v9526 = vmul.f32 %v9513, 1.442695
          %v9527 = vpow.pop %v9526
          %v9528 = vmul.f32 %v9514, 1.442695
          %v9529 = vpow.pop %v9528
          %v9530 = vmul.f32 %v9515, 1.442695
          %v9531 = vpow.pop %v9530
          %v9532 = vadd.f32 %v9517, 1.0
          %v9533 = vadd.f32 %v9519, 1.0
          %v9534 = vadd.f32 %v9521, 1.0
          %v9535 = vadd.f32 %v9523, 1.0
          %v9536 = vadd.f32 %v9525, 1.0
          %v9537 = vadd.f32 %v9527, 1.0
          %v9538 = vadd.f32 %v9529, 1.0
          %v9539 = vadd.f32 %v9531, 1.0
          %v9540 = vrcp.pop %v9532
          %v9541 = vrcp.pop %v9533
          %v9542 = vrcp.pop %v9534
          %v9543 = vrcp.pop %v9535
          %v9544 = vrcp.pop %v9536
          %v9545 = vrcp.pop %v9537
          %v9546 = vrcp.pop %v9538
          %v9547 = vrcp.pop %v9539
          %v9556 = vrot.slane %v9541, 6
          %v9557 = vrot.slane %v9542, 4
          %v9558 = vrot.slane %v9543, 2
          %v9559 = vrot.slane %v9545, 6
          %v9560 = vrot.slane %v9546, 4
          %v9561 = vrot.slane %v9547, 2
          %vm9562 = vcmask 1041408
          %v9563 = vsel %vm9562, %v9540, %v9556
          %vm9564 = vcmask 1045508
          %v9565 = vsel %vm9564, %v9557, %v9558
          %vm9566 = vcmask 1043456
          %v9567 = vsel %vm9566, %v9563, %v9565
          %v9568 = vsel %vm9562, %v9544, %v9559
          %v9569 = vsel %vm9564, %v9560, %v9561
          %v9570 = vsel %vm9566, %v9568, %v9569
          %9573 = vst [vmem:[#allocation37] sm:$0xff] %v9567
          %9574 = vst [vmem:[#allocation37 + $0x8] sm:$0xff] %v9570
          %v9575 = vld [vmem:[#allocation30] sm:$0xf]
          %v9576 = vld [vmem:[#allocation30 + $0x4] sm:$0xf]
          %v9577 = vld [vmem:[#allocation30 + $0x8] sm:$0xf]
          %v9578 = vld [vmem:[#allocation30 + $0xc] sm:$0xf]
          %v9579 = vld [vmem:[#allocation30 + $0x10] sm:$0xf]
          %v9580 = vld [vmem:[#allocation30 + $0x14] sm:$0xf]
          %v9581 = vld [vmem:[#allocation30 + $0x18] sm:$0xf]
          %v9582 = vld [vmem:[#allocation30 + $0x1c] sm:$0xf]
          %v9583 = vld [vmem:[#allocation30 + $0x20] sm:$0xf]
          %v9584 = vld [vmem:[#allocation30 + $0x24] sm:$0xf]
          %v9585 = vld [vmem:[#allocation30 + $0x28] sm:$0xf]
          %v9586 = vld [vmem:[#allocation30 + $0x2c] sm:$0xf]
          %v9587 = vld [vmem:[#allocation30 + $0x30] sm:$0xf]
          %v9588 = vld [vmem:[#allocation30 + $0x34] sm:$0xf]
          %v9589 = vld [vmem:[#allocation30 + $0x38] sm:$0xf]
          %v9590 = vld [vmem:[#allocation30 + $0x3c] sm:$0xf]
          %v9591 = vld [vmem:[#allocation31] sm:$0x1]
          %v9593 = vperm.slane %v9591, 0
          %v9611 = vunpack.c.l.b16 %v9575
          %v9612 = vunpack.c.l.b16 %v9576
          %v9613 = vunpack.c.l.b16 %v9577
          %v9614 = vunpack.c.l.b16 %v9578
          %v9615 = vunpack.c.l.b16 %v9579
          %v9616 = vunpack.c.l.b16 %v9580
          %v9617 = vunpack.c.l.b16 %v9581
          %v9618 = vunpack.c.l.b16 %v9582
          %v9619 = vunpack.c.l.b16 %v9583
          %v9620 = vunpack.c.l.b16 %v9584
          %v9621 = vunpack.c.l.b16 %v9585
          %v9622 = vunpack.c.l.b16 %v9586
          %v9623 = vunpack.c.l.b16 %v9587
          %v9624 = vunpack.c.l.b16 %v9588
          %v9625 = vunpack.c.l.b16 %v9589
          %v9626 = vunpack.c.l.b16 %v9590
          %v9627 = vpack.c.b16 %v9612, %v9611
          %v9628 = vpack.c.b16 %v9614, %v9613
          %v9629 = vpack.c.b16 %v9616, %v9615
          %v9630 = vpack.c.b16 %v9618, %v9617
          %v9631 = vpack.c.b16 %v9620, %v9619
          %v9632 = vpack.c.b16 %v9622, %v9621
          %v9633 = vpack.c.b16 %v9624, %v9623
          %v9634 = vpack.c.b16 %v9626, %v9625
          %9643 = vmatpush.bf16.msra.mxu0 %v9634
          %9644 = vmatpush.bf16.msra.mxu0 %v9633
          %9645 = vmatpush.bf16.msra.mxu0 %v9632
          %9646 = vmatpush.bf16.msra.mxu0 %v9631
          %9647 = vmatpush.bf16.msra.mxu0 %v9630
          %9648 = vmatpush.bf16.msra.mxu0 %v9629
          %9649 = vmatpush.bf16.msra.mxu0 %v9628
          %9650 = vmatpush.bf16.msra.mxu0 %v9627
          %9651 = vmatmul.bf16.gmra.mxu0 %v6899
          %v9652 = vpop.f32.mrf.mxu0
          %v9653 = vadd.f32 %v9593, %v9652
          %v9654 = vpop.f32.mrf.mxu0
          %9655 = vdwg.mxu0
          %9656 = vst [vmem:[#allocation34] sm:$0x3] %v9653
        $region192: #{forward.1} parent=107 // pred_fallthru
          _
        // Predicated region
        $region193: #{forward.1} parent=107 // pred_check
          %p9657 = pneg %p551
        $region194: #{forward.1} parent=107 // pred_check_branch
          %9659 = sbr.rel (%p9657) target = $region196
        $region195: #{forward.1} parent=107 // pred_region
          %9661 = vsyncadd [#allocation6], 0
          %s9663 = sshll.u32 [#allocation33], 4
          %s9664 = int_to_ptr.vmem [resolvable:$true] %s9663
          %s9665 = sshll.u32 %s22, 4
          %s9666 = int_to_ptr.hbm [resolvable:$true] %s9665
          %9668 = dma.vmem_to_hbm [thread:$0]  %s9664, 32, %s9666, [#allocation6]
        $region196: #{forward.1} parent=107 // pred_fallthru
          _
        // Predicated region
        $region197: #{forward.1} parent=107 // pred_check
          %p9669 = pneg %p572
        $region198: #{forward.1} parent=107 // pred_check_branch
          %9671 = sbr.rel (%p9669) target = $region200
        $region199: #{forward.1} parent=107 // pred_region
          %9673 = vsyncadd [#allocation35], 0
          %s9675 = sshll.u32 [#allocation34], 4
          %s9676 = int_to_ptr.vmem [resolvable:$true] %s9675
          %s9677 = sshll.u32 %s23, 4
          %s9678 = int_to_ptr.hbm [resolvable:$true] %s9677
          %9680 = dma.vmem_to_hbm [thread:$0]  %s9676, 32, %s9678, [#allocation35]
        $region200: #{forward.1} parent=107 // pred_fallthru
          _
        // Predicated region
        $region201: #{forward.1} parent=107 // pred_check
          %p9681 = pneg %p593
        $region202: #{forward.1} parent=107 // pred_check_branch
          %9683 = sbr.rel (%p9681) target = $region204
        $region203: #{forward.1} parent=107 // pred_region
          %9685 = vsyncadd [#allocation35], 0
          %s9687 = sshll.u32 [#allocation36], 4
          %s9688 = int_to_ptr.vmem [resolvable:$true] %s9687
          %s9689 = sshll.u32 %s24, 4
          %s9690 = int_to_ptr.hbm [resolvable:$true] %s9689
          %9692 = dma.vmem_to_hbm [thread:$0]  %s9688, 256, %s9690, [#allocation35]
        $region204: #{forward.1} parent=107 // pred_fallthru
          _
        // Predicated region
        $region205: #{forward.1} parent=107 // pred_check
          %p9693 = pneg %p614
        $region206: #{forward.1} parent=107 // pred_check_branch
          %9695 = sbr.rel (%p9693) target = $region208
        $region207: #{forward.1} parent=107 // pred_region
          %9697 = vsyncadd [#allocation38], 0
          %s9699 = sshll.u32 [#allocation37], 4
          %s9700 = int_to_ptr.vmem [resolvable:$true] %s9699
          %s9701 = sshll.u32 %s25, 4
          %s9702 = int_to_ptr.hbm [resolvable:$true] %s9701
          %9704 = dma.vmem_to_hbm [thread:$0]  %s9700, 256, %s9702, [#allocation38]
        $region208: #{forward.1} parent=107 // pred_fallthru
          _
        // Predicated region
        $region209: #{forward.1} parent=107 // pred_check
          %p9705 = pneg %p551
        $region210: #{forward.1} parent=107 // pred_check_branch
          %9707 = sbr.rel (%p9705) target = $region212
        $region211: #{forward.1} parent=107 // pred_region
          %9709 = dma.done [#allocation6], 32
        $region212: #{forward.1} parent=107 // pred_fallthru
          _
        // Predicated region
        $region213: #{forward.1} parent=107 // pred_check
          %p9710 = pneg %p572
        $region214: #{forward.1} parent=107 // pred_check_branch
          %9712 = sbr.rel (%p9710) target = $region216
        $region215: #{forward.1} parent=107 // pred_region
          %9714 = dma.done [#allocation35], 32
        $region216: #{forward.1} parent=107 // pred_fallthru
          _
        // Predicated region
        $region217: #{forward.1} parent=107 // pred_check
          %p9715 = pneg %p593
        $region218: #{forward.1} parent=107 // pred_check_branch
          %9717 = sbr.rel (%p9715) target = $region220
        $region219: #{forward.1} parent=107 // pred_region
          %9719 = dma.done [#allocation35], 256
        $region220: #{forward.1} parent=107 // pred_fallthru
          _
        // Predicated region
        $region221: #{forward.1} parent=107 // pred_check
          %p9720 = pneg %p614
        $region222: #{forward.1} parent=107 // pred_check_branch
          %9722 = sbr.rel (%p9720) target = $region224
        $region223: #{forward.1} parent=107 // pred_region
          %9724 = dma.done [#allocation38], 256
        $region224: #{forward.1} parent=107 // pred_fallthru
          _
      $region108: #{forward.1} parent=5 // pred_fallthru
        _
      %p9725 = scmp.le.s32.totalorder 2, %s51
      // Predicated region
      $region225: #{forward.1} parent=5 // pred_check
        %p9726 = pneg %p9725
      $region226: #{forward.1} parent=5 // pred_check_branch
        %9728 = sbr.rel (%p9726) target = $region228
      $region227: #{forward.1} parent=5 // pred_region
        %s9729 = ssub.s32 %s51, 2
      $region228: #{forward.1} parent=5 // pred_fallthru
        _
    $region6: #{forward.1} parent=1 // loop_footer
      %s55 = sadd.s32 1, %s51
    $region7: #{forward.1} parent=1 // loop_footer_branch
      %50 = sbr.rel target = $region3
    $region8: #{forward.1} parent=1 // loop_exit
      _
    %9730 = vsyncpa [#allocation5], 1
    %s9731 = scalar_lea.sflag [#allocation5], 1
    %9732 = vsyncpa %s9731, 1
    %9733 = vsyncpa [#allocation8], 1
    %s9734 = scalar_lea.sflag [#allocation8], 1
    %9735 = vsyncpa %s9734, 1
    %9736 = vsyncpa [#allocation11], 1
    %s9737 = scalar_lea.sflag [#allocation11], 1
    %9738 = vsyncpa %s9737, 1
    %9739 = vsyncpa [#allocation14], 1
    %9740 = vsyncpa [#allocation17], 1
    %9741 = vsyncpa [#allocation20], 1
    %9742 = vsyncpa [#allocation23], 1
    %9743 = vsyncpa [#allocation26], 1
    %9744 = vsyncpa [#allocation29], 1
    %9745 = vsyncpa [#allocation32], 1
    %9746 = vsyncpa [#allocation6], 1
    %s9747 = scalar_lea.sflag [#allocation6], 1
    %9748 = vsyncpa %s9747, 1
    %9749 = vsyncpa [#allocation35], 1
    %9750 = vsyncpa [#allocation38], 1

</llo_original>
